<compile_context>
chip_gen: v7x
topology: tpu7x:2x2x1
jax: 0.10.0
libtpu: 0.0.40
codegen_flags: <defaults>
</compile_context>

<pallas_src>
import math
from functools import partial

import jax
import jax.numpy as jnp
from jax.experimental import pallas as pl
from jax.experimental.pallas import tpu as pltpu


def _dense(a, w, b):
    """bf16 MXU matmul with f32 accumulation, f32 bias add."""
    return jnp.dot(a.astype(jnp.bfloat16), w, preferred_element_type=jnp.float32) + b


def model_ae_kernel(
    x_ref,
    w_e0_ref, b_e0_ref,
    w_e1_ref, b_e1_ref,
    w_sp_ref, b_sp_ref,
    w_d0_ref, b_d0_ref,
    w_d1_ref, b_d1_ref,
    w_lg_ref, b_lg_ref,
    z_ref, xrec_ref,
):
    x = x_ref[...]

    # ---- encoder ----
    h = jnp.maximum(_dense(x, w_e0_ref[...], b_e0_ref[...]), 0.0)
    h = jnp.maximum(_dense(h, w_e1_ref[...], b_e1_ref[...]), 0.0)
    z = _dense(h, w_sp_ref[...], b_sp_ref[...])

    # z = z - z.mean()  (global mean over the tile == one logical batch)
    z = z - jnp.mean(z)
    # z = z / z.norm(dim=-1, keepdim=True)  via rsqrt (EUP slot, no vector divide)
    z = z * jax.lax.rsqrt(jnp.sum(z * z, axis=-1, keepdims=True))
    # TODO(synk): z_dim=16 (<128 lanes) means masked vst stores; negligible next
    # to the 784-wide x_rec writeback, so z is left unpadded.
    z_ref[...] = z.astype(z_ref.dtype)

    # ---- decoder ----
    d = jnp.maximum(_dense(z, w_d0_ref[...], b_d0_ref[...]), 0.0)
    d = jnp.maximum(_dense(d, w_d1_ref[...], b_d1_ref[...]), 0.0)
    logits = _dense(d, w_lg_ref[...], b_lg_ref[...])
    xrec_ref[...] = jax.nn.sigmoid(logits).astype(xrec_ref.dtype)


@partial(jax.jit, static_argnames=("tile_b",))
def model_ae_forward(x, prepared_params, *, tile_b=None):
    """Run ModelAE forward.

    x: (N, 784), ideally bf16 (the kernel casts before each matmul anyway).
    prepared_params: output of prepare_params() (bf16 weights, f32 (1,out) biases).
    Each tile_b-row slab is one logical batch (mean/norm per slab); pass
    tile_b == N for exact single-batch semantics of the original module.
    """
    N, in_dim = x.shape
    assert in_dim == 784
    if tile_b is None:
        tile_b = min(N, 512)  # never default to the whole batch (VMEM / pipelining)
    assert N % tile_b == 0, "N must be a multiple of tile_b"
    assert tile_b % 8 == 0, "tile_b must be a multiple of 8 (sublane)"
    num_tiles = N // tile_b
    z_dim = prepared_params["w_sphere"].shape[1]
    h2 = prepared_params["w_e0"].shape[1]
    h = prepared_params["w_e1"].shape[1]

    p = prepared_params
    weight_args = (p["w_e0"], p["b_e0"], p["w_e1"], p["b_e1"],
                   p["w_sphere"], p["b_sphere"], p["w_d0"], p["b_d0"],
                   p["w_d1"], p["b_d1"], p["w_logits"], p["b_logits"])

    # x/z/x_rec tiled over batch; weights/biases pinned resident via constant
    # index_map (block index never changes -> no re-DMA per grid step).
    x_spec = pl.BlockSpec((tile_b, 784), lambda b: (b, 0))
    const_specs = [pl.BlockSpec(a.shape, lambda b: (0, 0)) for a in weight_args]
    out_specs = (
        pl.BlockSpec((tile_b, z_dim), lambda b: (b, 0)),
        pl.BlockSpec((tile_b, 784), lambda b: (b, 0)),
    )

    # ---- VMEM budget: double-buffered x / z / x_rec tiles + resident weights
    # + f32 intermediates, with generous headroom; clamp to v7x-safe range. ----
    in_bytes = jnp.dtype(x.dtype).itemsize
    out_bytes = 2  # bf16 outputs
    tile_bytes = (
        2 * tile_b * 784 * in_bytes            # x tile, double buffered
        + 2 * tile_b * 784 * out_bytes         # x_rec tile, double buffered
        + 2 * tile_b * z_dim * out_bytes       # z tile, double buffered
        + tile_b * (h2 + h + z_dim + h + h2 + 784) * 4  # f32 intermediates
    )
    weight_bytes = sum(int(a.size) * jnp.dtype(a.dtype).itemsize for a in weight_args)
    vmem_limit = min(max(2 * (tile_bytes + 2 * weight_bytes), 16 << 20), 100 << 20)

    # ---- cost hint for the XLA scheduler ----
    flops_per_row = 2 * (784 * h2 + h2 * h + h * z_dim + z_dim * h + h * h2 + h2 * 784)
    cost = pl.CostEstimate(
        flops=N * flops_per_row,
        transcendentals=N * (784 + 1),  # sigmoid + rsqrt per row
        bytes_accessed=N * (784 * in_bytes + 784 * out_bytes + z_dim * out_bytes)
        + weight_bytes,
    )

    z, x_rec = pl.pallas_call(
        model_ae_kernel,
        out_shape=(
            jax.ShapeDtypeStruct((N, z_dim), jnp.bfloat16),
            jax.ShapeDtypeStruct((N, 784), jnp.bfloat16),
        ),
        grid=(num_tiles,),
        in_specs=[x_spec] + const_specs,
        out_specs=out_specs,
        compiler_params=pltpu.CompilerParams(
            dimension_semantics=("parallel",),  # tiles independent; 2x on v7x megacore
            vmem_limit_bytes=int(vmem_limit),
        ),
        cost_estimate=cost,
    )(x, *weight_args)
    return z, x_rec


def prepare_params(params):
    """One-time prep outside the forward path: bf16 weights, f32 (1,out) biases."""
    out = {}
    for k, v in params.items():
        out[k] = v.astype(jnp.bfloat16) if k.startswith("w_") else v.astype(jnp.float32)
    return out


def init_params(key, h_dim, z_dim):
    """Deterministic init mirroring the PyTorch module's init scheme.

    nn.Linear stores weight as (out, in); we store the transpose (in, out).
    Weights: U(-1/sqrt(fan_in), 1/sqrt(fan_in)); biases: PyTorch default, same bound.
    """
    dims = [
        ("e0", 784, h_dim * 2),
        ("e1", h_dim * 2, h_dim),
        ("sphere", h_dim, z_dim),
        ("d0", z_dim, h_dim),
        ("d1", h_dim, h_dim * 2),
        ("logits", h_dim * 2, 784),
    ]
    params = {}
    for name, fan_in, fan_out in dims:
        key, kw, kb = jax.random.split(key, 3)
        bound = 1.0 / math.sqrt(fan_in)
        params[f"w_{name}"] = jax.random.uniform(
            kw, (fan_in, fan_out), jnp.float32, minval=-bound, maxval=bound
        )
        params[f"b_{name}"] = jax.random.uniform(
            kb, (1, fan_out), jnp.float32, minval=-bound, maxval=bound
        )
    return params


def reference_forward(x, prepared_params, tile_b):
    """Pure-JAX mirror of the kernel (same bf16 weight / pre-matmul activation
    casts, f32 accumulation), applied per batch tile. Returns f32."""
    N = x.shape[0]
    xt = x.reshape(N // tile_b, tile_b, 784)
    p = prepared_params

    def per_tile(xi):
        h = jnp.maximum(_dense(xi, p["w_e0"], p["b_e0"]), 0.0)
        h = jnp.maximum(_dense(h, p["w_e1"], p["b_e1"]), 0.0)
        z = _dense(h, p["w_sphere"], p["b_sphere"])
        z = z - jnp.mean(z)
        z = z * jax.lax.rsqrt(jnp.sum(z * z, axis=-1, keepdims=True))
        d = jnp.maximum(_dense(z, p["w_d0"], p["b_d0"]), 0.0)
        d = jnp.maximum(_dense(d, p["w_d1"], p["b_d1"]), 0.0)
        x_ = jax.nn.sigmoid(_dense(d, p["w_logits"], p["b_logits"]))
        return z, x_

    z, xr = jax.vmap(per_tile)(xt)
    return z.reshape(N, -1), xr.reshape(N, 784)


if __name__ == "__main__":
    H_DIM, Z_DIM = 32, 16
    TILE_B = 256     # rows per grid step = one logical batch; fills the MXU M dim
    NUM_TILES = 4    # even -> balances v7x's 2 TensorCores; amortizes weight DMA
    N = TILE_B * NUM_TILES

    key = jax.random.PRNGKey(0)
    key, kx = jax.random.split(key)
    # Producer supplies bf16 directly (no extra wrapper-side cast pass).
    x = jax.random.uniform(kx, (N, 784), jnp.bfloat16)  # MNIST-like flattened input

    params = init_params(key, H_DIM, Z_DIM)
    prepared = prepare_params(params)  # bf16 weights, done once outside forward

    z, x_rec = model_ae_forward(x, prepared, tile_b=TILE_B)
    jax.block_until_ready((z, x_rec))

    # sanity check vs a pure-JAX mirror using the same bf16 casts
    z_ref, xr_ref = reference_forward(x, prepared, TILE_B)
    assert z.shape == (N, Z_DIM) and x_rec.shape == (N, 784)
    assert z.dtype == jnp.bfloat16 and x_rec.dtype == jnp.bfloat16
    # bf16 output rounding (~4e-3 rel) on top of matching bf16 matmul math
    assert jnp.allclose(z.astype(jnp.float32), z_ref, atol=1.5e-2, rtol=1.5e-2)
    assert jnp.allclose(x_rec.astype(jnp.float32), xr_ref, atol=1.5e-2, rtol=1.5e-2)

    print("KERNEL_OK")
</pallas_src>

<mosaic_0001>
module attributes {stable_mosaic.version = 11 : i64} {
  func.func @model_ae_kernel(%arg0: i32, %arg1: memref<256x784xbf16, #tpu.memory_space<vmem>>, %arg2: memref<784x64xbf16, #tpu.memory_space<vmem>>, %arg3: memref<1x64xf32, #tpu.memory_space<vmem>>, %arg4: memref<64x32xbf16, #tpu.memory_space<vmem>>, %arg5: memref<1x32xf32, #tpu.memory_space<vmem>>, %arg6: memref<32x16xbf16, #tpu.memory_space<vmem>>, %arg7: memref<1x16xf32, #tpu.memory_space<vmem>>, %arg8: memref<16x32xbf16, #tpu.memory_space<vmem>>, %arg9: memref<1x32xf32, #tpu.memory_space<vmem>>, %arg10: memref<32x64xbf16, #tpu.memory_space<vmem>>, %arg11: memref<1x64xf32, #tpu.memory_space<vmem>>, %arg12: memref<64x784xbf16, #tpu.memory_space<vmem>>, %arg13: memref<1x784xf32, #tpu.memory_space<vmem>>, %arg14: memref<256x16xbf16, #tpu.memory_space<vmem>>, %arg15: memref<256x784xbf16, #tpu.memory_space<vmem>>) attributes {dimension_semantics = [#tpu.dimension_semantics<parallel>], iteration_bounds = array<i64: 4>, scalar_prefetch = 0 : i64, scratch_operands = 0 : i64, tpu.core_type = #tpu.core_type<tc>, window_params = [{transform_indices = @transform_0, window_bounds = array<i64: 256, 784>}, {pipeline_mode = #tpu.pipeline_mode<synchronous>, transform_indices = @transform_1, window_bounds = array<i64: 784, 64>}, {pipeline_mode = #tpu.pipeline_mode<synchronous>, transform_indices = @transform_2, window_bounds = array<i64: 1, 64>}, {pipeline_mode = #tpu.pipeline_mode<synchronous>, transform_indices = @transform_3, window_bounds = array<i64: 64, 32>}, {pipeline_mode = #tpu.pipeline_mode<synchronous>, transform_indices = @transform_4, window_bounds = array<i64: 1, 32>}, {pipeline_mode = #tpu.pipeline_mode<synchronous>, transform_indices = @transform_5, window_bounds = array<i64: 32, 16>}, {pipeline_mode = #tpu.pipeline_mode<synchronous>, transform_indices = @transform_6, window_bounds = array<i64: 1, 16>}, {pipeline_mode = #tpu.pipeline_mode<synchronous>, transform_indices = @transform_7, window_bounds = array<i64: 16, 32>}, {pipeline_mode = #tpu.pipeline_mode<synchronous>, transform_indices = @transform_8, window_bounds = array<i64: 1, 32>}, {pipeline_mode = #tpu.pipeline_mode<synchronous>, transform_indices = @transform_9, window_bounds = array<i64: 32, 64>}, {pipeline_mode = #tpu.pipeline_mode<synchronous>, transform_indices = @transform_10, window_bounds = array<i64: 1, 64>}, {pipeline_mode = #tpu.pipeline_mode<synchronous>, transform_indices = @transform_11, window_bounds = array<i64: 64, 784>}, {pipeline_mode = #tpu.pipeline_mode<synchronous>, transform_indices = @transform_12, window_bounds = array<i64: 1, 784>}, {transform_indices = @transform_13, window_bounds = array<i64: 256, 16>}, {transform_indices = @transform_14, window_bounds = array<i64: 256, 784>}]} {
    %c0 = arith.constant 0 : index
    %c0_0 = arith.constant 0 : index
    %0 = vector.load %arg1[%c0, %c0_0] : memref<256x784xbf16, #tpu.memory_space<vmem>>, vector<256x784xbf16>
    %c0_1 = arith.constant 0 : index
    %c0_2 = arith.constant 0 : index
    %1 = vector.load %arg2[%c0_1, %c0_2] : memref<784x64xbf16, #tpu.memory_space<vmem>>, vector<784x64xbf16>
    %c0_3 = arith.constant 0 : index
    %c0_4 = arith.constant 0 : index
    %2 = vector.load %arg3[%c0_3, %c0_4] : memref<1x64xf32, #tpu.memory_space<vmem>>, vector<1x64xf32>
    %cst = arith.constant dense<0.000000e+00> : vector<256x64xf32>
    %3 = tpu.matmul %0, %1, %cst {dimension_numbers = #tpu.dot_dimension_numbers<[1], [0], [0], [1], [0, 0, 1, 1], [], []>} : vector<256x784xbf16>, vector<784x64xbf16>, vector<256x64xf32> -> vector<256x64xf32>
    %4 = vector.broadcast %2 : vector<1x64xf32> to vector<256x64xf32>
    %5 = arith.addf %3, %4 : vector<256x64xf32>
    %cst_5 = arith.constant 0.000000e+00 : f32
    %6 = vector.broadcast %cst_5 : f32 to vector<256x64xf32>
    %7 = arith.maximumf %5, %6 : vector<256x64xf32>
    %c0_6 = arith.constant 0 : index
    %c0_7 = arith.constant 0 : index
    %8 = vector.load %arg4[%c0_6, %c0_7] : memref<64x32xbf16, #tpu.memory_space<vmem>>, vector<64x32xbf16>
    %c0_8 = arith.constant 0 : index
    %c0_9 = arith.constant 0 : index
    %9 = vector.load %arg5[%c0_8, %c0_9] : memref<1x32xf32, #tpu.memory_space<vmem>>, vector<1x32xf32>
    %10 = arith.truncf %7 : vector<256x64xf32> to vector<256x64xbf16>
    %cst_10 = arith.constant dense<0.000000e+00> : vector<256x32xf32>
    %11 = tpu.matmul %10, %8, %cst_10 {dimension_numbers = #tpu.dot_dimension_numbers<[1], [0], [0], [1], [0, 0, 1, 1], [], []>} : vector<256x64xbf16>, vector<64x32xbf16>, vector<256x32xf32> -> vector<256x32xf32>
    %12 = vector.broadcast %9 : vector<1x32xf32> to vector<256x32xf32>
    %13 = arith.addf %11, %12 : vector<256x32xf32>
    %cst_11 = arith.constant 0.000000e+00 : f32
    %14 = vector.broadcast %cst_11 : f32 to vector<256x32xf32>
    %15 = arith.maximumf %13, %14 : vector<256x32xf32>
    %c0_12 = arith.constant 0 : index
    %c0_13 = arith.constant 0 : index
    %16 = vector.load %arg6[%c0_12, %c0_13] : memref<32x16xbf16, #tpu.memory_space<vmem>>, vector<32x16xbf16>
    %c0_14 = arith.constant 0 : index
    %c0_15 = arith.constant 0 : index
    %17 = vector.load %arg7[%c0_14, %c0_15] : memref<1x16xf32, #tpu.memory_space<vmem>>, vector<1x16xf32>
    %18 = arith.truncf %15 : vector<256x32xf32> to vector<256x32xbf16>
    %cst_16 = arith.constant dense<0.000000e+00> : vector<256x16xf32>
    %19 = tpu.matmul %18, %16, %cst_16 {dimension_numbers = #tpu.dot_dimension_numbers<[1], [0], [0], [1], [0, 0, 1, 1], [], []>} : vector<256x32xbf16>, vector<32x16xbf16>, vector<256x16xf32> -> vector<256x16xf32>
    %20 = vector.broadcast %17 : vector<1x16xf32> to vector<256x16xf32>
    %21 = arith.addf %19, %20 : vector<256x16xf32>
    %22 = vector.shape_cast %21 : vector<256x16xf32> to vector<1x256x16xf32>
    %cst_17 = arith.constant dense<0.000000e+00> : vector<1xf32>
    %23 = vector.multi_reduction <add>, %22, %cst_17 [1, 2] : vector<1x256x16xf32> to vector<1xf32>
    %24 = vector.shape_cast %23 : vector<1xf32> to vector<1x1x1xf32>
    %25 = vector.extract %24[0, 0, 0] : f32 from vector<1x1x1xf32>
    %cst_18 = arith.constant 4.096000e+03 : f32
    %26 = arith.divf %25, %cst_18 : f32
    %27 = vector.broadcast %26 : f32 to vector<256x16xf32>
    %28 = arith.subf %21, %27 : vector<256x16xf32>
    %29 = arith.mulf %28, %28 : vector<256x16xf32>
    %cst_19 = arith.constant dense<0.000000e+00> : vector<256xf32>
    %30 = vector.multi_reduction <add>, %29, %cst_19 [1] : vector<256x16xf32> to vector<256xf32>
    %31 = vector.shape_cast %30 : vector<256xf32> to vector<256x1xf32>
    %32 = math.rsqrt %31 : vector<256x1xf32>
    %33 = vector.broadcast %32 : vector<256x1xf32> to vector<256x16xf32>
    %34 = arith.mulf %28, %33 : vector<256x16xf32>
    %35 = arith.truncf %34 : vector<256x16xf32> to vector<256x16xbf16>
    %c0_20 = arith.constant 0 : index
    %c0_21 = arith.constant 0 : index
    %36 = vector.load %arg14[%c0_20, %c0_21] : memref<256x16xbf16, #tpu.memory_space<vmem>>, vector<256x16xbf16>
    tpu.vector_store %arg14[%c0_20, %c0_21], %35 {strides = array<i32>} : memref<256x16xbf16, #tpu.memory_space<vmem>>, vector<256x16xbf16>,
    %c0_22 = arith.constant 0 : index
    %c0_23 = arith.constant 0 : index
    %37 = vector.load %arg8[%c0_22, %c0_23] : memref<16x32xbf16, #tpu.memory_space<vmem>>, vector<16x32xbf16>
    %c0_24 = arith.constant 0 : index
    %c0_25 = arith.constant 0 : index
    %38 = vector.load %arg9[%c0_24, %c0_25] : memref<1x32xf32, #tpu.memory_space<vmem>>, vector<1x32xf32>
    %39 = arith.truncf %34 : vector<256x16xf32> to vector<256x16xbf16>
    %cst_26 = arith.constant dense<0.000000e+00> : vector<256x32xf32>
    %40 = tpu.matmul %39, %37, %cst_26 {dimension_numbers = #tpu.dot_dimension_numbers<[1], [0], [0], [1], [0, 0, 1, 1], [], []>} : vector<256x16xbf16>, vector<16x32xbf16>, vector<256x32xf32> -> vector<256x32xf32>
    %41 = vector.broadcast %38 : vector<1x32xf32> to vector<256x32xf32>
    %42 = arith.addf %40, %41 : vector<256x32xf32>
    %cst_27 = arith.constant 0.000000e+00 : f32
    %43 = vector.broadcast %cst_27 : f32 to vector<256x32xf32>
    %44 = arith.maximumf %42, %43 : vector<256x32xf32>
    %c0_28 = arith.constant 0 : index
    %c0_29 = arith.constant 0 : index
    %45 = vector.load %arg10[%c0_28, %c0_29] : memref<32x64xbf16, #tpu.memory_space<vmem>>, vector<32x64xbf16>
    %c0_30 = arith.constant 0 : index
    %c0_31 = arith.constant 0 : index
    %46 = vector.load %arg11[%c0_30, %c0_31] : memref<1x64xf32, #tpu.memory_space<vmem>>, vector<1x64xf32>
    %47 = arith.truncf %44 : vector<256x32xf32> to vector<256x32xbf16>
    %cst_32 = arith.constant dense<0.000000e+00> : vector<256x64xf32>
    %48 = tpu.matmul %47, %45, %cst_32 {dimension_numbers = #tpu.dot_dimension_numbers<[1], [0], [0], [1], [0, 0, 1, 1], [], []>} : vector<256x32xbf16>, vector<32x64xbf16>, vector<256x64xf32> -> vector<256x64xf32>
    %49 = vector.broadcast %46 : vector<1x64xf32> to vector<256x64xf32>
    %50 = arith.addf %48, %49 : vector<256x64xf32>
    %cst_33 = arith.constant 0.000000e+00 : f32
    %51 = vector.broadcast %cst_33 : f32 to vector<256x64xf32>
    %52 = arith.maximumf %50, %51 : vector<256x64xf32>
    %c0_34 = arith.constant 0 : index
    %c0_35 = arith.constant 0 : index
    %53 = vector.load %arg12[%c0_34, %c0_35] : memref<64x784xbf16, #tpu.memory_space<vmem>>, vector<64x784xbf16>
    %c0_36 = arith.constant 0 : index
    %c0_37 = arith.constant 0 : index
    %54 = vector.load %arg13[%c0_36, %c0_37] : memref<1x784xf32, #tpu.memory_space<vmem>>, vector<1x784xf32>
    %55 = arith.truncf %52 : vector<256x64xf32> to vector<256x64xbf16>
    %cst_38 = arith.constant dense<0.000000e+00> : vector<256x784xf32>
    %56 = tpu.matmul %55, %53, %cst_38 {dimension_numbers = #tpu.dot_dimension_numbers<[1], [0], [0], [1], [0, 0, 1, 1], [], []>} : vector<256x64xbf16>, vector<64x784xbf16>, vector<256x784xf32> -> vector<256x784xf32>
    %57 = vector.broadcast %54 : vector<1x784xf32> to vector<256x784xf32>
    %58 = arith.addf %56, %57 : vector<256x784xf32>
    %59 = arith.negf %58 : vector<256x784xf32>
    %60 = math.exp %59 : vector<256x784xf32>
    %cst_39 = arith.constant 1.000000e+00 : f32
    %61 = vector.broadcast %cst_39 : f32 to vector<256x784xf32>
    %62 = arith.addf %61, %60 : vector<256x784xf32>
    %63 = arith.divf %61, %62 : vector<256x784xf32>
    %64 = arith.truncf %63 : vector<256x784xf32> to vector<256x784xbf16>
    %c0_40 = arith.constant 0 : index
    %c0_41 = arith.constant 0 : index
    %65 = vector.load %arg15[%c0_40, %c0_41] : memref<256x784xbf16, #tpu.memory_space<vmem>>, vector<256x784xbf16>
    tpu.vector_store %arg15[%c0_40, %c0_41], %64 {strides = array<i32>} : memref<256x784xbf16, #tpu.memory_space<vmem>>, vector<256x784xbf16>,
    return
  }
  func.func @transform_0(%arg0: i32) -> (i32, i32) {
    %c0_i32 = arith.constant 0 : i32
    %c0_i32_0 = arith.constant 0 : i32
    return %arg0, %c0_i32 : i32, i32
  }
  func.func @transform_1(%arg0: i32) -> (i32, i32) {
    %c0_i32 = arith.constant 0 : i32
    %c0_i32_0 = arith.constant 0 : i32
    %c0_i32_1 = arith.constant 0 : i32
    return %c0_i32, %c0_i32_0 : i32, i32
  }
  func.func @transform_2(%arg0: i32) -> (i32, i32) {
    %c0_i32 = arith.constant 0 : i32
    %c0_i32_0 = arith.constant 0 : i32
    %c0_i32_1 = arith.constant 0 : i32
    return %c0_i32, %c0_i32_0 : i32, i32
  }
  func.func @transform_3(%arg0: i32) -> (i32, i32) {
    %c0_i32 = arith.constant 0 : i32
    %c0_i32_0 = arith.constant 0 : i32
    %c0_i32_1 = arith.constant 0 : i32
    return %c0_i32, %c0_i32_0 : i32, i32
  }
  func.func @transform_4(%arg0: i32) -> (i32, i32) {
    %c0_i32 = arith.constant 0 : i32
    %c0_i32_0 = arith.constant 0 : i32
    %c0_i32_1 = arith.constant 0 : i32
    return %c0_i32, %c0_i32_0 : i32, i32
  }
  func.func @transform_5(%arg0: i32) -> (i32, i32) {
    %c0_i32 = arith.constant 0 : i32
    %c0_i32_0 = arith.constant 0 : i32
    %c0_i32_1 = arith.constant 0 : i32
    return %c0_i32, %c0_i32_0 : i32, i32
  }
  func.func @transform_6(%arg0: i32) -> (i32, i32) {
    %c0_i32 = arith.constant 0 : i32
    %c0_i32_0 = arith.constant 0 : i32
    %c0_i32_1 = arith.constant 0 : i32
    return %c0_i32, %c0_i32_0 : i32, i32
  }
  func.func @transform_7(%arg0: i32) -> (i32, i32) {
    %c0_i32 = arith.constant 0 : i32
    %c0_i32_0 = arith.constant 0 : i32
    %c0_i32_1 = arith.constant 0 : i32
    return %c0_i32, %c0_i32_0 : i32, i32
  }
  func.func @transform_8(%arg0: i32) -> (i32, i32) {
    %c0_i32 = arith.constant 0 : i32
    %c0_i32_0 = arith.constant 0 : i32
    %c0_i32_1 = arith.constant 0 : i32
    return %c0_i32, %c0_i32_0 : i32, i32
  }
  func.func @transform_9(%arg0: i32) -> (i32, i32) {
    %c0_i32 = arith.constant 0 : i32
    %c0_i32_0 = arith.constant 0 : i32
    %c0_i32_1 = arith.constant 0 : i32
    return %c0_i32, %c0_i32_0 : i32, i32
  }
  func.func @transform_10(%arg0: i32) -> (i32, i32) {
    %c0_i32 = arith.constant 0 : i32
    %c0_i32_0 = arith.constant 0 : i32
    %c0_i32_1 = arith.constant 0 : i32
    return %c0_i32, %c0_i32_0 : i32, i32
  }
  func.func @transform_11(%arg0: i32) -> (i32, i32) {
    %c0_i32 = arith.constant 0 : i32
    %c0_i32_0 = arith.constant 0 : i32
    %c0_i32_1 = arith.constant 0 : i32
    return %c0_i32, %c0_i32_0 : i32, i32
  }
  func.func @transform_12(%arg0: i32) -> (i32, i32) {
    %c0_i32 = arith.constant 0 : i32
    %c0_i32_0 = arith.constant 0 : i32
    %c0_i32_1 = arith.constant 0 : i32
    return %c0_i32, %c0_i32_0 : i32, i32
  }
  func.func @transform_13(%arg0: i32) -> (i32, i32) {
    %c0_i32 = arith.constant 0 : i32
    %c0_i32_0 = arith.constant 0 : i32
    return %arg0, %c0_i32 : i32, i32
  }
  func.func @transform_14(%arg0: i32) -> (i32, i32) {
    %c0_i32 = arith.constant 0 : i32
    %c0_i32_0 = arith.constant 0 : i32
    return %arg0, %c0_i32 : i32, i32
  }
}

</mosaic_0001>

<llo_original>
// kernel: model_ae_forward.1
$region0: #{model_ae_forward.1}
  #allocation0 [shape = 'u32[]', space=smem, size = 0x4, offset = 0x4, fixed_abs, tag = 'smem constant byte address 0x4 - core index']
  #allocation1 [shape = 'u32[144,128]{1,0:T(1,128)}', space=vmem, size = 0x12000, scoped, tag = 'internal scratch']
  %s0 = inlined_call_operand.vmem [shape: bf16[1024,784], index: 0, kind: input, shape index: {}]
  %s1 = inlined_call_operand.vmem [shape: bf16[784,64], index: 1, kind: input, shape index: {}]
  %s2 = inlined_call_operand.vmem [shape: f32[1,64], index: 2, kind: input, shape index: {}]
  %s3 = inlined_call_operand.vmem [shape: bf16[64,32], index: 3, kind: input, shape index: {}]
  %s4 = inlined_call_operand.vmem [shape: f32[1,32], index: 4, kind: input, shape index: {}]
  %s5 = inlined_call_operand.vmem [shape: bf16[32,16], index: 5, kind: input, shape index: {}]
  %s6 = inlined_call_operand.vmem [shape: f32[1,16], index: 6, kind: input, shape index: {}]
  %s7 = inlined_call_operand.vmem [shape: bf16[16,32], index: 7, kind: input, shape index: {}]
  %s8 = inlined_call_operand.vmem [shape: f32[1,32], index: 8, kind: input, shape index: {}]
  %s9 = inlined_call_operand.vmem [shape: bf16[32,64], index: 9, kind: input, shape index: {}]
  %s10 = inlined_call_operand.vmem [shape: f32[1,64], index: 10, kind: input, shape index: {}]
  %s11 = inlined_call_operand.vmem [shape: bf16[64,784], index: 11, kind: input, shape index: {}]
  %s12 = inlined_call_operand.vmem [shape: f32[1,784], index: 12, kind: input, shape index: {}]
  %s13 = inlined_call_operand.vmem [shape: bf16[1024,16], index: 13, kind: output, shape index: {0}]
  %s14 = inlined_call_operand.vmem [shape: bf16[1024,784], index: 14, kind: output, shape index: {1}]
  %15 = xla_tuple %s13, %s14
  %s16 = sld [smem:[#allocation0]]
  $region93: #{model_ae_forward.1} parent=0
    _
  %s18 = ssub.s32 1, %s16
  %s19 = scalar_select 0, %s18, %s16
  loop: start=0, step=1, limit=6
  $region2: #{model_ae_forward.1} parent=0 // loop_pre_header
    _
  $region3: #{model_ae_forward.1} parent=0 // loop_header
    %s21 = sphi 0, %s25
    %p22 = scmp.ge.s32.totalorder %s21, 6
    %s31 = sphi 0, %s33
    %s34 = sphi 0, %s31
    %s35 = sphi 0, %s34
    %s51 = sphi 0, %s35
    %s55 = sphi 0, %s55
    %s57 = sphi 0, %s55
    %s58 = sphi 0, %s57
    %s72 = sphi 0, %s58
    %s76 = sphi 0, %s76
    %s78 = sphi 0, %s76
    %s79 = sphi 0, %s78
    %s93 = sphi 0, %s79
    %s97 = sphi 0, %s97
    %s99 = sphi 0, %s97
    %s100 = sphi 0, %s99
    %s114 = sphi 0, %s100
    %s118 = sphi 0, %s118
    %s120 = sphi 0, %s118
    %s121 = sphi 0, %s120
    %s135 = sphi 0, %s121
    %s139 = sphi 0, %s139
    %s141 = sphi 0, %s139
    %s142 = sphi 0, %s141
    %s156 = sphi 0, %s142
    %s160 = sphi 0, %s160
    %s162 = sphi 0, %s160
    %s163 = sphi 0, %s162
    %s177 = sphi 0, %s163
    %s181 = sphi 0, %s181
    %s183 = sphi 0, %s181
    %s184 = sphi 0, %s183
    %s198 = sphi 0, %s184
    %s202 = sphi 0, %s202
    %s204 = sphi 0, %s202
    %s205 = sphi 0, %s204
    %s219 = sphi 0, %s205
    %s223 = sphi 0, %s223
    %s225 = sphi 0, %s223
    %s226 = sphi 0, %s225
    %s240 = sphi 0, %s226
    %s244 = sphi 0, %s244
    %s246 = sphi 0, %s244
    %s247 = sphi 0, %s246
    %s261 = sphi 0, %s247
    %s265 = sphi 0, %s265
    %s267 = sphi 0, %s265
    %s268 = sphi 0, %s267
    %s282 = sphi 0, %s268
    %s286 = sphi 0, %s286
    %s288 = sphi 0, %s286
    %s289 = sphi 0, %s288
    %s303 = sphi 0, %s289
    %s309 = sphi 0, %s311
    %s312 = sphi 0, %s309
    %s313 = sphi 0, %s312
    %s329 = sphi 0, %s313
    %s335 = sphi 0, %s337
    %s338 = sphi 0, %s335
    %s339 = sphi 0, %s338
    %s355 = sphi 0, %s339
  $region4: #{model_ae_forward.1} parent=0 // loop_header_branch
    %24 = sbr.rel (%p22) target = $region8
  $region5: #{model_ae_forward.1} parent=0 // loop_body
    %s26 = ssub.s32 %s21, 1
    %s27 = ssub.s32 %s21, 2
    %s28 = sadd.s32 %s21, 1
    %s29 = ssub.s32 %s21, %s28
    %p30 = scmp.eq.s32.totalorder %s29, 0
    %s32 = sadd.s32 %s31, 1
    %s33 = scalar_select %p30, %s31, %s32
    %p36 = pneg %p30
    %p37 = scmp.eq.s32.totalorder %s21, 3
    %p38 = por %p36, %p37
    %p39 = scmp.ne.s32.totalorder %s31, %s34
    %p40 = scmp.eq.s32.totalorder %s21, 0
    %p41 = por %p39, %p40
    %p42 = scmp.ne.s32.totalorder %s31, %s34
    %p43 = scmp.eq.s32.totalorder %s26, 3
    %p44 = por %p42, %p43
    %p45 = scmp.ne.s32.totalorder %s34, %s35
    %p46 = scmp.eq.s32.totalorder %s26, 0
    %p47 = por %p45, %p46
    %p48 = scmp.ne.s32.totalorder %s34, %s35
    %p49 = scmp.eq.s32.totalorder %s27, 3
    %p50 = por %p48, %p49
    %p52 = scmp.ne.s32.totalorder %s35, %s51
    %p53 = scmp.eq.s32.totalorder %s27, 0
    %p54 = por %p52, %p53
    %s56 = sadd.s32 %s55, 1
    %p59 = scmp.eq.s32.totalorder %s21, 3
    %p60 = scmp.ne.s32.totalorder %s55, %s57
    %p61 = scmp.eq.s32.totalorder %s21, 0
    %p62 = por %p60, %p61
    %p63 = scmp.ne.s32.totalorder %s55, %s57
    %p64 = scmp.eq.s32.totalorder %s26, 3
    %p65 = por %p63, %p64
    %p66 = scmp.ne.s32.totalorder %s57, %s58
    %p67 = scmp.eq.s32.totalorder %s26, 0
    %p68 = por %p66, %p67
    %p69 = scmp.ne.s32.totalorder %s57, %s58
    %p70 = scmp.eq.s32.totalorder %s27, 3
    %p71 = por %p69, %p70
    %p73 = scmp.ne.s32.totalorder %s58, %s72
    %p74 = scmp.eq.s32.totalorder %s27, 0
    %p75 = por %p73, %p74
    %s77 = sadd.s32 %s76, 1
    %p80 = scmp.eq.s32.totalorder %s21, 3
    %p81 = scmp.ne.s32.totalorder %s76, %s78
    %p82 = scmp.eq.s32.totalorder %s21, 0
    %p83 = por %p81, %p82
    %p84 = scmp.ne.s32.totalorder %s76, %s78
    %p85 = scmp.eq.s32.totalorder %s26, 3
    %p86 = por %p84, %p85
    %p87 = scmp.ne.s32.totalorder %s78, %s79
    %p88 = scmp.eq.s32.totalorder %s26, 0
    %p89 = por %p87, %p88
    %p90 = scmp.ne.s32.totalorder %s78, %s79
    %p91 = scmp.eq.s32.totalorder %s27, 3
    %p92 = por %p90, %p91
    %p94 = scmp.ne.s32.totalorder %s79, %s93
    %p95 = scmp.eq.s32.totalorder %s27, 0
    %p96 = por %p94, %p95
    %s98 = sadd.s32 %s97, 1
    %p101 = scmp.eq.s32.totalorder %s21, 3
    %p102 = scmp.ne.s32.totalorder %s97, %s99
    %p103 = scmp.eq.s32.totalorder %s21, 0
    %p104 = por %p102, %p103
    %p105 = scmp.ne.s32.totalorder %s97, %s99
    %p106 = scmp.eq.s32.totalorder %s26, 3
    %p107 = por %p105, %p106
    %p108 = scmp.ne.s32.totalorder %s99, %s100
    %p109 = scmp.eq.s32.totalorder %s26, 0
    %p110 = por %p108, %p109
    %p111 = scmp.ne.s32.totalorder %s99, %s100
    %p112 = scmp.eq.s32.totalorder %s27, 3
    %p113 = por %p111, %p112
    %p115 = scmp.ne.s32.totalorder %s100, %s114
    %p116 = scmp.eq.s32.totalorder %s27, 0
    %p117 = por %p115, %p116
    %s119 = sadd.s32 %s118, 1
    %p122 = scmp.eq.s32.totalorder %s21, 3
    %p123 = scmp.ne.s32.totalorder %s118, %s120
    %p124 = scmp.eq.s32.totalorder %s21, 0
    %p125 = por %p123, %p124
    %p126 = scmp.ne.s32.totalorder %s118, %s120
    %p127 = scmp.eq.s32.totalorder %s26, 3
    %p128 = por %p126, %p127
    %p129 = scmp.ne.s32.totalorder %s120, %s121
    %p130 = scmp.eq.s32.totalorder %s26, 0
    %p131 = por %p129, %p130
    %p132 = scmp.ne.s32.totalorder %s120, %s121
    %p133 = scmp.eq.s32.totalorder %s27, 3
    %p134 = por %p132, %p133
    %p136 = scmp.ne.s32.totalorder %s121, %s135
    %p137 = scmp.eq.s32.totalorder %s27, 0
    %p138 = por %p136, %p137
    %s140 = sadd.s32 %s139, 1
    %p143 = scmp.eq.s32.totalorder %s21, 3
    %p144 = scmp.ne.s32.totalorder %s139, %s141
    %p145 = scmp.eq.s32.totalorder %s21, 0
    %p146 = por %p144, %p145
    %p147 = scmp.ne.s32.totalorder %s139, %s141
    %p148 = scmp.eq.s32.totalorder %s26, 3
    %p149 = por %p147, %p148
    %p150 = scmp.ne.s32.totalorder %s141, %s142
    %p151 = scmp.eq.s32.totalorder %s26, 0
    %p152 = por %p150, %p151
    %p153 = scmp.ne.s32.totalorder %s141, %s142
    %p154 = scmp.eq.s32.totalorder %s27, 3
    %p155 = por %p153, %p154
    %p157 = scmp.ne.s32.totalorder %s142, %s156
    %p158 = scmp.eq.s32.totalorder %s27, 0
    %p159 = por %p157, %p158
    %s161 = sadd.s32 %s160, 1
    %p164 = scmp.eq.s32.totalorder %s21, 3
    %p165 = scmp.ne.s32.totalorder %s160, %s162
    %p166 = scmp.eq.s32.totalorder %s21, 0
    %p167 = por %p165, %p166
    %p168 = scmp.ne.s32.totalorder %s160, %s162
    %p169 = scmp.eq.s32.totalorder %s26, 3
    %p170 = por %p168, %p169
    %p171 = scmp.ne.s32.totalorder %s162, %s163
    %p172 = scmp.eq.s32.totalorder %s26, 0
    %p173 = por %p171, %p172
    %p174 = scmp.ne.s32.totalorder %s162, %s163
    %p175 = scmp.eq.s32.totalorder %s27, 3
    %p176 = por %p174, %p175
    %p178 = scmp.ne.s32.totalorder %s163, %s177
    %p179 = scmp.eq.s32.totalorder %s27, 0
    %p180 = por %p178, %p179
    %s182 = sadd.s32 %s181, 1
    %p185 = scmp.eq.s32.totalorder %s21, 3
    %p186 = scmp.ne.s32.totalorder %s181, %s183
    %p187 = scmp.eq.s32.totalorder %s21, 0
    %p188 = por %p186, %p187
    %p189 = scmp.ne.s32.totalorder %s181, %s183
    %p190 = scmp.eq.s32.totalorder %s26, 3
    %p191 = por %p189, %p190
    %p192 = scmp.ne.s32.totalorder %s183, %s184
    %p193 = scmp.eq.s32.totalorder %s26, 0
    %p194 = por %p192, %p193
    %p195 = scmp.ne.s32.totalorder %s183, %s184
    %p196 = scmp.eq.s32.totalorder %s27, 3
    %p197 = por %p195, %p196
    %p199 = scmp.ne.s32.totalorder %s184, %s198
    %p200 = scmp.eq.s32.totalorder %s27, 0
    %p201 = por %p199, %p200
    %s203 = sadd.s32 %s202, 1
    %p206 = scmp.eq.s32.totalorder %s21, 3
    %p207 = scmp.ne.s32.totalorder %s202, %s204
    %p208 = scmp.eq.s32.totalorder %s21, 0
    %p209 = por %p207, %p208
    %p210 = scmp.ne.s32.totalorder %s202, %s204
    %p211 = scmp.eq.s32.totalorder %s26, 3
    %p212 = por %p210, %p211
    %p213 = scmp.ne.s32.totalorder %s204, %s205
    %p214 = scmp.eq.s32.totalorder %s26, 0
    %p215 = por %p213, %p214
    %p216 = scmp.ne.s32.totalorder %s204, %s205
    %p217 = scmp.eq.s32.totalorder %s27, 3
    %p218 = por %p216, %p217
    %p220 = scmp.ne.s32.totalorder %s205, %s219
    %p221 = scmp.eq.s32.totalorder %s27, 0
    %p222 = por %p220, %p221
    %s224 = sadd.s32 %s223, 1
    %p227 = scmp.eq.s32.totalorder %s21, 3
    %p228 = scmp.ne.s32.totalorder %s223, %s225
    %p229 = scmp.eq.s32.totalorder %s21, 0
    %p230 = por %p228, %p229
    %p231 = scmp.ne.s32.totalorder %s223, %s225
    %p232 = scmp.eq.s32.totalorder %s26, 3
    %p233 = por %p231, %p232
    %p234 = scmp.ne.s32.totalorder %s225, %s226
    %p235 = scmp.eq.s32.totalorder %s26, 0
    %p236 = por %p234, %p235
    %p237 = scmp.ne.s32.totalorder %s225, %s226
    %p238 = scmp.eq.s32.totalorder %s27, 3
    %p239 = por %p237, %p238
    %p241 = scmp.ne.s32.totalorder %s226, %s240
    %p242 = scmp.eq.s32.totalorder %s27, 0
    %p243 = por %p241, %p242
    %s245 = sadd.s32 %s244, 1
    %p248 = scmp.eq.s32.totalorder %s21, 3
    %p249 = scmp.ne.s32.totalorder %s244, %s246
    %p250 = scmp.eq.s32.totalorder %s21, 0
    %p251 = por %p249, %p250
    %p252 = scmp.ne.s32.totalorder %s244, %s246
    %p253 = scmp.eq.s32.totalorder %s26, 3
    %p254 = por %p252, %p253
    %p255 = scmp.ne.s32.totalorder %s246, %s247
    %p256 = scmp.eq.s32.totalorder %s26, 0
    %p257 = por %p255, %p256
    %p258 = scmp.ne.s32.totalorder %s246, %s247
    %p259 = scmp.eq.s32.totalorder %s27, 3
    %p260 = por %p258, %p259
    %p262 = scmp.ne.s32.totalorder %s247, %s261
    %p263 = scmp.eq.s32.totalorder %s27, 0
    %p264 = por %p262, %p263
    %s266 = sadd.s32 %s265, 1
    %p269 = scmp.eq.s32.totalorder %s21, 3
    %p270 = scmp.ne.s32.totalorder %s265, %s267
    %p271 = scmp.eq.s32.totalorder %s21, 0
    %p272 = por %p270, %p271
    %p273 = scmp.ne.s32.totalorder %s265, %s267
    %p274 = scmp.eq.s32.totalorder %s26, 3
    %p275 = por %p273, %p274
    %p276 = scmp.ne.s32.totalorder %s267, %s268
    %p277 = scmp.eq.s32.totalorder %s26, 0
    %p278 = por %p276, %p277
    %p279 = scmp.ne.s32.totalorder %s267, %s268
    %p280 = scmp.eq.s32.totalorder %s27, 3
    %p281 = por %p279, %p280
    %p283 = scmp.ne.s32.totalorder %s268, %s282
    %p284 = scmp.eq.s32.totalorder %s27, 0
    %p285 = por %p283, %p284
    %s287 = sadd.s32 %s286, 1
    %p290 = scmp.eq.s32.totalorder %s21, 3
    %p291 = scmp.ne.s32.totalorder %s286, %s288
    %p292 = scmp.eq.s32.totalorder %s21, 0
    %p293 = por %p291, %p292
    %p294 = scmp.ne.s32.totalorder %s286, %s288
    %p295 = scmp.eq.s32.totalorder %s26, 3
    %p296 = por %p294, %p295
    %p297 = scmp.ne.s32.totalorder %s288, %s289
    %p298 = scmp.eq.s32.totalorder %s26, 0
    %p299 = por %p297, %p298
    %p300 = scmp.ne.s32.totalorder %s288, %s289
    %p301 = scmp.eq.s32.totalorder %s27, 3
    %p302 = por %p300, %p301
    %p304 = scmp.ne.s32.totalorder %s289, %s303
    %p305 = scmp.eq.s32.totalorder %s27, 0
    %p306 = por %p304, %p305
    %s307 = ssub.s32 %s21, %s28
    %p308 = scmp.eq.s32.totalorder %s307, 0
    %s310 = sadd.s32 %s309, 1
    %s311 = scalar_select %p308, %s309, %s310
    %p314 = pneg %p308
    %p315 = scmp.eq.s32.totalorder %s21, 3
    %p316 = por %p314, %p315
    %p317 = scmp.ne.s32.totalorder %s309, %s312
    %p318 = scmp.eq.s32.totalorder %s21, 0
    %p319 = por %p317, %p318
    %p320 = scmp.ne.s32.totalorder %s309, %s312
    %p321 = scmp.eq.s32.totalorder %s26, 3
    %p322 = por %p320, %p321
    %p323 = scmp.ne.s32.totalorder %s312, %s313
    %p324 = scmp.eq.s32.totalorder %s26, 0
    %p325 = por %p323, %p324
    %p326 = scmp.ne.s32.totalorder %s312, %s313
    %p327 = scmp.eq.s32.totalorder %s27, 3
    %p328 = por %p326, %p327
    %p330 = scmp.ne.s32.totalorder %s313, %s329
    %p331 = scmp.eq.s32.totalorder %s27, 0
    %p332 = por %p330, %p331
    %s333 = ssub.s32 %s21, %s28
    %p334 = scmp.eq.s32.totalorder %s333, 0
    %s336 = sadd.s32 %s335, 1
    %s337 = scalar_select %p334, %s335, %s336
    %p340 = pneg %p334
    %p341 = scmp.eq.s32.totalorder %s21, 3
    %p342 = por %p340, %p341
    %p343 = scmp.ne.s32.totalorder %s335, %s338
    %p344 = scmp.eq.s32.totalorder %s21, 0
    %p345 = por %p343, %p344
    %p346 = scmp.ne.s32.totalorder %s335, %s338
    %p347 = scmp.eq.s32.totalorder %s26, 3
    %p348 = por %p346, %p347
    %p349 = scmp.ne.s32.totalorder %s338, %s339
    %p350 = scmp.eq.s32.totalorder %s26, 0
    %p351 = por %p349, %p350
    %p352 = scmp.ne.s32.totalorder %s338, %s339
    %p353 = scmp.eq.s32.totalorder %s27, 3
    %p354 = por %p352, %p353
    %p356 = scmp.ne.s32.totalorder %s339, %s355
    %p357 = scmp.eq.s32.totalorder %s27, 0
    %p358 = por %p356, %p357
    %p359 = scmp.le.s32.totalorder 1, %s21
    %p360 = scmp.lt.s32.totalorder %s21, 5
    %p361 = pnand %p359, %p360
    %p362 = pneg %p361
    // Predicated region
    $region9: #{model_ae_forward.1} parent=5 // pred_check
      _
    $region10: #{model_ae_forward.1} parent=5 // pred_check_branch
      %364 = sbr.rel (%p361) target = $region12
    $region11: #{model_ae_forward.1} parent=5 // pred_region
      %s365 = ssub.s32 %s21, 1
      // Predicated region
      $region13: #{model_ae_forward.1} parent=11 // pred_check
        %p366 = pneg %p68
      $region14: #{model_ae_forward.1} parent=11 // pred_check_branch
        %368 = sbr.rel (%p366) target = $region16
      $region15: #{model_ae_forward.1} parent=11 // pred_region
        _
      $region16: #{model_ae_forward.1} parent=11 // pred_fallthru
        _
      // Predicated region
      $region17: #{model_ae_forward.1} parent=11 // pred_check
        %p369 = pneg %p89
      $region18: #{model_ae_forward.1} parent=11 // pred_check_branch
        %371 = sbr.rel (%p369) target = $region20
      $region19: #{model_ae_forward.1} parent=11 // pred_region
        _
      $region20: #{model_ae_forward.1} parent=11 // pred_fallthru
        _
      // Predicated region
      $region21: #{model_ae_forward.1} parent=11 // pred_check
        %p372 = pneg %p110
      $region22: #{model_ae_forward.1} parent=11 // pred_check_branch
        %374 = sbr.rel (%p372) target = $region24
      $region23: #{model_ae_forward.1} parent=11 // pred_region
        _
      $region24: #{model_ae_forward.1} parent=11 // pred_fallthru
        _
      // Predicated region
      $region25: #{model_ae_forward.1} parent=11 // pred_check
        %p375 = pneg %p131
      $region26: #{model_ae_forward.1} parent=11 // pred_check_branch
        %377 = sbr.rel (%p375) target = $region28
      $region27: #{model_ae_forward.1} parent=11 // pred_region
        _
      $region28: #{model_ae_forward.1} parent=11 // pred_fallthru
        _
      // Predicated region
      $region29: #{model_ae_forward.1} parent=11 // pred_check
        %p378 = pneg %p152
      $region30: #{model_ae_forward.1} parent=11 // pred_check_branch
        %380 = sbr.rel (%p378) target = $region32
      $region31: #{model_ae_forward.1} parent=11 // pred_region
        _
      $region32: #{model_ae_forward.1} parent=11 // pred_fallthru
        _
      // Predicated region
      $region33: #{model_ae_forward.1} parent=11 // pred_check
        %p381 = pneg %p173
      $region34: #{model_ae_forward.1} parent=11 // pred_check_branch
        %383 = sbr.rel (%p381) target = $region36
      $region35: #{model_ae_forward.1} parent=11 // pred_region
        _
      $region36: #{model_ae_forward.1} parent=11 // pred_fallthru
        _
      // Predicated region
      $region37: #{model_ae_forward.1} parent=11 // pred_check
        %p384 = pneg %p194
      $region38: #{model_ae_forward.1} parent=11 // pred_check_branch
        %386 = sbr.rel (%p384) target = $region40
      $region39: #{model_ae_forward.1} parent=11 // pred_region
        _
      $region40: #{model_ae_forward.1} parent=11 // pred_fallthru
        _
      // Predicated region
      $region41: #{model_ae_forward.1} parent=11 // pred_check
        %p387 = pneg %p215
      $region42: #{model_ae_forward.1} parent=11 // pred_check_branch
        %389 = sbr.rel (%p387) target = $region44
      $region43: #{model_ae_forward.1} parent=11 // pred_region
        _
      $region44: #{model_ae_forward.1} parent=11 // pred_fallthru
        _
      // Predicated region
      $region45: #{model_ae_forward.1} parent=11 // pred_check
        %p390 = pneg %p236
      $region46: #{model_ae_forward.1} parent=11 // pred_check_branch
        %392 = sbr.rel (%p390) target = $region48
      $region47: #{model_ae_forward.1} parent=11 // pred_region
        _
      $region48: #{model_ae_forward.1} parent=11 // pred_fallthru
        _
      // Predicated region
      $region49: #{model_ae_forward.1} parent=11 // pred_check
        %p393 = pneg %p257
      $region50: #{model_ae_forward.1} parent=11 // pred_check_branch
        %395 = sbr.rel (%p393) target = $region52
      $region51: #{model_ae_forward.1} parent=11 // pred_region
        _
      $region52: #{model_ae_forward.1} parent=11 // pred_fallthru
        _
      // Predicated region
      $region53: #{model_ae_forward.1} parent=11 // pred_check
        %p396 = pneg %p278
      $region54: #{model_ae_forward.1} parent=11 // pred_check_branch
        %398 = sbr.rel (%p396) target = $region56
      $region55: #{model_ae_forward.1} parent=11 // pred_region
        _
      $region56: #{model_ae_forward.1} parent=11 // pred_fallthru
        _
      // Predicated region
      $region57: #{model_ae_forward.1} parent=11 // pred_check
        %p399 = pneg %p299
      $region58: #{model_ae_forward.1} parent=11 // pred_check_branch
        %401 = sbr.rel (%p399) target = $region60
      $region59: #{model_ae_forward.1} parent=11 // pred_region
        _
      $region60: #{model_ae_forward.1} parent=11 // pred_fallthru
        _
    $region12: #{model_ae_forward.1} parent=5 // pred_fallthru
      _
    %p402 = scmp.lt.s32.totalorder %s21, 4
    // Predicated region
    $region61: #{model_ae_forward.1} parent=5 // pred_check
      %p403 = pneg %p402
    $region62: #{model_ae_forward.1} parent=5 // pred_check_branch
      %405 = sbr.rel (%p403) target = $region64
    $region63: #{model_ae_forward.1} parent=5 // pred_region
      // Predicated region
      $region65: #{model_ae_forward.1} parent=63 // pred_check
        %p406 = pneg %p41
      $region66: #{model_ae_forward.1} parent=63 // pred_check_branch
        %408 = sbr.rel (%p406) target = $region68
      $region67: #{model_ae_forward.1} parent=63 // pred_region
        %s409 = smul.u32 32, %s21
        %p410 = scmp.lt.s32.totalorder %s409, 127
        %s411 = scalar_select %p410, %s409, 127
        %s412 = smul.addr %s411, 7
        %s413 = smul.addr %s412, 4
        %s414 = scalar_lea.vmem %s0, %s413
        %s415 = smul.u32 32, %s21
      $region68: #{model_ae_forward.1} parent=63 // pred_fallthru
        _
    $region64: #{model_ae_forward.1} parent=5 // pred_fallthru
      _
    %p416 = scmp.le.s32.totalorder 1, %s21
    %p417 = scmp.lt.s32.totalorder %s21, 5
    %p418 = pnand %p416, %p417
    %p419 = pneg %p418
    // Predicated region
    $region69: #{model_ae_forward.1} parent=5 // pred_check
      _
    $region70: #{model_ae_forward.1} parent=5 // pred_check_branch
      %421 = sbr.rel (%p418) target = $region72
    $region71: #{model_ae_forward.1} parent=5 // pred_region
      %s422 = ssub.s32 %s21, 1
      %s423 = smul.u32 32, %s26
      %p424 = scmp.lt.s32.totalorder %s423, 127
      %s425 = scalar_select %p424, %s423, 127
      %s426 = smul.addr %s425, 7
      %s427 = smul.addr %s426, 4
      %s428 = scalar_lea.vmem %s0, %s427
      %p429 = pneg %p47
      %p430 = pneg %p44
      %p431 = pneg %p68
      %p432 = pneg %p65
      %p433 = pneg %p89
      %p434 = pneg %p86
      %p435 = pneg %p110
      %p436 = pneg %p107
      %p437 = pneg %p131
      %p438 = pneg %p128
      %p439 = pneg %p152
      %p440 = pneg %p149
      %p441 = pneg %p173
      %p442 = pneg %p170
      %p443 = pneg %p194
      %p444 = pneg %p191
      %p445 = pneg %p215
      %p446 = pneg %p212
      %p447 = pneg %p236
      %p448 = pneg %p233
      %p449 = pneg %p257
      %p450 = pneg %p254
      %p451 = pneg %p278
      %p452 = pneg %p275
      %p453 = pneg %p299
      %p454 = pneg %p296
      %p455 = pneg %p325
      %p456 = pneg %p322
      %s457 = smul.u32 32, %s26
      %p458 = scmp.lt.s32.totalorder %s457, 127
      %s459 = scalar_select %p458, %s457, 127
      %s460 = smul.addr %s459, 4
      %s461 = scalar_lea.vmem %s13, %s460
      %p462 = pneg %p351
      %p463 = pneg %p348
      %s464 = smul.u32 32, %s26
      %p465 = scmp.lt.s32.totalorder %s464, 127
      %s466 = scalar_select %p465, %s464, 127
      %s467 = smul.addr %s466, 7
      %s468 = smul.addr %s467, 4
      %s469 = scalar_lea.vmem %s14, %s468
      %s470 = smul.u32 32, %s26
      %p471 = scmp.lt.s32.totalorder %s470, 127
      %s472 = scalar_select %p471, %s470, 127
      %s473 = smul.addr %s472, 7
      %s474 = smul.addr %s473, 4
      %s475 = scalar_lea.vmem %s0, %s474
      %s476 = smul.u32 32, %s26
      %s477 = smul.u32 32, %s26
      %p478 = scmp.lt.s32.totalorder %s477, 127
      %s479 = scalar_select %p478, %s477, 127
      %s480 = smul.addr %s479, 4
      %s481 = scalar_lea.vmem %s13, %s480
      %s482 = smul.u32 32, %s26
      %s483 = smul.u32 32, %s26
      %p484 = scmp.lt.s32.totalorder %s483, 127
      %s485 = scalar_select %p484, %s483, 127
      %s486 = smul.addr %s485, 7
      %s487 = smul.addr %s486, 4
      %s488 = scalar_lea.vmem %s14, %s487
      %s489 = smul.u32 32, %s26
      %v491 = vld [vmem:[%s475] sm:$0xff]
      %v492 = vld [vmem:[%s475 + $0x8] sm:$0xff]
      %v493 = vld [vmem:[%s475 + $0x10] sm:$0xff]
      %v494 = vld [vmem:[%s475 + $0x18] sm:$0xf]
      %v495 = vld [vmem:[%s475 + $0x1c] sm:$0xff]
      %v496 = vld [vmem:[%s475 + $0x24] sm:$0xff]
      %v497 = vld [vmem:[%s475 + $0x2c] sm:$0xff]
      %v498 = vld [vmem:[%s475 + $0x34] sm:$0xf]
      %v499 = vld [vmem:[%s475 + $0x38] sm:$0xff]
      %v500 = vld [vmem:[%s475 + $0x40] sm:$0xff]
      %v501 = vld [vmem:[%s475 + $0x48] sm:$0xff]
      %v502 = vld [vmem:[%s475 + $0x50] sm:$0xf]
      %v503 = vld [vmem:[%s475 + $0x54] sm:$0xff]
      %v504 = vld [vmem:[%s475 + $0x5c] sm:$0xff]
      %v505 = vld [vmem:[%s475 + $0x64] sm:$0xff]
      %v506 = vld [vmem:[%s475 + $0x6c] sm:$0xf]
      %v507 = vld [vmem:[%s475 + $0x70] sm:$0xff]
      %v508 = vld [vmem:[%s475 + $0x78] sm:$0xff]
      %v509 = vld [vmem:[%s475 + $0x80] sm:$0xff]
      %v510 = vld [vmem:[%s475 + $0x88] sm:$0xf]
      %v511 = vld [vmem:[%s475 + $0x8c] sm:$0xff]
      %v512 = vld [vmem:[%s475 + $0x94] sm:$0xff]
      %v513 = vld [vmem:[%s475 + $0x9c] sm:$0xff]
      %v514 = vld [vmem:[%s475 + $0xa4] sm:$0xf]
      %v515 = vld [vmem:[%s475 + $0xa8] sm:$0xff]
      %v516 = vld [vmem:[%s475 + $0xb0] sm:$0xff]
      %v517 = vld [vmem:[%s475 + $0xb8] sm:$0xff]
      %v518 = vld [vmem:[%s475 + $0xc0] sm:$0xf]
      %v519 = vld [vmem:[%s475 + $0xc4] sm:$0xff]
      %v520 = vld [vmem:[%s475 + $0xcc] sm:$0xff]
      %v521 = vld [vmem:[%s475 + $0xd4] sm:$0xff]
      %v522 = vld [vmem:[%s475 + $0xdc] sm:$0xf]
      %v523 = vld [vmem:[%s475 + $0xe0] sm:$0xff]
      %v524 = vld [vmem:[%s475 + $0xe8] sm:$0xff]
      %v525 = vld [vmem:[%s475 + $0xf0] sm:$0xff]
      %v526 = vld [vmem:[%s475 + $0xf8] sm:$0xf]
      %v527 = vld [vmem:[%s475 + $0xfc] sm:$0xff]
      %v528 = vld [vmem:[%s475 + $0x104] sm:$0xff]
      %v529 = vld [vmem:[%s475 + $0x10c] sm:$0xff]
      %v530 = vld [vmem:[%s475 + $0x114] sm:$0xf]
      %v531 = vld [vmem:[%s475 + $0x118] sm:$0xff]
      %v532 = vld [vmem:[%s475 + $0x120] sm:$0xff]
      %v533 = vld [vmem:[%s475 + $0x128] sm:$0xff]
      %v534 = vld [vmem:[%s475 + $0x130] sm:$0xf]
      %v535 = vld [vmem:[%s475 + $0x134] sm:$0xff]
      %v536 = vld [vmem:[%s475 + $0x13c] sm:$0xff]
      %v537 = vld [vmem:[%s475 + $0x144] sm:$0xff]
      %v538 = vld [vmem:[%s475 + $0x14c] sm:$0xf]
      %v539 = vld [vmem:[%s475 + $0x150] sm:$0xff]
      %v540 = vld [vmem:[%s475 + $0x158] sm:$0xff]
      %v541 = vld [vmem:[%s475 + $0x160] sm:$0xff]
      %v542 = vld [vmem:[%s475 + $0x168] sm:$0xf]
      %v543 = vld [vmem:[%s475 + $0x16c] sm:$0xff]
      %v544 = vld [vmem:[%s475 + $0x174] sm:$0xff]
      %v545 = vld [vmem:[%s475 + $0x17c] sm:$0xff]
      %v546 = vld [vmem:[%s475 + $0x184] sm:$0xf]
      %v547 = vld [vmem:[%s475 + $0x188] sm:$0xff]
      %v548 = vld [vmem:[%s475 + $0x190] sm:$0xff]
      %v549 = vld [vmem:[%s475 + $0x198] sm:$0xff]
      %v550 = vld [vmem:[%s475 + $0x1a0] sm:$0xf]
      %v551 = vld [vmem:[%s475 + $0x1a4] sm:$0xff]
      %v552 = vld [vmem:[%s475 + $0x1ac] sm:$0xff]
      %v553 = vld [vmem:[%s475 + $0x1b4] sm:$0xff]
      %v554 = vld [vmem:[%s475 + $0x1bc] sm:$0xf]
      %v555 = vld [vmem:[%s475 + $0x1c0] sm:$0xff]
      %v556 = vld [vmem:[%s475 + $0x1c8] sm:$0xff]
      %v557 = vld [vmem:[%s475 + $0x1d0] sm:$0xff]
      %v558 = vld [vmem:[%s475 + $0x1d8] sm:$0xf]
      %v559 = vld [vmem:[%s475 + $0x1dc] sm:$0xff]
      %v560 = vld [vmem:[%s475 + $0x1e4] sm:$0xff]
      %v561 = vld [vmem:[%s475 + $0x1ec] sm:$0xff]
      %v562 = vld [vmem:[%s475 + $0x1f4] sm:$0xf]
      %v563 = vld [vmem:[%s475 + $0x1f8] sm:$0xff]
      %v564 = vld [vmem:[%s475 + $0x200] sm:$0xff]
      %v565 = vld [vmem:[%s475 + $0x208] sm:$0xff]
      %v566 = vld [vmem:[%s475 + $0x210] sm:$0xf]
      %v567 = vld [vmem:[%s475 + $0x214] sm:$0xff]
      %v568 = vld [vmem:[%s475 + $0x21c] sm:$0xff]
      %v569 = vld [vmem:[%s475 + $0x224] sm:$0xff]
      %v570 = vld [vmem:[%s475 + $0x22c] sm:$0xf]
      %v571 = vld [vmem:[%s475 + $0x230] sm:$0xff]
      %v572 = vld [vmem:[%s475 + $0x238] sm:$0xff]
      %v573 = vld [vmem:[%s475 + $0x240] sm:$0xff]
      %v574 = vld [vmem:[%s475 + $0x248] sm:$0xf]
      %v575 = vld [vmem:[%s475 + $0x24c] sm:$0xff]
      %v576 = vld [vmem:[%s475 + $0x254] sm:$0xff]
      %v577 = vld [vmem:[%s475 + $0x25c] sm:$0xff]
      %v578 = vld [vmem:[%s475 + $0x264] sm:$0xf]
      %v579 = vld [vmem:[%s475 + $0x268] sm:$0xff]
      %v580 = vld [vmem:[%s475 + $0x270] sm:$0xff]
      %v581 = vld [vmem:[%s475 + $0x278] sm:$0xff]
      %v582 = vld [vmem:[%s475 + $0x280] sm:$0xf]
      %v583 = vld [vmem:[%s475 + $0x284] sm:$0xff]
      %v584 = vld [vmem:[%s475 + $0x28c] sm:$0xff]
      %v585 = vld [vmem:[%s475 + $0x294] sm:$0xff]
      %v586 = vld [vmem:[%s475 + $0x29c] sm:$0xf]
      %v587 = vld [vmem:[%s475 + $0x2a0] sm:$0xff]
      %v588 = vld [vmem:[%s475 + $0x2a8] sm:$0xff]
      %v589 = vld [vmem:[%s475 + $0x2b0] sm:$0xff]
      %v590 = vld [vmem:[%s475 + $0x2b8] sm:$0xf]
      %v591 = vld [vmem:[%s475 + $0x2bc] sm:$0xff]
      %v592 = vld [vmem:[%s475 + $0x2c4] sm:$0xff]
      %v593 = vld [vmem:[%s475 + $0x2cc] sm:$0xff]
      %v594 = vld [vmem:[%s475 + $0x2d4] sm:$0xf]
      %v595 = vld [vmem:[%s475 + $0x2d8] sm:$0xff]
      %v596 = vld [vmem:[%s475 + $0x2e0] sm:$0xff]
      %v597 = vld [vmem:[%s475 + $0x2e8] sm:$0xff]
      %v598 = vld [vmem:[%s475 + $0x2f0] sm:$0xf]
      %v599 = vld [vmem:[%s475 + $0x2f4] sm:$0xff]
      %v600 = vld [vmem:[%s475 + $0x2fc] sm:$0xff]
      %v601 = vld [vmem:[%s475 + $0x304] sm:$0xff]
      %v602 = vld [vmem:[%s475 + $0x30c] sm:$0xf]
      %v603 = vld [vmem:[%s475 + $0x310] sm:$0xff]
      %v604 = vld [vmem:[%s475 + $0x318] sm:$0xff]
      %v605 = vld [vmem:[%s475 + $0x320] sm:$0xff]
      %v606 = vld [vmem:[%s475 + $0x328] sm:$0xf]
      %v607 = vld [vmem:[%s475 + $0x32c] sm:$0xff]
      %v608 = vld [vmem:[%s475 + $0x334] sm:$0xff]
      %v609 = vld [vmem:[%s475 + $0x33c] sm:$0xff]
      %v610 = vld [vmem:[%s475 + $0x344] sm:$0xf]
      %v611 = vld [vmem:[%s475 + $0x348] sm:$0xff]
      %v612 = vld [vmem:[%s475 + $0x350] sm:$0xff]
      %v613 = vld [vmem:[%s475 + $0x358] sm:$0xff]
      %v614 = vld [vmem:[%s475 + $0x360] sm:$0xf]
      %v615 = vld [vmem:[%s475 + $0x364] sm:$0xff]
      %v616 = vld [vmem:[%s475 + $0x36c] sm:$0xff]
      %v617 = vld [vmem:[%s475 + $0x374] sm:$0xff]
      %v618 = vld [vmem:[%s475 + $0x37c] sm:$0xf]
      %v619 = vld [vmem:[%s1] sm:$0xf]
      %v620 = vld [vmem:[%s1 + $0x4] sm:$0xf]
      %v621 = vld [vmem:[%s1 + $0x8] sm:$0xf]
      %v622 = vld [vmem:[%s1 + $0xc] sm:$0xf]
      %v623 = vld [vmem:[%s1 + $0x10] sm:$0xf]
      %v624 = vld [vmem:[%s1 + $0x14] sm:$0xf]
      %v625 = vld [vmem:[%s1 + $0x18] sm:$0xf]
      %v626 = vld [vmem:[%s1 + $0x1c] sm:$0xf]
      %v627 = vld [vmem:[%s1 + $0x20] sm:$0xf]
      %v628 = vld [vmem:[%s1 + $0x24] sm:$0xf]
      %v629 = vld [vmem:[%s1 + $0x28] sm:$0xf]
      %v630 = vld [vmem:[%s1 + $0x2c] sm:$0xf]
      %v631 = vld [vmem:[%s1 + $0x30] sm:$0xf]
      %v632 = vld [vmem:[%s1 + $0x34] sm:$0xf]
      %v633 = vld [vmem:[%s1 + $0x38] sm:$0xf]
      %v634 = vld [vmem:[%s1 + $0x3c] sm:$0xf]
      %v635 = vld [vmem:[%s1 + $0x40] sm:$0xf]
      %v636 = vld [vmem:[%s1 + $0x44] sm:$0xf]
      %v637 = vld [vmem:[%s1 + $0x48] sm:$0xf]
      %v638 = vld [vmem:[%s1 + $0x4c] sm:$0xf]
      %v639 = vld [vmem:[%s1 + $0x50] sm:$0xf]
      %v640 = vld [vmem:[%s1 + $0x54] sm:$0xf]
      %v641 = vld [vmem:[%s1 + $0x58] sm:$0xf]
      %v642 = vld [vmem:[%s1 + $0x5c] sm:$0xf]
      %v643 = vld [vmem:[%s1 + $0x60] sm:$0xf]
      %v644 = vld [vmem:[%s1 + $0x64] sm:$0xf]
      %v645 = vld [vmem:[%s1 + $0x68] sm:$0xf]
      %v646 = vld [vmem:[%s1 + $0x6c] sm:$0xf]
      %v647 = vld [vmem:[%s1 + $0x70] sm:$0xf]
      %v648 = vld [vmem:[%s1 + $0x74] sm:$0xf]
      %v649 = vld [vmem:[%s1 + $0x78] sm:$0xf]
      %v650 = vld [vmem:[%s1 + $0x7c] sm:$0xf]
      %v651 = vld [vmem:[%s1 + $0x80] sm:$0xf]
      %v652 = vld [vmem:[%s1 + $0x84] sm:$0xf]
      %v653 = vld [vmem:[%s1 + $0x88] sm:$0xf]
      %v654 = vld [vmem:[%s1 + $0x8c] sm:$0xf]
      %v655 = vld [vmem:[%s1 + $0x90] sm:$0xf]
      %v656 = vld [vmem:[%s1 + $0x94] sm:$0xf]
      %v657 = vld [vmem:[%s1 + $0x98] sm:$0xf]
      %v658 = vld [vmem:[%s1 + $0x9c] sm:$0xf]
      %v659 = vld [vmem:[%s1 + $0xa0] sm:$0xf]
      %v660 = vld [vmem:[%s1 + $0xa4] sm:$0xf]
      %v661 = vld [vmem:[%s1 + $0xa8] sm:$0xf]
      %v662 = vld [vmem:[%s1 + $0xac] sm:$0xf]
      %v663 = vld [vmem:[%s1 + $0xb0] sm:$0xf]
      %v664 = vld [vmem:[%s1 + $0xb4] sm:$0xf]
      %v665 = vld [vmem:[%s1 + $0xb8] sm:$0xf]
      %v666 = vld [vmem:[%s1 + $0xbc] sm:$0xf]
      %v667 = vld [vmem:[%s1 + $0xc0] sm:$0xf]
      %v668 = vld [vmem:[%s1 + $0xc4] sm:$0xf]
      %v669 = vld [vmem:[%s1 + $0xc8] sm:$0xf]
      %v670 = vld [vmem:[%s1 + $0xcc] sm:$0xf]
      %v671 = vld [vmem:[%s1 + $0xd0] sm:$0xf]
      %v672 = vld [vmem:[%s1 + $0xd4] sm:$0xf]
      %v673 = vld [vmem:[%s1 + $0xd8] sm:$0xf]
      %v674 = vld [vmem:[%s1 + $0xdc] sm:$0xf]
      %v675 = vld [vmem:[%s1 + $0xe0] sm:$0xf]
      %v676 = vld [vmem:[%s1 + $0xe4] sm:$0xf]
      %v677 = vld [vmem:[%s1 + $0xe8] sm:$0xf]
      %v678 = vld [vmem:[%s1 + $0xec] sm:$0xf]
      %v679 = vld [vmem:[%s1 + $0xf0] sm:$0xf]
      %v680 = vld [vmem:[%s1 + $0xf4] sm:$0xf]
      %v681 = vld [vmem:[%s1 + $0xf8] sm:$0xf]
      %v682 = vld [vmem:[%s1 + $0xfc] sm:$0xf]
      %v683 = vld [vmem:[%s1 + $0x100] sm:$0xf]
      %v684 = vld [vmem:[%s1 + $0x104] sm:$0xf]
      %v685 = vld [vmem:[%s1 + $0x108] sm:$0xf]
      %v686 = vld [vmem:[%s1 + $0x10c] sm:$0xf]
      %v687 = vld [vmem:[%s1 + $0x110] sm:$0xf]
      %v688 = vld [vmem:[%s1 + $0x114] sm:$0xf]
      %v689 = vld [vmem:[%s1 + $0x118] sm:$0xf]
      %v690 = vld [vmem:[%s1 + $0x11c] sm:$0xf]
      %v691 = vld [vmem:[%s1 + $0x120] sm:$0xf]
      %v692 = vld [vmem:[%s1 + $0x124] sm:$0xf]
      %v693 = vld [vmem:[%s1 + $0x128] sm:$0xf]
      %v694 = vld [vmem:[%s1 + $0x12c] sm:$0xf]
      %v695 = vld [vmem:[%s1 + $0x130] sm:$0xf]
      %v696 = vld [vmem:[%s1 + $0x134] sm:$0xf]
      %v697 = vld [vmem:[%s1 + $0x138] sm:$0xf]
      %v698 = vld [vmem:[%s1 + $0x13c] sm:$0xf]
      %v699 = vld [vmem:[%s1 + $0x140] sm:$0xf]
      %v700 = vld [vmem:[%s1 + $0x144] sm:$0xf]
      %v701 = vld [vmem:[%s1 + $0x148] sm:$0xf]
      %v702 = vld [vmem:[%s1 + $0x14c] sm:$0xf]
      %v703 = vld [vmem:[%s1 + $0x150] sm:$0xf]
      %v704 = vld [vmem:[%s1 + $0x154] sm:$0xf]
      %v705 = vld [vmem:[%s1 + $0x158] sm:$0xf]
      %v706 = vld [vmem:[%s1 + $0x15c] sm:$0xf]
      %v707 = vld [vmem:[%s1 + $0x160] sm:$0xf]
      %v708 = vld [vmem:[%s1 + $0x164] sm:$0xf]
      %v709 = vld [vmem:[%s1 + $0x168] sm:$0xf]
      %v710 = vld [vmem:[%s1 + $0x16c] sm:$0xf]
      %v711 = vld [vmem:[%s1 + $0x170] sm:$0xf]
      %v712 = vld [vmem:[%s1 + $0x174] sm:$0xf]
      %v713 = vld [vmem:[%s1 + $0x178] sm:$0xf]
      %v714 = vld [vmem:[%s1 + $0x17c] sm:$0xf]
      %v715 = vld [vmem:[%s1 + $0x180] sm:$0xf]
      %v716 = vld [vmem:[%s1 + $0x184] sm:$0xf]
      %v717 = vld [vmem:[%s2] sm:$0x1]
      %v719 = vlaneseq
      %v720 = vshrl.u32 %v719, 7
      %v721 = vsub.s32 0, %v720
      %v722 = vrot.slane %v717, %v721
      %v852 = vunpack.c.l.b16 %v491
      %v853 = vunpack.c.h.b16 %v491
      %v854 = vunpack.c.l.b16 %v492
      %v855 = vunpack.c.h.b16 %v492
      %v856 = vunpack.c.l.b16 %v493
      %v857 = vunpack.c.h.b16 %v493
      %v858 = vunpack.c.l.b16 %v494
      %v859 = vunpack.c.l.b16 %v495
      %v860 = vunpack.c.h.b16 %v495
      %v861 = vunpack.c.l.b16 %v496
      %v862 = vunpack.c.h.b16 %v496
      %v863 = vunpack.c.l.b16 %v497
      %v864 = vunpack.c.h.b16 %v497
      %v865 = vunpack.c.l.b16 %v498
      %v866 = vunpack.c.l.b16 %v499
      %v867 = vunpack.c.h.b16 %v499
      %v868 = vunpack.c.l.b16 %v500
      %v869 = vunpack.c.h.b16 %v500
      %v870 = vunpack.c.l.b16 %v501
      %v871 = vunpack.c.h.b16 %v501
      %v872 = vunpack.c.l.b16 %v502
      %v873 = vunpack.c.l.b16 %v503
      %v874 = vunpack.c.h.b16 %v503
      %v875 = vunpack.c.l.b16 %v504
      %v876 = vunpack.c.h.b16 %v504
      %v877 = vunpack.c.l.b16 %v505
      %v878 = vunpack.c.h.b16 %v505
      %v879 = vunpack.c.l.b16 %v506
      %v880 = vunpack.c.l.b16 %v507
      %v881 = vunpack.c.h.b16 %v507
      %v882 = vunpack.c.l.b16 %v508
      %v883 = vunpack.c.h.b16 %v508
      %v884 = vunpack.c.l.b16 %v509
      %v885 = vunpack.c.h.b16 %v509
      %v886 = vunpack.c.l.b16 %v510
      %v887 = vunpack.c.l.b16 %v511
      %v888 = vunpack.c.h.b16 %v511
      %v889 = vunpack.c.l.b16 %v512
      %v890 = vunpack.c.h.b16 %v512
      %v891 = vunpack.c.l.b16 %v513
      %v892 = vunpack.c.h.b16 %v513
      %v893 = vunpack.c.l.b16 %v514
      %v894 = vunpack.c.l.b16 %v515
      %v895 = vunpack.c.h.b16 %v515
      %v896 = vunpack.c.l.b16 %v516
      %v897 = vunpack.c.h.b16 %v516
      %v898 = vunpack.c.l.b16 %v517
      %v899 = vunpack.c.h.b16 %v517
      %v900 = vunpack.c.l.b16 %v518
      %v901 = vunpack.c.l.b16 %v519
      %v902 = vunpack.c.h.b16 %v519
      %v903 = vunpack.c.l.b16 %v520
      %v904 = vunpack.c.h.b16 %v520
      %v905 = vunpack.c.l.b16 %v521
      %v906 = vunpack.c.h.b16 %v521
      %v907 = vunpack.c.l.b16 %v522
      %v908 = vunpack.c.l.b16 %v523
      %v909 = vunpack.c.h.b16 %v523
      %v910 = vunpack.c.l.b16 %v524
      %v911 = vunpack.c.h.b16 %v524
      %v912 = vunpack.c.l.b16 %v525
      %v913 = vunpack.c.h.b16 %v525
      %v914 = vunpack.c.l.b16 %v526
      %v915 = vunpack.c.l.b16 %v527
      %v916 = vunpack.c.h.b16 %v527
      %v917 = vunpack.c.l.b16 %v528
      %v918 = vunpack.c.h.b16 %v528
      %v919 = vunpack.c.l.b16 %v529
      %v920 = vunpack.c.h.b16 %v529
      %v921 = vunpack.c.l.b16 %v530
      %v922 = vunpack.c.l.b16 %v531
      %v923 = vunpack.c.h.b16 %v531
      %v924 = vunpack.c.l.b16 %v532
      %v925 = vunpack.c.h.b16 %v532
      %v926 = vunpack.c.l.b16 %v533
      %v927 = vunpack.c.h.b16 %v533
      %v928 = vunpack.c.l.b16 %v534
      %v929 = vunpack.c.l.b16 %v535
      %v930 = vunpack.c.h.b16 %v535
      %v931 = vunpack.c.l.b16 %v536
      %v932 = vunpack.c.h.b16 %v536
      %v933 = vunpack.c.l.b16 %v537
      %v934 = vunpack.c.h.b16 %v537
      %v935 = vunpack.c.l.b16 %v538
      %v936 = vunpack.c.l.b16 %v539
      %v937 = vunpack.c.h.b16 %v539
      %v938 = vunpack.c.l.b16 %v540
      %v939 = vunpack.c.h.b16 %v540
      %v940 = vunpack.c.l.b16 %v541
      %v941 = vunpack.c.h.b16 %v541
      %v942 = vunpack.c.l.b16 %v542
      %v943 = vunpack.c.l.b16 %v543
      %v944 = vunpack.c.h.b16 %v543
      %v945 = vunpack.c.l.b16 %v544
      %v946 = vunpack.c.h.b16 %v544
      %v947 = vunpack.c.l.b16 %v545
      %v948 = vunpack.c.h.b16 %v545
      %v949 = vunpack.c.l.b16 %v546
      %v950 = vunpack.c.l.b16 %v547
      %v951 = vunpack.c.h.b16 %v547
      %v952 = vunpack.c.l.b16 %v548
      %v953 = vunpack.c.h.b16 %v548
      %v954 = vunpack.c.l.b16 %v549
      %v955 = vunpack.c.h.b16 %v549
      %v956 = vunpack.c.l.b16 %v550
      %v957 = vunpack.c.l.b16 %v551
      %v958 = vunpack.c.h.b16 %v551
      %v959 = vunpack.c.l.b16 %v552
      %v960 = vunpack.c.h.b16 %v552
      %v961 = vunpack.c.l.b16 %v553
      %v962 = vunpack.c.h.b16 %v553
      %v963 = vunpack.c.l.b16 %v554
      %v964 = vunpack.c.l.b16 %v555
      %v965 = vunpack.c.h.b16 %v555
      %v966 = vunpack.c.l.b16 %v556
      %v967 = vunpack.c.h.b16 %v556
      %v968 = vunpack.c.l.b16 %v557
      %v969 = vunpack.c.h.b16 %v557
      %v970 = vunpack.c.l.b16 %v558
      %v971 = vunpack.c.l.b16 %v559
      %v972 = vunpack.c.h.b16 %v559
      %v973 = vunpack.c.l.b16 %v560
      %v974 = vunpack.c.h.b16 %v560
      %v975 = vunpack.c.l.b16 %v561
      %v976 = vunpack.c.h.b16 %v561
      %v977 = vunpack.c.l.b16 %v562
      %v978 = vunpack.c.l.b16 %v563
      %v979 = vunpack.c.h.b16 %v563
      %v980 = vunpack.c.l.b16 %v564
      %v981 = vunpack.c.h.b16 %v564
      %v982 = vunpack.c.l.b16 %v565
      %v983 = vunpack.c.h.b16 %v565
      %v984 = vunpack.c.l.b16 %v566
      %v985 = vunpack.c.l.b16 %v567
      %v986 = vunpack.c.h.b16 %v567
      %v987 = vunpack.c.l.b16 %v568
      %v988 = vunpack.c.h.b16 %v568
      %v989 = vunpack.c.l.b16 %v569
      %v990 = vunpack.c.h.b16 %v569
      %v991 = vunpack.c.l.b16 %v570
      %v992 = vunpack.c.l.b16 %v571
      %v993 = vunpack.c.h.b16 %v571
      %v994 = vunpack.c.l.b16 %v572
      %v995 = vunpack.c.h.b16 %v572
      %v996 = vunpack.c.l.b16 %v573
      %v997 = vunpack.c.h.b16 %v573
      %v998 = vunpack.c.l.b16 %v574
      %v999 = vunpack.c.l.b16 %v575
      %v1000 = vunpack.c.h.b16 %v575
      %v1001 = vunpack.c.l.b16 %v576
      %v1002 = vunpack.c.h.b16 %v576
      %v1003 = vunpack.c.l.b16 %v577
      %v1004 = vunpack.c.h.b16 %v577
      %v1005 = vunpack.c.l.b16 %v578
      %v1006 = vunpack.c.l.b16 %v579
      %v1007 = vunpack.c.h.b16 %v579
      %v1008 = vunpack.c.l.b16 %v580
      %v1009 = vunpack.c.h.b16 %v580
      %v1010 = vunpack.c.l.b16 %v581
      %v1011 = vunpack.c.h.b16 %v581
      %v1012 = vunpack.c.l.b16 %v582
      %v1013 = vunpack.c.l.b16 %v583
      %v1014 = vunpack.c.h.b16 %v583
      %v1015 = vunpack.c.l.b16 %v584
      %v1016 = vunpack.c.h.b16 %v584
      %v1017 = vunpack.c.l.b16 %v585
      %v1018 = vunpack.c.h.b16 %v585
      %v1019 = vunpack.c.l.b16 %v586
      %v1020 = vunpack.c.l.b16 %v587
      %v1021 = vunpack.c.h.b16 %v587
      %v1022 = vunpack.c.l.b16 %v588
      %v1023 = vunpack.c.h.b16 %v588
      %v1024 = vunpack.c.l.b16 %v589
      %v1025 = vunpack.c.h.b16 %v589
      %v1026 = vunpack.c.l.b16 %v590
      %v1027 = vunpack.c.l.b16 %v591
      %v1028 = vunpack.c.h.b16 %v591
      %v1029 = vunpack.c.l.b16 %v592
      %v1030 = vunpack.c.h.b16 %v592
      %v1031 = vunpack.c.l.b16 %v593
      %v1032 = vunpack.c.h.b16 %v593
      %v1033 = vunpack.c.l.b16 %v594
      %v1034 = vunpack.c.l.b16 %v595
      %v1035 = vunpack.c.h.b16 %v595
      %v1036 = vunpack.c.l.b16 %v596
      %v1037 = vunpack.c.h.b16 %v596
      %v1038 = vunpack.c.l.b16 %v597
      %v1039 = vunpack.c.h.b16 %v597
      %v1040 = vunpack.c.l.b16 %v598
      %v1041 = vunpack.c.l.b16 %v599
      %v1042 = vunpack.c.h.b16 %v599
      %v1043 = vunpack.c.l.b16 %v600
      %v1044 = vunpack.c.h.b16 %v600
      %v1045 = vunpack.c.l.b16 %v601
      %v1046 = vunpack.c.h.b16 %v601
      %v1047 = vunpack.c.l.b16 %v602
      %v1048 = vunpack.c.l.b16 %v603
      %v1049 = vunpack.c.h.b16 %v603
      %v1050 = vunpack.c.l.b16 %v604
      %v1051 = vunpack.c.h.b16 %v604
      %v1052 = vunpack.c.l.b16 %v605
      %v1053 = vunpack.c.h.b16 %v605
      %v1054 = vunpack.c.l.b16 %v606
      %v1055 = vunpack.c.l.b16 %v607
      %v1056 = vunpack.c.h.b16 %v607
      %v1057 = vunpack.c.l.b16 %v608
      %v1058 = vunpack.c.h.b16 %v608
      %v1059 = vunpack.c.l.b16 %v609
      %v1060 = vunpack.c.h.b16 %v609
      %v1061 = vunpack.c.l.b16 %v610
      %v1062 = vunpack.c.l.b16 %v611
      %v1063 = vunpack.c.h.b16 %v611
      %v1064 = vunpack.c.l.b16 %v612
      %v1065 = vunpack.c.h.b16 %v612
      %v1066 = vunpack.c.l.b16 %v613
      %v1067 = vunpack.c.h.b16 %v613
      %v1068 = vunpack.c.l.b16 %v614
      %v1069 = vunpack.c.l.b16 %v615
      %v1070 = vunpack.c.h.b16 %v615
      %v1071 = vunpack.c.l.b16 %v616
      %v1072 = vunpack.c.h.b16 %v616
      %v1073 = vunpack.c.l.b16 %v617
      %v1074 = vunpack.c.h.b16 %v617
      %v1075 = vunpack.c.l.b16 %v618
      %v1076 = vpack.c.b16 %v859, %v852
      %v1077 = vpack.c.b16 %v860, %v853
      %v1078 = vpack.c.b16 %v861, %v854
      %v1079 = vpack.c.b16 %v862, %v855
      %v1080 = vpack.c.b16 %v863, %v856
      %v1081 = vpack.c.b16 %v864, %v857
      %v1082 = vpack.c.b16 %v865, %v858
      %v1083 = vpack.c.b16 %v873, %v866
      %v1084 = vpack.c.b16 %v874, %v867
      %v1085 = vpack.c.b16 %v875, %v868
      %v1086 = vpack.c.b16 %v876, %v869
      %v1087 = vpack.c.b16 %v877, %v870
      %v1088 = vpack.c.b16 %v878, %v871
      %v1089 = vpack.c.b16 %v879, %v872
      %v1090 = vpack.c.b16 %v887, %v880
      %v1091 = vpack.c.b16 %v888, %v881
      %v1092 = vpack.c.b16 %v889, %v882
      %v1093 = vpack.c.b16 %v890, %v883
      %v1094 = vpack.c.b16 %v891, %v884
      %v1095 = vpack.c.b16 %v892, %v885
      %v1096 = vpack.c.b16 %v893, %v886
      %v1097 = vpack.c.b16 %v901, %v894
      %v1098 = vpack.c.b16 %v902, %v895
      %v1099 = vpack.c.b16 %v903, %v896
      %v1100 = vpack.c.b16 %v904, %v897
      %v1101 = vpack.c.b16 %v905, %v898
      %v1102 = vpack.c.b16 %v906, %v899
      %v1103 = vpack.c.b16 %v907, %v900
      %v1104 = vpack.c.b16 %v915, %v908
      %v1105 = vpack.c.b16 %v916, %v909
      %v1106 = vpack.c.b16 %v917, %v910
      %v1107 = vpack.c.b16 %v918, %v911
      %v1108 = vpack.c.b16 %v919, %v912
      %v1109 = vpack.c.b16 %v920, %v913
      %v1110 = vpack.c.b16 %v921, %v914
      %v1111 = vpack.c.b16 %v929, %v922
      %v1112 = vpack.c.b16 %v930, %v923
      %v1113 = vpack.c.b16 %v931, %v924
      %v1114 = vpack.c.b16 %v932, %v925
      %v1115 = vpack.c.b16 %v933, %v926
      %v1116 = vpack.c.b16 %v934, %v927
      %v1117 = vpack.c.b16 %v935, %v928
      %v1118 = vpack.c.b16 %v943, %v936
      %v1119 = vpack.c.b16 %v944, %v937
      %v1120 = vpack.c.b16 %v945, %v938
      %v1121 = vpack.c.b16 %v946, %v939
      %v1122 = vpack.c.b16 %v947, %v940
      %v1123 = vpack.c.b16 %v948, %v941
      %v1124 = vpack.c.b16 %v949, %v942
      %v1125 = vpack.c.b16 %v957, %v950
      %v1126 = vpack.c.b16 %v958, %v951
      %v1127 = vpack.c.b16 %v959, %v952
      %v1128 = vpack.c.b16 %v960, %v953
      %v1129 = vpack.c.b16 %v961, %v954
      %v1130 = vpack.c.b16 %v962, %v955
      %v1131 = vpack.c.b16 %v963, %v956
      %v1132 = vpack.c.b16 %v971, %v964
      %v1133 = vpack.c.b16 %v972, %v965
      %v1134 = vpack.c.b16 %v973, %v966
      %v1135 = vpack.c.b16 %v974, %v967
      %v1136 = vpack.c.b16 %v975, %v968
      %v1137 = vpack.c.b16 %v976, %v969
      %v1138 = vpack.c.b16 %v977, %v970
      %v1139 = vpack.c.b16 %v985, %v978
      %v1140 = vpack.c.b16 %v986, %v979
      %v1141 = vpack.c.b16 %v987, %v980
      %v1142 = vpack.c.b16 %v988, %v981
      %v1143 = vpack.c.b16 %v989, %v982
      %v1144 = vpack.c.b16 %v990, %v983
      %v1145 = vpack.c.b16 %v991, %v984
      %v1146 = vpack.c.b16 %v999, %v992
      %v1147 = vpack.c.b16 %v1000, %v993
      %v1148 = vpack.c.b16 %v1001, %v994
      %v1149 = vpack.c.b16 %v1002, %v995
      %v1150 = vpack.c.b16 %v1003, %v996
      %v1151 = vpack.c.b16 %v1004, %v997
      %v1152 = vpack.c.b16 %v1005, %v998
      %v1153 = vpack.c.b16 %v1013, %v1006
      %v1154 = vpack.c.b16 %v1014, %v1007
      %v1155 = vpack.c.b16 %v1015, %v1008
      %v1156 = vpack.c.b16 %v1016, %v1009
      %v1157 = vpack.c.b16 %v1017, %v1010
      %v1158 = vpack.c.b16 %v1018, %v1011
      %v1159 = vpack.c.b16 %v1019, %v1012
      %v1160 = vpack.c.b16 %v1027, %v1020
      %v1161 = vpack.c.b16 %v1028, %v1021
      %v1162 = vpack.c.b16 %v1029, %v1022
      %v1163 = vpack.c.b16 %v1030, %v1023
      %v1164 = vpack.c.b16 %v1031, %v1024
      %v1165 = vpack.c.b16 %v1032, %v1025
      %v1166 = vpack.c.b16 %v1033, %v1026
      %v1167 = vpack.c.b16 %v1041, %v1034
      %v1168 = vpack.c.b16 %v1042, %v1035
      %v1169 = vpack.c.b16 %v1043, %v1036
      %v1170 = vpack.c.b16 %v1044, %v1037
      %v1171 = vpack.c.b16 %v1045, %v1038
      %v1172 = vpack.c.b16 %v1046, %v1039
      %v1173 = vpack.c.b16 %v1047, %v1040
      %v1174 = vpack.c.b16 %v1055, %v1048
      %v1175 = vpack.c.b16 %v1056, %v1049
      %v1176 = vpack.c.b16 %v1057, %v1050
      %v1177 = vpack.c.b16 %v1058, %v1051
      %v1178 = vpack.c.b16 %v1059, %v1052
      %v1179 = vpack.c.b16 %v1060, %v1053
      %v1180 = vpack.c.b16 %v1061, %v1054
      %v1181 = vpack.c.b16 %v1069, %v1062
      %v1182 = vpack.c.b16 %v1070, %v1063
      %v1183 = vpack.c.b16 %v1071, %v1064
      %v1184 = vpack.c.b16 %v1072, %v1065
      %v1185 = vpack.c.b16 %v1073, %v1066
      %v1186 = vpack.c.b16 %v1074, %v1067
      %v1187 = vpack.c.b16 %v1075, %v1068
      %v1382 = vunpack.c.l.b16 %v619
      %v1383 = vunpack.c.l.b16 %v620
      %v1384 = vunpack.c.l.b16 %v621
      %v1385 = vunpack.c.l.b16 %v622
      %v1386 = vunpack.c.l.b16 %v623
      %v1387 = vunpack.c.l.b16 %v624
      %v1388 = vunpack.c.l.b16 %v625
      %v1389 = vunpack.c.l.b16 %v626
      %v1390 = vunpack.c.l.b16 %v627
      %v1391 = vunpack.c.l.b16 %v628
      %v1392 = vunpack.c.l.b16 %v629
      %v1393 = vunpack.c.l.b16 %v630
      %v1394 = vunpack.c.l.b16 %v631
      %v1395 = vunpack.c.l.b16 %v632
      %v1396 = vunpack.c.l.b16 %v633
      %v1397 = vunpack.c.l.b16 %v634
      %v1398 = vunpack.c.l.b16 %v635
      %v1399 = vunpack.c.l.b16 %v636
      %v1400 = vunpack.c.l.b16 %v637
      %v1401 = vunpack.c.l.b16 %v638
      %v1402 = vunpack.c.l.b16 %v639
      %v1403 = vunpack.c.l.b16 %v640
      %v1404 = vunpack.c.l.b16 %v641
      %v1405 = vunpack.c.l.b16 %v642
      %v1406 = vunpack.c.l.b16 %v643
      %v1407 = vunpack.c.l.b16 %v644
      %v1408 = vunpack.c.l.b16 %v645
      %v1409 = vunpack.c.l.b16 %v646
      %v1410 = vunpack.c.l.b16 %v647
      %v1411 = vunpack.c.l.b16 %v648
      %v1412 = vunpack.c.l.b16 %v649
      %v1413 = vunpack.c.l.b16 %v650
      %v1414 = vunpack.c.l.b16 %v651
      %v1415 = vunpack.c.l.b16 %v652
      %v1416 = vunpack.c.l.b16 %v653
      %v1417 = vunpack.c.l.b16 %v654
      %v1418 = vunpack.c.l.b16 %v655
      %v1419 = vunpack.c.l.b16 %v656
      %v1420 = vunpack.c.l.b16 %v657
      %v1421 = vunpack.c.l.b16 %v658
      %v1422 = vunpack.c.l.b16 %v659
      %v1423 = vunpack.c.l.b16 %v660
      %v1424 = vunpack.c.l.b16 %v661
      %v1425 = vunpack.c.l.b16 %v662
      %v1426 = vunpack.c.l.b16 %v663
      %v1427 = vunpack.c.l.b16 %v664
      %v1428 = vunpack.c.l.b16 %v665
      %v1429 = vunpack.c.l.b16 %v666
      %v1430 = vunpack.c.l.b16 %v667
      %v1431 = vunpack.c.l.b16 %v668
      %v1432 = vunpack.c.l.b16 %v669
      %v1433 = vunpack.c.l.b16 %v670
      %v1434 = vunpack.c.l.b16 %v671
      %v1435 = vunpack.c.l.b16 %v672
      %v1436 = vunpack.c.l.b16 %v673
      %v1437 = vunpack.c.l.b16 %v674
      %v1438 = vunpack.c.l.b16 %v675
      %v1439 = vunpack.c.l.b16 %v676
      %v1440 = vunpack.c.l.b16 %v677
      %v1441 = vunpack.c.l.b16 %v678
      %v1442 = vunpack.c.l.b16 %v679
      %v1443 = vunpack.c.l.b16 %v680
      %v1444 = vunpack.c.l.b16 %v681
      %v1445 = vunpack.c.l.b16 %v682
      %v1446 = vunpack.c.l.b16 %v683
      %v1447 = vunpack.c.l.b16 %v684
      %v1448 = vunpack.c.l.b16 %v685
      %v1449 = vunpack.c.l.b16 %v686
      %v1450 = vunpack.c.l.b16 %v687
      %v1451 = vunpack.c.l.b16 %v688
      %v1452 = vunpack.c.l.b16 %v689
      %v1453 = vunpack.c.l.b16 %v690
      %v1454 = vunpack.c.l.b16 %v691
      %v1455 = vunpack.c.l.b16 %v692
      %v1456 = vunpack.c.l.b16 %v693
      %v1457 = vunpack.c.l.b16 %v694
      %v1458 = vunpack.c.l.b16 %v695
      %v1459 = vunpack.c.l.b16 %v696
      %v1460 = vunpack.c.l.b16 %v697
      %v1461 = vunpack.c.l.b16 %v698
      %v1462 = vunpack.c.l.b16 %v699
      %v1463 = vunpack.c.l.b16 %v700
      %v1464 = vunpack.c.l.b16 %v701
      %v1465 = vunpack.c.l.b16 %v702
      %v1466 = vunpack.c.l.b16 %v703
      %v1467 = vunpack.c.l.b16 %v704
      %v1468 = vunpack.c.l.b16 %v705
      %v1469 = vunpack.c.l.b16 %v706
      %v1470 = vunpack.c.l.b16 %v707
      %v1471 = vunpack.c.l.b16 %v708
      %v1472 = vunpack.c.l.b16 %v709
      %v1473 = vunpack.c.l.b16 %v710
      %v1474 = vunpack.c.l.b16 %v711
      %v1475 = vunpack.c.l.b16 %v712
      %v1476 = vunpack.c.l.b16 %v713
      %v1477 = vunpack.c.l.b16 %v714
      %v1478 = vunpack.c.l.b16 %v715
      %v1479 = vunpack.c.l.b16 %v716
      %v1480 = vpack.c.b16 %v1383, %v1382
      %v1481 = vpack.c.b16 %v1385, %v1384
      %v1482 = vpack.c.b16 %v1387, %v1386
      %v1483 = vpack.c.b16 %v1389, %v1388
      %v1484 = vpack.c.b16 %v1391, %v1390
      %v1485 = vpack.c.b16 %v1393, %v1392
      %v1486 = vpack.c.b16 %v1395, %v1394
      %v1487 = vpack.c.b16 %v1397, %v1396
      %v1488 = vpack.c.b16 %v1399, %v1398
      %v1489 = vpack.c.b16 %v1401, %v1400
      %v1490 = vpack.c.b16 %v1403, %v1402
      %v1491 = vpack.c.b16 %v1405, %v1404
      %v1492 = vpack.c.b16 %v1407, %v1406
      %v1493 = vpack.c.b16 %v1409, %v1408
      %v1494 = vpack.c.b16 %v1411, %v1410
      %v1495 = vpack.c.b16 %v1413, %v1412
      %v1496 = vpack.c.b16 %v1415, %v1414
      %v1497 = vpack.c.b16 %v1417, %v1416
      %v1498 = vpack.c.b16 %v1419, %v1418
      %v1499 = vpack.c.b16 %v1421, %v1420
      %v1500 = vpack.c.b16 %v1423, %v1422
      %v1501 = vpack.c.b16 %v1425, %v1424
      %v1502 = vpack.c.b16 %v1427, %v1426
      %v1503 = vpack.c.b16 %v1429, %v1428
      %v1504 = vpack.c.b16 %v1431, %v1430
      %v1505 = vpack.c.b16 %v1433, %v1432
      %v1506 = vpack.c.b16 %v1435, %v1434
      %v1507 = vpack.c.b16 %v1437, %v1436
      %v1508 = vpack.c.b16 %v1439, %v1438
      %v1509 = vpack.c.b16 %v1441, %v1440
      %v1510 = vpack.c.b16 %v1443, %v1442
      %v1511 = vpack.c.b16 %v1445, %v1444
      %v1512 = vpack.c.b16 %v1447, %v1446
      %v1513 = vpack.c.b16 %v1449, %v1448
      %v1514 = vpack.c.b16 %v1451, %v1450
      %v1515 = vpack.c.b16 %v1453, %v1452
      %v1516 = vpack.c.b16 %v1455, %v1454
      %v1517 = vpack.c.b16 %v1457, %v1456
      %v1518 = vpack.c.b16 %v1459, %v1458
      %v1519 = vpack.c.b16 %v1461, %v1460
      %v1520 = vpack.c.b16 %v1463, %v1462
      %v1521 = vpack.c.b16 %v1465, %v1464
      %v1522 = vpack.c.b16 %v1467, %v1466
      %v1523 = vpack.c.b16 %v1469, %v1468
      %v1524 = vpack.c.b16 %v1471, %v1470
      %v1525 = vpack.c.b16 %v1473, %v1472
      %v1526 = vpack.c.b16 %v1475, %v1474
      %v1527 = vpack.c.b16 %v1477, %v1476
      %v1528 = vpack.c.b16 %v1479, %v1478
      %vm1578 = vcmask 130048
      %v1580 = vsel %vm1578, %v1082, 0
      %v1583 = vsel %vm1578, %v1089, 0
      %v1586 = vsel %vm1578, %v1096, 0
      %v1589 = vsel %vm1578, %v1103, 0
      %v1592 = vsel %vm1578, %v1110, 0
      %v1595 = vsel %vm1578, %v1117, 0
      %v1598 = vsel %vm1578, %v1124, 0
      %v1601 = vsel %vm1578, %v1131, 0
      %v1604 = vsel %vm1578, %v1138, 0
      %v1607 = vsel %vm1578, %v1145, 0
      %v1610 = vsel %vm1578, %v1152, 0
      %v1613 = vsel %vm1578, %v1159, 0
      %v1616 = vsel %vm1578, %v1166, 0
      %v1619 = vsel %vm1578, %v1173, 0
      %v1622 = vsel %vm1578, %v1180, 0
      %v1625 = vsel %vm1578, %v1187, 0
      %1627 = vmatprep.subr.bf16.mxu0 0
      %1628 = vmatpush1.bf16.msra.mxu0 %v1480
      %1629 = vmatprep.subr.bf16.mxu0 0
      %1630 = vmatpush1.bf16.msra.mxu0 %v1481
      %1631 = vmatprep.subr.bf16.mxu0 0
      %1632 = vmatpush1.bf16.msra.mxu0 %v1482
      %1633 = vmatprep.subr.bf16.mxu0 0
      %1634 = vmatpush1.bf16.msra.mxu0 %v1483
      %1635 = vmatprep.subr.bf16.mxu0 0
      %1636 = vmatpush1.bf16.msra.mxu0 %v1484
      %1637 = vmatprep.subr.bf16.mxu0 0
      %1638 = vmatpush1.bf16.msra.mxu0 %v1485
      %1639 = vmatprep.subr.bf16.mxu0 0
      %1640 = vmatpush1.bf16.msra.mxu0 %v1486
      %1641 = vmatprep.subr.bf16.mxu0 0
      %1642 = vmatpush1.bf16.msra.mxu0 %v1487
      %1643 = vmatprep.subr.bf16.mxu0 0
      %1644 = vmatpush1.bf16.msra.mxu0 %v1488
      %1645 = vmatprep.subr.bf16.mxu0 0
      %1646 = vmatpush1.bf16.msra.mxu0 %v1489
      %1647 = vmatprep.subr.bf16.mxu0 0
      %1648 = vmatpush1.bf16.msra.mxu0 %v1490
      %1649 = vmatprep.subr.bf16.mxu0 0
      %1650 = vmatpush1.bf16.msra.mxu0 %v1491
      %1651 = vmatprep.subr.bf16.mxu0 0
      %1652 = vmatpush1.bf16.msra.mxu0 %v1492
      %1653 = vmatprep.subr.bf16.mxu0 0
      %1654 = vmatpush1.bf16.msra.mxu0 %v1493
      %1655 = vmatprep.subr.bf16.mxu0 0
      %1656 = vmatpush1.bf16.msra.mxu0 %v1494
      %1657 = vmatprep.subr.bf16.mxu0 0
      %1658 = vmatpush1.bf16.msra.mxu0 %v1495
      %1659 = vmatprep.mubr.bf16.mxu0 %v1077
      %1660 = vmatmul.mubr.bf16.gmra.mrb[0].mxu0 %v1076
      %v1661 = vpop.f32.mrb[0].mxu0
      %v1662 = vadd.f32 %v722, %v1661
      %v1663 = vpop.f32.mrb[0].mxu0
      %v1664 = vpop.f32.mrb[0].mxu0
      %v1665 = vadd.f32 %v722, %v1664
      %v1666 = vpop.f32.mrb[0].mxu0
      %1667 = vmatprep.mubr.bf16.mxu0 %v1084
      %1668 = vmatmul.mubr.bf16.gmra.mrb[0].mxu0 %v1083
      %v1669 = vpop.f32.mrb[0].mxu0
      %v1670 = vadd.f32 %v722, %v1669
      %v1671 = vpop.f32.mrb[0].mxu0
      %v1672 = vpop.f32.mrb[0].mxu0
      %v1673 = vadd.f32 %v722, %v1672
      %v1674 = vpop.f32.mrb[0].mxu0
      %1675 = vmatprep.mubr.bf16.mxu0 %v1091
      %1676 = vmatmul.mubr.bf16.gmra.mrb[0].mxu0 %v1090
      %v1677 = vpop.f32.mrb[0].mxu0
      %v1678 = vadd.f32 %v722, %v1677
      %v1679 = vpop.f32.mrb[0].mxu0
      %v1680 = vpop.f32.mrb[0].mxu0
      %v1681 = vadd.f32 %v722, %v1680
      %v1682 = vpop.f32.mrb[0].mxu0
      %1683 = vmatprep.mubr.bf16.mxu0 %v1098
      %1684 = vmatmul.mubr.bf16.gmra.mrb[0].mxu0 %v1097
      %v1685 = vpop.f32.mrb[0].mxu0
      %v1686 = vadd.f32 %v722, %v1685
      %v1687 = vpop.f32.mrb[0].mxu0
      %v1688 = vpop.f32.mrb[0].mxu0
      %v1689 = vadd.f32 %v722, %v1688
      %v1690 = vpop.f32.mrb[0].mxu0
      %1691 = vmatprep.mubr.bf16.mxu0 %v1105
      %1692 = vmatmul.mubr.bf16.gmra.mrb[0].mxu0 %v1104
      %v1693 = vpop.f32.mrb[0].mxu0
      %v1694 = vadd.f32 %v722, %v1693
      %v1695 = vpop.f32.mrb[0].mxu0
      %v1696 = vpop.f32.mrb[0].mxu0
      %v1697 = vadd.f32 %v722, %v1696
      %v1698 = vpop.f32.mrb[0].mxu0
      %1699 = vmatprep.mubr.bf16.mxu0 %v1112
      %1700 = vmatmul.mubr.bf16.gmra.mrb[0].mxu0 %v1111
      %v1701 = vpop.f32.mrb[0].mxu0
      %v1702 = vadd.f32 %v722, %v1701
      %v1703 = vpop.f32.mrb[0].mxu0
      %v1704 = vpop.f32.mrb[0].mxu0
      %v1705 = vadd.f32 %v722, %v1704
      %v1706 = vpop.f32.mrb[0].mxu0
      %1707 = vmatprep.mubr.bf16.mxu0 %v1119
      %1708 = vmatmul.mubr.bf16.gmra.mrb[0].mxu0 %v1118
      %v1709 = vpop.f32.mrb[0].mxu0
      %v1710 = vadd.f32 %v722, %v1709
      %v1711 = vpop.f32.mrb[0].mxu0
      %v1712 = vpop.f32.mrb[0].mxu0
      %v1713 = vadd.f32 %v722, %v1712
      %v1714 = vpop.f32.mrb[0].mxu0
      %1715 = vmatprep.mubr.bf16.mxu0 %v1126
      %1716 = vmatmul.mubr.bf16.gmra.mrb[0].mxu0 %v1125
      %v1717 = vpop.f32.mrb[0].mxu0
      %v1718 = vadd.f32 %v722, %v1717
      %v1719 = vpop.f32.mrb[0].mxu0
      %v1720 = vpop.f32.mrb[0].mxu0
      %v1721 = vadd.f32 %v722, %v1720
      %v1722 = vpop.f32.mrb[0].mxu0
      %1723 = vmatprep.mubr.bf16.mxu0 %v1133
      %1724 = vmatmul.mubr.bf16.gmra.mrb[0].mxu0 %v1132
      %v1725 = vpop.f32.mrb[0].mxu0
      %v1726 = vadd.f32 %v722, %v1725
      %v1727 = vpop.f32.mrb[0].mxu0
      %v1728 = vpop.f32.mrb[0].mxu0
      %v1729 = vadd.f32 %v722, %v1728
      %v1730 = vpop.f32.mrb[0].mxu0
      %1731 = vmatprep.mubr.bf16.mxu0 %v1140
      %1732 = vmatmul.mubr.bf16.gmra.mrb[0].mxu0 %v1139
      %v1733 = vpop.f32.mrb[0].mxu0
      %v1734 = vadd.f32 %v722, %v1733
      %v1735 = vpop.f32.mrb[0].mxu0
      %v1736 = vpop.f32.mrb[0].mxu0
      %v1737 = vadd.f32 %v722, %v1736
      %v1738 = vpop.f32.mrb[0].mxu0
      %1739 = vmatprep.mubr.bf16.mxu0 %v1147
      %1740 = vmatmul.mubr.bf16.gmra.mrb[0].mxu0 %v1146
      %v1741 = vpop.f32.mrb[0].mxu0
      %v1742 = vadd.f32 %v722, %v1741
      %v1743 = vpop.f32.mrb[0].mxu0
      %v1744 = vpop.f32.mrb[0].mxu0
      %v1745 = vadd.f32 %v722, %v1744
      %v1746 = vpop.f32.mrb[0].mxu0
      %1747 = vmatprep.mubr.bf16.mxu0 %v1154
      %1748 = vmatmul.mubr.bf16.gmra.mrb[0].mxu0 %v1153
      %v1749 = vpop.f32.mrb[0].mxu0
      %v1750 = vadd.f32 %v722, %v1749
      %v1751 = vpop.f32.mrb[0].mxu0
      %v1752 = vpop.f32.mrb[0].mxu0
      %v1753 = vadd.f32 %v722, %v1752
      %v1754 = vpop.f32.mrb[0].mxu0
      %1755 = vmatprep.mubr.bf16.mxu0 %v1161
      %1756 = vmatmul.mubr.bf16.gmra.mrb[0].mxu0 %v1160
      %v1757 = vpop.f32.mrb[0].mxu0
      %v1758 = vadd.f32 %v722, %v1757
      %v1759 = vpop.f32.mrb[0].mxu0
      %v1760 = vpop.f32.mrb[0].mxu0
      %v1761 = vadd.f32 %v722, %v1760
      %v1762 = vpop.f32.mrb[0].mxu0
      %1763 = vmatprep.mubr.bf16.mxu0 %v1168
      %1764 = vmatmul.mubr.bf16.gmra.mrb[0].mxu0 %v1167
      %v1765 = vpop.f32.mrb[0].mxu0
      %v1766 = vadd.f32 %v722, %v1765
      %v1767 = vpop.f32.mrb[0].mxu0
      %v1768 = vpop.f32.mrb[0].mxu0
      %v1769 = vadd.f32 %v722, %v1768
      %v1770 = vpop.f32.mrb[0].mxu0
      %1771 = vmatprep.mubr.bf16.mxu0 %v1175
      %1772 = vmatmul.mubr.bf16.gmra.mrb[0].mxu0 %v1174
      %v1773 = vpop.f32.mrb[0].mxu0
      %v1774 = vadd.f32 %v722, %v1773
      %v1775 = vpop.f32.mrb[0].mxu0
      %v1776 = vpop.f32.mrb[0].mxu0
      %v1777 = vadd.f32 %v722, %v1776
      %v1778 = vpop.f32.mrb[0].mxu0
      %1779 = vmatprep.mubr.bf16.mxu0 %v1182
      %1780 = vmatmul.mubr.bf16.gmra.mrb[0].mxu0 %v1181
      %v1781 = vpop.f32.mrb[0].mxu0
      %v1782 = vadd.f32 %v722, %v1781
      %v1783 = vpop.f32.mrb[0].mxu0
      %v1784 = vpop.f32.mrb[0].mxu0
      %v1785 = vadd.f32 %v722, %v1784
      %v1786 = vpop.f32.mrb[0].mxu0
      %1787 = vdwg.mxu0
      %1788 = vmatprep.subr.bf16.mxu0 0
      %1789 = vmatpush1.bf16.msra.mxu0 %v1496
      %1790 = vmatprep.subr.bf16.mxu0 0
      %1791 = vmatpush1.bf16.msra.mxu0 %v1497
      %1792 = vmatprep.subr.bf16.mxu0 0
      %1793 = vmatpush1.bf16.msra.mxu0 %v1498
      %1794 = vmatprep.subr.bf16.mxu0 0
      %1795 = vmatpush1.bf16.msra.mxu0 %v1499
      %1796 = vmatprep.subr.bf16.mxu0 0
      %1797 = vmatpush1.bf16.msra.mxu0 %v1500
      %1798 = vmatprep.subr.bf16.mxu0 0
      %1799 = vmatpush1.bf16.msra.mxu0 %v1501
      %1800 = vmatprep.subr.bf16.mxu0 0
      %1801 = vmatpush1.bf16.msra.mxu0 %v1502
      %1802 = vmatprep.subr.bf16.mxu0 0
      %1803 = vmatpush1.bf16.msra.mxu0 %v1503
      %1804 = vmatprep.subr.bf16.mxu0 0
      %1805 = vmatpush1.bf16.msra.mxu0 %v1504
      %1806 = vmatprep.subr.bf16.mxu0 0
      %1807 = vmatpush1.bf16.msra.mxu0 %v1505
      %1808 = vmatprep.subr.bf16.mxu0 0
      %1809 = vmatpush1.bf16.msra.mxu0 %v1506
      %1810 = vmatprep.subr.bf16.mxu0 0
      %1811 = vmatpush1.bf16.msra.mxu0 %v1507
      %1812 = vmatprep.subr.bf16.mxu0 0
      %1813 = vmatpush1.bf16.msra.mxu0 %v1508
      %1814 = vmatprep.subr.bf16.mxu0 0
      %1815 = vmatpush1.bf16.msra.mxu0 %v1509
      %1816 = vmatprep.subr.bf16.mxu0 0
      %1817 = vmatpush1.bf16.msra.mxu0 %v1510
      %1818 = vmatprep.subr.bf16.mxu0 0
      %1819 = vmatpush1.bf16.msra.mxu0 %v1511
      %1820 = vmatprep.mubr.bf16.mxu0 %v1079
      %1821 = vmatmul.mubr.bf16.gmra.mrb[0].mxu0 %v1078
      %v1822 = vpop.f32.mrb[0].mxu0
      %v1823 = vadd.f32 %v1662, %v1822
      %v1824 = vpop.f32.mrb[0].mxu0
      %v1825 = vpop.f32.mrb[0].mxu0
      %v1826 = vadd.f32 %v1665, %v1825
      %v1827 = vpop.f32.mrb[0].mxu0
      %1828 = vmatprep.mubr.bf16.mxu0 %v1086
      %1829 = vmatmul.mubr.bf16.gmra.mrb[0].mxu0 %v1085
      %v1830 = vpop.f32.mrb[0].mxu0
      %v1831 = vadd.f32 %v1670, %v1830
      %v1832 = vpop.f32.mrb[0].mxu0
      %v1833 = vpop.f32.mrb[0].mxu0
      %v1834 = vadd.f32 %v1673, %v1833
      %v1835 = vpop.f32.mrb[0].mxu0
      %1836 = vmatprep.mubr.bf16.mxu0 %v1093
      %1837 = vmatmul.mubr.bf16.gmra.mrb[0].mxu0 %v1092
      %v1838 = vpop.f32.mrb[0].mxu0
      %v1839 = vadd.f32 %v1678, %v1838
      %v1840 = vpop.f32.mrb[0].mxu0
      %v1841 = vpop.f32.mrb[0].mxu0
      %v1842 = vadd.f32 %v1681, %v1841
      %v1843 = vpop.f32.mrb[0].mxu0
      %1844 = vmatprep.mubr.bf16.mxu0 %v1100
      %1845 = vmatmul.mubr.bf16.gmra.mrb[0].mxu0 %v1099
      %v1846 = vpop.f32.mrb[0].mxu0
      %v1847 = vadd.f32 %v1686, %v1846
      %v1848 = vpop.f32.mrb[0].mxu0
      %v1849 = vpop.f32.mrb[0].mxu0
      %v1850 = vadd.f32 %v1689, %v1849
      %v1851 = vpop.f32.mrb[0].mxu0
      %1852 = vmatprep.mubr.bf16.mxu0 %v1107
      %1853 = vmatmul.mubr.bf16.gmra.mrb[0].mxu0 %v1106
      %v1854 = vpop.f32.mrb[0].mxu0
      %v1855 = vadd.f32 %v1694, %v1854
      %v1856 = vpop.f32.mrb[0].mxu0
      %v1857 = vpop.f32.mrb[0].mxu0
      %v1858 = vadd.f32 %v1697, %v1857
      %v1859 = vpop.f32.mrb[0].mxu0
      %1860 = vmatprep.mubr.bf16.mxu0 %v1114
      %1861 = vmatmul.mubr.bf16.gmra.mrb[0].mxu0 %v1113
      %v1862 = vpop.f32.mrb[0].mxu0
      %v1863 = vadd.f32 %v1702, %v1862
      %v1864 = vpop.f32.mrb[0].mxu0
      %v1865 = vpop.f32.mrb[0].mxu0
      %v1866 = vadd.f32 %v1705, %v1865
      %v1867 = vpop.f32.mrb[0].mxu0
      %1868 = vmatprep.mubr.bf16.mxu0 %v1121
      %1869 = vmatmul.mubr.bf16.gmra.mrb[0].mxu0 %v1120
      %v1870 = vpop.f32.mrb[0].mxu0
      %v1871 = vadd.f32 %v1710, %v1870
      %v1872 = vpop.f32.mrb[0].mxu0
      %v1873 = vpop.f32.mrb[0].mxu0
      %v1874 = vadd.f32 %v1713, %v1873
      %v1875 = vpop.f32.mrb[0].mxu0
      %1876 = vmatprep.mubr.bf16.mxu0 %v1128
      %1877 = vmatmul.mubr.bf16.gmra.mrb[0].mxu0 %v1127
      %v1878 = vpop.f32.mrb[0].mxu0
      %v1879 = vadd.f32 %v1718, %v1878
      %v1880 = vpop.f32.mrb[0].mxu0
      %v1881 = vpop.f32.mrb[0].mxu0
      %v1882 = vadd.f32 %v1721, %v1881
      %v1883 = vpop.f32.mrb[0].mxu0
      %1884 = vmatprep.mubr.bf16.mxu0 %v1135
      %1885 = vmatmul.mubr.bf16.gmra.mrb[0].mxu0 %v1134
      %v1886 = vpop.f32.mrb[0].mxu0
      %v1887 = vadd.f32 %v1726, %v1886
      %v1888 = vpop.f32.mrb[0].mxu0
      %v1889 = vpop.f32.mrb[0].mxu0
      %v1890 = vadd.f32 %v1729, %v1889
      %v1891 = vpop.f32.mrb[0].mxu0
      %1892 = vmatprep.mubr.bf16.mxu0 %v1142
      %1893 = vmatmul.mubr.bf16.gmra.mrb[0].mxu0 %v1141
      %v1894 = vpop.f32.mrb[0].mxu0
      %v1895 = vadd.f32 %v1734, %v1894
      %v1896 = vpop.f32.mrb[0].mxu0
      %v1897 = vpop.f32.mrb[0].mxu0
      %v1898 = vadd.f32 %v1737, %v1897
      %v1899 = vpop.f32.mrb[0].mxu0
      %1900 = vmatprep.mubr.bf16.mxu0 %v1149
      %1901 = vmatmul.mubr.bf16.gmra.mrb[0].mxu0 %v1148
      %v1902 = vpop.f32.mrb[0].mxu0
      %v1903 = vadd.f32 %v1742, %v1902
      %v1904 = vpop.f32.mrb[0].mxu0
      %v1905 = vpop.f32.mrb[0].mxu0
      %v1906 = vadd.f32 %v1745, %v1905
      %v1907 = vpop.f32.mrb[0].mxu0
      %1908 = vmatprep.mubr.bf16.mxu0 %v1156
      %1909 = vmatmul.mubr.bf16.gmra.mrb[0].mxu0 %v1155
      %v1910 = vpop.f32.mrb[0].mxu0
      %v1911 = vadd.f32 %v1750, %v1910
      %v1912 = vpop.f32.mrb[0].mxu0
      %v1913 = vpop.f32.mrb[0].mxu0
      %v1914 = vadd.f32 %v1753, %v1913
      %v1915 = vpop.f32.mrb[0].mxu0
      %1916 = vmatprep.mubr.bf16.mxu0 %v1163
      %1917 = vmatmul.mubr.bf16.gmra.mrb[0].mxu0 %v1162
      %v1918 = vpop.f32.mrb[0].mxu0
      %v1919 = vadd.f32 %v1758, %v1918
      %v1920 = vpop.f32.mrb[0].mxu0
      %v1921 = vpop.f32.mrb[0].mxu0
      %v1922 = vadd.f32 %v1761, %v1921
      %v1923 = vpop.f32.mrb[0].mxu0
      %1924 = vmatprep.mubr.bf16.mxu0 %v1170
      %1925 = vmatmul.mubr.bf16.gmra.mrb[0].mxu0 %v1169
      %v1926 = vpop.f32.mrb[0].mxu0
      %v1927 = vadd.f32 %v1766, %v1926
      %v1928 = vpop.f32.mrb[0].mxu0
      %v1929 = vpop.f32.mrb[0].mxu0
      %v1930 = vadd.f32 %v1769, %v1929
      %v1931 = vpop.f32.mrb[0].mxu0
      %1932 = vmatprep.mubr.bf16.mxu0 %v1177
      %1933 = vmatmul.mubr.bf16.gmra.mrb[0].mxu0 %v1176
      %v1934 = vpop.f32.mrb[0].mxu0
      %v1935 = vadd.f32 %v1774, %v1934
      %v1936 = vpop.f32.mrb[0].mxu0
      %v1937 = vpop.f32.mrb[0].mxu0
      %v1938 = vadd.f32 %v1777, %v1937
      %v1939 = vpop.f32.mrb[0].mxu0
      %1940 = vmatprep.mubr.bf16.mxu0 %v1184
      %1941 = vmatmul.mubr.bf16.gmra.mrb[0].mxu0 %v1183
      %v1942 = vpop.f32.mrb[0].mxu0
      %v1943 = vadd.f32 %v1782, %v1942
      %v1944 = vpop.f32.mrb[0].mxu0
      %v1945 = vpop.f32.mrb[0].mxu0
      %v1946 = vadd.f32 %v1785, %v1945
      %v1947 = vpop.f32.mrb[0].mxu0
      %1948 = vdwg.mxu0
      %1949 = vmatprep.subr.bf16.mxu0 0
      %1950 = vmatpush1.bf16.msra.mxu0 %v1512
      %1951 = vmatprep.subr.bf16.mxu0 0
      %1952 = vmatpush1.bf16.msra.mxu0 %v1513
      %1953 = vmatprep.subr.bf16.mxu0 0
      %1954 = vmatpush1.bf16.msra.mxu0 %v1514
      %1955 = vmatprep.subr.bf16.mxu0 0
      %1956 = vmatpush1.bf16.msra.mxu0 %v1515
      %1957 = vmatprep.subr.bf16.mxu0 0
      %1958 = vmatpush1.bf16.msra.mxu0 %v1516
      %1959 = vmatprep.subr.bf16.mxu0 0
      %1960 = vmatpush1.bf16.msra.mxu0 %v1517
      %1961 = vmatprep.subr.bf16.mxu0 0
      %1962 = vmatpush1.bf16.msra.mxu0 %v1518
      %1963 = vmatprep.subr.bf16.mxu0 0
      %1964 = vmatpush1.bf16.msra.mxu0 %v1519
      %1965 = vmatprep.subr.bf16.mxu0 0
      %1966 = vmatpush1.bf16.msra.mxu0 %v1520
      %1967 = vmatprep.subr.bf16.mxu0 0
      %1968 = vmatpush1.bf16.msra.mxu0 %v1521
      %1969 = vmatprep.subr.bf16.mxu0 0
      %1970 = vmatpush1.bf16.msra.mxu0 %v1522
      %1971 = vmatprep.subr.bf16.mxu0 0
      %1972 = vmatpush1.bf16.msra.mxu0 %v1523
      %1973 = vmatprep.subr.bf16.mxu0 0
      %1974 = vmatpush1.bf16.msra.mxu0 %v1524
      %1975 = vmatprep.subr.bf16.mxu0 0
      %1976 = vmatpush1.bf16.msra.mxu0 %v1525
      %1977 = vmatprep.subr.bf16.mxu0 0
      %1978 = vmatpush1.bf16.msra.mxu0 %v1526
      %1979 = vmatprep.subr.bf16.mxu0 0
      %1980 = vmatpush1.bf16.msra.mxu0 %v1527
      %1981 = vmatprep.mubr.bf16.mxu0 %v1081
      %1982 = vmatmul.mubr.bf16.gmra.mrb[0].mxu0 %v1080
      %v1983 = vpop.f32.mrb[0].mxu0
      %v1984 = vadd.f32 %v1823, %v1983
      %v1985 = vpop.f32.mrb[0].mxu0
      %v1986 = vpop.f32.mrb[0].mxu0
      %v1987 = vadd.f32 %v1826, %v1986
      %v1988 = vpop.f32.mrb[0].mxu0
      %1989 = vmatprep.mubr.bf16.mxu0 %v1088
      %1990 = vmatmul.mubr.bf16.gmra.mrb[0].mxu0 %v1087
      %v1991 = vpop.f32.mrb[0].mxu0
      %v1992 = vadd.f32 %v1831, %v1991
      %v1993 = vpop.f32.mrb[0].mxu0
      %v1994 = vpop.f32.mrb[0].mxu0
      %v1995 = vadd.f32 %v1834, %v1994
      %v1996 = vpop.f32.mrb[0].mxu0
      %1997 = vmatprep.mubr.bf16.mxu0 %v1095
      %1998 = vmatmul.mubr.bf16.gmra.mrb[0].mxu0 %v1094
      %v1999 = vpop.f32.mrb[0].mxu0
      %v2000 = vadd.f32 %v1839, %v1999
      %v2001 = vpop.f32.mrb[0].mxu0
      %v2002 = vpop.f32.mrb[0].mxu0
      %v2003 = vadd.f32 %v1842, %v2002
      %v2004 = vpop.f32.mrb[0].mxu0
      %2005 = vmatprep.mubr.bf16.mxu0 %v1102
      %2006 = vmatmul.mubr.bf16.gmra.mrb[0].mxu0 %v1101
      %v2007 = vpop.f32.mrb[0].mxu0
      %v2008 = vadd.f32 %v1847, %v2007
      %v2009 = vpop.f32.mrb[0].mxu0
      %v2010 = vpop.f32.mrb[0].mxu0
      %v2011 = vadd.f32 %v1850, %v2010
      %v2012 = vpop.f32.mrb[0].mxu0
      %2013 = vmatprep.mubr.bf16.mxu0 %v1109
      %2014 = vmatmul.mubr.bf16.gmra.mrb[0].mxu0 %v1108
      %v2015 = vpop.f32.mrb[0].mxu0
      %v2016 = vadd.f32 %v1855, %v2015
      %v2017 = vpop.f32.mrb[0].mxu0
      %v2018 = vpop.f32.mrb[0].mxu0
      %v2019 = vadd.f32 %v1858, %v2018
      %v2020 = vpop.f32.mrb[0].mxu0
      %2021 = vmatprep.mubr.bf16.mxu0 %v1116
      %2022 = vmatmul.mubr.bf16.gmra.mrb[0].mxu0 %v1115
      %v2023 = vpop.f32.mrb[0].mxu0
      %v2024 = vadd.f32 %v1863, %v2023
      %v2025 = vpop.f32.mrb[0].mxu0
      %v2026 = vpop.f32.mrb[0].mxu0
      %v2027 = vadd.f32 %v1866, %v2026
      %v2028 = vpop.f32.mrb[0].mxu0
      %2029 = vmatprep.mubr.bf16.mxu0 %v1123
      %2030 = vmatmul.mubr.bf16.gmra.mrb[0].mxu0 %v1122
      %v2031 = vpop.f32.mrb[0].mxu0
      %v2032 = vadd.f32 %v1871, %v2031
      %v2033 = vpop.f32.mrb[0].mxu0
      %v2034 = vpop.f32.mrb[0].mxu0
      %v2035 = vadd.f32 %v1874, %v2034
      %v2036 = vpop.f32.mrb[0].mxu0
      %2037 = vmatprep.mubr.bf16.mxu0 %v1130
      %2038 = vmatmul.mubr.bf16.gmra.mrb[0].mxu0 %v1129
      %v2039 = vpop.f32.mrb[0].mxu0
      %v2040 = vadd.f32 %v1879, %v2039
      %v2041 = vpop.f32.mrb[0].mxu0
      %v2042 = vpop.f32.mrb[0].mxu0
      %v2043 = vadd.f32 %v1882, %v2042
      %v2044 = vpop.f32.mrb[0].mxu0
      %2045 = vmatprep.mubr.bf16.mxu0 %v1137
      %2046 = vmatmul.mubr.bf16.gmra.mrb[0].mxu0 %v1136
      %v2047 = vpop.f32.mrb[0].mxu0
      %v2048 = vadd.f32 %v1887, %v2047
      %v2049 = vpop.f32.mrb[0].mxu0
      %v2050 = vpop.f32.mrb[0].mxu0
      %v2051 = vadd.f32 %v1890, %v2050
      %v2052 = vpop.f32.mrb[0].mxu0
      %2053 = vmatprep.mubr.bf16.mxu0 %v1144
      %2054 = vmatmul.mubr.bf16.gmra.mrb[0].mxu0 %v1143
      %v2055 = vpop.f32.mrb[0].mxu0
      %v2056 = vadd.f32 %v1895, %v2055
      %v2057 = vpop.f32.mrb[0].mxu0
      %v2058 = vpop.f32.mrb[0].mxu0
      %v2059 = vadd.f32 %v1898, %v2058
      %v2060 = vpop.f32.mrb[0].mxu0
      %2061 = vmatprep.mubr.bf16.mxu0 %v1151
      %2062 = vmatmul.mubr.bf16.gmra.mrb[0].mxu0 %v1150
      %v2063 = vpop.f32.mrb[0].mxu0
      %v2064 = vadd.f32 %v1903, %v2063
      %v2065 = vpop.f32.mrb[0].mxu0
      %v2066 = vpop.f32.mrb[0].mxu0
      %v2067 = vadd.f32 %v1906, %v2066
      %v2068 = vpop.f32.mrb[0].mxu0
      %2069 = vmatprep.mubr.bf16.mxu0 %v1158
      %2070 = vmatmul.mubr.bf16.gmra.mrb[0].mxu0 %v1157
      %v2071 = vpop.f32.mrb[0].mxu0
      %v2072 = vadd.f32 %v1911, %v2071
      %v2073 = vpop.f32.mrb[0].mxu0
      %v2074 = vpop.f32.mrb[0].mxu0
      %v2075 = vadd.f32 %v1914, %v2074
      %v2076 = vpop.f32.mrb[0].mxu0
      %2077 = vmatprep.mubr.bf16.mxu0 %v1165
      %2078 = vmatmul.mubr.bf16.gmra.mrb[0].mxu0 %v1164
      %v2079 = vpop.f32.mrb[0].mxu0
      %v2080 = vadd.f32 %v1919, %v2079
      %v2081 = vpop.f32.mrb[0].mxu0
      %v2082 = vpop.f32.mrb[0].mxu0
      %v2083 = vadd.f32 %v1922, %v2082
      %v2084 = vpop.f32.mrb[0].mxu0
      %2085 = vmatprep.mubr.bf16.mxu0 %v1172
      %2086 = vmatmul.mubr.bf16.gmra.mrb[0].mxu0 %v1171
      %v2087 = vpop.f32.mrb[0].mxu0
      %v2088 = vadd.f32 %v1927, %v2087
      %v2089 = vpop.f32.mrb[0].mxu0
      %v2090 = vpop.f32.mrb[0].mxu0
      %v2091 = vadd.f32 %v1930, %v2090
      %v2092 = vpop.f32.mrb[0].mxu0
      %2093 = vmatprep.mubr.bf16.mxu0 %v1179
      %2094 = vmatmul.mubr.bf16.gmra.mrb[0].mxu0 %v1178
      %v2095 = vpop.f32.mrb[0].mxu0
      %v2096 = vadd.f32 %v1935, %v2095
      %v2097 = vpop.f32.mrb[0].mxu0
      %v2098 = vpop.f32.mrb[0].mxu0
      %v2099 = vadd.f32 %v1938, %v2098
      %v2100 = vpop.f32.mrb[0].mxu0
      %2101 = vmatprep.mubr.bf16.mxu0 %v1186
      %2102 = vmatmul.mubr.bf16.gmra.mrb[0].mxu0 %v1185
      %v2103 = vpop.f32.mrb[0].mxu0
      %v2104 = vadd.f32 %v1943, %v2103
      %v2105 = vpop.f32.mrb[0].mxu0
      %v2106 = vpop.f32.mrb[0].mxu0
      %v2107 = vadd.f32 %v1946, %v2106
      %v2108 = vpop.f32.mrb[0].mxu0
      %2109 = vdwg.mxu0
      %2110 = vmatprep.subr.bf16.mxu0 0
      %2111 = vmatpush1.bf16.msra.mxu0 %v1528
      %2112 = vmatprep.subr.bf16.mxu0 0
      %2113 = vmatpush1.bf16.msra.mxu0 0
      %2114 = vmatprep.subr.bf16.mxu0 0
      %2115 = vmatpush1.bf16.msra.mxu0 0
      %2116 = vmatprep.subr.bf16.mxu0 0
      %2117 = vmatpush1.bf16.msra.mxu0 0
      %2118 = vmatprep.subr.bf16.mxu0 0
      %2119 = vmatpush1.bf16.msra.mxu0 0
      %2120 = vmatprep.subr.bf16.mxu0 0
      %2121 = vmatpush1.bf16.msra.mxu0 0
      %2122 = vmatprep.subr.bf16.mxu0 0
      %2123 = vmatpush1.bf16.msra.mxu0 0
      %2124 = vmatprep.subr.bf16.mxu0 0
      %2125 = vmatpush1.bf16.msra.mxu0 0
      %2126 = vmatprep.subr.bf16.mxu0 0
      %2127 = vmatpush1.bf16.msra.mxu0 0
      %2128 = vmatprep.subr.bf16.mxu0 0
      %2129 = vmatpush1.bf16.msra.mxu0 0
      %2130 = vmatprep.subr.bf16.mxu0 0
      %2131 = vmatpush1.bf16.msra.mxu0 0
      %2132 = vmatprep.subr.bf16.mxu0 0
      %2133 = vmatpush1.bf16.msra.mxu0 0
      %2134 = vmatprep.subr.bf16.mxu0 0
      %2135 = vmatpush1.bf16.msra.mxu0 0
      %2136 = vmatprep.subr.bf16.mxu0 0
      %2137 = vmatpush1.bf16.msra.mxu0 0
      %2138 = vmatprep.subr.bf16.mxu0 0
      %2139 = vmatpush1.bf16.msra.mxu0 0
      %2140 = vmatprep.subr.bf16.mxu0 0
      %2141 = vmatpush1.bf16.msra.mxu0 0
      %2142 = vmatprep.mubr.bf16.mxu0 0
      %2143 = vmatmul.mubr.bf16.gmra.mrb[0].mxu0 %v1580
      %v2144 = vpop.f32.mrb[0].mxu0
      %v2145 = vadd.f32 %v1984, %v2144
      %v2146 = vpop.f32.mrb[0].mxu0
      %v2147 = vpop.f32.mrb[0].mxu0
      %v2148 = vadd.f32 %v1987, %v2147
      %v2149 = vpop.f32.mrb[0].mxu0
      %2150 = vmatprep.mubr.bf16.mxu0 0
      %2151 = vmatmul.mubr.bf16.gmra.mrb[0].mxu0 %v1583
      %v2152 = vpop.f32.mrb[0].mxu0
      %v2153 = vadd.f32 %v1992, %v2152
      %v2154 = vpop.f32.mrb[0].mxu0
      %v2155 = vpop.f32.mrb[0].mxu0
      %v2156 = vadd.f32 %v1995, %v2155
      %v2157 = vpop.f32.mrb[0].mxu0
      %2158 = vmatprep.mubr.bf16.mxu0 0
      %2159 = vmatmul.mubr.bf16.gmra.mrb[0].mxu0 %v1586
      %v2160 = vpop.f32.mrb[0].mxu0
      %v2161 = vadd.f32 %v2000, %v2160
      %v2162 = vpop.f32.mrb[0].mxu0
      %v2163 = vpop.f32.mrb[0].mxu0
      %v2164 = vadd.f32 %v2003, %v2163
      %v2165 = vpop.f32.mrb[0].mxu0
      %2166 = vmatprep.mubr.bf16.mxu0 0
      %2167 = vmatmul.mubr.bf16.gmra.mrb[0].mxu0 %v1589
      %v2168 = vpop.f32.mrb[0].mxu0
      %v2169 = vadd.f32 %v2008, %v2168
      %v2170 = vpop.f32.mrb[0].mxu0
      %v2171 = vpop.f32.mrb[0].mxu0
      %v2172 = vadd.f32 %v2011, %v2171
      %v2173 = vpop.f32.mrb[0].mxu0
      %2174 = vmatprep.mubr.bf16.mxu0 0
      %2175 = vmatmul.mubr.bf16.gmra.mrb[0].mxu0 %v1592
      %v2176 = vpop.f32.mrb[0].mxu0
      %v2177 = vadd.f32 %v2016, %v2176
      %v2178 = vpop.f32.mrb[0].mxu0
      %v2179 = vpop.f32.mrb[0].mxu0
      %v2180 = vadd.f32 %v2019, %v2179
      %v2181 = vpop.f32.mrb[0].mxu0
      %2182 = vmatprep.mubr.bf16.mxu0 0
      %2183 = vmatmul.mubr.bf16.gmra.mrb[0].mxu0 %v1595
      %v2184 = vpop.f32.mrb[0].mxu0
      %v2185 = vadd.f32 %v2024, %v2184
      %v2186 = vpop.f32.mrb[0].mxu0
      %v2187 = vpop.f32.mrb[0].mxu0
      %v2188 = vadd.f32 %v2027, %v2187
      %v2189 = vpop.f32.mrb[0].mxu0
      %2190 = vmatprep.mubr.bf16.mxu0 0
      %2191 = vmatmul.mubr.bf16.gmra.mrb[0].mxu0 %v1598
      %v2192 = vpop.f32.mrb[0].mxu0
      %v2193 = vadd.f32 %v2032, %v2192
      %v2194 = vpop.f32.mrb[0].mxu0
      %v2195 = vpop.f32.mrb[0].mxu0
      %v2196 = vadd.f32 %v2035, %v2195
      %v2197 = vpop.f32.mrb[0].mxu0
      %2198 = vmatprep.mubr.bf16.mxu0 0
      %2199 = vmatmul.mubr.bf16.gmra.mrb[0].mxu0 %v1601
      %v2200 = vpop.f32.mrb[0].mxu0
      %v2201 = vadd.f32 %v2040, %v2200
      %v2202 = vpop.f32.mrb[0].mxu0
      %v2203 = vpop.f32.mrb[0].mxu0
      %v2204 = vadd.f32 %v2043, %v2203
      %v2205 = vpop.f32.mrb[0].mxu0
      %2206 = vmatprep.mubr.bf16.mxu0 0
      %2207 = vmatmul.mubr.bf16.gmra.mrb[0].mxu0 %v1604
      %v2208 = vpop.f32.mrb[0].mxu0
      %v2209 = vadd.f32 %v2048, %v2208
      %v2210 = vpop.f32.mrb[0].mxu0
      %v2211 = vpop.f32.mrb[0].mxu0
      %v2212 = vadd.f32 %v2051, %v2211
      %v2213 = vpop.f32.mrb[0].mxu0
      %2214 = vmatprep.mubr.bf16.mxu0 0
      %2215 = vmatmul.mubr.bf16.gmra.mrb[0].mxu0 %v1607
      %v2216 = vpop.f32.mrb[0].mxu0
      %v2217 = vadd.f32 %v2056, %v2216
      %v2218 = vpop.f32.mrb[0].mxu0
      %v2219 = vpop.f32.mrb[0].mxu0
      %v2220 = vadd.f32 %v2059, %v2219
      %v2221 = vpop.f32.mrb[0].mxu0
      %2222 = vmatprep.mubr.bf16.mxu0 0
      %2223 = vmatmul.mubr.bf16.gmra.mrb[0].mxu0 %v1610
      %v2224 = vpop.f32.mrb[0].mxu0
      %v2225 = vadd.f32 %v2064, %v2224
      %v2226 = vpop.f32.mrb[0].mxu0
      %v2227 = vpop.f32.mrb[0].mxu0
      %v2228 = vadd.f32 %v2067, %v2227
      %v2229 = vpop.f32.mrb[0].mxu0
      %2230 = vmatprep.mubr.bf16.mxu0 0
      %2231 = vmatmul.mubr.bf16.gmra.mrb[0].mxu0 %v1613
      %v2232 = vpop.f32.mrb[0].mxu0
      %v2233 = vadd.f32 %v2072, %v2232
      %v2234 = vpop.f32.mrb[0].mxu0
      %v2235 = vpop.f32.mrb[0].mxu0
      %v2236 = vadd.f32 %v2075, %v2235
      %v2237 = vpop.f32.mrb[0].mxu0
      %2238 = vmatprep.mubr.bf16.mxu0 0
      %2239 = vmatmul.mubr.bf16.gmra.mrb[0].mxu0 %v1616
      %v2240 = vpop.f32.mrb[0].mxu0
      %v2241 = vadd.f32 %v2080, %v2240
      %v2242 = vpop.f32.mrb[0].mxu0
      %v2243 = vpop.f32.mrb[0].mxu0
      %v2244 = vadd.f32 %v2083, %v2243
      %v2245 = vpop.f32.mrb[0].mxu0
      %2246 = vmatprep.mubr.bf16.mxu0 0
      %2247 = vmatmul.mubr.bf16.gmra.mrb[0].mxu0 %v1619
      %v2248 = vpop.f32.mrb[0].mxu0
      %v2249 = vadd.f32 %v2088, %v2248
      %v2250 = vpop.f32.mrb[0].mxu0
      %v2251 = vpop.f32.mrb[0].mxu0
      %v2252 = vadd.f32 %v2091, %v2251
      %v2253 = vpop.f32.mrb[0].mxu0
      %2254 = vmatprep.mubr.bf16.mxu0 0
      %2255 = vmatmul.mubr.bf16.gmra.mrb[0].mxu0 %v1622
      %v2256 = vpop.f32.mrb[0].mxu0
      %v2257 = vadd.f32 %v2096, %v2256
      %v2258 = vpop.f32.mrb[0].mxu0
      %v2259 = vpop.f32.mrb[0].mxu0
      %v2260 = vadd.f32 %v2099, %v2259
      %v2261 = vpop.f32.mrb[0].mxu0
      %2262 = vmatprep.mubr.bf16.mxu0 0
      %2263 = vmatmul.mubr.bf16.gmra.mrb[0].mxu0 %v1625
      %v2264 = vpop.f32.mrb[0].mxu0
      %v2265 = vadd.f32 %v2104, %v2264
      %v2266 = vpop.f32.mrb[0].mxu0
      %v2267 = vpop.f32.mrb[0].mxu0
      %v2268 = vadd.f32 %v2107, %v2267
      %v2269 = vpop.f32.mrb[0].mxu0
      %2270 = vdwg.mxu0
      %v2271 = vmax.f32 %v2145, 0.0
      %v2272 = vmax.f32 %v2148, 0.0
      %v2273 = vmax.f32 %v2153, 0.0
      %v2274 = vmax.f32 %v2156, 0.0
      %v2275 = vmax.f32 %v2161, 0.0
      %v2276 = vmax.f32 %v2164, 0.0
      %v2277 = vmax.f32 %v2169, 0.0
      %v2278 = vmax.f32 %v2172, 0.0
      %v2279 = vmax.f32 %v2177, 0.0
      %v2280 = vmax.f32 %v2180, 0.0
      %v2281 = vmax.f32 %v2185, 0.0
      %v2282 = vmax.f32 %v2188, 0.0
      %v2283 = vmax.f32 %v2193, 0.0
      %v2284 = vmax.f32 %v2196, 0.0
      %v2285 = vmax.f32 %v2201, 0.0
      %v2286 = vmax.f32 %v2204, 0.0
      %v2287 = vmax.f32 %v2209, 0.0
      %v2288 = vmax.f32 %v2212, 0.0
      %v2289 = vmax.f32 %v2217, 0.0
      %v2290 = vmax.f32 %v2220, 0.0
      %v2291 = vmax.f32 %v2225, 0.0
      %v2292 = vmax.f32 %v2228, 0.0
      %v2293 = vmax.f32 %v2233, 0.0
      %v2294 = vmax.f32 %v2236, 0.0
      %v2295 = vmax.f32 %v2241, 0.0
      %v2296 = vmax.f32 %v2244, 0.0
      %v2297 = vmax.f32 %v2249, 0.0
      %v2298 = vmax.f32 %v2252, 0.0
      %v2299 = vmax.f32 %v2257, 0.0
      %v2300 = vmax.f32 %v2260, 0.0
      %v2301 = vmax.f32 %v2265, 0.0
      %v2302 = vmax.f32 %v2268, 0.0
      %v2303 = vld [vmem:[%s3] sm:$0xf]
      %v2304 = vld [vmem:[%s3 + $0x4] sm:$0xf]
      %v2305 = vld [vmem:[%s3 + $0x8] sm:$0xf]
      %v2306 = vld [vmem:[%s3 + $0xc] sm:$0xf]
      %v2307 = vld [vmem:[%s3 + $0x10] sm:$0xf]
      %v2308 = vld [vmem:[%s3 + $0x14] sm:$0xf]
      %v2309 = vld [vmem:[%s3 + $0x18] sm:$0xf]
      %v2310 = vld [vmem:[%s3 + $0x1c] sm:$0xf]
      %v2311 = vld [vmem:[%s4] sm:$0x1]
      %v2312 = vpack.c.bf16 %v2272, %v2271
      %v2313 = vpack.c.bf16 %v2274, %v2273
      %v2314 = vpack.c.bf16 %v2276, %v2275
      %v2315 = vpack.c.bf16 %v2278, %v2277
      %v2316 = vpack.c.bf16 %v2280, %v2279
      %v2317 = vpack.c.bf16 %v2282, %v2281
      %v2318 = vpack.c.bf16 %v2284, %v2283
      %v2319 = vpack.c.bf16 %v2286, %v2285
      %v2320 = vpack.c.bf16 %v2288, %v2287
      %v2321 = vpack.c.bf16 %v2290, %v2289
      %v2322 = vpack.c.bf16 %v2292, %v2291
      %v2323 = vpack.c.bf16 %v2294, %v2293
      %v2324 = vpack.c.bf16 %v2296, %v2295
      %v2325 = vpack.c.bf16 %v2298, %v2297
      %v2326 = vpack.c.bf16 %v2300, %v2299
      %v2327 = vpack.c.bf16 %v2302, %v2301
      %v2329 = vlaneseq
      %v2330 = vshrl.u32 %v2329, 7
      %v2331 = vsub.s32 0, %v2330
      %v2332 = vrot.slane %v2311, %v2331
      %v2342 = vunpack.c.l.b16 %v2303
      %v2343 = vunpack.c.l.b16 %v2304
      %v2344 = vunpack.c.l.b16 %v2305
      %v2345 = vunpack.c.l.b16 %v2306
      %v2346 = vunpack.c.l.b16 %v2307
      %v2347 = vunpack.c.l.b16 %v2308
      %v2348 = vunpack.c.l.b16 %v2309
      %v2349 = vunpack.c.l.b16 %v2310
      %v2350 = vpack.c.b16 %v2343, %v2342
      %v2351 = vpack.c.b16 %v2345, %v2344
      %v2352 = vpack.c.b16 %v2347, %v2346
      %v2353 = vpack.c.b16 %v2349, %v2348
      %vm2358 = vcmask 523264
      %v2360 = vsel %vm2358, %v2312, 0
      %v2363 = vsel %vm2358, %v2313, 0
      %v2366 = vsel %vm2358, %v2314, 0
      %v2369 = vsel %vm2358, %v2315, 0
      %v2372 = vsel %vm2358, %v2316, 0
      %v2375 = vsel %vm2358, %v2317, 0
      %v2378 = vsel %vm2358, %v2318, 0
      %v2381 = vsel %vm2358, %v2319, 0
      %v2384 = vsel %vm2358, %v2320, 0
      %v2387 = vsel %vm2358, %v2321, 0
      %v2390 = vsel %vm2358, %v2322, 0
      %v2393 = vsel %vm2358, %v2323, 0
      %v2396 = vsel %vm2358, %v2324, 0
      %v2399 = vsel %vm2358, %v2325, 0
      %v2402 = vsel %vm2358, %v2326, 0
      %v2405 = vsel %vm2358, %v2327, 0
      %2407 = vmatprep.subr.bf16.mxu0 0
      %2408 = vmatpush1.bf16.msra.mxu0 %v2350
      %2409 = vmatprep.subr.bf16.mxu0 0
      %2410 = vmatpush1.bf16.msra.mxu0 %v2351
      %2411 = vmatprep.subr.bf16.mxu0 0
      %2412 = vmatpush1.bf16.msra.mxu0 %v2352
      %2413 = vmatprep.subr.bf16.mxu0 0
      %2414 = vmatpush1.bf16.msra.mxu0 %v2353
      %2415 = vmatprep.subr.bf16.mxu0 0
      %2416 = vmatpush1.bf16.msra.mxu0 0
      %2417 = vmatprep.subr.bf16.mxu0 0
      %2418 = vmatpush1.bf16.msra.mxu0 0
      %2419 = vmatprep.subr.bf16.mxu0 0
      %2420 = vmatpush1.bf16.msra.mxu0 0
      %2421 = vmatprep.subr.bf16.mxu0 0
      %2422 = vmatpush1.bf16.msra.mxu0 0
      %2423 = vmatprep.subr.bf16.mxu0 0
      %2424 = vmatpush1.bf16.msra.mxu0 0
      %2425 = vmatprep.subr.bf16.mxu0 0
      %2426 = vmatpush1.bf16.msra.mxu0 0
      %2427 = vmatprep.subr.bf16.mxu0 0
      %2428 = vmatpush1.bf16.msra.mxu0 0
      %2429 = vmatprep.subr.bf16.mxu0 0
      %2430 = vmatpush1.bf16.msra.mxu0 0
      %2431 = vmatprep.subr.bf16.mxu0 0
      %2432 = vmatpush1.bf16.msra.mxu0 0
      %2433 = vmatprep.subr.bf16.mxu0 0
      %2434 = vmatpush1.bf16.msra.mxu0 0
      %2435 = vmatprep.subr.bf16.mxu0 0
      %2436 = vmatpush1.bf16.msra.mxu0 0
      %2437 = vmatprep.subr.bf16.mxu0 0
      %2438 = vmatpush1.bf16.msra.mxu0 0
      %2439 = vmatprep.mubr.bf16.mxu0 0
      %2440 = vmatmul.mubr.bf16.gmra.mrb[0].mxu0 %v2360
      %v2441 = vpop.f32.mrb[0].mxu0
      %v2442 = vadd.f32 %v2332, %v2441
      %v2443 = vpop.f32.mrb[0].mxu0
      %v2444 = vpop.f32.mrb[0].mxu0
      %v2445 = vadd.f32 %v2332, %v2444
      %v2446 = vpop.f32.mrb[0].mxu0
      %2447 = vmatprep.mubr.bf16.mxu0 0
      %2448 = vmatmul.mubr.bf16.gmra.mrb[0].mxu0 %v2363
      %v2449 = vpop.f32.mrb[0].mxu0
      %v2450 = vadd.f32 %v2332, %v2449
      %v2451 = vpop.f32.mrb[0].mxu0
      %v2452 = vpop.f32.mrb[0].mxu0
      %v2453 = vadd.f32 %v2332, %v2452
      %v2454 = vpop.f32.mrb[0].mxu0
      %2455 = vmatprep.mubr.bf16.mxu0 0
      %2456 = vmatmul.mubr.bf16.gmra.mrb[0].mxu0 %v2366
      %v2457 = vpop.f32.mrb[0].mxu0
      %v2458 = vadd.f32 %v2332, %v2457
      %v2459 = vpop.f32.mrb[0].mxu0
      %v2460 = vpop.f32.mrb[0].mxu0
      %v2461 = vadd.f32 %v2332, %v2460
      %v2462 = vpop.f32.mrb[0].mxu0
      %2463 = vmatprep.mubr.bf16.mxu0 0
      %2464 = vmatmul.mubr.bf16.gmra.mrb[0].mxu0 %v2369
      %v2465 = vpop.f32.mrb[0].mxu0
      %v2466 = vadd.f32 %v2332, %v2465
      %v2467 = vpop.f32.mrb[0].mxu0
      %v2468 = vpop.f32.mrb[0].mxu0
      %v2469 = vadd.f32 %v2332, %v2468
      %v2470 = vpop.f32.mrb[0].mxu0
      %2471 = vmatprep.mubr.bf16.mxu0 0
      %2472 = vmatmul.mubr.bf16.gmra.mrb[0].mxu0 %v2372
      %v2473 = vpop.f32.mrb[0].mxu0
      %v2474 = vadd.f32 %v2332, %v2473
      %v2475 = vpop.f32.mrb[0].mxu0
      %v2476 = vpop.f32.mrb[0].mxu0
      %v2477 = vadd.f32 %v2332, %v2476
      %v2478 = vpop.f32.mrb[0].mxu0
      %2479 = vmatprep.mubr.bf16.mxu0 0
      %2480 = vmatmul.mubr.bf16.gmra.mrb[0].mxu0 %v2375
      %v2481 = vpop.f32.mrb[0].mxu0
      %v2482 = vadd.f32 %v2332, %v2481
      %v2483 = vpop.f32.mrb[0].mxu0
      %v2484 = vpop.f32.mrb[0].mxu0
      %v2485 = vadd.f32 %v2332, %v2484
      %v2486 = vpop.f32.mrb[0].mxu0
      %2487 = vmatprep.mubr.bf16.mxu0 0
      %2488 = vmatmul.mubr.bf16.gmra.mrb[0].mxu0 %v2378
      %v2489 = vpop.f32.mrb[0].mxu0
      %v2490 = vadd.f32 %v2332, %v2489
      %v2491 = vpop.f32.mrb[0].mxu0
      %v2492 = vpop.f32.mrb[0].mxu0
      %v2493 = vadd.f32 %v2332, %v2492
      %v2494 = vpop.f32.mrb[0].mxu0
      %2495 = vmatprep.mubr.bf16.mxu0 0
      %2496 = vmatmul.mubr.bf16.gmra.mrb[0].mxu0 %v2381
      %v2497 = vpop.f32.mrb[0].mxu0
      %v2498 = vadd.f32 %v2332, %v2497
      %v2499 = vpop.f32.mrb[0].mxu0
      %v2500 = vpop.f32.mrb[0].mxu0
      %v2501 = vadd.f32 %v2332, %v2500
      %v2502 = vpop.f32.mrb[0].mxu0
      %2503 = vmatprep.mubr.bf16.mxu0 0
      %2504 = vmatmul.mubr.bf16.gmra.mrb[0].mxu0 %v2384
      %v2505 = vpop.f32.mrb[0].mxu0
      %v2506 = vadd.f32 %v2332, %v2505
      %v2507 = vpop.f32.mrb[0].mxu0
      %v2508 = vpop.f32.mrb[0].mxu0
      %v2509 = vadd.f32 %v2332, %v2508
      %v2510 = vpop.f32.mrb[0].mxu0
      %2511 = vmatprep.mubr.bf16.mxu0 0
      %2512 = vmatmul.mubr.bf16.gmra.mrb[0].mxu0 %v2387
      %v2513 = vpop.f32.mrb[0].mxu0
      %v2514 = vadd.f32 %v2332, %v2513
      %v2515 = vpop.f32.mrb[0].mxu0
      %v2516 = vpop.f32.mrb[0].mxu0
      %v2517 = vadd.f32 %v2332, %v2516
      %v2518 = vpop.f32.mrb[0].mxu0
      %2519 = vmatprep.mubr.bf16.mxu0 0
      %2520 = vmatmul.mubr.bf16.gmra.mrb[0].mxu0 %v2390
      %v2521 = vpop.f32.mrb[0].mxu0
      %v2522 = vadd.f32 %v2332, %v2521
      %v2523 = vpop.f32.mrb[0].mxu0
      %v2524 = vpop.f32.mrb[0].mxu0
      %v2525 = vadd.f32 %v2332, %v2524
      %v2526 = vpop.f32.mrb[0].mxu0
      %2527 = vmatprep.mubr.bf16.mxu0 0
      %2528 = vmatmul.mubr.bf16.gmra.mrb[0].mxu0 %v2393
      %v2529 = vpop.f32.mrb[0].mxu0
      %v2530 = vadd.f32 %v2332, %v2529
      %v2531 = vpop.f32.mrb[0].mxu0
      %v2532 = vpop.f32.mrb[0].mxu0
      %v2533 = vadd.f32 %v2332, %v2532
      %v2534 = vpop.f32.mrb[0].mxu0
      %2535 = vmatprep.mubr.bf16.mxu0 0
      %2536 = vmatmul.mubr.bf16.gmra.mrb[0].mxu0 %v2396
      %v2537 = vpop.f32.mrb[0].mxu0
      %v2538 = vadd.f32 %v2332, %v2537
      %v2539 = vpop.f32.mrb[0].mxu0
      %v2540 = vpop.f32.mrb[0].mxu0
      %v2541 = vadd.f32 %v2332, %v2540
      %v2542 = vpop.f32.mrb[0].mxu0
      %2543 = vmatprep.mubr.bf16.mxu0 0
      %2544 = vmatmul.mubr.bf16.gmra.mrb[0].mxu0 %v2399
      %v2545 = vpop.f32.mrb[0].mxu0
      %v2546 = vadd.f32 %v2332, %v2545
      %v2547 = vpop.f32.mrb[0].mxu0
      %v2548 = vpop.f32.mrb[0].mxu0
      %v2549 = vadd.f32 %v2332, %v2548
      %v2550 = vpop.f32.mrb[0].mxu0
      %2551 = vmatprep.mubr.bf16.mxu0 0
      %2552 = vmatmul.mubr.bf16.gmra.mrb[0].mxu0 %v2402
      %v2553 = vpop.f32.mrb[0].mxu0
      %v2554 = vadd.f32 %v2332, %v2553
      %v2555 = vpop.f32.mrb[0].mxu0
      %v2556 = vpop.f32.mrb[0].mxu0
      %v2557 = vadd.f32 %v2332, %v2556
      %v2558 = vpop.f32.mrb[0].mxu0
      %2559 = vmatprep.mubr.bf16.mxu0 0
      %2560 = vmatmul.mubr.bf16.gmra.mrb[0].mxu0 %v2405
      %v2561 = vpop.f32.mrb[0].mxu0
      %v2562 = vadd.f32 %v2332, %v2561
      %v2563 = vpop.f32.mrb[0].mxu0
      %v2564 = vpop.f32.mrb[0].mxu0
      %v2565 = vadd.f32 %v2332, %v2564
      %v2566 = vpop.f32.mrb[0].mxu0
      %2567 = vdwg.mxu0
      %v2568 = vmax.f32 %v2442, 0.0
      %v2569 = vmax.f32 %v2445, 0.0
      %v2570 = vmax.f32 %v2450, 0.0
      %v2571 = vmax.f32 %v2453, 0.0
      %v2572 = vmax.f32 %v2458, 0.0
      %v2573 = vmax.f32 %v2461, 0.0
      %v2574 = vmax.f32 %v2466, 0.0
      %v2575 = vmax.f32 %v2469, 0.0
      %v2576 = vmax.f32 %v2474, 0.0
      %v2577 = vmax.f32 %v2477, 0.0
      %v2578 = vmax.f32 %v2482, 0.0
      %v2579 = vmax.f32 %v2485, 0.0
      %v2580 = vmax.f32 %v2490, 0.0
      %v2581 = vmax.f32 %v2493, 0.0
      %v2582 = vmax.f32 %v2498, 0.0
      %v2583 = vmax.f32 %v2501, 0.0
      %v2584 = vmax.f32 %v2506, 0.0
      %v2585 = vmax.f32 %v2509, 0.0
      %v2586 = vmax.f32 %v2514, 0.0
      %v2587 = vmax.f32 %v2517, 0.0
      %v2588 = vmax.f32 %v2522, 0.0
      %v2589 = vmax.f32 %v2525, 0.0
      %v2590 = vmax.f32 %v2530, 0.0
      %v2591 = vmax.f32 %v2533, 0.0
      %v2592 = vmax.f32 %v2538, 0.0
      %v2593 = vmax.f32 %v2541, 0.0
      %v2594 = vmax.f32 %v2546, 0.0
      %v2595 = vmax.f32 %v2549, 0.0
      %v2596 = vmax.f32 %v2554, 0.0
      %v2597 = vmax.f32 %v2557, 0.0
      %v2598 = vmax.f32 %v2562, 0.0
      %v2599 = vmax.f32 %v2565, 0.0
      %v2600 = vld [vmem:[%s5] sm:$0xf]
      %v2601 = vld [vmem:[%s5 + $0x4] sm:$0xf]
      %v2602 = vld [vmem:[%s5 + $0x8] sm:$0xf]
      %v2603 = vld [vmem:[%s5 + $0xc] sm:$0xf]
      %v2604 = vld [vmem:[%s6] sm:$0x1]
      %v2605 = vpack.c.bf16 %v2569, %v2568
      %v2606 = vpack.c.bf16 %v2571, %v2570
      %v2607 = vpack.c.bf16 %v2573, %v2572
      %v2608 = vpack.c.bf16 %v2575, %v2574
      %v2609 = vpack.c.bf16 %v2577, %v2576
      %v2610 = vpack.c.bf16 %v2579, %v2578
      %v2611 = vpack.c.bf16 %v2581, %v2580
      %v2612 = vpack.c.bf16 %v2583, %v2582
      %v2613 = vpack.c.bf16 %v2585, %v2584
      %v2614 = vpack.c.bf16 %v2587, %v2586
      %v2615 = vpack.c.bf16 %v2589, %v2588
      %v2616 = vpack.c.bf16 %v2591, %v2590
      %v2617 = vpack.c.bf16 %v2593, %v2592
      %v2618 = vpack.c.bf16 %v2595, %v2594
      %v2619 = vpack.c.bf16 %v2597, %v2596
      %v2620 = vpack.c.bf16 %v2599, %v2598
      %v2622 = vlaneseq
      %v2623 = vshrl.u32 %v2622, 7
      %v2624 = vsub.s32 0, %v2623
      %v2625 = vrot.slane %v2604, %v2624
      %v2631 = vunpack.c.l.b16 %v2600
      %v2632 = vunpack.c.l.b16 %v2601
      %v2633 = vunpack.c.l.b16 %v2602
      %v2634 = vunpack.c.l.b16 %v2603
      %v2635 = vpack.c.b16 %v2632, %v2631
      %v2636 = vpack.c.b16 %v2634, %v2633
      %vm2639 = vcmask 261120
      %v2641 = vsel %vm2639, %v2605, 0
      %v2644 = vsel %vm2639, %v2606, 0
      %v2647 = vsel %vm2639, %v2607, 0
      %v2650 = vsel %vm2639, %v2608, 0
      %v2653 = vsel %vm2639, %v2609, 0
      %v2656 = vsel %vm2639, %v2610, 0
      %v2659 = vsel %vm2639, %v2611, 0
      %v2662 = vsel %vm2639, %v2612, 0
      %v2665 = vsel %vm2639, %v2613, 0
      %v2668 = vsel %vm2639, %v2614, 0
      %v2671 = vsel %vm2639, %v2615, 0
      %v2674 = vsel %vm2639, %v2616, 0
      %v2677 = vsel %vm2639, %v2617, 0
      %v2680 = vsel %vm2639, %v2618, 0
      %v2683 = vsel %vm2639, %v2619, 0
      %v2686 = vsel %vm2639, %v2620, 0
      %2688 = vmatprep.subr.bf16.mxu0 0
      %2689 = vmatpush1.bf16.msra.mxu0 %v2635
      %2690 = vmatprep.subr.bf16.mxu0 0
      %2691 = vmatpush1.bf16.msra.mxu0 %v2636
      %2692 = vmatprep.subr.bf16.mxu0 0
      %2693 = vmatpush1.bf16.msra.mxu0 0
      %2694 = vmatprep.subr.bf16.mxu0 0
      %2695 = vmatpush1.bf16.msra.mxu0 0
      %2696 = vmatprep.subr.bf16.mxu0 0
      %2697 = vmatpush1.bf16.msra.mxu0 0
      %2698 = vmatprep.subr.bf16.mxu0 0
      %2699 = vmatpush1.bf16.msra.mxu0 0
      %2700 = vmatprep.subr.bf16.mxu0 0
      %2701 = vmatpush1.bf16.msra.mxu0 0
      %2702 = vmatprep.subr.bf16.mxu0 0
      %2703 = vmatpush1.bf16.msra.mxu0 0
      %2704 = vmatprep.subr.bf16.mxu0 0
      %2705 = vmatpush1.bf16.msra.mxu0 0
      %2706 = vmatprep.subr.bf16.mxu0 0
      %2707 = vmatpush1.bf16.msra.mxu0 0
      %2708 = vmatprep.subr.bf16.mxu0 0
      %2709 = vmatpush1.bf16.msra.mxu0 0
      %2710 = vmatprep.subr.bf16.mxu0 0
      %2711 = vmatpush1.bf16.msra.mxu0 0
      %2712 = vmatprep.subr.bf16.mxu0 0
      %2713 = vmatpush1.bf16.msra.mxu0 0
      %2714 = vmatprep.subr.bf16.mxu0 0
      %2715 = vmatpush1.bf16.msra.mxu0 0
      %2716 = vmatprep.subr.bf16.mxu0 0
      %2717 = vmatpush1.bf16.msra.mxu0 0
      %2718 = vmatprep.subr.bf16.mxu0 0
      %2719 = vmatpush1.bf16.msra.mxu0 0
      %2720 = vmatprep.mubr.bf16.mxu0 0
      %2721 = vmatmul.mubr.bf16.gmra.mrb[0].mxu0 %v2641
      %v2722 = vpop.f32.mrb[0].mxu0
      %v2723 = vadd.f32 %v2625, %v2722
      %v2724 = vpop.f32.mrb[0].mxu0
      %v2725 = vpop.f32.mrb[0].mxu0
      %v2726 = vadd.f32 %v2625, %v2725
      %v2727 = vpop.f32.mrb[0].mxu0
      %2728 = vmatprep.mubr.bf16.mxu0 0
      %2729 = vmatmul.mubr.bf16.gmra.mrb[0].mxu0 %v2644
      %v2730 = vpop.f32.mrb[0].mxu0
      %v2731 = vadd.f32 %v2625, %v2730
      %v2732 = vpop.f32.mrb[0].mxu0
      %v2733 = vpop.f32.mrb[0].mxu0
      %v2734 = vadd.f32 %v2625, %v2733
      %v2735 = vpop.f32.mrb[0].mxu0
      %2736 = vmatprep.mubr.bf16.mxu0 0
      %2737 = vmatmul.mubr.bf16.gmra.mrb[0].mxu0 %v2647
      %v2738 = vpop.f32.mrb[0].mxu0
      %v2739 = vadd.f32 %v2625, %v2738
      %v2740 = vpop.f32.mrb[0].mxu0
      %v2741 = vpop.f32.mrb[0].mxu0
      %v2742 = vadd.f32 %v2625, %v2741
      %v2743 = vpop.f32.mrb[0].mxu0
      %2744 = vmatprep.mubr.bf16.mxu0 0
      %2745 = vmatmul.mubr.bf16.gmra.mrb[0].mxu0 %v2650
      %v2746 = vpop.f32.mrb[0].mxu0
      %v2747 = vadd.f32 %v2625, %v2746
      %v2748 = vpop.f32.mrb[0].mxu0
      %v2749 = vpop.f32.mrb[0].mxu0
      %v2750 = vadd.f32 %v2625, %v2749
      %v2751 = vpop.f32.mrb[0].mxu0
      %2752 = vmatprep.mubr.bf16.mxu0 0
      %2753 = vmatmul.mubr.bf16.gmra.mrb[0].mxu0 %v2653
      %v2754 = vpop.f32.mrb[0].mxu0
      %v2755 = vadd.f32 %v2625, %v2754
      %v2756 = vpop.f32.mrb[0].mxu0
      %v2757 = vpop.f32.mrb[0].mxu0
      %v2758 = vadd.f32 %v2625, %v2757
      %v2759 = vpop.f32.mrb[0].mxu0
      %2760 = vmatprep.mubr.bf16.mxu0 0
      %2761 = vmatmul.mubr.bf16.gmra.mrb[0].mxu0 %v2656
      %v2762 = vpop.f32.mrb[0].mxu0
      %v2763 = vadd.f32 %v2625, %v2762
      %v2764 = vpop.f32.mrb[0].mxu0
      %v2765 = vpop.f32.mrb[0].mxu0
      %v2766 = vadd.f32 %v2625, %v2765
      %v2767 = vpop.f32.mrb[0].mxu0
      %2768 = vmatprep.mubr.bf16.mxu0 0
      %2769 = vmatmul.mubr.bf16.gmra.mrb[0].mxu0 %v2659
      %v2770 = vpop.f32.mrb[0].mxu0
      %v2771 = vadd.f32 %v2625, %v2770
      %v2772 = vpop.f32.mrb[0].mxu0
      %v2773 = vpop.f32.mrb[0].mxu0
      %v2774 = vadd.f32 %v2625, %v2773
      %v2775 = vpop.f32.mrb[0].mxu0
      %2776 = vmatprep.mubr.bf16.mxu0 0
      %2777 = vmatmul.mubr.bf16.gmra.mrb[0].mxu0 %v2662
      %v2778 = vpop.f32.mrb[0].mxu0
      %v2779 = vadd.f32 %v2625, %v2778
      %v2780 = vpop.f32.mrb[0].mxu0
      %v2781 = vpop.f32.mrb[0].mxu0
      %v2782 = vadd.f32 %v2625, %v2781
      %v2783 = vpop.f32.mrb[0].mxu0
      %2784 = vmatprep.mubr.bf16.mxu0 0
      %2785 = vmatmul.mubr.bf16.gmra.mrb[0].mxu0 %v2665
      %v2786 = vpop.f32.mrb[0].mxu0
      %v2787 = vadd.f32 %v2625, %v2786
      %v2788 = vpop.f32.mrb[0].mxu0
      %v2789 = vpop.f32.mrb[0].mxu0
      %v2790 = vadd.f32 %v2625, %v2789
      %v2791 = vpop.f32.mrb[0].mxu0
      %2792 = vmatprep.mubr.bf16.mxu0 0
      %2793 = vmatmul.mubr.bf16.gmra.mrb[0].mxu0 %v2668
      %v2794 = vpop.f32.mrb[0].mxu0
      %v2795 = vadd.f32 %v2625, %v2794
      %v2796 = vpop.f32.mrb[0].mxu0
      %v2797 = vpop.f32.mrb[0].mxu0
      %v2798 = vadd.f32 %v2625, %v2797
      %v2799 = vpop.f32.mrb[0].mxu0
      %2800 = vmatprep.mubr.bf16.mxu0 0
      %2801 = vmatmul.mubr.bf16.gmra.mrb[0].mxu0 %v2671
      %v2802 = vpop.f32.mrb[0].mxu0
      %v2803 = vadd.f32 %v2625, %v2802
      %v2804 = vpop.f32.mrb[0].mxu0
      %v2805 = vpop.f32.mrb[0].mxu0
      %v2806 = vadd.f32 %v2625, %v2805
      %v2807 = vpop.f32.mrb[0].mxu0
      %2808 = vmatprep.mubr.bf16.mxu0 0
      %2809 = vmatmul.mubr.bf16.gmra.mrb[0].mxu0 %v2674
      %v2810 = vpop.f32.mrb[0].mxu0
      %v2811 = vadd.f32 %v2625, %v2810
      %v2812 = vpop.f32.mrb[0].mxu0
      %v2813 = vpop.f32.mrb[0].mxu0
      %v2814 = vadd.f32 %v2625, %v2813
      %v2815 = vpop.f32.mrb[0].mxu0
      %2816 = vmatprep.mubr.bf16.mxu0 0
      %2817 = vmatmul.mubr.bf16.gmra.mrb[0].mxu0 %v2677
      %v2818 = vpop.f32.mrb[0].mxu0
      %v2819 = vadd.f32 %v2625, %v2818
      %v2820 = vpop.f32.mrb[0].mxu0
      %v2821 = vpop.f32.mrb[0].mxu0
      %v2822 = vadd.f32 %v2625, %v2821
      %v2823 = vpop.f32.mrb[0].mxu0
      %2824 = vmatprep.mubr.bf16.mxu0 0
      %2825 = vmatmul.mubr.bf16.gmra.mrb[0].mxu0 %v2680
      %v2826 = vpop.f32.mrb[0].mxu0
      %v2827 = vadd.f32 %v2625, %v2826
      %v2828 = vpop.f32.mrb[0].mxu0
      %v2829 = vpop.f32.mrb[0].mxu0
      %v2830 = vadd.f32 %v2625, %v2829
      %v2831 = vpop.f32.mrb[0].mxu0
      %2832 = vmatprep.mubr.bf16.mxu0 0
      %2833 = vmatmul.mubr.bf16.gmra.mrb[0].mxu0 %v2683
      %v2834 = vpop.f32.mrb[0].mxu0
      %v2835 = vadd.f32 %v2625, %v2834
      %v2836 = vpop.f32.mrb[0].mxu0
      %v2837 = vpop.f32.mrb[0].mxu0
      %v2838 = vadd.f32 %v2625, %v2837
      %v2839 = vpop.f32.mrb[0].mxu0
      %2840 = vmatprep.mubr.bf16.mxu0 0
      %2841 = vmatmul.mubr.bf16.gmra.mrb[0].mxu0 %v2686
      %v2842 = vpop.f32.mrb[0].mxu0
      %v2843 = vadd.f32 %v2625, %v2842
      %v2844 = vpop.f32.mrb[0].mxu0
      %v2845 = vpop.f32.mrb[0].mxu0
      %v2846 = vadd.f32 %v2625, %v2845
      %v2847 = vpop.f32.mrb[0].mxu0
      %2848 = vdwg.mxu0
      %v2849 = vsel %vm1578, %v2723, 0.0
      %v2850 = vsel %vm1578, %v2726, 0.0
      %v2851 = vadd.f32 %v2849, %v2850
      %v2852 = vsel %vm1578, %v2731, 0.0
      %v2853 = vadd.f32 %v2851, %v2852
      %v2854 = vsel %vm1578, %v2734, 0.0
      %v2855 = vadd.f32 %v2853, %v2854
      %v2856 = vsel %vm1578, %v2739, 0.0
      %v2857 = vadd.f32 %v2855, %v2856
      %v2858 = vsel %vm1578, %v2742, 0.0
      %v2859 = vadd.f32 %v2857, %v2858
      %v2860 = vsel %vm1578, %v2747, 0.0
      %v2861 = vadd.f32 %v2859, %v2860
      %v2862 = vsel %vm1578, %v2750, 0.0
      %v2863 = vadd.f32 %v2861, %v2862
      %v2864 = vsel %vm1578, %v2755, 0.0
      %v2865 = vadd.f32 %v2863, %v2864
      %v2866 = vsel %vm1578, %v2758, 0.0
      %v2867 = vadd.f32 %v2865, %v2866
      %v2868 = vsel %vm1578, %v2763, 0.0
      %v2869 = vadd.f32 %v2867, %v2868
      %v2870 = vsel %vm1578, %v2766, 0.0
      %v2871 = vadd.f32 %v2869, %v2870
      %v2872 = vsel %vm1578, %v2771, 0.0
      %v2873 = vadd.f32 %v2871, %v2872
      %v2874 = vsel %vm1578, %v2774, 0.0
      %v2875 = vadd.f32 %v2873, %v2874
      %v2876 = vsel %vm1578, %v2779, 0.0
      %v2877 = vadd.f32 %v2875, %v2876
      %v2878 = vsel %vm1578, %v2782, 0.0
      %v2879 = vadd.f32 %v2877, %v2878
      %v2880 = vsel %vm1578, %v2787, 0.0
      %v2881 = vadd.f32 %v2879, %v2880
      %v2882 = vsel %vm1578, %v2790, 0.0
      %v2883 = vadd.f32 %v2881, %v2882
      %v2884 = vsel %vm1578, %v2795, 0.0
      %v2885 = vadd.f32 %v2883, %v2884
      %v2886 = vsel %vm1578, %v2798, 0.0
      %v2887 = vadd.f32 %v2885, %v2886
      %v2888 = vsel %vm1578, %v2803, 0.0
      %v2889 = vadd.f32 %v2887, %v2888
      %v2890 = vsel %vm1578, %v2806, 0.0
      %v2891 = vadd.f32 %v2889, %v2890
      %v2892 = vsel %vm1578, %v2811, 0.0
      %v2893 = vadd.f32 %v2891, %v2892
      %v2894 = vsel %vm1578, %v2814, 0.0
      %v2895 = vadd.f32 %v2893, %v2894
      %v2896 = vsel %vm1578, %v2819, 0.0
      %v2897 = vadd.f32 %v2895, %v2896
      %v2898 = vsel %vm1578, %v2822, 0.0
      %v2899 = vadd.f32 %v2897, %v2898
      %v2900 = vsel %vm1578, %v2827, 0.0
      %v2901 = vadd.f32 %v2899, %v2900
      %v2902 = vsel %vm1578, %v2830, 0.0
      %v2903 = vadd.f32 %v2901, %v2902
      %v2904 = vsel %vm1578, %v2835, 0.0
      %v2905 = vadd.f32 %v2903, %v2904
      %v2906 = vsel %vm1578, %v2838, 0.0
      %v2907 = vadd.f32 %v2905, %v2906
      %v2908 = vsel %vm1578, %v2843, 0.0
      %v2909 = vadd.f32 %v2907, %v2908
      %v2910 = vsel %vm1578, %v2846, 0.0
      %v2911 = vadd.f32 %v2909, %v2910
      %2912 = vadd.xlane.f32.xlu0 %v2911
      %v2913 = vpop.xlane.xlu0 %2912
      %v2914 = vrot.slane %v2913, 4
      %v2915 = vadd.f32 %v2913, %v2914
      %v2916 = vrot.slane %v2915, 2
      %v2917 = vadd.f32 %v2915, %v2916
      %v2918 = vrot.slane %v2917, 1
      %v2919 = vadd.f32 %v2917, %v2918
      %s2920 = vtos %v2919
      %v2921 = vrcp.pop 4096.0
      %s2922 = vtos %v2921
      %s2923 = smul.f32 %s2920, %s2922
      %v2924 = vstv %s2923
      %v2925 = vsub.f32 %v2723, %v2924
      %v2926 = vsub.f32 %v2726, %v2924
      %v2927 = vsub.f32 %v2731, %v2924
      %v2928 = vsub.f32 %v2734, %v2924
      %v2929 = vsub.f32 %v2739, %v2924
      %v2930 = vsub.f32 %v2742, %v2924
      %v2931 = vsub.f32 %v2747, %v2924
      %v2932 = vsub.f32 %v2750, %v2924
      %v2933 = vsub.f32 %v2755, %v2924
      %v2934 = vsub.f32 %v2758, %v2924
      %v2935 = vsub.f32 %v2763, %v2924
      %v2936 = vsub.f32 %v2766, %v2924
      %v2937 = vsub.f32 %v2771, %v2924
      %v2938 = vsub.f32 %v2774, %v2924
      %v2939 = vsub.f32 %v2779, %v2924
      %v2940 = vsub.f32 %v2782, %v2924
      %v2941 = vsub.f32 %v2787, %v2924
      %v2942 = vsub.f32 %v2790, %v2924
      %v2943 = vsub.f32 %v2795, %v2924
      %v2944 = vsub.f32 %v2798, %v2924
      %v2945 = vsub.f32 %v2803, %v2924
      %v2946 = vsub.f32 %v2806, %v2924
      %v2947 = vsub.f32 %v2811, %v2924
      %v2948 = vsub.f32 %v2814, %v2924
      %v2949 = vsub.f32 %v2819, %v2924
      %v2950 = vsub.f32 %v2822, %v2924
      %v2951 = vsub.f32 %v2827, %v2924
      %v2952 = vsub.f32 %v2830, %v2924
      %v2953 = vsub.f32 %v2835, %v2924
      %v2954 = vsub.f32 %v2838, %v2924
      %v2955 = vsub.f32 %v2843, %v2924
      %v2956 = vsub.f32 %v2846, %v2924
      %v2957 = vmul.f32 %v2925, %v2925
      %v2958 = vmul.f32 %v2926, %v2926
      %v2959 = vmul.f32 %v2927, %v2927
      %v2960 = vmul.f32 %v2928, %v2928
      %v2961 = vmul.f32 %v2929, %v2929
      %v2962 = vmul.f32 %v2930, %v2930
      %v2963 = vmul.f32 %v2931, %v2931
      %v2964 = vmul.f32 %v2932, %v2932
      %v2965 = vmul.f32 %v2933, %v2933
      %v2966 = vmul.f32 %v2934, %v2934
      %v2967 = vmul.f32 %v2935, %v2935
      %v2968 = vmul.f32 %v2936, %v2936
      %v2969 = vmul.f32 %v2937, %v2937
      %v2970 = vmul.f32 %v2938, %v2938
      %v2971 = vmul.f32 %v2939, %v2939
      %v2972 = vmul.f32 %v2940, %v2940
      %v2973 = vmul.f32 %v2941, %v2941
      %v2974 = vmul.f32 %v2942, %v2942
      %v2975 = vmul.f32 %v2943, %v2943
      %v2976 = vmul.f32 %v2944, %v2944
      %v2977 = vmul.f32 %v2945, %v2945
      %v2978 = vmul.f32 %v2946, %v2946
      %v2979 = vmul.f32 %v2947, %v2947
      %v2980 = vmul.f32 %v2948, %v2948
      %v2981 = vmul.f32 %v2949, %v2949
      %v2982 = vmul.f32 %v2950, %v2950
      %v2983 = vmul.f32 %v2951, %v2951
      %v2984 = vmul.f32 %v2952, %v2952
      %v2985 = vmul.f32 %v2953, %v2953
      %v2986 = vmul.f32 %v2954, %v2954
      %v2987 = vmul.f32 %v2955, %v2955
      %v2988 = vmul.f32 %v2956, %v2956
      %v2989 = vsel %vm1578, %v2957, 0.0
      %2990 = vadd.xlane.f32.xlu0 %v2989
      %v2991 = vpop.xlane.xlu0 %2990
      %v2992 = vsel %vm1578, %v2958, 0.0
      %2993 = vadd.xlane.f32.xlu0 %v2992
      %v2994 = vpop.xlane.xlu0 %2993
      %v2995 = vsel %vm1578, %v2959, 0.0
      %2996 = vadd.xlane.f32.xlu0 %v2995
      %v2997 = vpop.xlane.xlu0 %2996
      %v2998 = vsel %vm1578, %v2960, 0.0
      %2999 = vadd.xlane.f32.xlu0 %v2998
      %v3000 = vpop.xlane.xlu0 %2999
      %v3001 = vsel %vm1578, %v2961, 0.0
      %3002 = vadd.xlane.f32.xlu0 %v3001
      %v3003 = vpop.xlane.xlu0 %3002
      %v3004 = vsel %vm1578, %v2962, 0.0
      %3005 = vadd.xlane.f32.xlu0 %v3004
      %v3006 = vpop.xlane.xlu0 %3005
      %v3007 = vsel %vm1578, %v2963, 0.0
      %3008 = vadd.xlane.f32.xlu0 %v3007
      %v3009 = vpop.xlane.xlu0 %3008
      %v3010 = vsel %vm1578, %v2964, 0.0
      %3011 = vadd.xlane.f32.xlu0 %v3010
      %v3012 = vpop.xlane.xlu0 %3011
      %v3013 = vsel %vm1578, %v2965, 0.0
      %3014 = vadd.xlane.f32.xlu0 %v3013
      %v3015 = vpop.xlane.xlu0 %3014
      %v3016 = vsel %vm1578, %v2966, 0.0
      %3017 = vadd.xlane.f32.xlu0 %v3016
      %v3018 = vpop.xlane.xlu0 %3017
      %v3019 = vsel %vm1578, %v2967, 0.0
      %3020 = vadd.xlane.f32.xlu0 %v3019
      %v3021 = vpop.xlane.xlu0 %3020
      %v3022 = vsel %vm1578, %v2968, 0.0
      %3023 = vadd.xlane.f32.xlu0 %v3022
      %v3024 = vpop.xlane.xlu0 %3023
      %v3025 = vsel %vm1578, %v2969, 0.0
      %3026 = vadd.xlane.f32.xlu0 %v3025
      %v3027 = vpop.xlane.xlu0 %3026
      %v3028 = vsel %vm1578, %v2970, 0.0
      %3029 = vadd.xlane.f32.xlu0 %v3028
      %v3030 = vpop.xlane.xlu0 %3029
      %v3031 = vsel %vm1578, %v2971, 0.0
      %3032 = vadd.xlane.f32.xlu0 %v3031
      %v3033 = vpop.xlane.xlu0 %3032
      %v3034 = vsel %vm1578, %v2972, 0.0
      %3035 = vadd.xlane.f32.xlu0 %v3034
      %v3036 = vpop.xlane.xlu0 %3035
      %v3037 = vsel %vm1578, %v2973, 0.0
      %3038 = vadd.xlane.f32.xlu0 %v3037
      %v3039 = vpop.xlane.xlu0 %3038
      %v3040 = vsel %vm1578, %v2974, 0.0
      %3041 = vadd.xlane.f32.xlu0 %v3040
      %v3042 = vpop.xlane.xlu0 %3041
      %v3043 = vsel %vm1578, %v2975, 0.0
      %3044 = vadd.xlane.f32.xlu0 %v3043
      %v3045 = vpop.xlane.xlu0 %3044
      %v3046 = vsel %vm1578, %v2976, 0.0
      %3047 = vadd.xlane.f32.xlu0 %v3046
      %v3048 = vpop.xlane.xlu0 %3047
      %v3049 = vsel %vm1578, %v2977, 0.0
      %3050 = vadd.xlane.f32.xlu0 %v3049
      %v3051 = vpop.xlane.xlu0 %3050
      %v3052 = vsel %vm1578, %v2978, 0.0
      %3053 = vadd.xlane.f32.xlu0 %v3052
      %v3054 = vpop.xlane.xlu0 %3053
      %v3055 = vsel %vm1578, %v2979, 0.0
      %3056 = vadd.xlane.f32.xlu0 %v3055
      %v3057 = vpop.xlane.xlu0 %3056
      %v3058 = vsel %vm1578, %v2980, 0.0
      %3059 = vadd.xlane.f32.xlu0 %v3058
      %v3060 = vpop.xlane.xlu0 %3059
      %v3061 = vsel %vm1578, %v2981, 0.0
      %3062 = vadd.xlane.f32.xlu0 %v3061
      %v3063 = vpop.xlane.xlu0 %3062
      %v3064 = vsel %vm1578, %v2982, 0.0
      %3065 = vadd.xlane.f32.xlu0 %v3064
      %v3066 = vpop.xlane.xlu0 %3065
      %v3067 = vsel %vm1578, %v2983, 0.0
      %3068 = vadd.xlane.f32.xlu0 %v3067
      %v3069 = vpop.xlane.xlu0 %3068
      %v3070 = vsel %vm1578, %v2984, 0.0
      %3071 = vadd.xlane.f32.xlu0 %v3070
      %v3072 = vpop.xlane.xlu0 %3071
      %v3073 = vsel %vm1578, %v2985, 0.0
      %3074 = vadd.xlane.f32.xlu0 %v3073
      %v3075 = vpop.xlane.xlu0 %3074
      %v3076 = vsel %vm1578, %v2986, 0.0
      %3077 = vadd.xlane.f32.xlu0 %v3076
      %v3078 = vpop.xlane.xlu0 %3077
      %v3079 = vsel %vm1578, %v2987, 0.0
      %3080 = vadd.xlane.f32.xlu0 %v3079
      %v3081 = vpop.xlane.xlu0 %3080
      %v3082 = vsel %vm1578, %v2988, 0.0
      %3083 = vadd.xlane.f32.xlu0 %v3082
      %v3084 = vpop.xlane.xlu0 %3083
      %v3085 = vrsqrt.pop %v2991
      %v3086 = vrsqrt.pop %v2994
      %v3087 = vrsqrt.pop %v2997
      %v3088 = vrsqrt.pop %v3000
      %v3089 = vrsqrt.pop %v3003
      %v3090 = vrsqrt.pop %v3006
      %v3091 = vrsqrt.pop %v3009
      %v3092 = vrsqrt.pop %v3012
      %v3093 = vrsqrt.pop %v3015
      %v3094 = vrsqrt.pop %v3018
      %v3095 = vrsqrt.pop %v3021
      %v3096 = vrsqrt.pop %v3024
      %v3097 = vrsqrt.pop %v3027
      %v3098 = vrsqrt.pop %v3030
      %v3099 = vrsqrt.pop %v3033
      %v3100 = vrsqrt.pop %v3036
      %v3101 = vrsqrt.pop %v3039
      %v3102 = vrsqrt.pop %v3042
      %v3103 = vrsqrt.pop %v3045
      %v3104 = vrsqrt.pop %v3048
      %v3105 = vrsqrt.pop %v3051
      %v3106 = vrsqrt.pop %v3054
      %v3107 = vrsqrt.pop %v3057
      %v3108 = vrsqrt.pop %v3060
      %v3109 = vrsqrt.pop %v3063
      %v3110 = vrsqrt.pop %v3066
      %v3111 = vrsqrt.pop %v3069
      %v3112 = vrsqrt.pop %v3072
      %v3113 = vrsqrt.pop %v3075
      %v3114 = vrsqrt.pop %v3078
      %v3115 = vrsqrt.pop %v3081
      %v3116 = vrsqrt.pop %v3084
      %v3117 = vmul.f32 %v2925, %v3085
      %v3118 = vmul.f32 %v2926, %v3086
      %v3119 = vmul.f32 %v2927, %v3087
      %v3120 = vmul.f32 %v2928, %v3088
      %v3121 = vmul.f32 %v2929, %v3089
      %v3122 = vmul.f32 %v2930, %v3090
      %v3123 = vmul.f32 %v2931, %v3091
      %v3124 = vmul.f32 %v2932, %v3092
      %v3125 = vmul.f32 %v2933, %v3093
      %v3126 = vmul.f32 %v2934, %v3094
      %v3127 = vmul.f32 %v2935, %v3095
      %v3128 = vmul.f32 %v2936, %v3096
      %v3129 = vmul.f32 %v2937, %v3097
      %v3130 = vmul.f32 %v2938, %v3098
      %v3131 = vmul.f32 %v2939, %v3099
      %v3132 = vmul.f32 %v2940, %v3100
      %v3133 = vmul.f32 %v2941, %v3101
      %v3134 = vmul.f32 %v2942, %v3102
      %v3135 = vmul.f32 %v2943, %v3103
      %v3136 = vmul.f32 %v2944, %v3104
      %v3137 = vmul.f32 %v2945, %v3105
      %v3138 = vmul.f32 %v2946, %v3106
      %v3139 = vmul.f32 %v2947, %v3107
      %v3140 = vmul.f32 %v2948, %v3108
      %v3141 = vmul.f32 %v2949, %v3109
      %v3142 = vmul.f32 %v2950, %v3110
      %v3143 = vmul.f32 %v2951, %v3111
      %v3144 = vmul.f32 %v2952, %v3112
      %v3145 = vmul.f32 %v2953, %v3113
      %v3146 = vmul.f32 %v2954, %v3114
      %v3147 = vmul.f32 %v2955, %v3115
      %v3148 = vmul.f32 %v2956, %v3116
      %v3149 = vpack.c.bf16 %v3118, %v3117
      %v3150 = vpack.c.bf16 %v3120, %v3119
      %v3151 = vpack.c.bf16 %v3122, %v3121
      %v3152 = vpack.c.bf16 %v3124, %v3123
      %v3153 = vpack.c.bf16 %v3126, %v3125
      %v3154 = vpack.c.bf16 %v3128, %v3127
      %v3155 = vpack.c.bf16 %v3130, %v3129
      %v3156 = vpack.c.bf16 %v3132, %v3131
      %v3157 = vpack.c.bf16 %v3134, %v3133
      %v3158 = vpack.c.bf16 %v3136, %v3135
      %v3159 = vpack.c.bf16 %v3138, %v3137
      %v3160 = vpack.c.bf16 %v3140, %v3139
      %v3161 = vpack.c.bf16 %v3142, %v3141
      %v3162 = vpack.c.bf16 %v3144, %v3143
      %v3163 = vpack.c.bf16 %v3146, %v3145
      %v3164 = vpack.c.bf16 %v3148, %v3147
      %v3181 = vunpack.c.l.b16 %v3149
      %v3182 = vunpack.c.h.b16 %v3149
      %v3183 = vunpack.c.l.b16 %v3150
      %v3184 = vunpack.c.h.b16 %v3150
      %v3185 = vunpack.c.l.b16 %v3151
      %v3186 = vunpack.c.h.b16 %v3151
      %v3187 = vunpack.c.l.b16 %v3152
      %v3188 = vunpack.c.h.b16 %v3152
      %v3189 = vunpack.c.l.b16 %v3153
      %v3190 = vunpack.c.h.b16 %v3153
      %v3191 = vunpack.c.l.b16 %v3154
      %v3192 = vunpack.c.h.b16 %v3154
      %v3193 = vunpack.c.l.b16 %v3155
      %v3194 = vunpack.c.h.b16 %v3155
      %v3195 = vunpack.c.l.b16 %v3156
      %v3196 = vunpack.c.h.b16 %v3156
      %v3197 = vunpack.c.l.b16 %v3157
      %v3198 = vunpack.c.h.b16 %v3157
      %v3199 = vunpack.c.l.b16 %v3158
      %v3200 = vunpack.c.h.b16 %v3158
      %v3201 = vunpack.c.l.b16 %v3159
      %v3202 = vunpack.c.h.b16 %v3159
      %v3203 = vunpack.c.l.b16 %v3160
      %v3204 = vunpack.c.h.b16 %v3160
      %v3205 = vunpack.c.l.b16 %v3161
      %v3206 = vunpack.c.h.b16 %v3161
      %v3207 = vunpack.c.l.b16 %v3162
      %v3208 = vunpack.c.h.b16 %v3162
      %v3209 = vunpack.c.l.b16 %v3163
      %v3210 = vunpack.c.h.b16 %v3163
      %v3211 = vunpack.c.l.b16 %v3164
      %v3212 = vunpack.c.h.b16 %v3164
      %v3213 = vpack.c.b16 %v3181, %v3181
      %v3214 = vpack.c.b16 %v3182, %v3182
      %v3215 = vpack.c.b16 %v3183, %v3183
      %v3216 = vpack.c.b16 %v3184, %v3184
      %v3217 = vpack.c.b16 %v3185, %v3185
      %v3218 = vpack.c.b16 %v3186, %v3186
      %v3219 = vpack.c.b16 %v3187, %v3187
      %v3220 = vpack.c.b16 %v3188, %v3188
      %v3221 = vpack.c.b16 %v3189, %v3189
      %v3222 = vpack.c.b16 %v3190, %v3190
      %v3223 = vpack.c.b16 %v3191, %v3191
      %v3224 = vpack.c.b16 %v3192, %v3192
      %v3225 = vpack.c.b16 %v3193, %v3193
      %v3226 = vpack.c.b16 %v3194, %v3194
      %v3227 = vpack.c.b16 %v3195, %v3195
      %v3228 = vpack.c.b16 %v3196, %v3196
      %v3229 = vpack.c.b16 %v3197, %v3197
      %v3230 = vpack.c.b16 %v3198, %v3198
      %v3231 = vpack.c.b16 %v3199, %v3199
      %v3232 = vpack.c.b16 %v3200, %v3200
      %v3233 = vpack.c.b16 %v3201, %v3201
      %v3234 = vpack.c.b16 %v3202, %v3202
      %v3235 = vpack.c.b16 %v3203, %v3203
      %v3236 = vpack.c.b16 %v3204, %v3204
      %v3237 = vpack.c.b16 %v3205, %v3205
      %v3238 = vpack.c.b16 %v3206, %v3206
      %v3239 = vpack.c.b16 %v3207, %v3207
      %v3240 = vpack.c.b16 %v3208, %v3208
      %v3241 = vpack.c.b16 %v3209, %v3209
      %v3242 = vpack.c.b16 %v3210, %v3210
      %v3243 = vpack.c.b16 %v3211, %v3211
      %v3244 = vpack.c.b16 %v3212, %v3212
      %vm3277 = vcmask 125952
      %3278 = vst.msk [vmem:[%s481] sm:$0xf] %vm3277, %v3213
      %3279 = vst.msk [vmem:[%s481 + $0x4] sm:$0xf] %vm3277, %v3214
      %3280 = vst.msk [vmem:[%s481 + $0x8] sm:$0xf] %vm3277, %v3215
      %3281 = vst.msk [vmem:[%s481 + $0xc] sm:$0xf] %vm3277, %v3216
      %3282 = vst.msk [vmem:[%s481 + $0x10] sm:$0xf] %vm3277, %v3217
      %3283 = vst.msk [vmem:[%s481 + $0x14] sm:$0xf] %vm3277, %v3218
      %3284 = vst.msk [vmem:[%s481 + $0x18] sm:$0xf] %vm3277, %v3219
      %3285 = vst.msk [vmem:[%s481 + $0x1c] sm:$0xf] %vm3277, %v3220
      %3286 = vst.msk [vmem:[%s481 + $0x20] sm:$0xf] %vm3277, %v3221
      %3287 = vst.msk [vmem:[%s481 + $0x24] sm:$0xf] %vm3277, %v3222
      %3288 = vst.msk [vmem:[%s481 + $0x28] sm:$0xf] %vm3277, %v3223
      %3289 = vst.msk [vmem:[%s481 + $0x2c] sm:$0xf] %vm3277, %v3224
      %3290 = vst.msk [vmem:[%s481 + $0x30] sm:$0xf] %vm3277, %v3225
      %3291 = vst.msk [vmem:[%s481 + $0x34] sm:$0xf] %vm3277, %v3226
      %3292 = vst.msk [vmem:[%s481 + $0x38] sm:$0xf] %vm3277, %v3227
      %3293 = vst.msk [vmem:[%s481 + $0x3c] sm:$0xf] %vm3277, %v3228
      %3294 = vst.msk [vmem:[%s481 + $0x40] sm:$0xf] %vm3277, %v3229
      %3295 = vst.msk [vmem:[%s481 + $0x44] sm:$0xf] %vm3277, %v3230
      %3296 = vst.msk [vmem:[%s481 + $0x48] sm:$0xf] %vm3277, %v3231
      %3297 = vst.msk [vmem:[%s481 + $0x4c] sm:$0xf] %vm3277, %v3232
      %3298 = vst.msk [vmem:[%s481 + $0x50] sm:$0xf] %vm3277, %v3233
      %3299 = vst.msk [vmem:[%s481 + $0x54] sm:$0xf] %vm3277, %v3234
      %3300 = vst.msk [vmem:[%s481 + $0x58] sm:$0xf] %vm3277, %v3235
      %3301 = vst.msk [vmem:[%s481 + $0x5c] sm:$0xf] %vm3277, %v3236
      %3302 = vst.msk [vmem:[%s481 + $0x60] sm:$0xf] %vm3277, %v3237
      %3303 = vst.msk [vmem:[%s481 + $0x64] sm:$0xf] %vm3277, %v3238
      %3304 = vst.msk [vmem:[%s481 + $0x68] sm:$0xf] %vm3277, %v3239
      %3305 = vst.msk [vmem:[%s481 + $0x6c] sm:$0xf] %vm3277, %v3240
      %3306 = vst.msk [vmem:[%s481 + $0x70] sm:$0xf] %vm3277, %v3241
      %3307 = vst.msk [vmem:[%s481 + $0x74] sm:$0xf] %vm3277, %v3242
      %3308 = vst.msk [vmem:[%s481 + $0x78] sm:$0xf] %vm3277, %v3243
      %3309 = vst.msk [vmem:[%s481 + $0x7c] sm:$0xf] %vm3277, %v3244
      %v3310 = vld [vmem:[%s7] sm:$0xf]
      %v3311 = vld [vmem:[%s7 + $0x4] sm:$0xf]
      %v3312 = vld [vmem:[%s8] sm:$0x1]
      %v3314 = vlaneseq
      %v3315 = vshrl.u32 %v3314, 7
      %v3316 = vsub.s32 0, %v3315
      %v3317 = vrot.slane %v3312, %v3316
      %v3321 = vunpack.c.l.b16 %v3310
      %v3322 = vunpack.c.l.b16 %v3311
      %v3323 = vpack.c.b16 %v3322, %v3321
      %v3326 = vsel %vm1578, %v3149, 0
      %v3329 = vsel %vm1578, %v3150, 0
      %v3332 = vsel %vm1578, %v3151, 0
      %v3335 = vsel %vm1578, %v3152, 0
      %v3338 = vsel %vm1578, %v3153, 0
      %v3341 = vsel %vm1578, %v3154, 0
      %v3344 = vsel %vm1578, %v3155, 0
      %v3347 = vsel %vm1578, %v3156, 0
      %v3350 = vsel %vm1578, %v3157, 0
      %v3353 = vsel %vm1578, %v3158, 0
      %v3356 = vsel %vm1578, %v3159, 0
      %v3359 = vsel %vm1578, %v3160, 0
      %v3362 = vsel %vm1578, %v3161, 0
      %v3365 = vsel %vm1578, %v3162, 0
      %v3368 = vsel %vm1578, %v3163, 0
      %v3371 = vsel %vm1578, %v3164, 0
      %3373 = vmatprep.subr.bf16.mxu0 0
      %3374 = vmatpush1.bf16.msra.mxu0 %v3323
      %3375 = vmatprep.subr.bf16.mxu0 0
      %3376 = vmatpush1.bf16.msra.mxu0 0
      %3377 = vmatprep.subr.bf16.mxu0 0
      %3378 = vmatpush1.bf16.msra.mxu0 0
      %3379 = vmatprep.subr.bf16.mxu0 0
      %3380 = vmatpush1.bf16.msra.mxu0 0
      %3381 = vmatprep.subr.bf16.mxu0 0
      %3382 = vmatpush1.bf16.msra.mxu0 0
      %3383 = vmatprep.subr.bf16.mxu0 0
      %3384 = vmatpush1.bf16.msra.mxu0 0
      %3385 = vmatprep.subr.bf16.mxu0 0
      %3386 = vmatpush1.bf16.msra.mxu0 0
      %3387 = vmatprep.subr.bf16.mxu0 0
      %3388 = vmatpush1.bf16.msra.mxu0 0
      %3389 = vmatprep.subr.bf16.mxu0 0
      %3390 = vmatpush1.bf16.msra.mxu0 0
      %3391 = vmatprep.subr.bf16.mxu0 0
      %3392 = vmatpush1.bf16.msra.mxu0 0
      %3393 = vmatprep.subr.bf16.mxu0 0
      %3394 = vmatpush1.bf16.msra.mxu0 0
      %3395 = vmatprep.subr.bf16.mxu0 0
      %3396 = vmatpush1.bf16.msra.mxu0 0
      %3397 = vmatprep.subr.bf16.mxu0 0
      %3398 = vmatpush1.bf16.msra.mxu0 0
      %3399 = vmatprep.subr.bf16.mxu0 0
      %3400 = vmatpush1.bf16.msra.mxu0 0
      %3401 = vmatprep.subr.bf16.mxu0 0
      %3402 = vmatpush1.bf16.msra.mxu0 0
      %3403 = vmatprep.subr.bf16.mxu0 0
      %3404 = vmatpush1.bf16.msra.mxu0 0
      %3405 = vmatprep.mubr.bf16.mxu0 0
      %3406 = vmatmul.mubr.bf16.gmra.mrb[0].mxu0 %v3326
      %v3407 = vpop.f32.mrb[0].mxu0
      %v3408 = vadd.f32 %v3317, %v3407
      %v3409 = vpop.f32.mrb[0].mxu0
      %v3410 = vpop.f32.mrb[0].mxu0
      %v3411 = vadd.f32 %v3317, %v3410
      %v3412 = vpop.f32.mrb[0].mxu0
      %3413 = vmatprep.mubr.bf16.mxu0 0
      %3414 = vmatmul.mubr.bf16.gmra.mrb[0].mxu0 %v3329
      %v3415 = vpop.f32.mrb[0].mxu0
      %v3416 = vadd.f32 %v3317, %v3415
      %v3417 = vpop.f32.mrb[0].mxu0
      %v3418 = vpop.f32.mrb[0].mxu0
      %v3419 = vadd.f32 %v3317, %v3418
      %v3420 = vpop.f32.mrb[0].mxu0
      %3421 = vmatprep.mubr.bf16.mxu0 0
      %3422 = vmatmul.mubr.bf16.gmra.mrb[0].mxu0 %v3332
      %v3423 = vpop.f32.mrb[0].mxu0
      %v3424 = vadd.f32 %v3317, %v3423
      %v3425 = vpop.f32.mrb[0].mxu0
      %v3426 = vpop.f32.mrb[0].mxu0
      %v3427 = vadd.f32 %v3317, %v3426
      %v3428 = vpop.f32.mrb[0].mxu0
      %3429 = vmatprep.mubr.bf16.mxu0 0
      %3430 = vmatmul.mubr.bf16.gmra.mrb[0].mxu0 %v3335
      %v3431 = vpop.f32.mrb[0].mxu0
      %v3432 = vadd.f32 %v3317, %v3431
      %v3433 = vpop.f32.mrb[0].mxu0
      %v3434 = vpop.f32.mrb[0].mxu0
      %v3435 = vadd.f32 %v3317, %v3434
      %v3436 = vpop.f32.mrb[0].mxu0
      %3437 = vmatprep.mubr.bf16.mxu0 0
      %3438 = vmatmul.mubr.bf16.gmra.mrb[0].mxu0 %v3338
      %v3439 = vpop.f32.mrb[0].mxu0
      %v3440 = vadd.f32 %v3317, %v3439
      %v3441 = vpop.f32.mrb[0].mxu0
      %v3442 = vpop.f32.mrb[0].mxu0
      %v3443 = vadd.f32 %v3317, %v3442
      %v3444 = vpop.f32.mrb[0].mxu0
      %3445 = vmatprep.mubr.bf16.mxu0 0
      %3446 = vmatmul.mubr.bf16.gmra.mrb[0].mxu0 %v3341
      %v3447 = vpop.f32.mrb[0].mxu0
      %v3448 = vadd.f32 %v3317, %v3447
      %v3449 = vpop.f32.mrb[0].mxu0
      %v3450 = vpop.f32.mrb[0].mxu0
      %v3451 = vadd.f32 %v3317, %v3450
      %v3452 = vpop.f32.mrb[0].mxu0
      %3453 = vmatprep.mubr.bf16.mxu0 0
      %3454 = vmatmul.mubr.bf16.gmra.mrb[0].mxu0 %v3344
      %v3455 = vpop.f32.mrb[0].mxu0
      %v3456 = vadd.f32 %v3317, %v3455
      %v3457 = vpop.f32.mrb[0].mxu0
      %v3458 = vpop.f32.mrb[0].mxu0
      %v3459 = vadd.f32 %v3317, %v3458
      %v3460 = vpop.f32.mrb[0].mxu0
      %3461 = vmatprep.mubr.bf16.mxu0 0
      %3462 = vmatmul.mubr.bf16.gmra.mrb[0].mxu0 %v3347
      %v3463 = vpop.f32.mrb[0].mxu0
      %v3464 = vadd.f32 %v3317, %v3463
      %v3465 = vpop.f32.mrb[0].mxu0
      %v3466 = vpop.f32.mrb[0].mxu0
      %v3467 = vadd.f32 %v3317, %v3466
      %v3468 = vpop.f32.mrb[0].mxu0
      %3469 = vmatprep.mubr.bf16.mxu0 0
      %3470 = vmatmul.mubr.bf16.gmra.mrb[0].mxu0 %v3350
      %v3471 = vpop.f32.mrb[0].mxu0
      %v3472 = vadd.f32 %v3317, %v3471
      %v3473 = vpop.f32.mrb[0].mxu0
      %v3474 = vpop.f32.mrb[0].mxu0
      %v3475 = vadd.f32 %v3317, %v3474
      %v3476 = vpop.f32.mrb[0].mxu0
      %3477 = vmatprep.mubr.bf16.mxu0 0
      %3478 = vmatmul.mubr.bf16.gmra.mrb[0].mxu0 %v3353
      %v3479 = vpop.f32.mrb[0].mxu0
      %v3480 = vadd.f32 %v3317, %v3479
      %v3481 = vpop.f32.mrb[0].mxu0
      %v3482 = vpop.f32.mrb[0].mxu0
      %v3483 = vadd.f32 %v3317, %v3482
      %v3484 = vpop.f32.mrb[0].mxu0
      %3485 = vmatprep.mubr.bf16.mxu0 0
      %3486 = vmatmul.mubr.bf16.gmra.mrb[0].mxu0 %v3356
      %v3487 = vpop.f32.mrb[0].mxu0
      %v3488 = vadd.f32 %v3317, %v3487
      %v3489 = vpop.f32.mrb[0].mxu0
      %v3490 = vpop.f32.mrb[0].mxu0
      %v3491 = vadd.f32 %v3317, %v3490
      %v3492 = vpop.f32.mrb[0].mxu0
      %3493 = vmatprep.mubr.bf16.mxu0 0
      %3494 = vmatmul.mubr.bf16.gmra.mrb[0].mxu0 %v3359
      %v3495 = vpop.f32.mrb[0].mxu0
      %v3496 = vadd.f32 %v3317, %v3495
      %v3497 = vpop.f32.mrb[0].mxu0
      %v3498 = vpop.f32.mrb[0].mxu0
      %v3499 = vadd.f32 %v3317, %v3498
      %v3500 = vpop.f32.mrb[0].mxu0
      %3501 = vmatprep.mubr.bf16.mxu0 0
      %3502 = vmatmul.mubr.bf16.gmra.mrb[0].mxu0 %v3362
      %v3503 = vpop.f32.mrb[0].mxu0
      %v3504 = vadd.f32 %v3317, %v3503
      %v3505 = vpop.f32.mrb[0].mxu0
      %v3506 = vpop.f32.mrb[0].mxu0
      %v3507 = vadd.f32 %v3317, %v3506
      %v3508 = vpop.f32.mrb[0].mxu0
      %3509 = vmatprep.mubr.bf16.mxu0 0
      %3510 = vmatmul.mubr.bf16.gmra.mrb[0].mxu0 %v3365
      %v3511 = vpop.f32.mrb[0].mxu0
      %v3512 = vadd.f32 %v3317, %v3511
      %v3513 = vpop.f32.mrb[0].mxu0
      %v3514 = vpop.f32.mrb[0].mxu0
      %v3515 = vadd.f32 %v3317, %v3514
      %v3516 = vpop.f32.mrb[0].mxu0
      %3517 = vmatprep.mubr.bf16.mxu0 0
      %3518 = vmatmul.mubr.bf16.gmra.mrb[0].mxu0 %v3368
      %v3519 = vpop.f32.mrb[0].mxu0
      %v3520 = vadd.f32 %v3317, %v3519
      %v3521 = vpop.f32.mrb[0].mxu0
      %v3522 = vpop.f32.mrb[0].mxu0
      %v3523 = vadd.f32 %v3317, %v3522
      %v3524 = vpop.f32.mrb[0].mxu0
      %3525 = vmatprep.mubr.bf16.mxu0 0
      %3526 = vmatmul.mubr.bf16.gmra.mrb[0].mxu0 %v3371
      %v3527 = vpop.f32.mrb[0].mxu0
      %v3528 = vadd.f32 %v3317, %v3527
      %v3529 = vpop.f32.mrb[0].mxu0
      %v3530 = vpop.f32.mrb[0].mxu0
      %v3531 = vadd.f32 %v3317, %v3530
      %v3532 = vpop.f32.mrb[0].mxu0
      %3533 = vdwg.mxu0
      %v3534 = vmax.f32 %v3408, 0.0
      %v3535 = vmax.f32 %v3411, 0.0
      %v3536 = vmax.f32 %v3416, 0.0
      %v3537 = vmax.f32 %v3419, 0.0
      %v3538 = vmax.f32 %v3424, 0.0
      %v3539 = vmax.f32 %v3427, 0.0
      %v3540 = vmax.f32 %v3432, 0.0
      %v3541 = vmax.f32 %v3435, 0.0
      %v3542 = vmax.f32 %v3440, 0.0
      %v3543 = vmax.f32 %v3443, 0.0
      %v3544 = vmax.f32 %v3448, 0.0
      %v3545 = vmax.f32 %v3451, 0.0
      %v3546 = vmax.f32 %v3456, 0.0
      %v3547 = vmax.f32 %v3459, 0.0
      %v3548 = vmax.f32 %v3464, 0.0
      %v3549 = vmax.f32 %v3467, 0.0
      %v3550 = vmax.f32 %v3472, 0.0
      %v3551 = vmax.f32 %v3475, 0.0
      %v3552 = vmax.f32 %v3480, 0.0
      %v3553 = vmax.f32 %v3483, 0.0
      %v3554 = vmax.f32 %v3488, 0.0
      %v3555 = vmax.f32 %v3491, 0.0
      %v3556 = vmax.f32 %v3496, 0.0
      %v3557 = vmax.f32 %v3499, 0.0
      %v3558 = vmax.f32 %v3504, 0.0
      %v3559 = vmax.f32 %v3507, 0.0
      %v3560 = vmax.f32 %v3512, 0.0
      %v3561 = vmax.f32 %v3515, 0.0
      %v3562 = vmax.f32 %v3520, 0.0
      %v3563 = vmax.f32 %v3523, 0.0
      %v3564 = vmax.f32 %v3528, 0.0
      %v3565 = vmax.f32 %v3531, 0.0
      %v3566 = vld [vmem:[%s9] sm:$0xf]
      %v3567 = vld [vmem:[%s9 + $0x4] sm:$0xf]
      %v3568 = vld [vmem:[%s9 + $0x8] sm:$0xf]
      %v3569 = vld [vmem:[%s9 + $0xc] sm:$0xf]
      %v3570 = vld [vmem:[%s10] sm:$0x1]
      %v3571 = vpack.c.bf16 %v3535, %v3534
      %v3572 = vpack.c.bf16 %v3537, %v3536
      %v3573 = vpack.c.bf16 %v3539, %v3538
      %v3574 = vpack.c.bf16 %v3541, %v3540
      %v3575 = vpack.c.bf16 %v3543, %v3542
      %v3576 = vpack.c.bf16 %v3545, %v3544
      %v3577 = vpack.c.bf16 %v3547, %v3546
      %v3578 = vpack.c.bf16 %v3549, %v3548
      %v3579 = vpack.c.bf16 %v3551, %v3550
      %v3580 = vpack.c.bf16 %v3553, %v3552
      %v3581 = vpack.c.bf16 %v3555, %v3554
      %v3582 = vpack.c.bf16 %v3557, %v3556
      %v3583 = vpack.c.bf16 %v3559, %v3558
      %v3584 = vpack.c.bf16 %v3561, %v3560
      %v3585 = vpack.c.bf16 %v3563, %v3562
      %v3586 = vpack.c.bf16 %v3565, %v3564
      %v3588 = vlaneseq
      %v3589 = vshrl.u32 %v3588, 7
      %v3590 = vsub.s32 0, %v3589
      %v3591 = vrot.slane %v3570, %v3590
      %v3597 = vunpack.c.l.b16 %v3566
      %v3598 = vunpack.c.l.b16 %v3567
      %v3599 = vunpack.c.l.b16 %v3568
      %v3600 = vunpack.c.l.b16 %v3569
      %v3601 = vpack.c.b16 %v3598, %v3597
      %v3602 = vpack.c.b16 %v3600, %v3599
      %v3606 = vsel %vm2639, %v3571, 0
      %v3609 = vsel %vm2639, %v3572, 0
      %v3612 = vsel %vm2639, %v3573, 0
      %v3615 = vsel %vm2639, %v3574, 0
      %v3618 = vsel %vm2639, %v3575, 0
      %v3621 = vsel %vm2639, %v3576, 0
      %v3624 = vsel %vm2639, %v3577, 0
      %v3627 = vsel %vm2639, %v3578, 0
      %v3630 = vsel %vm2639, %v3579, 0
      %v3633 = vsel %vm2639, %v3580, 0
      %v3636 = vsel %vm2639, %v3581, 0
      %v3639 = vsel %vm2639, %v3582, 0
      %v3642 = vsel %vm2639, %v3583, 0
      %v3645 = vsel %vm2639, %v3584, 0
      %v3648 = vsel %vm2639, %v3585, 0
      %v3651 = vsel %vm2639, %v3586, 0
      %3653 = vmatprep.subr.bf16.mxu0 0
      %3654 = vmatpush1.bf16.msra.mxu0 %v3601
      %3655 = vmatprep.subr.bf16.mxu0 0
      %3656 = vmatpush1.bf16.msra.mxu0 %v3602
      %3657 = vmatprep.subr.bf16.mxu0 0
      %3658 = vmatpush1.bf16.msra.mxu0 0
      %3659 = vmatprep.subr.bf16.mxu0 0
      %3660 = vmatpush1.bf16.msra.mxu0 0
      %3661 = vmatprep.subr.bf16.mxu0 0
      %3662 = vmatpush1.bf16.msra.mxu0 0
      %3663 = vmatprep.subr.bf16.mxu0 0
      %3664 = vmatpush1.bf16.msra.mxu0 0
      %3665 = vmatprep.subr.bf16.mxu0 0
      %3666 = vmatpush1.bf16.msra.mxu0 0
      %3667 = vmatprep.subr.bf16.mxu0 0
      %3668 = vmatpush1.bf16.msra.mxu0 0
      %3669 = vmatprep.subr.bf16.mxu0 0
      %3670 = vmatpush1.bf16.msra.mxu0 0
      %3671 = vmatprep.subr.bf16.mxu0 0
      %3672 = vmatpush1.bf16.msra.mxu0 0
      %3673 = vmatprep.subr.bf16.mxu0 0
      %3674 = vmatpush1.bf16.msra.mxu0 0
      %3675 = vmatprep.subr.bf16.mxu0 0
      %3676 = vmatpush1.bf16.msra.mxu0 0
      %3677 = vmatprep.subr.bf16.mxu0 0
      %3678 = vmatpush1.bf16.msra.mxu0 0
      %3679 = vmatprep.subr.bf16.mxu0 0
      %3680 = vmatpush1.bf16.msra.mxu0 0
      %3681 = vmatprep.subr.bf16.mxu0 0
      %3682 = vmatpush1.bf16.msra.mxu0 0
      %3683 = vmatprep.subr.bf16.mxu0 0
      %3684 = vmatpush1.bf16.msra.mxu0 0
      %3685 = vmatprep.mubr.bf16.mxu0 0
      %3686 = vmatmul.mubr.bf16.gmra.mrb[0].mxu0 %v3606
      %v3687 = vpop.f32.mrb[0].mxu0
      %v3688 = vadd.f32 %v3591, %v3687
      %v3689 = vpop.f32.mrb[0].mxu0
      %v3690 = vpop.f32.mrb[0].mxu0
      %v3691 = vadd.f32 %v3591, %v3690
      %v3692 = vpop.f32.mrb[0].mxu0
      %3693 = vmatprep.mubr.bf16.mxu0 0
      %3694 = vmatmul.mubr.bf16.gmra.mrb[0].mxu0 %v3609
      %v3695 = vpop.f32.mrb[0].mxu0
      %v3696 = vadd.f32 %v3591, %v3695
      %v3697 = vpop.f32.mrb[0].mxu0
      %v3698 = vpop.f32.mrb[0].mxu0
      %v3699 = vadd.f32 %v3591, %v3698
      %v3700 = vpop.f32.mrb[0].mxu0
      %3701 = vmatprep.mubr.bf16.mxu0 0
      %3702 = vmatmul.mubr.bf16.gmra.mrb[0].mxu0 %v3612
      %v3703 = vpop.f32.mrb[0].mxu0
      %v3704 = vadd.f32 %v3591, %v3703
      %v3705 = vpop.f32.mrb[0].mxu0
      %v3706 = vpop.f32.mrb[0].mxu0
      %v3707 = vadd.f32 %v3591, %v3706
      %v3708 = vpop.f32.mrb[0].mxu0
      %3709 = vmatprep.mubr.bf16.mxu0 0
      %3710 = vmatmul.mubr.bf16.gmra.mrb[0].mxu0 %v3615
      %v3711 = vpop.f32.mrb[0].mxu0
      %v3712 = vadd.f32 %v3591, %v3711
      %v3713 = vpop.f32.mrb[0].mxu0
      %v3714 = vpop.f32.mrb[0].mxu0
      %v3715 = vadd.f32 %v3591, %v3714
      %v3716 = vpop.f32.mrb[0].mxu0
      %3717 = vmatprep.mubr.bf16.mxu0 0
      %3718 = vmatmul.mubr.bf16.gmra.mrb[0].mxu0 %v3618
      %v3719 = vpop.f32.mrb[0].mxu0
      %v3720 = vadd.f32 %v3591, %v3719
      %v3721 = vpop.f32.mrb[0].mxu0
      %v3722 = vpop.f32.mrb[0].mxu0
      %v3723 = vadd.f32 %v3591, %v3722
      %v3724 = vpop.f32.mrb[0].mxu0
      %3725 = vmatprep.mubr.bf16.mxu0 0
      %3726 = vmatmul.mubr.bf16.gmra.mrb[0].mxu0 %v3621
      %v3727 = vpop.f32.mrb[0].mxu0
      %v3728 = vadd.f32 %v3591, %v3727
      %v3729 = vpop.f32.mrb[0].mxu0
      %v3730 = vpop.f32.mrb[0].mxu0
      %v3731 = vadd.f32 %v3591, %v3730
      %v3732 = vpop.f32.mrb[0].mxu0
      %3733 = vmatprep.mubr.bf16.mxu0 0
      %3734 = vmatmul.mubr.bf16.gmra.mrb[0].mxu0 %v3624
      %v3735 = vpop.f32.mrb[0].mxu0
      %v3736 = vadd.f32 %v3591, %v3735
      %v3737 = vpop.f32.mrb[0].mxu0
      %v3738 = vpop.f32.mrb[0].mxu0
      %v3739 = vadd.f32 %v3591, %v3738
      %v3740 = vpop.f32.mrb[0].mxu0
      %3741 = vmatprep.mubr.bf16.mxu0 0
      %3742 = vmatmul.mubr.bf16.gmra.mrb[0].mxu0 %v3627
      %v3743 = vpop.f32.mrb[0].mxu0
      %v3744 = vadd.f32 %v3591, %v3743
      %v3745 = vpop.f32.mrb[0].mxu0
      %v3746 = vpop.f32.mrb[0].mxu0
      %v3747 = vadd.f32 %v3591, %v3746
      %v3748 = vpop.f32.mrb[0].mxu0
      %3749 = vmatprep.mubr.bf16.mxu0 0
      %3750 = vmatmul.mubr.bf16.gmra.mrb[0].mxu0 %v3630
      %v3751 = vpop.f32.mrb[0].mxu0
      %v3752 = vadd.f32 %v3591, %v3751
      %v3753 = vpop.f32.mrb[0].mxu0
      %v3754 = vpop.f32.mrb[0].mxu0
      %v3755 = vadd.f32 %v3591, %v3754
      %v3756 = vpop.f32.mrb[0].mxu0
      %3757 = vmatprep.mubr.bf16.mxu0 0
      %3758 = vmatmul.mubr.bf16.gmra.mrb[0].mxu0 %v3633
      %v3759 = vpop.f32.mrb[0].mxu0
      %v3760 = vadd.f32 %v3591, %v3759
      %v3761 = vpop.f32.mrb[0].mxu0
      %v3762 = vpop.f32.mrb[0].mxu0
      %v3763 = vadd.f32 %v3591, %v3762
      %v3764 = vpop.f32.mrb[0].mxu0
      %3765 = vmatprep.mubr.bf16.mxu0 0
      %3766 = vmatmul.mubr.bf16.gmra.mrb[0].mxu0 %v3636
      %v3767 = vpop.f32.mrb[0].mxu0
      %v3768 = vadd.f32 %v3591, %v3767
      %v3769 = vpop.f32.mrb[0].mxu0
      %v3770 = vpop.f32.mrb[0].mxu0
      %v3771 = vadd.f32 %v3591, %v3770
      %v3772 = vpop.f32.mrb[0].mxu0
      %3773 = vmatprep.mubr.bf16.mxu0 0
      %3774 = vmatmul.mubr.bf16.gmra.mrb[0].mxu0 %v3639
      %v3775 = vpop.f32.mrb[0].mxu0
      %v3776 = vadd.f32 %v3591, %v3775
      %v3777 = vpop.f32.mrb[0].mxu0
      %v3778 = vpop.f32.mrb[0].mxu0
      %v3779 = vadd.f32 %v3591, %v3778
      %v3780 = vpop.f32.mrb[0].mxu0
      %3781 = vmatprep.mubr.bf16.mxu0 0
      %3782 = vmatmul.mubr.bf16.gmra.mrb[0].mxu0 %v3642
      %v3783 = vpop.f32.mrb[0].mxu0
      %v3784 = vadd.f32 %v3591, %v3783
      %v3785 = vpop.f32.mrb[0].mxu0
      %v3786 = vpop.f32.mrb[0].mxu0
      %v3787 = vadd.f32 %v3591, %v3786
      %v3788 = vpop.f32.mrb[0].mxu0
      %3789 = vmatprep.mubr.bf16.mxu0 0
      %3790 = vmatmul.mubr.bf16.gmra.mrb[0].mxu0 %v3645
      %v3791 = vpop.f32.mrb[0].mxu0
      %v3792 = vadd.f32 %v3591, %v3791
      %v3793 = vpop.f32.mrb[0].mxu0
      %v3794 = vpop.f32.mrb[0].mxu0
      %v3795 = vadd.f32 %v3591, %v3794
      %v3796 = vpop.f32.mrb[0].mxu0
      %3797 = vmatprep.mubr.bf16.mxu0 0
      %3798 = vmatmul.mubr.bf16.gmra.mrb[0].mxu0 %v3648
      %v3799 = vpop.f32.mrb[0].mxu0
      %v3800 = vadd.f32 %v3591, %v3799
      %v3801 = vpop.f32.mrb[0].mxu0
      %v3802 = vpop.f32.mrb[0].mxu0
      %v3803 = vadd.f32 %v3591, %v3802
      %v3804 = vpop.f32.mrb[0].mxu0
      %3805 = vmatprep.mubr.bf16.mxu0 0
      %3806 = vmatmul.mubr.bf16.gmra.mrb[0].mxu0 %v3651
      %v3807 = vpop.f32.mrb[0].mxu0
      %v3808 = vadd.f32 %v3591, %v3807
      %v3809 = vpop.f32.mrb[0].mxu0
      %v3810 = vpop.f32.mrb[0].mxu0
      %v3811 = vadd.f32 %v3591, %v3810
      %v3812 = vpop.f32.mrb[0].mxu0
      %3813 = vdwg.mxu0
      %v3814 = vmax.f32 %v3688, 0.0
      %v3815 = vmax.f32 %v3691, 0.0
      %v3816 = vmax.f32 %v3696, 0.0
      %v3817 = vmax.f32 %v3699, 0.0
      %v3818 = vmax.f32 %v3704, 0.0
      %v3819 = vmax.f32 %v3707, 0.0
      %v3820 = vmax.f32 %v3712, 0.0
      %v3821 = vmax.f32 %v3715, 0.0
      %v3822 = vmax.f32 %v3720, 0.0
      %v3823 = vmax.f32 %v3723, 0.0
      %v3824 = vmax.f32 %v3728, 0.0
      %v3825 = vmax.f32 %v3731, 0.0
      %v3826 = vmax.f32 %v3736, 0.0
      %v3827 = vmax.f32 %v3739, 0.0
      %v3828 = vmax.f32 %v3744, 0.0
      %v3829 = vmax.f32 %v3747, 0.0
      %v3830 = vmax.f32 %v3752, 0.0
      %v3831 = vmax.f32 %v3755, 0.0
      %v3832 = vmax.f32 %v3760, 0.0
      %v3833 = vmax.f32 %v3763, 0.0
      %v3834 = vmax.f32 %v3768, 0.0
      %v3835 = vmax.f32 %v3771, 0.0
      %v3836 = vmax.f32 %v3776, 0.0
      %v3837 = vmax.f32 %v3779, 0.0
      %v3838 = vmax.f32 %v3784, 0.0
      %v3839 = vmax.f32 %v3787, 0.0
      %v3840 = vmax.f32 %v3792, 0.0
      %v3841 = vmax.f32 %v3795, 0.0
      %v3842 = vmax.f32 %v3800, 0.0
      %v3843 = vmax.f32 %v3803, 0.0
      %v3844 = vmax.f32 %v3808, 0.0
      %v3845 = vmax.f32 %v3811, 0.0
      %v3846 = vld [vmem:[%s11] sm:$0xff]
      %v3847 = vld [vmem:[%s11 + $0x8] sm:$0xff]
      %v3848 = vld [vmem:[%s11 + $0x10] sm:$0xff]
      %v3849 = vld [vmem:[%s11 + $0x18] sm:$0xf]
      %v3850 = vld [vmem:[%s11 + $0x1c] sm:$0xff]
      %v3851 = vld [vmem:[%s11 + $0x24] sm:$0xff]
      %v3852 = vld [vmem:[%s11 + $0x2c] sm:$0xff]
      %v3853 = vld [vmem:[%s11 + $0x34] sm:$0xf]
      %v3854 = vld [vmem:[%s11 + $0x38] sm:$0xff]
      %v3855 = vld [vmem:[%s11 + $0x40] sm:$0xff]
      %v3856 = vld [vmem:[%s11 + $0x48] sm:$0xff]
      %v3857 = vld [vmem:[%s11 + $0x50] sm:$0xf]
      %v3858 = vld [vmem:[%s11 + $0x54] sm:$0xff]
      %v3859 = vld [vmem:[%s11 + $0x5c] sm:$0xff]
      %v3860 = vld [vmem:[%s11 + $0x64] sm:$0xff]
      %v3861 = vld [vmem:[%s11 + $0x6c] sm:$0xf]
      %v3862 = vld [vmem:[%s11 + $0x70] sm:$0xff]
      %v3863 = vld [vmem:[%s11 + $0x78] sm:$0xff]
      %v3864 = vld [vmem:[%s11 + $0x80] sm:$0xff]
      %v3865 = vld [vmem:[%s11 + $0x88] sm:$0xf]
      %v3866 = vld [vmem:[%s11 + $0x8c] sm:$0xff]
      %v3867 = vld [vmem:[%s11 + $0x94] sm:$0xff]
      %v3868 = vld [vmem:[%s11 + $0x9c] sm:$0xff]
      %v3869 = vld [vmem:[%s11 + $0xa4] sm:$0xf]
      %v3870 = vld [vmem:[%s11 + $0xa8] sm:$0xff]
      %v3871 = vld [vmem:[%s11 + $0xb0] sm:$0xff]
      %v3872 = vld [vmem:[%s11 + $0xb8] sm:$0xff]
      %v3873 = vld [vmem:[%s11 + $0xc0] sm:$0xf]
      %v3874 = vld [vmem:[%s11 + $0xc4] sm:$0xff]
      %v3875 = vld [vmem:[%s11 + $0xcc] sm:$0xff]
      %v3876 = vld [vmem:[%s11 + $0xd4] sm:$0xff]
      %v3877 = vld [vmem:[%s11 + $0xdc] sm:$0xf]
      %v3878 = vld [vmem:[%s12] sm:$0x7f]
      %v3879 = vpack.c.bf16 %v3815, %v3814
      %v3880 = vpack.c.bf16 %v3817, %v3816
      %v3881 = vpack.c.bf16 %v3819, %v3818
      %v3882 = vpack.c.bf16 %v3821, %v3820
      %v3883 = vpack.c.bf16 %v3823, %v3822
      %v3884 = vpack.c.bf16 %v3825, %v3824
      %v3885 = vpack.c.bf16 %v3827, %v3826
      %v3886 = vpack.c.bf16 %v3829, %v3828
      %v3887 = vpack.c.bf16 %v3831, %v3830
      %v3888 = vpack.c.bf16 %v3833, %v3832
      %v3889 = vpack.c.bf16 %v3835, %v3834
      %v3890 = vpack.c.bf16 %v3837, %v3836
      %v3891 = vpack.c.bf16 %v3839, %v3838
      %v3892 = vpack.c.bf16 %v3841, %v3840
      %v3893 = vpack.c.bf16 %v3843, %v3842
      %v3894 = vpack.c.bf16 %v3845, %v3844
      %v3896 = vlaneseq
      %v3897 = vshrl.u32 %v3896, 7
      %v3898 = vsub.s32 0, %v3897
      %v3899 = vrot.slane %v3878, %v3898
      %v3900 = vlaneseq
      %v3901 = vshrl.u32 %v3900, 7
      %v3902 = vsub.s32 1, %v3901
      %v3903 = vrot.slane %v3878, %v3902
      %v3904 = vlaneseq
      %v3905 = vshrl.u32 %v3904, 7
      %v3906 = vsub.s32 2, %v3905
      %v3907 = vrot.slane %v3878, %v3906
      %v3908 = vlaneseq
      %v3909 = vshrl.u32 %v3908, 7
      %v3910 = vsub.s32 3, %v3909
      %v3911 = vrot.slane %v3878, %v3910
      %v3912 = vlaneseq
      %v3913 = vshrl.u32 %v3912, 7
      %v3914 = vsub.s32 4, %v3913
      %v3915 = vrot.slane %v3878, %v3914
      %v3916 = vlaneseq
      %v3917 = vshrl.u32 %v3916, 7
      %v3918 = vsub.s32 5, %v3917
      %v3919 = vrot.slane %v3878, %v3918
      %v3920 = vlaneseq
      %v3921 = vshrl.u32 %v3920, 7
      %v3922 = vsub.s32 6, %v3921
      %v3923 = vrot.slane %v3878, %v3922
      %v3963 = vunpack.c.l.b16 %v3846
      %v3964 = vunpack.c.h.b16 %v3846
      %v3965 = vunpack.c.l.b16 %v3847
      %v3966 = vunpack.c.h.b16 %v3847
      %v3967 = vunpack.c.l.b16 %v3848
      %v3968 = vunpack.c.h.b16 %v3848
      %v3969 = vunpack.c.l.b16 %v3849
      %v3970 = vunpack.c.l.b16 %v3850
      %v3971 = vunpack.c.h.b16 %v3850
      %v3972 = vunpack.c.l.b16 %v3851
      %v3973 = vunpack.c.h.b16 %v3851
      %v3974 = vunpack.c.l.b16 %v3852
      %v3975 = vunpack.c.h.b16 %v3852
      %v3976 = vunpack.c.l.b16 %v3853
      %v3977 = vunpack.c.l.b16 %v3854
      %v3978 = vunpack.c.h.b16 %v3854
      %v3979 = vunpack.c.l.b16 %v3855
      %v3980 = vunpack.c.h.b16 %v3855
      %v3981 = vunpack.c.l.b16 %v3856
      %v3982 = vunpack.c.h.b16 %v3856
      %v3983 = vunpack.c.l.b16 %v3857
      %v3984 = vunpack.c.l.b16 %v3858
      %v3985 = vunpack.c.h.b16 %v3858
      %v3986 = vunpack.c.l.b16 %v3859
      %v3987 = vunpack.c.h.b16 %v3859
      %v3988 = vunpack.c.l.b16 %v3860
      %v3989 = vunpack.c.h.b16 %v3860
      %v3990 = vunpack.c.l.b16 %v3861
      %v3991 = vunpack.c.l.b16 %v3862
      %v3992 = vunpack.c.h.b16 %v3862
      %v3993 = vunpack.c.l.b16 %v3863
      %v3994 = vunpack.c.h.b16 %v3863
      %v3995 = vunpack.c.l.b16 %v3864
      %v3996 = vunpack.c.h.b16 %v3864
      %v3997 = vunpack.c.l.b16 %v3865
      %v3998 = vunpack.c.l.b16 %v3866
      %v3999 = vunpack.c.h.b16 %v3866
      %v4000 = vunpack.c.l.b16 %v3867
      %v4001 = vunpack.c.h.b16 %v3867
      %v4002 = vunpack.c.l.b16 %v3868
      %v4003 = vunpack.c.h.b16 %v3868
      %v4004 = vunpack.c.l.b16 %v3869
      %v4005 = vunpack.c.l.b16 %v3870
      %v4006 = vunpack.c.h.b16 %v3870
      %v4007 = vunpack.c.l.b16 %v3871
      %v4008 = vunpack.c.h.b16 %v3871
      %v4009 = vunpack.c.l.b16 %v3872
      %v4010 = vunpack.c.h.b16 %v3872
      %v4011 = vunpack.c.l.b16 %v3873
      %v4012 = vunpack.c.l.b16 %v3874
      %v4013 = vunpack.c.h.b16 %v3874
      %v4014 = vunpack.c.l.b16 %v3875
      %v4015 = vunpack.c.h.b16 %v3875
      %v4016 = vunpack.c.l.b16 %v3876
      %v4017 = vunpack.c.h.b16 %v3876
      %v4018 = vunpack.c.l.b16 %v3877
      %v4019 = vpack.c.b16 %v3970, %v3963
      %v4020 = vpack.c.b16 %v3971, %v3964
      %v4021 = vpack.c.b16 %v3972, %v3965
      %v4022 = vpack.c.b16 %v3973, %v3966
      %v4023 = vpack.c.b16 %v3974, %v3967
      %v4024 = vpack.c.b16 %v3975, %v3968
      %v4025 = vpack.c.b16 %v3976, %v3969
      %v4026 = vpack.c.b16 %v3984, %v3977
      %v4027 = vpack.c.b16 %v3985, %v3978
      %v4028 = vpack.c.b16 %v3986, %v3979
      %v4029 = vpack.c.b16 %v3987, %v3980
      %v4030 = vpack.c.b16 %v3988, %v3981
      %v4031 = vpack.c.b16 %v3989, %v3982
      %v4032 = vpack.c.b16 %v3990, %v3983
      %v4033 = vpack.c.b16 %v3998, %v3991
      %v4034 = vpack.c.b16 %v3999, %v3992
      %v4035 = vpack.c.b16 %v4000, %v3993
      %v4036 = vpack.c.b16 %v4001, %v3994
      %v4037 = vpack.c.b16 %v4002, %v3995
      %v4038 = vpack.c.b16 %v4003, %v3996
      %v4039 = vpack.c.b16 %v4004, %v3997
      %v4040 = vpack.c.b16 %v4012, %v4005
      %v4041 = vpack.c.b16 %v4013, %v4006
      %v4042 = vpack.c.b16 %v4014, %v4007
      %v4043 = vpack.c.b16 %v4015, %v4008
      %v4044 = vpack.c.b16 %v4016, %v4009
      %v4045 = vpack.c.b16 %v4017, %v4010
      %v4046 = vpack.c.b16 %v4018, %v4011
      %v4076 = vsel %vm2358, %v3879, 0
      %v4079 = vsel %vm2358, %v3880, 0
      %v4082 = vsel %vm2358, %v3881, 0
      %v4085 = vsel %vm2358, %v3882, 0
      %v4088 = vsel %vm2358, %v3883, 0
      %v4091 = vsel %vm2358, %v3884, 0
      %v4094 = vsel %vm2358, %v3885, 0
      %v4097 = vsel %vm2358, %v3886, 0
      %v4100 = vsel %vm2358, %v3887, 0
      %v4103 = vsel %vm2358, %v3888, 0
      %v4106 = vsel %vm2358, %v3889, 0
      %v4109 = vsel %vm2358, %v3890, 0
      %v4112 = vsel %vm2358, %v3891, 0
      %v4115 = vsel %vm2358, %v3892, 0
      %v4118 = vsel %vm2358, %v3893, 0
      %v4121 = vsel %vm2358, %v3894, 0
      %4123 = vmatprep.subr.bf16.mxu0 %v4020
      %4124 = vmatpush1.bf16.msra.mxu0 %v4019
      %4125 = vmatprep.subr.bf16.mxu0 %v4027
      %4126 = vmatpush1.bf16.msra.mxu0 %v4026
      %4127 = vmatprep.subr.bf16.mxu0 %v4034
      %4128 = vmatpush1.bf16.msra.mxu0 %v4033
      %4129 = vmatprep.subr.bf16.mxu0 %v4041
      %4130 = vmatpush1.bf16.msra.mxu0 %v4040
      %4131 = vmatprep.subr.bf16.mxu0 0
      %4132 = vmatpush1.bf16.msra.mxu0 0
      %4133 = vmatprep.subr.bf16.mxu0 0
      %4134 = vmatpush1.bf16.msra.mxu0 0
      %4135 = vmatprep.subr.bf16.mxu0 0
      %4136 = vmatpush1.bf16.msra.mxu0 0
      %4137 = vmatprep.subr.bf16.mxu0 0
      %4138 = vmatpush1.bf16.msra.mxu0 0
      %4139 = vmatprep.subr.bf16.mxu0 0
      %4140 = vmatpush1.bf16.msra.mxu0 0
      %4141 = vmatprep.subr.bf16.mxu0 0
      %4142 = vmatpush1.bf16.msra.mxu0 0
      %4143 = vmatprep.subr.bf16.mxu0 0
      %4144 = vmatpush1.bf16.msra.mxu0 0
      %4145 = vmatprep.subr.bf16.mxu0 0
      %4146 = vmatpush1.bf16.msra.mxu0 0
      %4147 = vmatprep.subr.bf16.mxu0 0
      %4148 = vmatpush1.bf16.msra.mxu0 0
      %4149 = vmatprep.subr.bf16.mxu0 0
      %4150 = vmatpush1.bf16.msra.mxu0 0
      %4151 = vmatprep.subr.bf16.mxu0 0
      %4152 = vmatpush1.bf16.msra.mxu0 0
      %4153 = vmatprep.subr.bf16.mxu0 0
      %4154 = vmatpush1.bf16.msra.mxu0 0
      %4155 = vmatprep.mubr.bf16.mxu0 0
      %4156 = vmatmul.mubr.bf16.gmra.mrb[0].mxu0 %v4076
      %v4157 = vpop.f32.mrb[0].mxu0
      %v4158 = vadd.f32 %v3899, %v4157
      %v4159 = vpop.f32.mrb[0].mxu0
      %v4160 = vadd.f32 %v3903, %v4159
      %v4161 = vpop.f32.mrb[0].mxu0
      %v4162 = vadd.f32 %v3899, %v4161
      %v4163 = vpop.f32.mrb[0].mxu0
      %v4164 = vadd.f32 %v3903, %v4163
      %4165 = vmatprep.mubr.bf16.mxu0 0
      %4166 = vmatmul.mubr.bf16.gmra.mrb[0].mxu0 %v4079
      %v4167 = vpop.f32.mrb[0].mxu0
      %v4168 = vadd.f32 %v3899, %v4167
      %v4169 = vpop.f32.mrb[0].mxu0
      %v4170 = vadd.f32 %v3903, %v4169
      %v4171 = vpop.f32.mrb[0].mxu0
      %v4172 = vadd.f32 %v3899, %v4171
      %v4173 = vpop.f32.mrb[0].mxu0
      %v4174 = vadd.f32 %v3903, %v4173
      %4175 = vmatprep.mubr.bf16.mxu0 0
      %4176 = vmatmul.mubr.bf16.gmra.mrb[0].mxu0 %v4082
      %v4177 = vpop.f32.mrb[0].mxu0
      %v4178 = vadd.f32 %v3899, %v4177
      %v4179 = vpop.f32.mrb[0].mxu0
      %v4180 = vadd.f32 %v3903, %v4179
      %v4181 = vpop.f32.mrb[0].mxu0
      %v4182 = vadd.f32 %v3899, %v4181
      %v4183 = vpop.f32.mrb[0].mxu0
      %v4184 = vadd.f32 %v3903, %v4183
      %4185 = vmatprep.mubr.bf16.mxu0 0
      %4186 = vmatmul.mubr.bf16.gmra.mrb[0].mxu0 %v4085
      %v4187 = vpop.f32.mrb[0].mxu0
      %v4188 = vadd.f32 %v3899, %v4187
      %v4189 = vpop.f32.mrb[0].mxu0
      %v4190 = vadd.f32 %v3903, %v4189
      %v4191 = vpop.f32.mrb[0].mxu0
      %v4192 = vadd.f32 %v3899, %v4191
      %v4193 = vpop.f32.mrb[0].mxu0
      %v4194 = vadd.f32 %v3903, %v4193
      %4195 = vmatprep.mubr.bf16.mxu0 0
      %4196 = vmatmul.mubr.bf16.gmra.mrb[0].mxu0 %v4088
      %v4197 = vpop.f32.mrb[0].mxu0
      %v4198 = vadd.f32 %v3899, %v4197
      %v4199 = vpop.f32.mrb[0].mxu0
      %v4200 = vadd.f32 %v3903, %v4199
      %v4201 = vpop.f32.mrb[0].mxu0
      %v4202 = vadd.f32 %v3899, %v4201
      %v4203 = vpop.f32.mrb[0].mxu0
      %v4204 = vadd.f32 %v3903, %v4203
      %4205 = vmatprep.mubr.bf16.mxu0 0
      %4206 = vmatmul.mubr.bf16.gmra.mrb[0].mxu0 %v4091
      %v4207 = vpop.f32.mrb[0].mxu0
      %v4208 = vadd.f32 %v3899, %v4207
      %v4209 = vpop.f32.mrb[0].mxu0
      %v4210 = vadd.f32 %v3903, %v4209
      %v4211 = vpop.f32.mrb[0].mxu0
      %v4212 = vadd.f32 %v3899, %v4211
      %v4213 = vpop.f32.mrb[0].mxu0
      %v4214 = vadd.f32 %v3903, %v4213
      %4215 = vmatprep.mubr.bf16.mxu0 0
      %4216 = vmatmul.mubr.bf16.gmra.mrb[0].mxu0 %v4094
      %v4217 = vpop.f32.mrb[0].mxu0
      %v4218 = vadd.f32 %v3899, %v4217
      %v4219 = vpop.f32.mrb[0].mxu0
      %v4220 = vadd.f32 %v3903, %v4219
      %v4221 = vpop.f32.mrb[0].mxu0
      %v4222 = vadd.f32 %v3899, %v4221
      %v4223 = vpop.f32.mrb[0].mxu0
      %v4224 = vadd.f32 %v3903, %v4223
      %4225 = vmatprep.mubr.bf16.mxu0 0
      %4226 = vmatmul.mubr.bf16.gmra.mrb[0].mxu0 %v4097
      %v4227 = vpop.f32.mrb[0].mxu0
      %v4228 = vadd.f32 %v3899, %v4227
      %v4229 = vpop.f32.mrb[0].mxu0
      %v4230 = vadd.f32 %v3903, %v4229
      %v4231 = vpop.f32.mrb[0].mxu0
      %v4232 = vadd.f32 %v3899, %v4231
      %v4233 = vpop.f32.mrb[0].mxu0
      %v4234 = vadd.f32 %v3903, %v4233
      %4235 = vmatprep.mubr.bf16.mxu0 0
      %4236 = vmatmul.mubr.bf16.gmra.mrb[0].mxu0 %v4100
      %v4237 = vpop.f32.mrb[0].mxu0
      %v4238 = vadd.f32 %v3899, %v4237
      %v4239 = vpop.f32.mrb[0].mxu0
      %v4240 = vadd.f32 %v3903, %v4239
      %v4241 = vpop.f32.mrb[0].mxu0
      %v4242 = vadd.f32 %v3899, %v4241
      %v4243 = vpop.f32.mrb[0].mxu0
      %v4244 = vadd.f32 %v3903, %v4243
      %4245 = vmatprep.mubr.bf16.mxu0 0
      %4246 = vmatmul.mubr.bf16.gmra.mrb[0].mxu0 %v4103
      %v4247 = vpop.f32.mrb[0].mxu0
      %v4248 = vadd.f32 %v3899, %v4247
      %v4249 = vpop.f32.mrb[0].mxu0
      %v4250 = vadd.f32 %v3903, %v4249
      %v4251 = vpop.f32.mrb[0].mxu0
      %v4252 = vadd.f32 %v3899, %v4251
      %v4253 = vpop.f32.mrb[0].mxu0
      %v4254 = vadd.f32 %v3903, %v4253
      %4255 = vmatprep.mubr.bf16.mxu0 0
      %4256 = vmatmul.mubr.bf16.gmra.mrb[0].mxu0 %v4106
      %v4257 = vpop.f32.mrb[0].mxu0
      %v4258 = vadd.f32 %v3899, %v4257
      %v4259 = vpop.f32.mrb[0].mxu0
      %v4260 = vadd.f32 %v3903, %v4259
      %v4261 = vpop.f32.mrb[0].mxu0
      %v4262 = vadd.f32 %v3899, %v4261
      %v4263 = vpop.f32.mrb[0].mxu0
      %v4264 = vadd.f32 %v3903, %v4263
      %4265 = vmatprep.mubr.bf16.mxu0 0
      %4266 = vmatmul.mubr.bf16.gmra.mrb[0].mxu0 %v4109
      %v4267 = vpop.f32.mrb[0].mxu0
      %v4268 = vadd.f32 %v3899, %v4267
      %v4269 = vpop.f32.mrb[0].mxu0
      %v4270 = vadd.f32 %v3903, %v4269
      %v4271 = vpop.f32.mrb[0].mxu0
      %v4272 = vadd.f32 %v3899, %v4271
      %v4273 = vpop.f32.mrb[0].mxu0
      %v4274 = vadd.f32 %v3903, %v4273
      %4275 = vmatprep.mubr.bf16.mxu0 0
      %4276 = vmatmul.mubr.bf16.gmra.mrb[0].mxu0 %v4112
      %v4277 = vpop.f32.mrb[0].mxu0
      %v4278 = vadd.f32 %v3899, %v4277
      %v4279 = vpop.f32.mrb[0].mxu0
      %v4280 = vadd.f32 %v3903, %v4279
      %v4281 = vpop.f32.mrb[0].mxu0
      %v4282 = vadd.f32 %v3899, %v4281
      %v4283 = vpop.f32.mrb[0].mxu0
      %v4284 = vadd.f32 %v3903, %v4283
      %4285 = vmatprep.mubr.bf16.mxu0 0
      %4286 = vmatmul.mubr.bf16.gmra.mrb[0].mxu0 %v4115
      %v4287 = vpop.f32.mrb[0].mxu0
      %v4288 = vadd.f32 %v3899, %v4287
      %v4289 = vpop.f32.mrb[0].mxu0
      %v4290 = vadd.f32 %v3903, %v4289
      %v4291 = vpop.f32.mrb[0].mxu0
      %v4292 = vadd.f32 %v3899, %v4291
      %v4293 = vpop.f32.mrb[0].mxu0
      %v4294 = vadd.f32 %v3903, %v4293
      %4295 = vmatprep.mubr.bf16.mxu0 0
      %4296 = vmatmul.mubr.bf16.gmra.mrb[0].mxu0 %v4118
      %v4297 = vpop.f32.mrb[0].mxu0
      %v4298 = vadd.f32 %v3899, %v4297
      %v4299 = vpop.f32.mrb[0].mxu0
      %v4300 = vadd.f32 %v3903, %v4299
      %v4301 = vpop.f32.mrb[0].mxu0
      %v4302 = vadd.f32 %v3899, %v4301
      %v4303 = vpop.f32.mrb[0].mxu0
      %v4304 = vadd.f32 %v3903, %v4303
      %4305 = vmatprep.mubr.bf16.mxu0 0
      %4306 = vmatmul.mubr.bf16.gmra.mrb[0].mxu0 %v4121
      %v4307 = vpop.f32.mrb[0].mxu0
      %v4308 = vadd.f32 %v3899, %v4307
      %v4309 = vpop.f32.mrb[0].mxu0
      %v4310 = vadd.f32 %v3903, %v4309
      %v4311 = vpop.f32.mrb[0].mxu0
      %v4312 = vadd.f32 %v3899, %v4311
      %v4313 = vpop.f32.mrb[0].mxu0
      %v4314 = vadd.f32 %v3903, %v4313
      %4315 = vdwg.mxu0
      %4316 = vmatprep.subr.bf16.mxu0 %v4022
      %4317 = vmatpush1.bf16.msra.mxu0 %v4021
      %4318 = vmatprep.subr.bf16.mxu0 %v4029
      %4319 = vmatpush1.bf16.msra.mxu0 %v4028
      %4320 = vmatprep.subr.bf16.mxu0 %v4036
      %4321 = vmatpush1.bf16.msra.mxu0 %v4035
      %4322 = vmatprep.subr.bf16.mxu0 %v4043
      %4323 = vmatpush1.bf16.msra.mxu0 %v4042
      %4324 = vmatprep.subr.bf16.mxu0 0
      %4325 = vmatpush1.bf16.msra.mxu0 0
      %4326 = vmatprep.subr.bf16.mxu0 0
      %4327 = vmatpush1.bf16.msra.mxu0 0
      %4328 = vmatprep.subr.bf16.mxu0 0
      %4329 = vmatpush1.bf16.msra.mxu0 0
      %4330 = vmatprep.subr.bf16.mxu0 0
      %4331 = vmatpush1.bf16.msra.mxu0 0
      %4332 = vmatprep.subr.bf16.mxu0 0
      %4333 = vmatpush1.bf16.msra.mxu0 0
      %4334 = vmatprep.subr.bf16.mxu0 0
      %4335 = vmatpush1.bf16.msra.mxu0 0
      %4336 = vmatprep.subr.bf16.mxu0 0
      %4337 = vmatpush1.bf16.msra.mxu0 0
      %4338 = vmatprep.subr.bf16.mxu0 0
      %4339 = vmatpush1.bf16.msra.mxu0 0
      %4340 = vmatprep.subr.bf16.mxu0 0
      %4341 = vmatpush1.bf16.msra.mxu0 0
      %4342 = vmatprep.subr.bf16.mxu0 0
      %4343 = vmatpush1.bf16.msra.mxu0 0
      %4344 = vmatprep.subr.bf16.mxu0 0
      %4345 = vmatpush1.bf16.msra.mxu0 0
      %4346 = vmatprep.subr.bf16.mxu0 0
      %4347 = vmatpush1.bf16.msra.mxu0 0
      %4348 = vmatprep.mubr.bf16.mxu0 0
      %4349 = vmatmul.mubr.bf16.gmra.mrb[0].mxu0 %v4076
      %v4350 = vpop.f32.mrb[0].mxu0
      %v4351 = vadd.f32 %v3907, %v4350
      %v4352 = vpop.f32.mrb[0].mxu0
      %v4353 = vadd.f32 %v3911, %v4352
      %v4354 = vpop.f32.mrb[0].mxu0
      %v4355 = vadd.f32 %v3907, %v4354
      %v4356 = vpop.f32.mrb[0].mxu0
      %v4357 = vadd.f32 %v3911, %v4356
      %4358 = vmatprep.mubr.bf16.mxu0 0
      %4359 = vmatmul.mubr.bf16.gmra.mrb[0].mxu0 %v4079
      %v4360 = vpop.f32.mrb[0].mxu0
      %v4361 = vadd.f32 %v3907, %v4360
      %v4362 = vpop.f32.mrb[0].mxu0
      %v4363 = vadd.f32 %v3911, %v4362
      %v4364 = vpop.f32.mrb[0].mxu0
      %v4365 = vadd.f32 %v3907, %v4364
      %v4366 = vpop.f32.mrb[0].mxu0
      %v4367 = vadd.f32 %v3911, %v4366
      %4368 = vmatprep.mubr.bf16.mxu0 0
      %4369 = vmatmul.mubr.bf16.gmra.mrb[0].mxu0 %v4082
      %v4370 = vpop.f32.mrb[0].mxu0
      %v4371 = vadd.f32 %v3907, %v4370
      %v4372 = vpop.f32.mrb[0].mxu0
      %v4373 = vadd.f32 %v3911, %v4372
      %v4374 = vpop.f32.mrb[0].mxu0
      %v4375 = vadd.f32 %v3907, %v4374
      %v4376 = vpop.f32.mrb[0].mxu0
      %v4377 = vadd.f32 %v3911, %v4376
      %4378 = vmatprep.mubr.bf16.mxu0 0
      %4379 = vmatmul.mubr.bf16.gmra.mrb[0].mxu0 %v4085
      %v4380 = vpop.f32.mrb[0].mxu0
      %v4381 = vadd.f32 %v3907, %v4380
      %v4382 = vpop.f32.mrb[0].mxu0
      %v4383 = vadd.f32 %v3911, %v4382
      %v4384 = vpop.f32.mrb[0].mxu0
      %v4385 = vadd.f32 %v3907, %v4384
      %v4386 = vpop.f32.mrb[0].mxu0
      %v4387 = vadd.f32 %v3911, %v4386
      %4388 = vmatprep.mubr.bf16.mxu0 0
      %4389 = vmatmul.mubr.bf16.gmra.mrb[0].mxu0 %v4088
      %v4390 = vpop.f32.mrb[0].mxu0
      %v4391 = vadd.f32 %v3907, %v4390
      %v4392 = vpop.f32.mrb[0].mxu0
      %v4393 = vadd.f32 %v3911, %v4392
      %v4394 = vpop.f32.mrb[0].mxu0
      %v4395 = vadd.f32 %v3907, %v4394
      %v4396 = vpop.f32.mrb[0].mxu0
      %v4397 = vadd.f32 %v3911, %v4396
      %4398 = vmatprep.mubr.bf16.mxu0 0
      %4399 = vmatmul.mubr.bf16.gmra.mrb[0].mxu0 %v4091
      %v4400 = vpop.f32.mrb[0].mxu0
      %v4401 = vadd.f32 %v3907, %v4400
      %v4402 = vpop.f32.mrb[0].mxu0
      %v4403 = vadd.f32 %v3911, %v4402
      %v4404 = vpop.f32.mrb[0].mxu0
      %v4405 = vadd.f32 %v3907, %v4404
      %v4406 = vpop.f32.mrb[0].mxu0
      %v4407 = vadd.f32 %v3911, %v4406
      %4408 = vmatprep.mubr.bf16.mxu0 0
      %4409 = vmatmul.mubr.bf16.gmra.mrb[0].mxu0 %v4094
      %v4410 = vpop.f32.mrb[0].mxu0
      %v4411 = vadd.f32 %v3907, %v4410
      %v4412 = vpop.f32.mrb[0].mxu0
      %v4413 = vadd.f32 %v3911, %v4412
      %v4414 = vpop.f32.mrb[0].mxu0
      %v4415 = vadd.f32 %v3907, %v4414
      %v4416 = vpop.f32.mrb[0].mxu0
      %v4417 = vadd.f32 %v3911, %v4416
      %4418 = vmatprep.mubr.bf16.mxu0 0
      %4419 = vmatmul.mubr.bf16.gmra.mrb[0].mxu0 %v4097
      %v4420 = vpop.f32.mrb[0].mxu0
      %v4421 = vadd.f32 %v3907, %v4420
      %v4422 = vpop.f32.mrb[0].mxu0
      %v4423 = vadd.f32 %v3911, %v4422
      %v4424 = vpop.f32.mrb[0].mxu0
      %v4425 = vadd.f32 %v3907, %v4424
      %v4426 = vpop.f32.mrb[0].mxu0
      %v4427 = vadd.f32 %v3911, %v4426
      %4428 = vmatprep.mubr.bf16.mxu0 0
      %4429 = vmatmul.mubr.bf16.gmra.mrb[0].mxu0 %v4100
      %v4430 = vpop.f32.mrb[0].mxu0
      %v4431 = vadd.f32 %v3907, %v4430
      %v4432 = vpop.f32.mrb[0].mxu0
      %v4433 = vadd.f32 %v3911, %v4432
      %v4434 = vpop.f32.mrb[0].mxu0
      %v4435 = vadd.f32 %v3907, %v4434
      %v4436 = vpop.f32.mrb[0].mxu0
      %v4437 = vadd.f32 %v3911, %v4436
      %4438 = vmatprep.mubr.bf16.mxu0 0
      %4439 = vmatmul.mubr.bf16.gmra.mrb[0].mxu0 %v4103
      %v4440 = vpop.f32.mrb[0].mxu0
      %v4441 = vadd.f32 %v3907, %v4440
      %v4442 = vpop.f32.mrb[0].mxu0
      %v4443 = vadd.f32 %v3911, %v4442
      %v4444 = vpop.f32.mrb[0].mxu0
      %v4445 = vadd.f32 %v3907, %v4444
      %v4446 = vpop.f32.mrb[0].mxu0
      %v4447 = vadd.f32 %v3911, %v4446
      %4448 = vmatprep.mubr.bf16.mxu0 0
      %4449 = vmatmul.mubr.bf16.gmra.mrb[0].mxu0 %v4106
      %v4450 = vpop.f32.mrb[0].mxu0
      %v4451 = vadd.f32 %v3907, %v4450
      %v4452 = vpop.f32.mrb[0].mxu0
      %v4453 = vadd.f32 %v3911, %v4452
      %v4454 = vpop.f32.mrb[0].mxu0
      %v4455 = vadd.f32 %v3907, %v4454
      %v4456 = vpop.f32.mrb[0].mxu0
      %v4457 = vadd.f32 %v3911, %v4456
      %4458 = vmatprep.mubr.bf16.mxu0 0
      %4459 = vmatmul.mubr.bf16.gmra.mrb[0].mxu0 %v4109
      %v4460 = vpop.f32.mrb[0].mxu0
      %v4461 = vadd.f32 %v3907, %v4460
      %v4462 = vpop.f32.mrb[0].mxu0
      %v4463 = vadd.f32 %v3911, %v4462
      %v4464 = vpop.f32.mrb[0].mxu0
      %v4465 = vadd.f32 %v3907, %v4464
      %v4466 = vpop.f32.mrb[0].mxu0
      %v4467 = vadd.f32 %v3911, %v4466
      %4468 = vmatprep.mubr.bf16.mxu0 0
      %4469 = vmatmul.mubr.bf16.gmra.mrb[0].mxu0 %v4112
      %v4470 = vpop.f32.mrb[0].mxu0
      %v4471 = vadd.f32 %v3907, %v4470
      %v4472 = vpop.f32.mrb[0].mxu0
      %v4473 = vadd.f32 %v3911, %v4472
      %v4474 = vpop.f32.mrb[0].mxu0
      %v4475 = vadd.f32 %v3907, %v4474
      %v4476 = vpop.f32.mrb[0].mxu0
      %v4477 = vadd.f32 %v3911, %v4476
      %4478 = vmatprep.mubr.bf16.mxu0 0
      %4479 = vmatmul.mubr.bf16.gmra.mrb[0].mxu0 %v4115
      %v4480 = vpop.f32.mrb[0].mxu0
      %v4481 = vadd.f32 %v3907, %v4480
      %v4482 = vpop.f32.mrb[0].mxu0
      %v4483 = vadd.f32 %v3911, %v4482
      %v4484 = vpop.f32.mrb[0].mxu0
      %v4485 = vadd.f32 %v3907, %v4484
      %v4486 = vpop.f32.mrb[0].mxu0
      %v4487 = vadd.f32 %v3911, %v4486
      %4488 = vmatprep.mubr.bf16.mxu0 0
      %4489 = vmatmul.mubr.bf16.gmra.mrb[0].mxu0 %v4118
      %v4490 = vpop.f32.mrb[0].mxu0
      %v4491 = vadd.f32 %v3907, %v4490
      %v4492 = vpop.f32.mrb[0].mxu0
      %v4493 = vadd.f32 %v3911, %v4492
      %v4494 = vpop.f32.mrb[0].mxu0
      %v4495 = vadd.f32 %v3907, %v4494
      %v4496 = vpop.f32.mrb[0].mxu0
      %v4497 = vadd.f32 %v3911, %v4496
      %4498 = vmatprep.mubr.bf16.mxu0 0
      %4499 = vmatmul.mubr.bf16.gmra.mrb[0].mxu0 %v4121
      %v4500 = vpop.f32.mrb[0].mxu0
      %v4501 = vadd.f32 %v3907, %v4500
      %v4502 = vpop.f32.mrb[0].mxu0
      %v4503 = vadd.f32 %v3911, %v4502
      %v4504 = vpop.f32.mrb[0].mxu0
      %v4505 = vadd.f32 %v3907, %v4504
      %v4506 = vpop.f32.mrb[0].mxu0
      %v4507 = vadd.f32 %v3911, %v4506
      %4508 = vdwg.mxu0
      %4509 = vmatprep.subr.bf16.mxu0 %v4024
      %4510 = vmatpush1.bf16.msra.mxu0 %v4023
      %4511 = vmatprep.subr.bf16.mxu0 %v4031
      %4512 = vmatpush1.bf16.msra.mxu0 %v4030
      %4513 = vmatprep.subr.bf16.mxu0 %v4038
      %4514 = vmatpush1.bf16.msra.mxu0 %v4037
      %4515 = vmatprep.subr.bf16.mxu0 %v4045
      %4516 = vmatpush1.bf16.msra.mxu0 %v4044
      %4517 = vmatprep.subr.bf16.mxu0 0
      %4518 = vmatpush1.bf16.msra.mxu0 0
      %4519 = vmatprep.subr.bf16.mxu0 0
      %4520 = vmatpush1.bf16.msra.mxu0 0
      %4521 = vmatprep.subr.bf16.mxu0 0
      %4522 = vmatpush1.bf16.msra.mxu0 0
      %4523 = vmatprep.subr.bf16.mxu0 0
      %4524 = vmatpush1.bf16.msra.mxu0 0
      %4525 = vmatprep.subr.bf16.mxu0 0
      %4526 = vmatpush1.bf16.msra.mxu0 0
      %4527 = vmatprep.subr.bf16.mxu0 0
      %4528 = vmatpush1.bf16.msra.mxu0 0
      %4529 = vmatprep.subr.bf16.mxu0 0
      %4530 = vmatpush1.bf16.msra.mxu0 0
      %4531 = vmatprep.subr.bf16.mxu0 0
      %4532 = vmatpush1.bf16.msra.mxu0 0
      %4533 = vmatprep.subr.bf16.mxu0 0
      %4534 = vmatpush1.bf16.msra.mxu0 0
      %4535 = vmatprep.subr.bf16.mxu0 0
      %4536 = vmatpush1.bf16.msra.mxu0 0
      %4537 = vmatprep.subr.bf16.mxu0 0
      %4538 = vmatpush1.bf16.msra.mxu0 0
      %4539 = vmatprep.subr.bf16.mxu0 0
      %4540 = vmatpush1.bf16.msra.mxu0 0
      %4541 = vmatprep.mubr.bf16.mxu0 0
      %4542 = vmatmul.mubr.bf16.gmra.mrb[0].mxu0 %v4076
      %v4543 = vpop.f32.mrb[0].mxu0
      %v4544 = vadd.f32 %v3915, %v4543
      %v4545 = vpop.f32.mrb[0].mxu0
      %v4546 = vadd.f32 %v3919, %v4545
      %v4547 = vpop.f32.mrb[0].mxu0
      %v4548 = vadd.f32 %v3915, %v4547
      %v4549 = vpop.f32.mrb[0].mxu0
      %v4550 = vadd.f32 %v3919, %v4549
      %4551 = vmatprep.mubr.bf16.mxu0 0
      %4552 = vmatmul.mubr.bf16.gmra.mrb[0].mxu0 %v4079
      %v4553 = vpop.f32.mrb[0].mxu0
      %v4554 = vadd.f32 %v3915, %v4553
      %v4555 = vpop.f32.mrb[0].mxu0
      %v4556 = vadd.f32 %v3919, %v4555
      %v4557 = vpop.f32.mrb[0].mxu0
      %v4558 = vadd.f32 %v3915, %v4557
      %v4559 = vpop.f32.mrb[0].mxu0
      %v4560 = vadd.f32 %v3919, %v4559
      %4561 = vmatprep.mubr.bf16.mxu0 0
      %4562 = vmatmul.mubr.bf16.gmra.mrb[0].mxu0 %v4082
      %v4563 = vpop.f32.mrb[0].mxu0
      %v4564 = vadd.f32 %v3915, %v4563
      %v4565 = vpop.f32.mrb[0].mxu0
      %v4566 = vadd.f32 %v3919, %v4565
      %v4567 = vpop.f32.mrb[0].mxu0
      %v4568 = vadd.f32 %v3915, %v4567
      %v4569 = vpop.f32.mrb[0].mxu0
      %v4570 = vadd.f32 %v3919, %v4569
      %4571 = vmatprep.mubr.bf16.mxu0 0
      %4572 = vmatmul.mubr.bf16.gmra.mrb[0].mxu0 %v4085
      %v4573 = vpop.f32.mrb[0].mxu0
      %v4574 = vadd.f32 %v3915, %v4573
      %v4575 = vpop.f32.mrb[0].mxu0
      %v4576 = vadd.f32 %v3919, %v4575
      %v4577 = vpop.f32.mrb[0].mxu0
      %v4578 = vadd.f32 %v3915, %v4577
      %v4579 = vpop.f32.mrb[0].mxu0
      %v4580 = vadd.f32 %v3919, %v4579
      %4581 = vmatprep.mubr.bf16.mxu0 0
      %4582 = vmatmul.mubr.bf16.gmra.mrb[0].mxu0 %v4088
      %v4583 = vpop.f32.mrb[0].mxu0
      %v4584 = vadd.f32 %v3915, %v4583
      %v4585 = vpop.f32.mrb[0].mxu0
      %v4586 = vadd.f32 %v3919, %v4585
      %v4587 = vpop.f32.mrb[0].mxu0
      %v4588 = vadd.f32 %v3915, %v4587
      %v4589 = vpop.f32.mrb[0].mxu0
      %v4590 = vadd.f32 %v3919, %v4589
      %4591 = vmatprep.mubr.bf16.mxu0 0
      %4592 = vmatmul.mubr.bf16.gmra.mrb[0].mxu0 %v4091
      %v4593 = vpop.f32.mrb[0].mxu0
      %v4594 = vadd.f32 %v3915, %v4593
      %v4595 = vpop.f32.mrb[0].mxu0
      %v4596 = vadd.f32 %v3919, %v4595
      %v4597 = vpop.f32.mrb[0].mxu0
      %v4598 = vadd.f32 %v3915, %v4597
      %v4599 = vpop.f32.mrb[0].mxu0
      %v4600 = vadd.f32 %v3919, %v4599
      %4601 = vmatprep.mubr.bf16.mxu0 0
      %4602 = vmatmul.mubr.bf16.gmra.mrb[0].mxu0 %v4094
      %v4603 = vpop.f32.mrb[0].mxu0
      %v4604 = vadd.f32 %v3915, %v4603
      %v4605 = vpop.f32.mrb[0].mxu0
      %v4606 = vadd.f32 %v3919, %v4605
      %v4607 = vpop.f32.mrb[0].mxu0
      %v4608 = vadd.f32 %v3915, %v4607
      %v4609 = vpop.f32.mrb[0].mxu0
      %v4610 = vadd.f32 %v3919, %v4609
      %4611 = vmatprep.mubr.bf16.mxu0 0
      %4612 = vmatmul.mubr.bf16.gmra.mrb[0].mxu0 %v4097
      %v4613 = vpop.f32.mrb[0].mxu0
      %v4614 = vadd.f32 %v3915, %v4613
      %v4615 = vpop.f32.mrb[0].mxu0
      %v4616 = vadd.f32 %v3919, %v4615
      %v4617 = vpop.f32.mrb[0].mxu0
      %v4618 = vadd.f32 %v3915, %v4617
      %v4619 = vpop.f32.mrb[0].mxu0
      %v4620 = vadd.f32 %v3919, %v4619
      %4621 = vmatprep.mubr.bf16.mxu0 0
      %4622 = vmatmul.mubr.bf16.gmra.mrb[0].mxu0 %v4100
      %v4623 = vpop.f32.mrb[0].mxu0
      %v4624 = vadd.f32 %v3915, %v4623
      %v4625 = vpop.f32.mrb[0].mxu0
      %v4626 = vadd.f32 %v3919, %v4625
      %v4627 = vpop.f32.mrb[0].mxu0
      %v4628 = vadd.f32 %v3915, %v4627
      %v4629 = vpop.f32.mrb[0].mxu0
      %v4630 = vadd.f32 %v3919, %v4629
      %4631 = vmatprep.mubr.bf16.mxu0 0
      %4632 = vmatmul.mubr.bf16.gmra.mrb[0].mxu0 %v4103
      %v4633 = vpop.f32.mrb[0].mxu0
      %v4634 = vadd.f32 %v3915, %v4633
      %v4635 = vpop.f32.mrb[0].mxu0
      %v4636 = vadd.f32 %v3919, %v4635
      %v4637 = vpop.f32.mrb[0].mxu0
      %v4638 = vadd.f32 %v3915, %v4637
      %v4639 = vpop.f32.mrb[0].mxu0
      %v4640 = vadd.f32 %v3919, %v4639
      %4641 = vmatprep.mubr.bf16.mxu0 0
      %4642 = vmatmul.mubr.bf16.gmra.mrb[0].mxu0 %v4106
      %v4643 = vpop.f32.mrb[0].mxu0
      %v4644 = vadd.f32 %v3915, %v4643
      %v4645 = vpop.f32.mrb[0].mxu0
      %v4646 = vadd.f32 %v3919, %v4645
      %v4647 = vpop.f32.mrb[0].mxu0
      %v4648 = vadd.f32 %v3915, %v4647
      %v4649 = vpop.f32.mrb[0].mxu0
      %v4650 = vadd.f32 %v3919, %v4649
      %4651 = vmatprep.mubr.bf16.mxu0 0
      %4652 = vmatmul.mubr.bf16.gmra.mrb[0].mxu0 %v4109
      %v4653 = vpop.f32.mrb[0].mxu0
      %v4654 = vadd.f32 %v3915, %v4653
      %v4655 = vpop.f32.mrb[0].mxu0
      %v4656 = vadd.f32 %v3919, %v4655
      %v4657 = vpop.f32.mrb[0].mxu0
      %v4658 = vadd.f32 %v3915, %v4657
      %v4659 = vpop.f32.mrb[0].mxu0
      %v4660 = vadd.f32 %v3919, %v4659
      %4661 = vmatprep.mubr.bf16.mxu0 0
      %4662 = vmatmul.mubr.bf16.gmra.mrb[0].mxu0 %v4112
      %v4663 = vpop.f32.mrb[0].mxu0
      %v4664 = vadd.f32 %v3915, %v4663
      %v4665 = vpop.f32.mrb[0].mxu0
      %v4666 = vadd.f32 %v3919, %v4665
      %v4667 = vpop.f32.mrb[0].mxu0
      %v4668 = vadd.f32 %v3915, %v4667
      %v4669 = vpop.f32.mrb[0].mxu0
      %v4670 = vadd.f32 %v3919, %v4669
      %4671 = vmatprep.mubr.bf16.mxu0 0
      %4672 = vmatmul.mubr.bf16.gmra.mrb[0].mxu0 %v4115
      %v4673 = vpop.f32.mrb[0].mxu0
      %v4674 = vadd.f32 %v3915, %v4673
      %v4675 = vpop.f32.mrb[0].mxu0
      %v4676 = vadd.f32 %v3919, %v4675
      %v4677 = vpop.f32.mrb[0].mxu0
      %v4678 = vadd.f32 %v3915, %v4677
      %v4679 = vpop.f32.mrb[0].mxu0
      %v4680 = vadd.f32 %v3919, %v4679
      %4681 = vmatprep.mubr.bf16.mxu0 0
      %4682 = vmatmul.mubr.bf16.gmra.mrb[0].mxu0 %v4118
      %v4683 = vpop.f32.mrb[0].mxu0
      %v4684 = vadd.f32 %v3915, %v4683
      %v4685 = vpop.f32.mrb[0].mxu0
      %v4686 = vadd.f32 %v3919, %v4685
      %v4687 = vpop.f32.mrb[0].mxu0
      %v4688 = vadd.f32 %v3915, %v4687
      %v4689 = vpop.f32.mrb[0].mxu0
      %v4690 = vadd.f32 %v3919, %v4689
      %4691 = vmatprep.mubr.bf16.mxu0 0
      %4692 = vmatmul.mubr.bf16.gmra.mrb[0].mxu0 %v4121
      %v4693 = vpop.f32.mrb[0].mxu0
      %v4694 = vadd.f32 %v3915, %v4693
      %v4695 = vpop.f32.mrb[0].mxu0
      %v4696 = vadd.f32 %v3919, %v4695
      %v4697 = vpop.f32.mrb[0].mxu0
      %v4698 = vadd.f32 %v3915, %v4697
      %v4699 = vpop.f32.mrb[0].mxu0
      %v4700 = vadd.f32 %v3919, %v4699
      %4701 = vdwg.mxu0
      %4702 = vmatprep.subr.bf16.mxu0 0
      %4703 = vmatpush1.bf16.msra.mxu0 %v4025
      %4704 = vmatprep.subr.bf16.mxu0 0
      %4705 = vmatpush1.bf16.msra.mxu0 %v4032
      %4706 = vmatprep.subr.bf16.mxu0 0
      %4707 = vmatpush1.bf16.msra.mxu0 %v4039
      %4708 = vmatprep.subr.bf16.mxu0 0
      %4709 = vmatpush1.bf16.msra.mxu0 %v4046
      %4710 = vmatprep.subr.bf16.mxu0 0
      %4711 = vmatpush1.bf16.msra.mxu0 0
      %4712 = vmatprep.subr.bf16.mxu0 0
      %4713 = vmatpush1.bf16.msra.mxu0 0
      %4714 = vmatprep.subr.bf16.mxu0 0
      %4715 = vmatpush1.bf16.msra.mxu0 0
      %4716 = vmatprep.subr.bf16.mxu0 0
      %4717 = vmatpush1.bf16.msra.mxu0 0
      %4718 = vmatprep.subr.bf16.mxu0 0
      %4719 = vmatpush1.bf16.msra.mxu0 0
      %4720 = vmatprep.subr.bf16.mxu0 0
      %4721 = vmatpush1.bf16.msra.mxu0 0
      %4722 = vmatprep.subr.bf16.mxu0 0
      %4723 = vmatpush1.bf16.msra.mxu0 0
      %4724 = vmatprep.subr.bf16.mxu0 0
      %4725 = vmatpush1.bf16.msra.mxu0 0
      %4726 = vmatprep.subr.bf16.mxu0 0
      %4727 = vmatpush1.bf16.msra.mxu0 0
      %4728 = vmatprep.subr.bf16.mxu0 0
      %4729 = vmatpush1.bf16.msra.mxu0 0
      %4730 = vmatprep.subr.bf16.mxu0 0
      %4731 = vmatpush1.bf16.msra.mxu0 0
      %4732 = vmatprep.subr.bf16.mxu0 0
      %4733 = vmatpush1.bf16.msra.mxu0 0
      %4734 = vmatprep.mubr.bf16.mxu0 0
      %4735 = vmatmul.mubr.bf16.gmra.mrb[0].mxu0 %v4076
      %v4736 = vpop.f32.mrb[0].mxu0
      %v4737 = vadd.f32 %v3923, %v4736
      %v4738 = vpop.f32.mrb[0].mxu0
      %v4739 = vpop.f32.mrb[0].mxu0
      %v4740 = vadd.f32 %v3923, %v4739
      %v4741 = vpop.f32.mrb[0].mxu0
      %4742 = vmatprep.mubr.bf16.mxu0 0
      %4743 = vmatmul.mubr.bf16.gmra.mrb[0].mxu0 %v4079
      %v4744 = vpop.f32.mrb[0].mxu0
      %v4745 = vadd.f32 %v3923, %v4744
      %v4746 = vpop.f32.mrb[0].mxu0
      %v4747 = vpop.f32.mrb[0].mxu0
      %v4748 = vadd.f32 %v3923, %v4747
      %v4749 = vpop.f32.mrb[0].mxu0
      %4750 = vmatprep.mubr.bf16.mxu0 0
      %4751 = vmatmul.mubr.bf16.gmra.mrb[0].mxu0 %v4082
      %v4752 = vpop.f32.mrb[0].mxu0
      %v4753 = vadd.f32 %v3923, %v4752
      %v4754 = vpop.f32.mrb[0].mxu0
      %v4755 = vpop.f32.mrb[0].mxu0
      %v4756 = vadd.f32 %v3923, %v4755
      %v4757 = vpop.f32.mrb[0].mxu0
      %4758 = vmatprep.mubr.bf16.mxu0 0
      %4759 = vmatmul.mubr.bf16.gmra.mrb[0].mxu0 %v4085
      %v4760 = vpop.f32.mrb[0].mxu0
      %v4761 = vadd.f32 %v3923, %v4760
      %v4762 = vpop.f32.mrb[0].mxu0
      %v4763 = vpop.f32.mrb[0].mxu0
      %v4764 = vadd.f32 %v3923, %v4763
      %v4765 = vpop.f32.mrb[0].mxu0
      %4766 = vmatprep.mubr.bf16.mxu0 0
      %4767 = vmatmul.mubr.bf16.gmra.mrb[0].mxu0 %v4088
      %v4768 = vpop.f32.mrb[0].mxu0
      %v4769 = vadd.f32 %v3923, %v4768
      %v4770 = vpop.f32.mrb[0].mxu0
      %v4771 = vpop.f32.mrb[0].mxu0
      %v4772 = vadd.f32 %v3923, %v4771
      %v4773 = vpop.f32.mrb[0].mxu0
      %4774 = vmatprep.mubr.bf16.mxu0 0
      %4775 = vmatmul.mubr.bf16.gmra.mrb[0].mxu0 %v4091
      %v4776 = vpop.f32.mrb[0].mxu0
      %v4777 = vadd.f32 %v3923, %v4776
      %v4778 = vpop.f32.mrb[0].mxu0
      %v4779 = vpop.f32.mrb[0].mxu0
      %v4780 = vadd.f32 %v3923, %v4779
      %v4781 = vpop.f32.mrb[0].mxu0
      %4782 = vmatprep.mubr.bf16.mxu0 0
      %4783 = vmatmul.mubr.bf16.gmra.mrb[0].mxu0 %v4094
      %v4784 = vpop.f32.mrb[0].mxu0
      %v4785 = vadd.f32 %v3923, %v4784
      %v4786 = vpop.f32.mrb[0].mxu0
      %v4787 = vpop.f32.mrb[0].mxu0
      %v4788 = vadd.f32 %v3923, %v4787
      %v4789 = vpop.f32.mrb[0].mxu0
      %4790 = vmatprep.mubr.bf16.mxu0 0
      %4791 = vmatmul.mubr.bf16.gmra.mrb[0].mxu0 %v4097
      %v4792 = vpop.f32.mrb[0].mxu0
      %v4793 = vadd.f32 %v3923, %v4792
      %v4794 = vpop.f32.mrb[0].mxu0
      %v4795 = vpop.f32.mrb[0].mxu0
      %v4796 = vadd.f32 %v3923, %v4795
      %v4797 = vpop.f32.mrb[0].mxu0
      %4798 = vmatprep.mubr.bf16.mxu0 0
      %4799 = vmatmul.mubr.bf16.gmra.mrb[0].mxu0 %v4100
      %v4800 = vpop.f32.mrb[0].mxu0
      %v4801 = vadd.f32 %v3923, %v4800
      %v4802 = vpop.f32.mrb[0].mxu0
      %v4803 = vpop.f32.mrb[0].mxu0
      %v4804 = vadd.f32 %v3923, %v4803
      %v4805 = vpop.f32.mrb[0].mxu0
      %4806 = vmatprep.mubr.bf16.mxu0 0
      %4807 = vmatmul.mubr.bf16.gmra.mrb[0].mxu0 %v4103
      %v4808 = vpop.f32.mrb[0].mxu0
      %v4809 = vadd.f32 %v3923, %v4808
      %v4810 = vpop.f32.mrb[0].mxu0
      %v4811 = vpop.f32.mrb[0].mxu0
      %v4812 = vadd.f32 %v3923, %v4811
      %v4813 = vpop.f32.mrb[0].mxu0
      %4814 = vmatprep.mubr.bf16.mxu0 0
      %4815 = vmatmul.mubr.bf16.gmra.mrb[0].mxu0 %v4106
      %v4816 = vpop.f32.mrb[0].mxu0
      %v4817 = vadd.f32 %v3923, %v4816
      %v4818 = vpop.f32.mrb[0].mxu0
      %v4819 = vpop.f32.mrb[0].mxu0
      %v4820 = vadd.f32 %v3923, %v4819
      %v4821 = vpop.f32.mrb[0].mxu0
      %4822 = vmatprep.mubr.bf16.mxu0 0
      %4823 = vmatmul.mubr.bf16.gmra.mrb[0].mxu0 %v4109
      %v4824 = vpop.f32.mrb[0].mxu0
      %v4825 = vadd.f32 %v3923, %v4824
      %v4826 = vpop.f32.mrb[0].mxu0
      %v4827 = vpop.f32.mrb[0].mxu0
      %v4828 = vadd.f32 %v3923, %v4827
      %v4829 = vpop.f32.mrb[0].mxu0
      %4830 = vmatprep.mubr.bf16.mxu0 0
      %4831 = vmatmul.mubr.bf16.gmra.mrb[0].mxu0 %v4112
      %v4832 = vpop.f32.mrb[0].mxu0
      %v4833 = vadd.f32 %v3923, %v4832
      %v4834 = vpop.f32.mrb[0].mxu0
      %v4835 = vpop.f32.mrb[0].mxu0
      %v4836 = vadd.f32 %v3923, %v4835
      %v4837 = vpop.f32.mrb[0].mxu0
      %4838 = vmatprep.mubr.bf16.mxu0 0
      %4839 = vmatmul.mubr.bf16.gmra.mrb[0].mxu0 %v4115
      %v4840 = vpop.f32.mrb[0].mxu0
      %v4841 = vadd.f32 %v3923, %v4840
      %v4842 = vpop.f32.mrb[0].mxu0
      %v4843 = vpop.f32.mrb[0].mxu0
      %v4844 = vadd.f32 %v3923, %v4843
      %v4845 = vpop.f32.mrb[0].mxu0
      %4846 = vmatprep.mubr.bf16.mxu0 0
      %4847 = vmatmul.mubr.bf16.gmra.mrb[0].mxu0 %v4118
      %v4848 = vpop.f32.mrb[0].mxu0
      %v4849 = vadd.f32 %v3923, %v4848
      %v4850 = vpop.f32.mrb[0].mxu0
      %v4851 = vpop.f32.mrb[0].mxu0
      %v4852 = vadd.f32 %v3923, %v4851
      %v4853 = vpop.f32.mrb[0].mxu0
      %4854 = vmatprep.mubr.bf16.mxu0 0
      %4855 = vmatmul.mubr.bf16.gmra.mrb[0].mxu0 %v4121
      %v4856 = vpop.f32.mrb[0].mxu0
      %v4857 = vadd.f32 %v3923, %v4856
      %v4858 = vpop.f32.mrb[0].mxu0
      %v4859 = vpop.f32.mrb[0].mxu0
      %v4860 = vadd.f32 %v3923, %v4859
      %v4861 = vpop.f32.mrb[0].mxu0
      %4862 = vdwg.mxu0
      %v4863 = vxor.u32 %v4158, 2147483648
      %v4864 = vxor.u32 %v4160, 2147483648
      %v4865 = vxor.u32 %v4351, 2147483648
      %v4866 = vxor.u32 %v4353, 2147483648
      %v4867 = vxor.u32 %v4544, 2147483648
      %v4868 = vxor.u32 %v4546, 2147483648
      %v4869 = vxor.u32 %v4737, 2147483648
      %v4870 = vxor.u32 %v4162, 2147483648
      %v4871 = vxor.u32 %v4164, 2147483648
      %v4872 = vxor.u32 %v4355, 2147483648
      %v4873 = vxor.u32 %v4357, 2147483648
      %v4874 = vxor.u32 %v4548, 2147483648
      %v4875 = vxor.u32 %v4550, 2147483648
      %v4876 = vxor.u32 %v4740, 2147483648
      %v4877 = vxor.u32 %v4168, 2147483648
      %v4878 = vxor.u32 %v4170, 2147483648
      %v4879 = vxor.u32 %v4361, 2147483648
      %v4880 = vxor.u32 %v4363, 2147483648
      %v4881 = vxor.u32 %v4554, 2147483648
      %v4882 = vxor.u32 %v4556, 2147483648
      %v4883 = vxor.u32 %v4745, 2147483648
      %v4884 = vxor.u32 %v4172, 2147483648
      %v4885 = vxor.u32 %v4174, 2147483648
      %v4886 = vxor.u32 %v4365, 2147483648
      %v4887 = vxor.u32 %v4367, 2147483648
      %v4888 = vxor.u32 %v4558, 2147483648
      %v4889 = vxor.u32 %v4560, 2147483648
      %v4890 = vxor.u32 %v4748, 2147483648
      %v4891 = vxor.u32 %v4178, 2147483648
      %v4892 = vxor.u32 %v4180, 2147483648
      %v4893 = vxor.u32 %v4371, 2147483648
      %v4894 = vxor.u32 %v4373, 2147483648
      %v4895 = vxor.u32 %v4564, 2147483648
      %v4896 = vxor.u32 %v4566, 2147483648
      %v4897 = vxor.u32 %v4753, 2147483648
      %v4898 = vxor.u32 %v4182, 2147483648
      %v4899 = vxor.u32 %v4184, 2147483648
      %v4900 = vxor.u32 %v4375, 2147483648
      %v4901 = vxor.u32 %v4377, 2147483648
      %v4902 = vxor.u32 %v4568, 2147483648
      %v4903 = vxor.u32 %v4570, 2147483648
      %v4904 = vxor.u32 %v4756, 2147483648
      %v4905 = vxor.u32 %v4188, 2147483648
      %v4906 = vxor.u32 %v4190, 2147483648
      %v4907 = vxor.u32 %v4381, 2147483648
      %v4908 = vxor.u32 %v4383, 2147483648
      %v4909 = vxor.u32 %v4574, 2147483648
      %v4910 = vxor.u32 %v4576, 2147483648
      %v4911 = vxor.u32 %v4761, 2147483648
      %v4912 = vxor.u32 %v4192, 2147483648
      %v4913 = vxor.u32 %v4194, 2147483648
      %v4914 = vxor.u32 %v4385, 2147483648
      %v4915 = vxor.u32 %v4387, 2147483648
      %v4916 = vxor.u32 %v4578, 2147483648
      %v4917 = vxor.u32 %v4580, 2147483648
      %v4918 = vxor.u32 %v4764, 2147483648
      %v4919 = vxor.u32 %v4198, 2147483648
      %v4920 = vxor.u32 %v4200, 2147483648
      %v4921 = vxor.u32 %v4391, 2147483648
      %v4922 = vxor.u32 %v4393, 2147483648
      %v4923 = vxor.u32 %v4584, 2147483648
      %v4924 = vxor.u32 %v4586, 2147483648
      %v4925 = vxor.u32 %v4769, 2147483648
      %v4926 = vxor.u32 %v4202, 2147483648
      %v4927 = vxor.u32 %v4204, 2147483648
      %v4928 = vxor.u32 %v4395, 2147483648
      %v4929 = vxor.u32 %v4397, 2147483648
      %v4930 = vxor.u32 %v4588, 2147483648
      %v4931 = vxor.u32 %v4590, 2147483648
      %v4932 = vxor.u32 %v4772, 2147483648
      %v4933 = vxor.u32 %v4208, 2147483648
      %v4934 = vxor.u32 %v4210, 2147483648
      %v4935 = vxor.u32 %v4401, 2147483648
      %v4936 = vxor.u32 %v4403, 2147483648
      %v4937 = vxor.u32 %v4594, 2147483648
      %v4938 = vxor.u32 %v4596, 2147483648
      %v4939 = vxor.u32 %v4777, 2147483648
      %v4940 = vxor.u32 %v4212, 2147483648
      %v4941 = vxor.u32 %v4214, 2147483648
      %v4942 = vxor.u32 %v4405, 2147483648
      %v4943 = vxor.u32 %v4407, 2147483648
      %v4944 = vxor.u32 %v4598, 2147483648
      %v4945 = vxor.u32 %v4600, 2147483648
      %v4946 = vxor.u32 %v4780, 2147483648
      %v4947 = vxor.u32 %v4218, 2147483648
      %v4948 = vxor.u32 %v4220, 2147483648
      %v4949 = vxor.u32 %v4411, 2147483648
      %v4950 = vxor.u32 %v4413, 2147483648
      %v4951 = vxor.u32 %v4604, 2147483648
      %v4952 = vxor.u32 %v4606, 2147483648
      %v4953 = vxor.u32 %v4785, 2147483648
      %v4954 = vxor.u32 %v4222, 2147483648
      %v4955 = vxor.u32 %v4224, 2147483648
      %v4956 = vxor.u32 %v4415, 2147483648
      %v4957 = vxor.u32 %v4417, 2147483648
      %v4958 = vxor.u32 %v4608, 2147483648
      %v4959 = vxor.u32 %v4610, 2147483648
      %v4960 = vxor.u32 %v4788, 2147483648
      %v4961 = vxor.u32 %v4228, 2147483648
      %v4962 = vxor.u32 %v4230, 2147483648
      %v4963 = vxor.u32 %v4421, 2147483648
      %v4964 = vxor.u32 %v4423, 2147483648
      %v4965 = vxor.u32 %v4614, 2147483648
      %v4966 = vxor.u32 %v4616, 2147483648
      %v4967 = vxor.u32 %v4793, 2147483648
      %v4968 = vxor.u32 %v4232, 2147483648
      %v4969 = vxor.u32 %v4234, 2147483648
      %v4970 = vxor.u32 %v4425, 2147483648
      %v4971 = vxor.u32 %v4427, 2147483648
      %v4972 = vxor.u32 %v4618, 2147483648
      %v4973 = vxor.u32 %v4620, 2147483648
      %v4974 = vxor.u32 %v4796, 2147483648
      %v4975 = vxor.u32 %v4238, 2147483648
      %v4976 = vxor.u32 %v4240, 2147483648
      %v4977 = vxor.u32 %v4431, 2147483648
      %v4978 = vxor.u32 %v4433, 2147483648
      %v4979 = vxor.u32 %v4624, 2147483648
      %v4980 = vxor.u32 %v4626, 2147483648
      %v4981 = vxor.u32 %v4801, 2147483648
      %v4982 = vxor.u32 %v4242, 2147483648
      %v4983 = vxor.u32 %v4244, 2147483648
      %v4984 = vxor.u32 %v4435, 2147483648
      %v4985 = vxor.u32 %v4437, 2147483648
      %v4986 = vxor.u32 %v4628, 2147483648
      %v4987 = vxor.u32 %v4630, 2147483648
      %v4988 = vxor.u32 %v4804, 2147483648
      %v4989 = vxor.u32 %v4248, 2147483648
      %v4990 = vxor.u32 %v4250, 2147483648
      %v4991 = vxor.u32 %v4441, 2147483648
      %v4992 = vxor.u32 %v4443, 2147483648
      %v4993 = vxor.u32 %v4634, 2147483648
      %v4994 = vxor.u32 %v4636, 2147483648
      %v4995 = vxor.u32 %v4809, 2147483648
      %v4996 = vxor.u32 %v4252, 2147483648
      %v4997 = vxor.u32 %v4254, 2147483648
      %v4998 = vxor.u32 %v4445, 2147483648
      %v4999 = vxor.u32 %v4447, 2147483648
      %v5000 = vxor.u32 %v4638, 2147483648
      %v5001 = vxor.u32 %v4640, 2147483648
      %v5002 = vxor.u32 %v4812, 2147483648
      %v5003 = vxor.u32 %v4258, 2147483648
      %v5004 = vxor.u32 %v4260, 2147483648
      %v5005 = vxor.u32 %v4451, 2147483648
      %v5006 = vxor.u32 %v4453, 2147483648
      %v5007 = vxor.u32 %v4644, 2147483648
      %v5008 = vxor.u32 %v4646, 2147483648
      %v5009 = vxor.u32 %v4817, 2147483648
      %v5010 = vxor.u32 %v4262, 2147483648
      %v5011 = vxor.u32 %v4264, 2147483648
      %v5012 = vxor.u32 %v4455, 2147483648
      %v5013 = vxor.u32 %v4457, 2147483648
      %v5014 = vxor.u32 %v4648, 2147483648
      %v5015 = vxor.u32 %v4650, 2147483648
      %v5016 = vxor.u32 %v4820, 2147483648
      %v5017 = vxor.u32 %v4268, 2147483648
      %v5018 = vxor.u32 %v4270, 2147483648
      %v5019 = vxor.u32 %v4461, 2147483648
      %v5020 = vxor.u32 %v4463, 2147483648
      %v5021 = vxor.u32 %v4654, 2147483648
      %v5022 = vxor.u32 %v4656, 2147483648
      %v5023 = vxor.u32 %v4825, 2147483648
      %v5024 = vxor.u32 %v4272, 2147483648
      %v5025 = vxor.u32 %v4274, 2147483648
      %v5026 = vxor.u32 %v4465, 2147483648
      %v5027 = vxor.u32 %v4467, 2147483648
      %v5028 = vxor.u32 %v4658, 2147483648
      %v5029 = vxor.u32 %v4660, 2147483648
      %v5030 = vxor.u32 %v4828, 2147483648
      %v5031 = vxor.u32 %v4278, 2147483648
      %v5032 = vxor.u32 %v4280, 2147483648
      %v5033 = vxor.u32 %v4471, 2147483648
      %v5034 = vxor.u32 %v4473, 2147483648
      %v5035 = vxor.u32 %v4664, 2147483648
      %v5036 = vxor.u32 %v4666, 2147483648
      %v5037 = vxor.u32 %v4833, 2147483648
      %v5038 = vxor.u32 %v4282, 2147483648
      %v5039 = vxor.u32 %v4284, 2147483648
      %v5040 = vxor.u32 %v4475, 2147483648
      %v5041 = vxor.u32 %v4477, 2147483648
      %v5042 = vxor.u32 %v4668, 2147483648
      %v5043 = vxor.u32 %v4670, 2147483648
      %v5044 = vxor.u32 %v4836, 2147483648
      %v5045 = vxor.u32 %v4288, 2147483648
      %v5046 = vxor.u32 %v4290, 2147483648
      %v5047 = vxor.u32 %v4481, 2147483648
      %v5048 = vxor.u32 %v4483, 2147483648
      %v5049 = vxor.u32 %v4674, 2147483648
      %v5050 = vxor.u32 %v4676, 2147483648
      %v5051 = vxor.u32 %v4841, 2147483648
      %v5052 = vxor.u32 %v4292, 2147483648
      %v5053 = vxor.u32 %v4294, 2147483648
      %v5054 = vxor.u32 %v4485, 2147483648
      %v5055 = vxor.u32 %v4487, 2147483648
      %v5056 = vxor.u32 %v4678, 2147483648
      %v5057 = vxor.u32 %v4680, 2147483648
      %v5058 = vxor.u32 %v4844, 2147483648
      %v5059 = vxor.u32 %v4298, 2147483648
      %v5060 = vxor.u32 %v4300, 2147483648
      %v5061 = vxor.u32 %v4491, 2147483648
      %v5062 = vxor.u32 %v4493, 2147483648
      %v5063 = vxor.u32 %v4684, 2147483648
      %v5064 = vxor.u32 %v4686, 2147483648
      %v5065 = vxor.u32 %v4849, 2147483648
      %v5066 = vxor.u32 %v4302, 2147483648
      %v5067 = vxor.u32 %v4304, 2147483648
      %v5068 = vxor.u32 %v4495, 2147483648
      %v5069 = vxor.u32 %v4497, 2147483648
      %v5070 = vxor.u32 %v4688, 2147483648
      %v5071 = vxor.u32 %v4690, 2147483648
      %v5072 = vxor.u32 %v4852, 2147483648
      %v5073 = vxor.u32 %v4308, 2147483648
      %v5074 = vxor.u32 %v4310, 2147483648
      %v5075 = vxor.u32 %v4501, 2147483648
      %v5076 = vxor.u32 %v4503, 2147483648
      %v5077 = vxor.u32 %v4694, 2147483648
      %v5078 = vxor.u32 %v4696, 2147483648
      %v5079 = vxor.u32 %v4857, 2147483648
      %v5080 = vxor.u32 %v4312, 2147483648
      %v5081 = vxor.u32 %v4314, 2147483648
      %v5082 = vxor.u32 %v4505, 2147483648
      %v5083 = vxor.u32 %v4507, 2147483648
      %v5084 = vxor.u32 %v4698, 2147483648
      %v5085 = vxor.u32 %v4700, 2147483648
      %v5086 = vxor.u32 %v4860, 2147483648
      %v5087 = vmul.f32 %v4863, 1.442695
      %v5088 = vpow.pop %v5087
      %v5089 = vmul.f32 %v4864, 1.442695
      %v5090 = vpow.pop %v5089
      %v5091 = vmul.f32 %v4865, 1.442695
      %v5092 = vpow.pop %v5091
      %v5093 = vmul.f32 %v4866, 1.442695
      %v5094 = vpow.pop %v5093
      %v5095 = vmul.f32 %v4867, 1.442695
      %v5096 = vpow.pop %v5095
      %v5097 = vmul.f32 %v4868, 1.442695
      %v5098 = vpow.pop %v5097
      %v5099 = vmul.f32 %v4869, 1.442695
      %v5100 = vpow.pop %v5099
      %v5101 = vmul.f32 %v4870, 1.442695
      %v5102 = vpow.pop %v5101
      %v5103 = vmul.f32 %v4871, 1.442695
      %v5104 = vpow.pop %v5103
      %v5105 = vmul.f32 %v4872, 1.442695
      %v5106 = vpow.pop %v5105
      %v5107 = vmul.f32 %v4873, 1.442695
      %v5108 = vpow.pop %v5107
      %v5109 = vmul.f32 %v4874, 1.442695
      %v5110 = vpow.pop %v5109
      %v5111 = vmul.f32 %v4875, 1.442695
      %v5112 = vpow.pop %v5111
      %v5113 = vmul.f32 %v4876, 1.442695
      %v5114 = vpow.pop %v5113
      %v5115 = vmul.f32 %v4877, 1.442695
      %v5116 = vpow.pop %v5115
      %v5117 = vmul.f32 %v4878, 1.442695
      %v5118 = vpow.pop %v5117
      %v5119 = vmul.f32 %v4879, 1.442695
      %v5120 = vpow.pop %v5119
      %v5121 = vmul.f32 %v4880, 1.442695
      %v5122 = vpow.pop %v5121
      %v5123 = vmul.f32 %v4881, 1.442695
      %v5124 = vpow.pop %v5123
      %v5125 = vmul.f32 %v4882, 1.442695
      %v5126 = vpow.pop %v5125
      %v5127 = vmul.f32 %v4883, 1.442695
      %v5128 = vpow.pop %v5127
      %v5129 = vmul.f32 %v4884, 1.442695
      %v5130 = vpow.pop %v5129
      %v5131 = vmul.f32 %v4885, 1.442695
      %v5132 = vpow.pop %v5131
      %v5133 = vmul.f32 %v4886, 1.442695
      %v5134 = vpow.pop %v5133
      %v5135 = vmul.f32 %v4887, 1.442695
      %v5136 = vpow.pop %v5135
      %v5137 = vmul.f32 %v4888, 1.442695
      %v5138 = vpow.pop %v5137
      %v5139 = vmul.f32 %v4889, 1.442695
      %v5140 = vpow.pop %v5139
      %v5141 = vmul.f32 %v4890, 1.442695
      %v5142 = vpow.pop %v5141
      %v5143 = vmul.f32 %v4891, 1.442695
      %v5144 = vpow.pop %v5143
      %v5145 = vmul.f32 %v4892, 1.442695
      %v5146 = vpow.pop %v5145
      %v5147 = vmul.f32 %v4893, 1.442695
      %v5148 = vpow.pop %v5147
      %v5149 = vmul.f32 %v4894, 1.442695
      %v5150 = vpow.pop %v5149
      %v5151 = vmul.f32 %v4895, 1.442695
      %v5152 = vpow.pop %v5151
      %v5153 = vmul.f32 %v4896, 1.442695
      %v5154 = vpow.pop %v5153
      %v5155 = vmul.f32 %v4897, 1.442695
      %v5156 = vpow.pop %v5155
      %v5157 = vmul.f32 %v4898, 1.442695
      %v5158 = vpow.pop %v5157
      %v5159 = vmul.f32 %v4899, 1.442695
      %v5160 = vpow.pop %v5159
      %v5161 = vmul.f32 %v4900, 1.442695
      %v5162 = vpow.pop %v5161
      %v5163 = vmul.f32 %v4901, 1.442695
      %v5164 = vpow.pop %v5163
      %v5165 = vmul.f32 %v4902, 1.442695
      %v5166 = vpow.pop %v5165
      %v5167 = vmul.f32 %v4903, 1.442695
      %v5168 = vpow.pop %v5167
      %v5169 = vmul.f32 %v4904, 1.442695
      %v5170 = vpow.pop %v5169
      %v5171 = vmul.f32 %v4905, 1.442695
      %v5172 = vpow.pop %v5171
      %v5173 = vmul.f32 %v4906, 1.442695
      %v5174 = vpow.pop %v5173
      %v5175 = vmul.f32 %v4907, 1.442695
      %v5176 = vpow.pop %v5175
      %v5177 = vmul.f32 %v4908, 1.442695
      %v5178 = vpow.pop %v5177
      %v5179 = vmul.f32 %v4909, 1.442695
      %v5180 = vpow.pop %v5179
      %v5181 = vmul.f32 %v4910, 1.442695
      %v5182 = vpow.pop %v5181
      %v5183 = vmul.f32 %v4911, 1.442695
      %v5184 = vpow.pop %v5183
      %v5185 = vmul.f32 %v4912, 1.442695
      %v5186 = vpow.pop %v5185
      %v5187 = vmul.f32 %v4913, 1.442695
      %v5188 = vpow.pop %v5187
      %v5189 = vmul.f32 %v4914, 1.442695
      %v5190 = vpow.pop %v5189
      %v5191 = vmul.f32 %v4915, 1.442695
      %v5192 = vpow.pop %v5191
      %v5193 = vmul.f32 %v4916, 1.442695
      %v5194 = vpow.pop %v5193
      %v5195 = vmul.f32 %v4917, 1.442695
      %v5196 = vpow.pop %v5195
      %v5197 = vmul.f32 %v4918, 1.442695
      %v5198 = vpow.pop %v5197
      %v5199 = vmul.f32 %v4919, 1.442695
      %v5200 = vpow.pop %v5199
      %v5201 = vmul.f32 %v4920, 1.442695
      %v5202 = vpow.pop %v5201
      %v5203 = vmul.f32 %v4921, 1.442695
      %v5204 = vpow.pop %v5203
      %v5205 = vmul.f32 %v4922, 1.442695
      %v5206 = vpow.pop %v5205
      %v5207 = vmul.f32 %v4923, 1.442695
      %v5208 = vpow.pop %v5207
      %v5209 = vmul.f32 %v4924, 1.442695
      %v5210 = vpow.pop %v5209
      %v5211 = vmul.f32 %v4925, 1.442695
      %v5212 = vpow.pop %v5211
      %v5213 = vmul.f32 %v4926, 1.442695
      %v5214 = vpow.pop %v5213
      %v5215 = vmul.f32 %v4927, 1.442695
      %v5216 = vpow.pop %v5215
      %v5217 = vmul.f32 %v4928, 1.442695
      %v5218 = vpow.pop %v5217
      %v5219 = vmul.f32 %v4929, 1.442695
      %v5220 = vpow.pop %v5219
      %v5221 = vmul.f32 %v4930, 1.442695
      %v5222 = vpow.pop %v5221
      %v5223 = vmul.f32 %v4931, 1.442695
      %v5224 = vpow.pop %v5223
      %v5225 = vmul.f32 %v4932, 1.442695
      %v5226 = vpow.pop %v5225
      %v5227 = vmul.f32 %v4933, 1.442695
      %v5228 = vpow.pop %v5227
      %v5229 = vmul.f32 %v4934, 1.442695
      %v5230 = vpow.pop %v5229
      %v5231 = vmul.f32 %v4935, 1.442695
      %v5232 = vpow.pop %v5231
      %v5233 = vmul.f32 %v4936, 1.442695
      %v5234 = vpow.pop %v5233
      %v5235 = vmul.f32 %v4937, 1.442695
      %v5236 = vpow.pop %v5235
      %v5237 = vmul.f32 %v4938, 1.442695
      %v5238 = vpow.pop %v5237
      %v5239 = vmul.f32 %v4939, 1.442695
      %v5240 = vpow.pop %v5239
      %v5241 = vmul.f32 %v4940, 1.442695
      %v5242 = vpow.pop %v5241
      %v5243 = vmul.f32 %v4941, 1.442695
      %v5244 = vpow.pop %v5243
      %v5245 = vmul.f32 %v4942, 1.442695
      %v5246 = vpow.pop %v5245
      %v5247 = vmul.f32 %v4943, 1.442695
      %v5248 = vpow.pop %v5247
      %v5249 = vmul.f32 %v4944, 1.442695
      %v5250 = vpow.pop %v5249
      %v5251 = vmul.f32 %v4945, 1.442695
      %v5252 = vpow.pop %v5251
      %v5253 = vmul.f32 %v4946, 1.442695
      %v5254 = vpow.pop %v5253
      %v5255 = vmul.f32 %v4947, 1.442695
      %v5256 = vpow.pop %v5255
      %v5257 = vmul.f32 %v4948, 1.442695
      %v5258 = vpow.pop %v5257
      %v5259 = vmul.f32 %v4949, 1.442695
      %v5260 = vpow.pop %v5259
      %v5261 = vmul.f32 %v4950, 1.442695
      %v5262 = vpow.pop %v5261
      %v5263 = vmul.f32 %v4951, 1.442695
      %v5264 = vpow.pop %v5263
      %v5265 = vmul.f32 %v4952, 1.442695
      %v5266 = vpow.pop %v5265
      %v5267 = vmul.f32 %v4953, 1.442695
      %v5268 = vpow.pop %v5267
      %v5269 = vmul.f32 %v4954, 1.442695
      %v5270 = vpow.pop %v5269
      %v5271 = vmul.f32 %v4955, 1.442695
      %v5272 = vpow.pop %v5271
      %v5273 = vmul.f32 %v4956, 1.442695
      %v5274 = vpow.pop %v5273
      %v5275 = vmul.f32 %v4957, 1.442695
      %v5276 = vpow.pop %v5275
      %v5277 = vmul.f32 %v4958, 1.442695
      %v5278 = vpow.pop %v5277
      %v5279 = vmul.f32 %v4959, 1.442695
      %v5280 = vpow.pop %v5279
      %v5281 = vmul.f32 %v4960, 1.442695
      %v5282 = vpow.pop %v5281
      %v5283 = vmul.f32 %v4961, 1.442695
      %v5284 = vpow.pop %v5283
      %v5285 = vmul.f32 %v4962, 1.442695
      %v5286 = vpow.pop %v5285
      %v5287 = vmul.f32 %v4963, 1.442695
      %v5288 = vpow.pop %v5287
      %v5289 = vmul.f32 %v4964, 1.442695
      %v5290 = vpow.pop %v5289
      %v5291 = vmul.f32 %v4965, 1.442695
      %v5292 = vpow.pop %v5291
      %v5293 = vmul.f32 %v4966, 1.442695
      %v5294 = vpow.pop %v5293
      %v5295 = vmul.f32 %v4967, 1.442695
      %v5296 = vpow.pop %v5295
      %v5297 = vmul.f32 %v4968, 1.442695
      %v5298 = vpow.pop %v5297
      %v5299 = vmul.f32 %v4969, 1.442695
      %v5300 = vpow.pop %v5299
      %v5301 = vmul.f32 %v4970, 1.442695
      %v5302 = vpow.pop %v5301
      %v5303 = vmul.f32 %v4971, 1.442695
      %v5304 = vpow.pop %v5303
      %v5305 = vmul.f32 %v4972, 1.442695
      %v5306 = vpow.pop %v5305
      %v5307 = vmul.f32 %v4973, 1.442695
      %v5308 = vpow.pop %v5307
      %v5309 = vmul.f32 %v4974, 1.442695
      %v5310 = vpow.pop %v5309
      %v5311 = vmul.f32 %v4975, 1.442695
      %v5312 = vpow.pop %v5311
      %v5313 = vmul.f32 %v4976, 1.442695
      %v5314 = vpow.pop %v5313
      %v5315 = vmul.f32 %v4977, 1.442695
      %v5316 = vpow.pop %v5315
      %v5317 = vmul.f32 %v4978, 1.442695
      %v5318 = vpow.pop %v5317
      %v5319 = vmul.f32 %v4979, 1.442695
      %v5320 = vpow.pop %v5319
      %v5321 = vmul.f32 %v4980, 1.442695
      %v5322 = vpow.pop %v5321
      %v5323 = vmul.f32 %v4981, 1.442695
      %v5324 = vpow.pop %v5323
      %v5325 = vmul.f32 %v4982, 1.442695
      %v5326 = vpow.pop %v5325
      %v5327 = vmul.f32 %v4983, 1.442695
      %v5328 = vpow.pop %v5327
      %v5329 = vmul.f32 %v4984, 1.442695
      %v5330 = vpow.pop %v5329
      %v5331 = vmul.f32 %v4985, 1.442695
      %v5332 = vpow.pop %v5331
      %v5333 = vmul.f32 %v4986, 1.442695
      %v5334 = vpow.pop %v5333
      %v5335 = vmul.f32 %v4987, 1.442695
      %v5336 = vpow.pop %v5335
      %v5337 = vmul.f32 %v4988, 1.442695
      %v5338 = vpow.pop %v5337
      %v5339 = vmul.f32 %v4989, 1.442695
      %v5340 = vpow.pop %v5339
      %v5341 = vmul.f32 %v4990, 1.442695
      %v5342 = vpow.pop %v5341
      %v5343 = vmul.f32 %v4991, 1.442695
      %v5344 = vpow.pop %v5343
      %v5345 = vmul.f32 %v4992, 1.442695
      %v5346 = vpow.pop %v5345
      %v5347 = vmul.f32 %v4993, 1.442695
      %v5348 = vpow.pop %v5347
      %v5349 = vmul.f32 %v4994, 1.442695
      %v5350 = vpow.pop %v5349
      %v5351 = vmul.f32 %v4995, 1.442695
      %v5352 = vpow.pop %v5351
      %v5353 = vmul.f32 %v4996, 1.442695
      %v5354 = vpow.pop %v5353
      %v5355 = vmul.f32 %v4997, 1.442695
      %v5356 = vpow.pop %v5355
      %v5357 = vmul.f32 %v4998, 1.442695
      %v5358 = vpow.pop %v5357
      %v5359 = vmul.f32 %v4999, 1.442695
      %v5360 = vpow.pop %v5359
      %v5361 = vmul.f32 %v5000, 1.442695
      %v5362 = vpow.pop %v5361
      %v5363 = vmul.f32 %v5001, 1.442695
      %v5364 = vpow.pop %v5363
      %v5365 = vmul.f32 %v5002, 1.442695
      %v5366 = vpow.pop %v5365
      %v5367 = vmul.f32 %v5003, 1.442695
      %v5368 = vpow.pop %v5367
      %v5369 = vmul.f32 %v5004, 1.442695
      %v5370 = vpow.pop %v5369
      %v5371 = vmul.f32 %v5005, 1.442695
      %v5372 = vpow.pop %v5371
      %v5373 = vmul.f32 %v5006, 1.442695
      %v5374 = vpow.pop %v5373
      %v5375 = vmul.f32 %v5007, 1.442695
      %v5376 = vpow.pop %v5375
      %v5377 = vmul.f32 %v5008, 1.442695
      %v5378 = vpow.pop %v5377
      %v5379 = vmul.f32 %v5009, 1.442695
      %v5380 = vpow.pop %v5379
      %v5381 = vmul.f32 %v5010, 1.442695
      %v5382 = vpow.pop %v5381
      %v5383 = vmul.f32 %v5011, 1.442695
      %v5384 = vpow.pop %v5383
      %v5385 = vmul.f32 %v5012, 1.442695
      %v5386 = vpow.pop %v5385
      %v5387 = vmul.f32 %v5013, 1.442695
      %v5388 = vpow.pop %v5387
      %v5389 = vmul.f32 %v5014, 1.442695
      %v5390 = vpow.pop %v5389
      %v5391 = vmul.f32 %v5015, 1.442695
      %v5392 = vpow.pop %v5391
      %v5393 = vmul.f32 %v5016, 1.442695
      %v5394 = vpow.pop %v5393
      %v5395 = vmul.f32 %v5017, 1.442695
      %v5396 = vpow.pop %v5395
      %v5397 = vmul.f32 %v5018, 1.442695
      %v5398 = vpow.pop %v5397
      %v5399 = vmul.f32 %v5019, 1.442695
      %v5400 = vpow.pop %v5399
      %v5401 = vmul.f32 %v5020, 1.442695
      %v5402 = vpow.pop %v5401
      %v5403 = vmul.f32 %v5021, 1.442695
      %v5404 = vpow.pop %v5403
      %v5405 = vmul.f32 %v5022, 1.442695
      %v5406 = vpow.pop %v5405
      %v5407 = vmul.f32 %v5023, 1.442695
      %v5408 = vpow.pop %v5407
      %v5409 = vmul.f32 %v5024, 1.442695
      %v5410 = vpow.pop %v5409
      %v5411 = vmul.f32 %v5025, 1.442695
      %v5412 = vpow.pop %v5411
      %v5413 = vmul.f32 %v5026, 1.442695
      %v5414 = vpow.pop %v5413
      %v5415 = vmul.f32 %v5027, 1.442695
      %v5416 = vpow.pop %v5415
      %v5417 = vmul.f32 %v5028, 1.442695
      %v5418 = vpow.pop %v5417
      %v5419 = vmul.f32 %v5029, 1.442695
      %v5420 = vpow.pop %v5419
      %v5421 = vmul.f32 %v5030, 1.442695
      %v5422 = vpow.pop %v5421
      %v5423 = vmul.f32 %v5031, 1.442695
      %v5424 = vpow.pop %v5423
      %v5425 = vmul.f32 %v5032, 1.442695
      %v5426 = vpow.pop %v5425
      %v5427 = vmul.f32 %v5033, 1.442695
      %v5428 = vpow.pop %v5427
      %v5429 = vmul.f32 %v5034, 1.442695
      %v5430 = vpow.pop %v5429
      %v5431 = vmul.f32 %v5035, 1.442695
      %v5432 = vpow.pop %v5431
      %v5433 = vmul.f32 %v5036, 1.442695
      %v5434 = vpow.pop %v5433
      %v5435 = vmul.f32 %v5037, 1.442695
      %v5436 = vpow.pop %v5435
      %v5437 = vmul.f32 %v5038, 1.442695
      %v5438 = vpow.pop %v5437
      %v5439 = vmul.f32 %v5039, 1.442695
      %v5440 = vpow.pop %v5439
      %v5441 = vmul.f32 %v5040, 1.442695
      %v5442 = vpow.pop %v5441
      %v5443 = vmul.f32 %v5041, 1.442695
      %v5444 = vpow.pop %v5443
      %v5445 = vmul.f32 %v5042, 1.442695
      %v5446 = vpow.pop %v5445
      %v5447 = vmul.f32 %v5043, 1.442695
      %v5448 = vpow.pop %v5447
      %v5449 = vmul.f32 %v5044, 1.442695
      %v5450 = vpow.pop %v5449
      %v5451 = vmul.f32 %v5045, 1.442695
      %v5452 = vpow.pop %v5451
      %v5453 = vmul.f32 %v5046, 1.442695
      %v5454 = vpow.pop %v5453
      %v5455 = vmul.f32 %v5047, 1.442695
      %v5456 = vpow.pop %v5455
      %v5457 = vmul.f32 %v5048, 1.442695
      %v5458 = vpow.pop %v5457
      %v5459 = vmul.f32 %v5049, 1.442695
      %v5460 = vpow.pop %v5459
      %v5461 = vmul.f32 %v5050, 1.442695
      %v5462 = vpow.pop %v5461
      %v5463 = vmul.f32 %v5051, 1.442695
      %v5464 = vpow.pop %v5463
      %v5465 = vmul.f32 %v5052, 1.442695
      %v5466 = vpow.pop %v5465
      %v5467 = vmul.f32 %v5053, 1.442695
      %v5468 = vpow.pop %v5467
      %v5469 = vmul.f32 %v5054, 1.442695
      %v5470 = vpow.pop %v5469
      %v5471 = vmul.f32 %v5055, 1.442695
      %v5472 = vpow.pop %v5471
      %v5473 = vmul.f32 %v5056, 1.442695
      %v5474 = vpow.pop %v5473
      %v5475 = vmul.f32 %v5057, 1.442695
      %v5476 = vpow.pop %v5475
      %v5477 = vmul.f32 %v5058, 1.442695
      %v5478 = vpow.pop %v5477
      %v5479 = vmul.f32 %v5059, 1.442695
      %v5480 = vpow.pop %v5479
      %v5481 = vmul.f32 %v5060, 1.442695
      %v5482 = vpow.pop %v5481
      %v5483 = vmul.f32 %v5061, 1.442695
      %v5484 = vpow.pop %v5483
      %v5485 = vmul.f32 %v5062, 1.442695
      %v5486 = vpow.pop %v5485
      %v5487 = vmul.f32 %v5063, 1.442695
      %v5488 = vpow.pop %v5487
      %v5489 = vmul.f32 %v5064, 1.442695
      %v5490 = vpow.pop %v5489
      %v5491 = vmul.f32 %v5065, 1.442695
      %v5492 = vpow.pop %v5491
      %v5493 = vmul.f32 %v5066, 1.442695
      %v5494 = vpow.pop %v5493
      %v5495 = vmul.f32 %v5067, 1.442695
      %v5496 = vpow.pop %v5495
      %v5497 = vmul.f32 %v5068, 1.442695
      %v5498 = vpow.pop %v5497
      %v5499 = vmul.f32 %v5069, 1.442695
      %v5500 = vpow.pop %v5499
      %v5501 = vmul.f32 %v5070, 1.442695
      %v5502 = vpow.pop %v5501
      %v5503 = vmul.f32 %v5071, 1.442695
      %v5504 = vpow.pop %v5503
      %v5505 = vmul.f32 %v5072, 1.442695
      %v5506 = vpow.pop %v5505
      %v5507 = vmul.f32 %v5073, 1.442695
      %v5508 = vpow.pop %v5507
      %v5509 = vmul.f32 %v5074, 1.442695
      %v5510 = vpow.pop %v5509
      %v5511 = vmul.f32 %v5075, 1.442695
      %v5512 = vpow.pop %v5511
      %v5513 = vmul.f32 %v5076, 1.442695
      %v5514 = vpow.pop %v5513
      %v5515 = vmul.f32 %v5077, 1.442695
      %v5516 = vpow.pop %v5515
      %v5517 = vmul.f32 %v5078, 1.442695
      %v5518 = vpow.pop %v5517
      %v5519 = vmul.f32 %v5079, 1.442695
      %v5520 = vpow.pop %v5519
      %v5521 = vmul.f32 %v5080, 1.442695
      %v5522 = vpow.pop %v5521
      %v5523 = vmul.f32 %v5081, 1.442695
      %v5524 = vpow.pop %v5523
      %v5525 = vmul.f32 %v5082, 1.442695
      %v5526 = vpow.pop %v5525
      %v5527 = vmul.f32 %v5083, 1.442695
      %v5528 = vpow.pop %v5527
      %v5529 = vmul.f32 %v5084, 1.442695
      %v5530 = vpow.pop %v5529
      %v5531 = vmul.f32 %v5085, 1.442695
      %v5532 = vpow.pop %v5531
      %v5533 = vmul.f32 %v5086, 1.442695
      %v5534 = vpow.pop %v5533
      %v5535 = vadd.f32 %v5088, 1.0
      %v5536 = vadd.f32 %v5090, 1.0
      %v5537 = vadd.f32 %v5092, 1.0
      %v5538 = vadd.f32 %v5094, 1.0
      %v5539 = vadd.f32 %v5096, 1.0
      %v5540 = vadd.f32 %v5098, 1.0
      %v5541 = vadd.f32 %v5100, 1.0
      %v5542 = vadd.f32 %v5102, 1.0
      %v5543 = vadd.f32 %v5104, 1.0
      %v5544 = vadd.f32 %v5106, 1.0
      %v5545 = vadd.f32 %v5108, 1.0
      %v5546 = vadd.f32 %v5110, 1.0
      %v5547 = vadd.f32 %v5112, 1.0
      %v5548 = vadd.f32 %v5114, 1.0
      %v5549 = vadd.f32 %v5116, 1.0
      %v5550 = vadd.f32 %v5118, 1.0
      %v5551 = vadd.f32 %v5120, 1.0
      %v5552 = vadd.f32 %v5122, 1.0
      %v5553 = vadd.f32 %v5124, 1.0
      %v5554 = vadd.f32 %v5126, 1.0
      %v5555 = vadd.f32 %v5128, 1.0
      %v5556 = vadd.f32 %v5130, 1.0
      %v5557 = vadd.f32 %v5132, 1.0
      %v5558 = vadd.f32 %v5134, 1.0
      %v5559 = vadd.f32 %v5136, 1.0
      %v5560 = vadd.f32 %v5138, 1.0
      %v5561 = vadd.f32 %v5140, 1.0
      %v5562 = vadd.f32 %v5142, 1.0
      %v5563 = vadd.f32 %v5144, 1.0
      %v5564 = vadd.f32 %v5146, 1.0
      %v5565 = vadd.f32 %v5148, 1.0
      %v5566 = vadd.f32 %v5150, 1.0
      %v5567 = vadd.f32 %v5152, 1.0
      %v5568 = vadd.f32 %v5154, 1.0
      %v5569 = vadd.f32 %v5156, 1.0
      %v5570 = vadd.f32 %v5158, 1.0
      %v5571 = vadd.f32 %v5160, 1.0
      %v5572 = vadd.f32 %v5162, 1.0
      %v5573 = vadd.f32 %v5164, 1.0
      %v5574 = vadd.f32 %v5166, 1.0
      %v5575 = vadd.f32 %v5168, 1.0
      %v5576 = vadd.f32 %v5170, 1.0
      %v5577 = vadd.f32 %v5172, 1.0
      %v5578 = vadd.f32 %v5174, 1.0
      %v5579 = vadd.f32 %v5176, 1.0
      %v5580 = vadd.f32 %v5178, 1.0
      %v5581 = vadd.f32 %v5180, 1.0
      %v5582 = vadd.f32 %v5182, 1.0
      %v5583 = vadd.f32 %v5184, 1.0
      %v5584 = vadd.f32 %v5186, 1.0
      %v5585 = vadd.f32 %v5188, 1.0
      %v5586 = vadd.f32 %v5190, 1.0
      %v5587 = vadd.f32 %v5192, 1.0
      %v5588 = vadd.f32 %v5194, 1.0
      %v5589 = vadd.f32 %v5196, 1.0
      %v5590 = vadd.f32 %v5198, 1.0
      %v5591 = vadd.f32 %v5200, 1.0
      %v5592 = vadd.f32 %v5202, 1.0
      %v5593 = vadd.f32 %v5204, 1.0
      %v5594 = vadd.f32 %v5206, 1.0
      %v5595 = vadd.f32 %v5208, 1.0
      %v5596 = vadd.f32 %v5210, 1.0
      %v5597 = vadd.f32 %v5212, 1.0
      %v5598 = vadd.f32 %v5214, 1.0
      %v5599 = vadd.f32 %v5216, 1.0
      %v5600 = vadd.f32 %v5218, 1.0
      %v5601 = vadd.f32 %v5220, 1.0
      %v5602 = vadd.f32 %v5222, 1.0
      %v5603 = vadd.f32 %v5224, 1.0
      %v5604 = vadd.f32 %v5226, 1.0
      %v5605 = vadd.f32 %v5228, 1.0
      %v5606 = vadd.f32 %v5230, 1.0
      %v5607 = vadd.f32 %v5232, 1.0
      %v5608 = vadd.f32 %v5234, 1.0
      %v5609 = vadd.f32 %v5236, 1.0
      %v5610 = vadd.f32 %v5238, 1.0
      %v5611 = vadd.f32 %v5240, 1.0
      %v5612 = vadd.f32 %v5242, 1.0
      %v5613 = vadd.f32 %v5244, 1.0
      %v5614 = vadd.f32 %v5246, 1.0
      %v5615 = vadd.f32 %v5248, 1.0
      %v5616 = vadd.f32 %v5250, 1.0
      %v5617 = vadd.f32 %v5252, 1.0
      %v5618 = vadd.f32 %v5254, 1.0
      %v5619 = vadd.f32 %v5256, 1.0
      %v5620 = vadd.f32 %v5258, 1.0
      %v5621 = vadd.f32 %v5260, 1.0
      %v5622 = vadd.f32 %v5262, 1.0
      %v5623 = vadd.f32 %v5264, 1.0
      %v5624 = vadd.f32 %v5266, 1.0
      %v5625 = vadd.f32 %v5268, 1.0
      %v5626 = vadd.f32 %v5270, 1.0
      %v5627 = vadd.f32 %v5272, 1.0
      %v5628 = vadd.f32 %v5274, 1.0
      %v5629 = vadd.f32 %v5276, 1.0
      %v5630 = vadd.f32 %v5278, 1.0
      %v5631 = vadd.f32 %v5280, 1.0
      %v5632 = vadd.f32 %v5282, 1.0
      %v5633 = vadd.f32 %v5284, 1.0
      %v5634 = vadd.f32 %v5286, 1.0
      %v5635 = vadd.f32 %v5288, 1.0
      %v5636 = vadd.f32 %v5290, 1.0
      %v5637 = vadd.f32 %v5292, 1.0
      %v5638 = vadd.f32 %v5294, 1.0
      %v5639 = vadd.f32 %v5296, 1.0
      %v5640 = vadd.f32 %v5298, 1.0
      %v5641 = vadd.f32 %v5300, 1.0
      %v5642 = vadd.f32 %v5302, 1.0
      %v5643 = vadd.f32 %v5304, 1.0
      %v5644 = vadd.f32 %v5306, 1.0
      %v5645 = vadd.f32 %v5308, 1.0
      %v5646 = vadd.f32 %v5310, 1.0
      %v5647 = vadd.f32 %v5312, 1.0
      %v5648 = vadd.f32 %v5314, 1.0
      %v5649 = vadd.f32 %v5316, 1.0
      %v5650 = vadd.f32 %v5318, 1.0
      %v5651 = vadd.f32 %v5320, 1.0
      %v5652 = vadd.f32 %v5322, 1.0
      %v5653 = vadd.f32 %v5324, 1.0
      %v5654 = vadd.f32 %v5326, 1.0
      %v5655 = vadd.f32 %v5328, 1.0
      %v5656 = vadd.f32 %v5330, 1.0
      %v5657 = vadd.f32 %v5332, 1.0
      %v5658 = vadd.f32 %v5334, 1.0
      %v5659 = vadd.f32 %v5336, 1.0
      %v5660 = vadd.f32 %v5338, 1.0
      %v5661 = vadd.f32 %v5340, 1.0
      %v5662 = vadd.f32 %v5342, 1.0
      %v5663 = vadd.f32 %v5344, 1.0
      %v5664 = vadd.f32 %v5346, 1.0
      %v5665 = vadd.f32 %v5348, 1.0
      %v5666 = vadd.f32 %v5350, 1.0
      %v5667 = vadd.f32 %v5352, 1.0
      %v5668 = vadd.f32 %v5354, 1.0
      %v5669 = vadd.f32 %v5356, 1.0
      %v5670 = vadd.f32 %v5358, 1.0
      %v5671 = vadd.f32 %v5360, 1.0
      %v5672 = vadd.f32 %v5362, 1.0
      %v5673 = vadd.f32 %v5364, 1.0
      %v5674 = vadd.f32 %v5366, 1.0
      %v5675 = vadd.f32 %v5368, 1.0
      %v5676 = vadd.f32 %v5370, 1.0
      %v5677 = vadd.f32 %v5372, 1.0
      %v5678 = vadd.f32 %v5374, 1.0
      %v5679 = vadd.f32 %v5376, 1.0
      %v5680 = vadd.f32 %v5378, 1.0
      %v5681 = vadd.f32 %v5380, 1.0
      %v5682 = vadd.f32 %v5382, 1.0
      %v5683 = vadd.f32 %v5384, 1.0
      %v5684 = vadd.f32 %v5386, 1.0
      %v5685 = vadd.f32 %v5388, 1.0
      %v5686 = vadd.f32 %v5390, 1.0
      %v5687 = vadd.f32 %v5392, 1.0
      %v5688 = vadd.f32 %v5394, 1.0
      %v5689 = vadd.f32 %v5396, 1.0
      %v5690 = vadd.f32 %v5398, 1.0
      %v5691 = vadd.f32 %v5400, 1.0
      %v5692 = vadd.f32 %v5402, 1.0
      %v5693 = vadd.f32 %v5404, 1.0
      %v5694 = vadd.f32 %v5406, 1.0
      %v5695 = vadd.f32 %v5408, 1.0
      %v5696 = vadd.f32 %v5410, 1.0
      %v5697 = vadd.f32 %v5412, 1.0
      %v5698 = vadd.f32 %v5414, 1.0
      %v5699 = vadd.f32 %v5416, 1.0
      %v5700 = vadd.f32 %v5418, 1.0
      %v5701 = vadd.f32 %v5420, 1.0
      %v5702 = vadd.f32 %v5422, 1.0
      %v5703 = vadd.f32 %v5424, 1.0
      %v5704 = vadd.f32 %v5426, 1.0
      %v5705 = vadd.f32 %v5428, 1.0
      %v5706 = vadd.f32 %v5430, 1.0
      %v5707 = vadd.f32 %v5432, 1.0
      %v5708 = vadd.f32 %v5434, 1.0
      %v5709 = vadd.f32 %v5436, 1.0
      %v5710 = vadd.f32 %v5438, 1.0
      %v5711 = vadd.f32 %v5440, 1.0
      %v5712 = vadd.f32 %v5442, 1.0
      %v5713 = vadd.f32 %v5444, 1.0
      %v5714 = vadd.f32 %v5446, 1.0
      %v5715 = vadd.f32 %v5448, 1.0
      %v5716 = vadd.f32 %v5450, 1.0
      %v5717 = vadd.f32 %v5452, 1.0
      %v5718 = vadd.f32 %v5454, 1.0
      %v5719 = vadd.f32 %v5456, 1.0
      %v5720 = vadd.f32 %v5458, 1.0
      %v5721 = vadd.f32 %v5460, 1.0
      %v5722 = vadd.f32 %v5462, 1.0
      %v5723 = vadd.f32 %v5464, 1.0
      %v5724 = vadd.f32 %v5466, 1.0
      %v5725 = vadd.f32 %v5468, 1.0
      %v5726 = vadd.f32 %v5470, 1.0
      %v5727 = vadd.f32 %v5472, 1.0
      %v5728 = vadd.f32 %v5474, 1.0
      %v5729 = vadd.f32 %v5476, 1.0
      %v5730 = vadd.f32 %v5478, 1.0
      %v5731 = vadd.f32 %v5480, 1.0
      %v5732 = vadd.f32 %v5482, 1.0
      %v5733 = vadd.f32 %v5484, 1.0
      %v5734 = vadd.f32 %v5486, 1.0
      %v5735 = vadd.f32 %v5488, 1.0
      %v5736 = vadd.f32 %v5490, 1.0
      %v5737 = vadd.f32 %v5492, 1.0
      %v5738 = vadd.f32 %v5494, 1.0
      %v5739 = vadd.f32 %v5496, 1.0
      %v5740 = vadd.f32 %v5498, 1.0
      %v5741 = vadd.f32 %v5500, 1.0
      %v5742 = vadd.f32 %v5502, 1.0
      %v5743 = vadd.f32 %v5504, 1.0
      %v5744 = vadd.f32 %v5506, 1.0
      %v5745 = vadd.f32 %v5508, 1.0
      %v5746 = vadd.f32 %v5510, 1.0
      %v5747 = vadd.f32 %v5512, 1.0
      %v5748 = vadd.f32 %v5514, 1.0
      %v5749 = vadd.f32 %v5516, 1.0
      %v5750 = vadd.f32 %v5518, 1.0
      %v5751 = vadd.f32 %v5520, 1.0
      %v5752 = vadd.f32 %v5522, 1.0
      %v5753 = vadd.f32 %v5524, 1.0
      %v5754 = vadd.f32 %v5526, 1.0
      %v5755 = vadd.f32 %v5528, 1.0
      %v5756 = vadd.f32 %v5530, 1.0
      %v5757 = vadd.f32 %v5532, 1.0
      %v5758 = vadd.f32 %v5534, 1.0
      %v5759 = vrcp.pop %v5535
      %v5760 = vmul.f32 1.0, %v5759
      %v5761 = vrcp.pop %v5536
      %v5762 = vmul.f32 1.0, %v5761
      %v5763 = vrcp.pop %v5537
      %v5764 = vmul.f32 1.0, %v5763
      %v5765 = vrcp.pop %v5538
      %v5766 = vmul.f32 1.0, %v5765
      %v5767 = vrcp.pop %v5539
      %v5768 = vmul.f32 1.0, %v5767
      %v5769 = vrcp.pop %v5540
      %v5770 = vmul.f32 1.0, %v5769
      %v5771 = vrcp.pop %v5541
      %v5772 = vmul.f32 1.0, %v5771
      %v5773 = vrcp.pop %v5542
      %v5774 = vmul.f32 1.0, %v5773
      %v5775 = vrcp.pop %v5543
      %v5776 = vmul.f32 1.0, %v5775
      %v5777 = vrcp.pop %v5544
      %v5778 = vmul.f32 1.0, %v5777
      %v5779 = vrcp.pop %v5545
      %v5780 = vmul.f32 1.0, %v5779
      %v5781 = vrcp.pop %v5546
      %v5782 = vmul.f32 1.0, %v5781
      %v5783 = vrcp.pop %v5547
      %v5784 = vmul.f32 1.0, %v5783
      %v5785 = vrcp.pop %v5548
      %v5786 = vmul.f32 1.0, %v5785
      %v5787 = vrcp.pop %v5549
      %v5788 = vmul.f32 1.0, %v5787
      %v5789 = vrcp.pop %v5550
      %v5790 = vmul.f32 1.0, %v5789
      %v5791 = vrcp.pop %v5551
      %v5792 = vmul.f32 1.0, %v5791
      %v5793 = vrcp.pop %v5552
      %v5794 = vmul.f32 1.0, %v5793
      %v5795 = vrcp.pop %v5553
      %v5796 = vmul.f32 1.0, %v5795
      %v5797 = vrcp.pop %v5554
      %v5798 = vmul.f32 1.0, %v5797
      %v5799 = vrcp.pop %v5555
      %v5800 = vmul.f32 1.0, %v5799
      %v5801 = vrcp.pop %v5556
      %v5802 = vmul.f32 1.0, %v5801
      %v5803 = vrcp.pop %v5557
      %v5804 = vmul.f32 1.0, %v5803
      %v5805 = vrcp.pop %v5558
      %v5806 = vmul.f32 1.0, %v5805
      %v5807 = vrcp.pop %v5559
      %v5808 = vmul.f32 1.0, %v5807
      %v5809 = vrcp.pop %v5560
      %v5810 = vmul.f32 1.0, %v5809
      %v5811 = vrcp.pop %v5561
      %v5812 = vmul.f32 1.0, %v5811
      %v5813 = vrcp.pop %v5562
      %v5814 = vmul.f32 1.0, %v5813
      %v5815 = vrcp.pop %v5563
      %v5816 = vmul.f32 1.0, %v5815
      %v5817 = vrcp.pop %v5564
      %v5818 = vmul.f32 1.0, %v5817
      %v5819 = vrcp.pop %v5565
      %v5820 = vmul.f32 1.0, %v5819
      %v5821 = vrcp.pop %v5566
      %v5822 = vmul.f32 1.0, %v5821
      %v5823 = vrcp.pop %v5567
      %v5824 = vmul.f32 1.0, %v5823
      %v5825 = vrcp.pop %v5568
      %v5826 = vmul.f32 1.0, %v5825
      %v5827 = vrcp.pop %v5569
      %v5828 = vmul.f32 1.0, %v5827
      %v5829 = vrcp.pop %v5570
      %v5830 = vmul.f32 1.0, %v5829
      %v5831 = vrcp.pop %v5571
      %v5832 = vmul.f32 1.0, %v5831
      %v5833 = vrcp.pop %v5572
      %v5834 = vmul.f32 1.0, %v5833
      %v5835 = vrcp.pop %v5573
      %v5836 = vmul.f32 1.0, %v5835
      %v5837 = vrcp.pop %v5574
      %v5838 = vmul.f32 1.0, %v5837
      %v5839 = vrcp.pop %v5575
      %v5840 = vmul.f32 1.0, %v5839
      %v5841 = vrcp.pop %v5576
      %v5842 = vmul.f32 1.0, %v5841
      %v5843 = vrcp.pop %v5577
      %v5844 = vmul.f32 1.0, %v5843
      %v5845 = vrcp.pop %v5578
      %v5846 = vmul.f32 1.0, %v5845
      %v5847 = vrcp.pop %v5579
      %v5848 = vmul.f32 1.0, %v5847
      %v5849 = vrcp.pop %v5580
      %v5850 = vmul.f32 1.0, %v5849
      %v5851 = vrcp.pop %v5581
      %v5852 = vmul.f32 1.0, %v5851
      %v5853 = vrcp.pop %v5582
      %v5854 = vmul.f32 1.0, %v5853
      %v5855 = vrcp.pop %v5583
      %v5856 = vmul.f32 1.0, %v5855
      %v5857 = vrcp.pop %v5584
      %v5858 = vmul.f32 1.0, %v5857
      %v5859 = vrcp.pop %v5585
      %v5860 = vmul.f32 1.0, %v5859
      %v5861 = vrcp.pop %v5586
      %v5862 = vmul.f32 1.0, %v5861
      %v5863 = vrcp.pop %v5587
      %v5864 = vmul.f32 1.0, %v5863
      %v5865 = vrcp.pop %v5588
      %v5866 = vmul.f32 1.0, %v5865
      %v5867 = vrcp.pop %v5589
      %v5868 = vmul.f32 1.0, %v5867
      %v5869 = vrcp.pop %v5590
      %v5870 = vmul.f32 1.0, %v5869
      %v5871 = vrcp.pop %v5591
      %v5872 = vmul.f32 1.0, %v5871
      %v5873 = vrcp.pop %v5592
      %v5874 = vmul.f32 1.0, %v5873
      %v5875 = vrcp.pop %v5593
      %v5876 = vmul.f32 1.0, %v5875
      %v5877 = vrcp.pop %v5594
      %v5878 = vmul.f32 1.0, %v5877
      %v5879 = vrcp.pop %v5595
      %v5880 = vmul.f32 1.0, %v5879
      %v5881 = vrcp.pop %v5596
      %v5882 = vmul.f32 1.0, %v5881
      %v5883 = vrcp.pop %v5597
      %v5884 = vmul.f32 1.0, %v5883
      %v5885 = vrcp.pop %v5598
      %v5886 = vmul.f32 1.0, %v5885
      %v5887 = vrcp.pop %v5599
      %v5888 = vmul.f32 1.0, %v5887
      %v5889 = vrcp.pop %v5600
      %v5890 = vmul.f32 1.0, %v5889
      %v5891 = vrcp.pop %v5601
      %v5892 = vmul.f32 1.0, %v5891
      %v5893 = vrcp.pop %v5602
      %v5894 = vmul.f32 1.0, %v5893
      %v5895 = vrcp.pop %v5603
      %v5896 = vmul.f32 1.0, %v5895
      %v5897 = vrcp.pop %v5604
      %v5898 = vmul.f32 1.0, %v5897
      %v5899 = vrcp.pop %v5605
      %v5900 = vmul.f32 1.0, %v5899
      %v5901 = vrcp.pop %v5606
      %v5902 = vmul.f32 1.0, %v5901
      %v5903 = vrcp.pop %v5607
      %v5904 = vmul.f32 1.0, %v5903
      %v5905 = vrcp.pop %v5608
      %v5906 = vmul.f32 1.0, %v5905
      %v5907 = vrcp.pop %v5609
      %v5908 = vmul.f32 1.0, %v5907
      %v5909 = vrcp.pop %v5610
      %v5910 = vmul.f32 1.0, %v5909
      %v5911 = vrcp.pop %v5611
      %v5912 = vmul.f32 1.0, %v5911
      %v5913 = vrcp.pop %v5612
      %v5914 = vmul.f32 1.0, %v5913
      %v5915 = vrcp.pop %v5613
      %v5916 = vmul.f32 1.0, %v5915
      %v5917 = vrcp.pop %v5614
      %v5918 = vmul.f32 1.0, %v5917
      %v5919 = vrcp.pop %v5615
      %v5920 = vmul.f32 1.0, %v5919
      %v5921 = vrcp.pop %v5616
      %v5922 = vmul.f32 1.0, %v5921
      %v5923 = vrcp.pop %v5617
      %v5924 = vmul.f32 1.0, %v5923
      %v5925 = vrcp.pop %v5618
      %v5926 = vmul.f32 1.0, %v5925
      %v5927 = vrcp.pop %v5619
      %v5928 = vmul.f32 1.0, %v5927
      %v5929 = vrcp.pop %v5620
      %v5930 = vmul.f32 1.0, %v5929
      %v5931 = vrcp.pop %v5621
      %v5932 = vmul.f32 1.0, %v5931
      %v5933 = vrcp.pop %v5622
      %v5934 = vmul.f32 1.0, %v5933
      %v5935 = vrcp.pop %v5623
      %v5936 = vmul.f32 1.0, %v5935
      %v5937 = vrcp.pop %v5624
      %v5938 = vmul.f32 1.0, %v5937
      %v5939 = vrcp.pop %v5625
      %v5940 = vmul.f32 1.0, %v5939
      %v5941 = vrcp.pop %v5626
      %v5942 = vmul.f32 1.0, %v5941
      %v5943 = vrcp.pop %v5627
      %v5944 = vmul.f32 1.0, %v5943
      %v5945 = vrcp.pop %v5628
      %v5946 = vmul.f32 1.0, %v5945
      %v5947 = vrcp.pop %v5629
      %v5948 = vmul.f32 1.0, %v5947
      %v5949 = vrcp.pop %v5630
      %v5950 = vmul.f32 1.0, %v5949
      %v5951 = vrcp.pop %v5631
      %v5952 = vmul.f32 1.0, %v5951
      %v5953 = vrcp.pop %v5632
      %v5954 = vmul.f32 1.0, %v5953
      %v5955 = vrcp.pop %v5633
      %v5956 = vmul.f32 1.0, %v5955
      %v5957 = vrcp.pop %v5634
      %v5958 = vmul.f32 1.0, %v5957
      %v5959 = vrcp.pop %v5635
      %v5960 = vmul.f32 1.0, %v5959
      %v5961 = vrcp.pop %v5636
      %v5962 = vmul.f32 1.0, %v5961
      %v5963 = vrcp.pop %v5637
      %v5964 = vmul.f32 1.0, %v5963
      %v5965 = vrcp.pop %v5638
      %v5966 = vmul.f32 1.0, %v5965
      %v5967 = vrcp.pop %v5639
      %v5968 = vmul.f32 1.0, %v5967
      %v5969 = vrcp.pop %v5640
      %v5970 = vmul.f32 1.0, %v5969
      %v5971 = vrcp.pop %v5641
      %v5972 = vmul.f32 1.0, %v5971
      %v5973 = vrcp.pop %v5642
      %v5974 = vmul.f32 1.0, %v5973
      %v5975 = vrcp.pop %v5643
      %v5976 = vmul.f32 1.0, %v5975
      %v5977 = vrcp.pop %v5644
      %v5978 = vmul.f32 1.0, %v5977
      %v5979 = vrcp.pop %v5645
      %v5980 = vmul.f32 1.0, %v5979
      %v5981 = vrcp.pop %v5646
      %v5982 = vmul.f32 1.0, %v5981
      %v5983 = vrcp.pop %v5647
      %v5984 = vmul.f32 1.0, %v5983
      %v5985 = vrcp.pop %v5648
      %v5986 = vmul.f32 1.0, %v5985
      %v5987 = vrcp.pop %v5649
      %v5988 = vmul.f32 1.0, %v5987
      %v5989 = vrcp.pop %v5650
      %v5990 = vmul.f32 1.0, %v5989
      %v5991 = vrcp.pop %v5651
      %v5992 = vmul.f32 1.0, %v5991
      %v5993 = vrcp.pop %v5652
      %v5994 = vmul.f32 1.0, %v5993
      %v5995 = vrcp.pop %v5653
      %v5996 = vmul.f32 1.0, %v5995
      %v5997 = vrcp.pop %v5654
      %v5998 = vmul.f32 1.0, %v5997
      %v5999 = vrcp.pop %v5655
      %v6000 = vmul.f32 1.0, %v5999
      %v6001 = vrcp.pop %v5656
      %v6002 = vmul.f32 1.0, %v6001
      %v6003 = vrcp.pop %v5657
      %v6004 = vmul.f32 1.0, %v6003
      %v6005 = vrcp.pop %v5658
      %v6006 = vmul.f32 1.0, %v6005
      %v6007 = vrcp.pop %v5659
      %v6008 = vmul.f32 1.0, %v6007
      %v6009 = vrcp.pop %v5660
      %v6010 = vmul.f32 1.0, %v6009
      %v6011 = vrcp.pop %v5661
      %v6012 = vmul.f32 1.0, %v6011
      %v6013 = vrcp.pop %v5662
      %v6014 = vmul.f32 1.0, %v6013
      %v6015 = vrcp.pop %v5663
      %v6016 = vmul.f32 1.0, %v6015
      %v6017 = vrcp.pop %v5664
      %v6018 = vmul.f32 1.0, %v6017
      %v6019 = vrcp.pop %v5665
      %v6020 = vmul.f32 1.0, %v6019
      %v6021 = vrcp.pop %v5666
      %v6022 = vmul.f32 1.0, %v6021
      %v6023 = vrcp.pop %v5667
      %v6024 = vmul.f32 1.0, %v6023
      %v6025 = vrcp.pop %v5668
      %v6026 = vmul.f32 1.0, %v6025
      %v6027 = vrcp.pop %v5669
      %v6028 = vmul.f32 1.0, %v6027
      %v6029 = vrcp.pop %v5670
      %v6030 = vmul.f32 1.0, %v6029
      %v6031 = vrcp.pop %v5671
      %v6032 = vmul.f32 1.0, %v6031
      %v6033 = vrcp.pop %v5672
      %v6034 = vmul.f32 1.0, %v6033
      %v6035 = vrcp.pop %v5673
      %v6036 = vmul.f32 1.0, %v6035
      %v6037 = vrcp.pop %v5674
      %v6038 = vmul.f32 1.0, %v6037
      %v6039 = vrcp.pop %v5675
      %v6040 = vmul.f32 1.0, %v6039
      %v6041 = vrcp.pop %v5676
      %v6042 = vmul.f32 1.0, %v6041
      %v6043 = vrcp.pop %v5677
      %v6044 = vmul.f32 1.0, %v6043
      %v6045 = vrcp.pop %v5678
      %v6046 = vmul.f32 1.0, %v6045
      %v6047 = vrcp.pop %v5679
      %v6048 = vmul.f32 1.0, %v6047
      %v6049 = vrcp.pop %v5680
      %v6050 = vmul.f32 1.0, %v6049
      %v6051 = vrcp.pop %v5681
      %v6052 = vmul.f32 1.0, %v6051
      %v6053 = vrcp.pop %v5682
      %v6054 = vmul.f32 1.0, %v6053
      %v6055 = vrcp.pop %v5683
      %v6056 = vmul.f32 1.0, %v6055
      %v6057 = vrcp.pop %v5684
      %v6058 = vmul.f32 1.0, %v6057
      %v6059 = vrcp.pop %v5685
      %v6060 = vmul.f32 1.0, %v6059
      %v6061 = vrcp.pop %v5686
      %v6062 = vmul.f32 1.0, %v6061
      %v6063 = vrcp.pop %v5687
      %v6064 = vmul.f32 1.0, %v6063
      %v6065 = vrcp.pop %v5688
      %v6066 = vmul.f32 1.0, %v6065
      %v6067 = vrcp.pop %v5689
      %v6068 = vmul.f32 1.0, %v6067
      %v6069 = vrcp.pop %v5690
      %v6070 = vmul.f32 1.0, %v6069
      %v6071 = vrcp.pop %v5691
      %v6072 = vmul.f32 1.0, %v6071
      %v6073 = vrcp.pop %v5692
      %v6074 = vmul.f32 1.0, %v6073
      %v6075 = vrcp.pop %v5693
      %v6076 = vmul.f32 1.0, %v6075
      %v6077 = vrcp.pop %v5694
      %v6078 = vmul.f32 1.0, %v6077
      %v6079 = vrcp.pop %v5695
      %v6080 = vmul.f32 1.0, %v6079
      %v6081 = vrcp.pop %v5696
      %v6082 = vmul.f32 1.0, %v6081
      %v6083 = vrcp.pop %v5697
      %v6084 = vmul.f32 1.0, %v6083
      %v6085 = vrcp.pop %v5698
      %v6086 = vmul.f32 1.0, %v6085
      %v6087 = vrcp.pop %v5699
      %v6088 = vmul.f32 1.0, %v6087
      %v6089 = vrcp.pop %v5700
      %v6090 = vmul.f32 1.0, %v6089
      %v6091 = vrcp.pop %v5701
      %v6092 = vmul.f32 1.0, %v6091
      %v6093 = vrcp.pop %v5702
      %v6094 = vmul.f32 1.0, %v6093
      %v6095 = vrcp.pop %v5703
      %v6096 = vmul.f32 1.0, %v6095
      %v6097 = vrcp.pop %v5704
      %v6098 = vmul.f32 1.0, %v6097
      %v6099 = vrcp.pop %v5705
      %v6100 = vmul.f32 1.0, %v6099
      %v6101 = vrcp.pop %v5706
      %v6102 = vmul.f32 1.0, %v6101
      %v6103 = vrcp.pop %v5707
      %v6104 = vmul.f32 1.0, %v6103
      %v6105 = vrcp.pop %v5708
      %v6106 = vmul.f32 1.0, %v6105
      %v6107 = vrcp.pop %v5709
      %v6108 = vmul.f32 1.0, %v6107
      %v6109 = vrcp.pop %v5710
      %v6110 = vmul.f32 1.0, %v6109
      %v6111 = vrcp.pop %v5711
      %v6112 = vmul.f32 1.0, %v6111
      %v6113 = vrcp.pop %v5712
      %v6114 = vmul.f32 1.0, %v6113
      %v6115 = vrcp.pop %v5713
      %v6116 = vmul.f32 1.0, %v6115
      %v6117 = vrcp.pop %v5714
      %v6118 = vmul.f32 1.0, %v6117
      %v6119 = vrcp.pop %v5715
      %v6120 = vmul.f32 1.0, %v6119
      %v6121 = vrcp.pop %v5716
      %v6122 = vmul.f32 1.0, %v6121
      %v6123 = vrcp.pop %v5717
      %v6124 = vmul.f32 1.0, %v6123
      %v6125 = vrcp.pop %v5718
      %v6126 = vmul.f32 1.0, %v6125
      %v6127 = vrcp.pop %v5719
      %v6128 = vmul.f32 1.0, %v6127
      %v6129 = vrcp.pop %v5720
      %v6130 = vmul.f32 1.0, %v6129
      %v6131 = vrcp.pop %v5721
      %v6132 = vmul.f32 1.0, %v6131
      %v6133 = vrcp.pop %v5722
      %v6134 = vmul.f32 1.0, %v6133
      %v6135 = vrcp.pop %v5723
      %v6136 = vmul.f32 1.0, %v6135
      %v6137 = vrcp.pop %v5724
      %v6138 = vmul.f32 1.0, %v6137
      %v6139 = vrcp.pop %v5725
      %v6140 = vmul.f32 1.0, %v6139
      %v6141 = vrcp.pop %v5726
      %v6142 = vmul.f32 1.0, %v6141
      %v6143 = vrcp.pop %v5727
      %v6144 = vmul.f32 1.0, %v6143
      %v6145 = vrcp.pop %v5728
      %v6146 = vmul.f32 1.0, %v6145
      %v6147 = vrcp.pop %v5729
      %v6148 = vmul.f32 1.0, %v6147
      %v6149 = vrcp.pop %v5730
      %v6150 = vmul.f32 1.0, %v6149
      %v6151 = vrcp.pop %v5731
      %v6152 = vmul.f32 1.0, %v6151
      %v6153 = vrcp.pop %v5732
      %v6154 = vmul.f32 1.0, %v6153
      %v6155 = vrcp.pop %v5733
      %v6156 = vmul.f32 1.0, %v6155
      %v6157 = vrcp.pop %v5734
      %v6158 = vmul.f32 1.0, %v6157
      %v6159 = vrcp.pop %v5735
      %v6160 = vmul.f32 1.0, %v6159
      %v6161 = vrcp.pop %v5736
      %v6162 = vmul.f32 1.0, %v6161
      %v6163 = vrcp.pop %v5737
      %v6164 = vmul.f32 1.0, %v6163
      %v6165 = vrcp.pop %v5738
      %v6166 = vmul.f32 1.0, %v6165
      %v6167 = vrcp.pop %v5739
      %v6168 = vmul.f32 1.0, %v6167
      %v6169 = vrcp.pop %v5740
      %v6170 = vmul.f32 1.0, %v6169
      %v6171 = vrcp.pop %v5741
      %v6172 = vmul.f32 1.0, %v6171
      %v6173 = vrcp.pop %v5742
      %v6174 = vmul.f32 1.0, %v6173
      %v6175 = vrcp.pop %v5743
      %v6176 = vmul.f32 1.0, %v6175
      %v6177 = vrcp.pop %v5744
      %v6178 = vmul.f32 1.0, %v6177
      %v6179 = vrcp.pop %v5745
      %v6180 = vmul.f32 1.0, %v6179
      %v6181 = vrcp.pop %v5746
      %v6182 = vmul.f32 1.0, %v6181
      %v6183 = vrcp.pop %v5747
      %v6184 = vmul.f32 1.0, %v6183
      %v6185 = vrcp.pop %v5748
      %v6186 = vmul.f32 1.0, %v6185
      %v6187 = vrcp.pop %v5749
      %v6188 = vmul.f32 1.0, %v6187
      %v6189 = vrcp.pop %v5750
      %v6190 = vmul.f32 1.0, %v6189
      %v6191 = vrcp.pop %v5751
      %v6192 = vmul.f32 1.0, %v6191
      %v6193 = vrcp.pop %v5752
      %v6194 = vmul.f32 1.0, %v6193
      %v6195 = vrcp.pop %v5753
      %v6196 = vmul.f32 1.0, %v6195
      %v6197 = vrcp.pop %v5754
      %v6198 = vmul.f32 1.0, %v6197
      %v6199 = vrcp.pop %v5755
      %v6200 = vmul.f32 1.0, %v6199
      %v6201 = vrcp.pop %v5756
      %v6202 = vmul.f32 1.0, %v6201
      %v6203 = vrcp.pop %v5757
      %v6204 = vmul.f32 1.0, %v6203
      %v6205 = vrcp.pop %v5758
      %v6206 = vmul.f32 1.0, %v6205
      %v6207 = vpack.c.bf16 %v5774, %v5760
      %v6208 = vpack.c.bf16 %v5776, %v5762
      %v6209 = vpack.c.bf16 %v5778, %v5764
      %v6210 = vpack.c.bf16 %v5780, %v5766
      %v6211 = vpack.c.bf16 %v5782, %v5768
      %v6212 = vpack.c.bf16 %v5784, %v5770
      %v6213 = vpack.c.bf16 %v5786, %v5772
      %v6214 = vpack.c.bf16 %v5802, %v5788
      %v6215 = vpack.c.bf16 %v5804, %v5790
      %v6216 = vpack.c.bf16 %v5806, %v5792
      %v6217 = vpack.c.bf16 %v5808, %v5794
      %v6218 = vpack.c.bf16 %v5810, %v5796
      %v6219 = vpack.c.bf16 %v5812, %v5798
      %v6220 = vpack.c.bf16 %v5814, %v5800
      %v6221 = vpack.c.bf16 %v5830, %v5816
      %v6222 = vpack.c.bf16 %v5832, %v5818
      %v6223 = vpack.c.bf16 %v5834, %v5820
      %v6224 = vpack.c.bf16 %v5836, %v5822
      %v6225 = vpack.c.bf16 %v5838, %v5824
      %v6226 = vpack.c.bf16 %v5840, %v5826
      %v6227 = vpack.c.bf16 %v5842, %v5828
      %v6228 = vpack.c.bf16 %v5858, %v5844
      %v6229 = vpack.c.bf16 %v5860, %v5846
      %v6230 = vpack.c.bf16 %v5862, %v5848
      %v6231 = vpack.c.bf16 %v5864, %v5850
      %v6232 = vpack.c.bf16 %v5866, %v5852
      %v6233 = vpack.c.bf16 %v5868, %v5854
      %v6234 = vpack.c.bf16 %v5870, %v5856
      %v6235 = vpack.c.bf16 %v5886, %v5872
      %v6236 = vpack.c.bf16 %v5888, %v5874
      %v6237 = vpack.c.bf16 %v5890, %v5876
      %v6238 = vpack.c.bf16 %v5892, %v5878
      %v6239 = vpack.c.bf16 %v5894, %v5880
      %v6240 = vpack.c.bf16 %v5896, %v5882
      %v6241 = vpack.c.bf16 %v5898, %v5884
      %v6242 = vpack.c.bf16 %v5914, %v5900
      %v6243 = vpack.c.bf16 %v5916, %v5902
      %v6244 = vpack.c.bf16 %v5918, %v5904
      %v6245 = vpack.c.bf16 %v5920, %v5906
      %v6246 = vpack.c.bf16 %v5922, %v5908
      %v6247 = vpack.c.bf16 %v5924, %v5910
      %v6248 = vpack.c.bf16 %v5926, %v5912
      %v6249 = vpack.c.bf16 %v5942, %v5928
      %v6250 = vpack.c.bf16 %v5944, %v5930
      %v6251 = vpack.c.bf16 %v5946, %v5932
      %v6252 = vpack.c.bf16 %v5948, %v5934
      %v6253 = vpack.c.bf16 %v5950, %v5936
      %v6254 = vpack.c.bf16 %v5952, %v5938
      %v6255 = vpack.c.bf16 %v5954, %v5940
      %v6256 = vpack.c.bf16 %v5970, %v5956
      %v6257 = vpack.c.bf16 %v5972, %v5958
      %v6258 = vpack.c.bf16 %v5974, %v5960
      %v6259 = vpack.c.bf16 %v5976, %v5962
      %v6260 = vpack.c.bf16 %v5978, %v5964
      %v6261 = vpack.c.bf16 %v5980, %v5966
      %v6262 = vpack.c.bf16 %v5982, %v5968
      %v6263 = vpack.c.bf16 %v5998, %v5984
      %v6264 = vpack.c.bf16 %v6000, %v5986
      %v6265 = vpack.c.bf16 %v6002, %v5988
      %v6266 = vpack.c.bf16 %v6004, %v5990
      %v6267 = vpack.c.bf16 %v6006, %v5992
      %v6268 = vpack.c.bf16 %v6008, %v5994
      %v6269 = vpack.c.bf16 %v6010, %v5996
      %v6270 = vpack.c.bf16 %v6026, %v6012
      %v6271 = vpack.c.bf16 %v6028, %v6014
      %v6272 = vpack.c.bf16 %v6030, %v6016
      %v6273 = vpack.c.bf16 %v6032, %v6018
      %v6274 = vpack.c.bf16 %v6034, %v6020
      %v6275 = vpack.c.bf16 %v6036, %v6022
      %v6276 = vpack.c.bf16 %v6038, %v6024
      %v6277 = vpack.c.bf16 %v6054, %v6040
      %v6278 = vpack.c.bf16 %v6056, %v6042
      %v6279 = vpack.c.bf16 %v6058, %v6044
      %v6280 = vpack.c.bf16 %v6060, %v6046
      %v6281 = vpack.c.bf16 %v6062, %v6048
      %v6282 = vpack.c.bf16 %v6064, %v6050
      %v6283 = vpack.c.bf16 %v6066, %v6052
      %v6284 = vpack.c.bf16 %v6082, %v6068
      %v6285 = vpack.c.bf16 %v6084, %v6070
      %v6286 = vpack.c.bf16 %v6086, %v6072
      %v6287 = vpack.c.bf16 %v6088, %v6074
      %v6288 = vpack.c.bf16 %v6090, %v6076
      %v6289 = vpack.c.bf16 %v6092, %v6078
      %v6290 = vpack.c.bf16 %v6094, %v6080
      %v6291 = vpack.c.bf16 %v6110, %v6096
      %v6292 = vpack.c.bf16 %v6112, %v6098
      %v6293 = vpack.c.bf16 %v6114, %v6100
      %v6294 = vpack.c.bf16 %v6116, %v6102
      %v6295 = vpack.c.bf16 %v6118, %v6104
      %v6296 = vpack.c.bf16 %v6120, %v6106
      %v6297 = vpack.c.bf16 %v6122, %v6108
      %v6298 = vpack.c.bf16 %v6138, %v6124
      %v6299 = vpack.c.bf16 %v6140, %v6126
      %v6300 = vpack.c.bf16 %v6142, %v6128
      %v6301 = vpack.c.bf16 %v6144, %v6130
      %v6302 = vpack.c.bf16 %v6146, %v6132
      %v6303 = vpack.c.bf16 %v6148, %v6134
      %v6304 = vpack.c.bf16 %v6150, %v6136
      %v6305 = vpack.c.bf16 %v6166, %v6152
      %v6306 = vpack.c.bf16 %v6168, %v6154
      %v6307 = vpack.c.bf16 %v6170, %v6156
      %v6308 = vpack.c.bf16 %v6172, %v6158
      %v6309 = vpack.c.bf16 %v6174, %v6160
      %v6310 = vpack.c.bf16 %v6176, %v6162
      %v6311 = vpack.c.bf16 %v6178, %v6164
      %v6312 = vpack.c.bf16 %v6194, %v6180
      %v6313 = vpack.c.bf16 %v6196, %v6182
      %v6314 = vpack.c.bf16 %v6198, %v6184
      %v6315 = vpack.c.bf16 %v6200, %v6186
      %v6316 = vpack.c.bf16 %v6202, %v6188
      %v6317 = vpack.c.bf16 %v6204, %v6190
      %v6318 = vpack.c.bf16 %v6206, %v6192
      %v6431 = vunpack.c.l.b16 %v6207
      %v6432 = vunpack.c.l.b16 %v6208
      %v6433 = vunpack.c.l.b16 %v6209
      %v6434 = vunpack.c.l.b16 %v6210
      %v6435 = vunpack.c.l.b16 %v6211
      %v6436 = vunpack.c.l.b16 %v6212
      %v6437 = vunpack.c.l.b16 %v6213
      %v6438 = vunpack.c.h.b16 %v6207
      %v6439 = vunpack.c.h.b16 %v6208
      %v6440 = vunpack.c.h.b16 %v6209
      %v6441 = vunpack.c.h.b16 %v6210
      %v6442 = vunpack.c.h.b16 %v6211
      %v6443 = vunpack.c.h.b16 %v6212
      %v6444 = vunpack.c.h.b16 %v6213
      %v6445 = vunpack.c.l.b16 %v6214
      %v6446 = vunpack.c.l.b16 %v6215
      %v6447 = vunpack.c.l.b16 %v6216
      %v6448 = vunpack.c.l.b16 %v6217
      %v6449 = vunpack.c.l.b16 %v6218
      %v6450 = vunpack.c.l.b16 %v6219
      %v6451 = vunpack.c.l.b16 %v6220
      %v6452 = vunpack.c.h.b16 %v6214
      %v6453 = vunpack.c.h.b16 %v6215
      %v6454 = vunpack.c.h.b16 %v6216
      %v6455 = vunpack.c.h.b16 %v6217
      %v6456 = vunpack.c.h.b16 %v6218
      %v6457 = vunpack.c.h.b16 %v6219
      %v6458 = vunpack.c.h.b16 %v6220
      %v6459 = vunpack.c.l.b16 %v6221
      %v6460 = vunpack.c.l.b16 %v6222
      %v6461 = vunpack.c.l.b16 %v6223
      %v6462 = vunpack.c.l.b16 %v6224
      %v6463 = vunpack.c.l.b16 %v6225
      %v6464 = vunpack.c.l.b16 %v6226
      %v6465 = vunpack.c.l.b16 %v6227
      %v6466 = vunpack.c.h.b16 %v6221
      %v6467 = vunpack.c.h.b16 %v6222
      %v6468 = vunpack.c.h.b16 %v6223
      %v6469 = vunpack.c.h.b16 %v6224
      %v6470 = vunpack.c.h.b16 %v6225
      %v6471 = vunpack.c.h.b16 %v6226
      %v6472 = vunpack.c.h.b16 %v6227
      %v6473 = vunpack.c.l.b16 %v6228
      %v6474 = vunpack.c.l.b16 %v6229
      %v6475 = vunpack.c.l.b16 %v6230
      %v6476 = vunpack.c.l.b16 %v6231
      %v6477 = vunpack.c.l.b16 %v6232
      %v6478 = vunpack.c.l.b16 %v6233
      %v6479 = vunpack.c.l.b16 %v6234
      %v6480 = vunpack.c.h.b16 %v6228
      %v6481 = vunpack.c.h.b16 %v6229
      %v6482 = vunpack.c.h.b16 %v6230
      %v6483 = vunpack.c.h.b16 %v6231
      %v6484 = vunpack.c.h.b16 %v6232
      %v6485 = vunpack.c.h.b16 %v6233
      %v6486 = vunpack.c.h.b16 %v6234
      %v6487 = vunpack.c.l.b16 %v6235
      %v6488 = vunpack.c.l.b16 %v6236
      %v6489 = vunpack.c.l.b16 %v6237
      %v6490 = vunpack.c.l.b16 %v6238
      %v6491 = vunpack.c.l.b16 %v6239
      %v6492 = vunpack.c.l.b16 %v6240
      %v6493 = vunpack.c.l.b16 %v6241
      %v6494 = vunpack.c.h.b16 %v6235
      %v6495 = vunpack.c.h.b16 %v6236
      %v6496 = vunpack.c.h.b16 %v6237
      %v6497 = vunpack.c.h.b16 %v6238
      %v6498 = vunpack.c.h.b16 %v6239
      %v6499 = vunpack.c.h.b16 %v6240
      %v6500 = vunpack.c.h.b16 %v6241
      %v6501 = vunpack.c.l.b16 %v6242
      %v6502 = vunpack.c.l.b16 %v6243
      %v6503 = vunpack.c.l.b16 %v6244
      %v6504 = vunpack.c.l.b16 %v6245
      %v6505 = vunpack.c.l.b16 %v6246
      %v6506 = vunpack.c.l.b16 %v6247
      %v6507 = vunpack.c.l.b16 %v6248
      %v6508 = vunpack.c.h.b16 %v6242
      %v6509 = vunpack.c.h.b16 %v6243
      %v6510 = vunpack.c.h.b16 %v6244
      %v6511 = vunpack.c.h.b16 %v6245
      %v6512 = vunpack.c.h.b16 %v6246
      %v6513 = vunpack.c.h.b16 %v6247
      %v6514 = vunpack.c.h.b16 %v6248
      %v6515 = vunpack.c.l.b16 %v6249
      %v6516 = vunpack.c.l.b16 %v6250
      %v6517 = vunpack.c.l.b16 %v6251
      %v6518 = vunpack.c.l.b16 %v6252
      %v6519 = vunpack.c.l.b16 %v6253
      %v6520 = vunpack.c.l.b16 %v6254
      %v6521 = vunpack.c.l.b16 %v6255
      %v6522 = vunpack.c.h.b16 %v6249
      %v6523 = vunpack.c.h.b16 %v6250
      %v6524 = vunpack.c.h.b16 %v6251
      %v6525 = vunpack.c.h.b16 %v6252
      %v6526 = vunpack.c.h.b16 %v6253
      %v6527 = vunpack.c.h.b16 %v6254
      %v6528 = vunpack.c.h.b16 %v6255
      %v6529 = vunpack.c.l.b16 %v6256
      %v6530 = vunpack.c.l.b16 %v6257
      %v6531 = vunpack.c.l.b16 %v6258
      %v6532 = vunpack.c.l.b16 %v6259
      %v6533 = vunpack.c.l.b16 %v6260
      %v6534 = vunpack.c.l.b16 %v6261
      %v6535 = vunpack.c.l.b16 %v6262
      %v6536 = vunpack.c.h.b16 %v6256
      %v6537 = vunpack.c.h.b16 %v6257
      %v6538 = vunpack.c.h.b16 %v6258
      %v6539 = vunpack.c.h.b16 %v6259
      %v6540 = vunpack.c.h.b16 %v6260
      %v6541 = vunpack.c.h.b16 %v6261
      %v6542 = vunpack.c.h.b16 %v6262
      %v6543 = vunpack.c.l.b16 %v6263
      %v6544 = vunpack.c.l.b16 %v6264
      %v6545 = vunpack.c.l.b16 %v6265
      %v6546 = vunpack.c.l.b16 %v6266
      %v6547 = vunpack.c.l.b16 %v6267
      %v6548 = vunpack.c.l.b16 %v6268
      %v6549 = vunpack.c.l.b16 %v6269
      %v6550 = vunpack.c.h.b16 %v6263
      %v6551 = vunpack.c.h.b16 %v6264
      %v6552 = vunpack.c.h.b16 %v6265
      %v6553 = vunpack.c.h.b16 %v6266
      %v6554 = vunpack.c.h.b16 %v6267
      %v6555 = vunpack.c.h.b16 %v6268
      %v6556 = vunpack.c.h.b16 %v6269
      %v6557 = vunpack.c.l.b16 %v6270
      %v6558 = vunpack.c.l.b16 %v6271
      %v6559 = vunpack.c.l.b16 %v6272
      %v6560 = vunpack.c.l.b16 %v6273
      %v6561 = vunpack.c.l.b16 %v6274
      %v6562 = vunpack.c.l.b16 %v6275
      %v6563 = vunpack.c.l.b16 %v6276
      %v6564 = vunpack.c.h.b16 %v6270
      %v6565 = vunpack.c.h.b16 %v6271
      %v6566 = vunpack.c.h.b16 %v6272
      %v6567 = vunpack.c.h.b16 %v6273
      %v6568 = vunpack.c.h.b16 %v6274
      %v6569 = vunpack.c.h.b16 %v6275
      %v6570 = vunpack.c.h.b16 %v6276
      %v6571 = vunpack.c.l.b16 %v6277
      %v6572 = vunpack.c.l.b16 %v6278
      %v6573 = vunpack.c.l.b16 %v6279
      %v6574 = vunpack.c.l.b16 %v6280
      %v6575 = vunpack.c.l.b16 %v6281
      %v6576 = vunpack.c.l.b16 %v6282
      %v6577 = vunpack.c.l.b16 %v6283
      %v6578 = vunpack.c.h.b16 %v6277
      %v6579 = vunpack.c.h.b16 %v6278
      %v6580 = vunpack.c.h.b16 %v6279
      %v6581 = vunpack.c.h.b16 %v6280
      %v6582 = vunpack.c.h.b16 %v6281
      %v6583 = vunpack.c.h.b16 %v6282
      %v6584 = vunpack.c.h.b16 %v6283
      %v6585 = vunpack.c.l.b16 %v6284
      %v6586 = vunpack.c.l.b16 %v6285
      %v6587 = vunpack.c.l.b16 %v6286
      %v6588 = vunpack.c.l.b16 %v6287
      %v6589 = vunpack.c.l.b16 %v6288
      %v6590 = vunpack.c.l.b16 %v6289
      %v6591 = vunpack.c.l.b16 %v6290
      %v6592 = vunpack.c.h.b16 %v6284
      %v6593 = vunpack.c.h.b16 %v6285
      %v6594 = vunpack.c.h.b16 %v6286
      %v6595 = vunpack.c.h.b16 %v6287
      %v6596 = vunpack.c.h.b16 %v6288
      %v6597 = vunpack.c.h.b16 %v6289
      %v6598 = vunpack.c.h.b16 %v6290
      %v6599 = vunpack.c.l.b16 %v6291
      %v6600 = vunpack.c.l.b16 %v6292
      %v6601 = vunpack.c.l.b16 %v6293
      %v6602 = vunpack.c.l.b16 %v6294
      %v6603 = vunpack.c.l.b16 %v6295
      %v6604 = vunpack.c.l.b16 %v6296
      %v6605 = vunpack.c.l.b16 %v6297
      %v6606 = vunpack.c.h.b16 %v6291
      %v6607 = vunpack.c.h.b16 %v6292
      %v6608 = vunpack.c.h.b16 %v6293
      %v6609 = vunpack.c.h.b16 %v6294
      %v6610 = vunpack.c.h.b16 %v6295
      %v6611 = vunpack.c.h.b16 %v6296
      %v6612 = vunpack.c.h.b16 %v6297
      %v6613 = vunpack.c.l.b16 %v6298
      %v6614 = vunpack.c.l.b16 %v6299
      %v6615 = vunpack.c.l.b16 %v6300
      %v6616 = vunpack.c.l.b16 %v6301
      %v6617 = vunpack.c.l.b16 %v6302
      %v6618 = vunpack.c.l.b16 %v6303
      %v6619 = vunpack.c.l.b16 %v6304
      %v6620 = vunpack.c.h.b16 %v6298
      %v6621 = vunpack.c.h.b16 %v6299
      %v6622 = vunpack.c.h.b16 %v6300
      %v6623 = vunpack.c.h.b16 %v6301
      %v6624 = vunpack.c.h.b16 %v6302
      %v6625 = vunpack.c.h.b16 %v6303
      %v6626 = vunpack.c.h.b16 %v6304
      %v6627 = vunpack.c.l.b16 %v6305
      %v6628 = vunpack.c.l.b16 %v6306
      %v6629 = vunpack.c.l.b16 %v6307
      %v6630 = vunpack.c.l.b16 %v6308
      %v6631 = vunpack.c.l.b16 %v6309
      %v6632 = vunpack.c.l.b16 %v6310
      %v6633 = vunpack.c.l.b16 %v6311
      %v6634 = vunpack.c.h.b16 %v6305
      %v6635 = vunpack.c.h.b16 %v6306
      %v6636 = vunpack.c.h.b16 %v6307
      %v6637 = vunpack.c.h.b16 %v6308
      %v6638 = vunpack.c.h.b16 %v6309
      %v6639 = vunpack.c.h.b16 %v6310
      %v6640 = vunpack.c.h.b16 %v6311
      %v6641 = vunpack.c.l.b16 %v6312
      %v6642 = vunpack.c.l.b16 %v6313
      %v6643 = vunpack.c.l.b16 %v6314
      %v6644 = vunpack.c.l.b16 %v6315
      %v6645 = vunpack.c.l.b16 %v6316
      %v6646 = vunpack.c.l.b16 %v6317
      %v6647 = vunpack.c.l.b16 %v6318
      %v6648 = vunpack.c.h.b16 %v6312
      %v6649 = vunpack.c.h.b16 %v6313
      %v6650 = vunpack.c.h.b16 %v6314
      %v6651 = vunpack.c.h.b16 %v6315
      %v6652 = vunpack.c.h.b16 %v6316
      %v6653 = vunpack.c.h.b16 %v6317
      %v6654 = vunpack.c.h.b16 %v6318
      %v6655 = vpack.c.b16 %v6432, %v6431
      %v6656 = vpack.c.b16 %v6434, %v6433
      %v6657 = vpack.c.b16 %v6436, %v6435
      %v6658 = vpack.c.b16 %v6437, %v6437
      %v6659 = vpack.c.b16 %v6439, %v6438
      %v6660 = vpack.c.b16 %v6441, %v6440
      %v6661 = vpack.c.b16 %v6443, %v6442
      %v6662 = vpack.c.b16 %v6444, %v6444
      %v6663 = vpack.c.b16 %v6446, %v6445
      %v6664 = vpack.c.b16 %v6448, %v6447
      %v6665 = vpack.c.b16 %v6450, %v6449
      %v6666 = vpack.c.b16 %v6451, %v6451
      %v6667 = vpack.c.b16 %v6453, %v6452
      %v6668 = vpack.c.b16 %v6455, %v6454
      %v6669 = vpack.c.b16 %v6457, %v6456
      %v6670 = vpack.c.b16 %v6458, %v6458
      %v6671 = vpack.c.b16 %v6460, %v6459
      %v6672 = vpack.c.b16 %v6462, %v6461
      %v6673 = vpack.c.b16 %v6464, %v6463
      %v6674 = vpack.c.b16 %v6465, %v6465
      %v6675 = vpack.c.b16 %v6467, %v6466
      %v6676 = vpack.c.b16 %v6469, %v6468
      %v6677 = vpack.c.b16 %v6471, %v6470
      %v6678 = vpack.c.b16 %v6472, %v6472
      %v6679 = vpack.c.b16 %v6474, %v6473
      %v6680 = vpack.c.b16 %v6476, %v6475
      %v6681 = vpack.c.b16 %v6478, %v6477
      %v6682 = vpack.c.b16 %v6479, %v6479
      %v6683 = vpack.c.b16 %v6481, %v6480
      %v6684 = vpack.c.b16 %v6483, %v6482
      %v6685 = vpack.c.b16 %v6485, %v6484
      %v6686 = vpack.c.b16 %v6486, %v6486
      %v6687 = vpack.c.b16 %v6488, %v6487
      %v6688 = vpack.c.b16 %v6490, %v6489
      %v6689 = vpack.c.b16 %v6492, %v6491
      %v6690 = vpack.c.b16 %v6493, %v6493
      %v6691 = vpack.c.b16 %v6495, %v6494
      %v6692 = vpack.c.b16 %v6497, %v6496
      %v6693 = vpack.c.b16 %v6499, %v6498
      %v6694 = vpack.c.b16 %v6500, %v6500
      %v6695 = vpack.c.b16 %v6502, %v6501
      %v6696 = vpack.c.b16 %v6504, %v6503
      %v6697 = vpack.c.b16 %v6506, %v6505
      %v6698 = vpack.c.b16 %v6507, %v6507
      %v6699 = vpack.c.b16 %v6509, %v6508
      %v6700 = vpack.c.b16 %v6511, %v6510
      %v6701 = vpack.c.b16 %v6513, %v6512
      %v6702 = vpack.c.b16 %v6514, %v6514
      %v6703 = vpack.c.b16 %v6516, %v6515
      %v6704 = vpack.c.b16 %v6518, %v6517
      %v6705 = vpack.c.b16 %v6520, %v6519
      %v6706 = vpack.c.b16 %v6521, %v6521
      %v6707 = vpack.c.b16 %v6523, %v6522
      %v6708 = vpack.c.b16 %v6525, %v6524
      %v6709 = vpack.c.b16 %v6527, %v6526
      %v6710 = vpack.c.b16 %v6528, %v6528
      %v6711 = vpack.c.b16 %v6530, %v6529
      %v6712 = vpack.c.b16 %v6532, %v6531
      %v6713 = vpack.c.b16 %v6534, %v6533
      %v6714 = vpack.c.b16 %v6535, %v6535
      %v6715 = vpack.c.b16 %v6537, %v6536
      %v6716 = vpack.c.b16 %v6539, %v6538
      %v6717 = vpack.c.b16 %v6541, %v6540
      %v6718 = vpack.c.b16 %v6542, %v6542
      %v6719 = vpack.c.b16 %v6544, %v6543
      %v6720 = vpack.c.b16 %v6546, %v6545
      %v6721 = vpack.c.b16 %v6548, %v6547
      %v6722 = vpack.c.b16 %v6549, %v6549
      %v6723 = vpack.c.b16 %v6551, %v6550
      %v6724 = vpack.c.b16 %v6553, %v6552
      %v6725 = vpack.c.b16 %v6555, %v6554
      %v6726 = vpack.c.b16 %v6556, %v6556
      %v6727 = vpack.c.b16 %v6558, %v6557
      %v6728 = vpack.c.b16 %v6560, %v6559
      %v6729 = vpack.c.b16 %v6562, %v6561
      %v6730 = vpack.c.b16 %v6563, %v6563
      %v6731 = vpack.c.b16 %v6565, %v6564
      %v6732 = vpack.c.b16 %v6567, %v6566
      %v6733 = vpack.c.b16 %v6569, %v6568
      %v6734 = vpack.c.b16 %v6570, %v6570
      %v6735 = vpack.c.b16 %v6572, %v6571
      %v6736 = vpack.c.b16 %v6574, %v6573
      %v6737 = vpack.c.b16 %v6576, %v6575
      %v6738 = vpack.c.b16 %v6577, %v6577
      %v6739 = vpack.c.b16 %v6579, %v6578
      %v6740 = vpack.c.b16 %v6581, %v6580
      %v6741 = vpack.c.b16 %v6583, %v6582
      %v6742 = vpack.c.b16 %v6584, %v6584
      %v6743 = vpack.c.b16 %v6586, %v6585
      %v6744 = vpack.c.b16 %v6588, %v6587
      %v6745 = vpack.c.b16 %v6590, %v6589
      %v6746 = vpack.c.b16 %v6591, %v6591
      %v6747 = vpack.c.b16 %v6593, %v6592
      %v6748 = vpack.c.b16 %v6595, %v6594
      %v6749 = vpack.c.b16 %v6597, %v6596
      %v6750 = vpack.c.b16 %v6598, %v6598
      %v6751 = vpack.c.b16 %v6600, %v6599
      %v6752 = vpack.c.b16 %v6602, %v6601
      %v6753 = vpack.c.b16 %v6604, %v6603
      %v6754 = vpack.c.b16 %v6605, %v6605
      %v6755 = vpack.c.b16 %v6607, %v6606
      %v6756 = vpack.c.b16 %v6609, %v6608
      %v6757 = vpack.c.b16 %v6611, %v6610
      %v6758 = vpack.c.b16 %v6612, %v6612
      %v6759 = vpack.c.b16 %v6614, %v6613
      %v6760 = vpack.c.b16 %v6616, %v6615
      %v6761 = vpack.c.b16 %v6618, %v6617
      %v6762 = vpack.c.b16 %v6619, %v6619
      %v6763 = vpack.c.b16 %v6621, %v6620
      %v6764 = vpack.c.b16 %v6623, %v6622
      %v6765 = vpack.c.b16 %v6625, %v6624
      %v6766 = vpack.c.b16 %v6626, %v6626
      %v6767 = vpack.c.b16 %v6628, %v6627
      %v6768 = vpack.c.b16 %v6630, %v6629
      %v6769 = vpack.c.b16 %v6632, %v6631
      %v6770 = vpack.c.b16 %v6633, %v6633
      %v6771 = vpack.c.b16 %v6635, %v6634
      %v6772 = vpack.c.b16 %v6637, %v6636
      %v6773 = vpack.c.b16 %v6639, %v6638
      %v6774 = vpack.c.b16 %v6640, %v6640
      %v6775 = vpack.c.b16 %v6642, %v6641
      %v6776 = vpack.c.b16 %v6644, %v6643
      %v6777 = vpack.c.b16 %v6646, %v6645
      %v6778 = vpack.c.b16 %v6647, %v6647
      %v6779 = vpack.c.b16 %v6649, %v6648
      %v6780 = vpack.c.b16 %v6651, %v6650
      %v6781 = vpack.c.b16 %v6653, %v6652
      %v6782 = vpack.c.b16 %v6654, %v6654
      %6911 = vst [vmem:[%s488] sm:$0xff] %v6655
      %6912 = vst [vmem:[%s488 + $0x8] sm:$0xff] %v6656
      %6913 = vst [vmem:[%s488 + $0x10] sm:$0xff] %v6657
      %6914 = vst.msk [vmem:[%s488 + $0x18] sm:$0xf] %vm3277, %v6658
      %6915 = vst [vmem:[%s488 + $0x1c] sm:$0xff] %v6659
      %6916 = vst [vmem:[%s488 + $0x24] sm:$0xff] %v6660
      %6917 = vst [vmem:[%s488 + $0x2c] sm:$0xff] %v6661
      %6918 = vst.msk [vmem:[%s488 + $0x34] sm:$0xf] %vm3277, %v6662
      %6919 = vst [vmem:[%s488 + $0x38] sm:$0xff] %v6663
      %6920 = vst [vmem:[%s488 + $0x40] sm:$0xff] %v6664
      %6921 = vst [vmem:[%s488 + $0x48] sm:$0xff] %v6665
      %6922 = vst.msk [vmem:[%s488 + $0x50] sm:$0xf] %vm3277, %v6666
      %6923 = vst [vmem:[%s488 + $0x54] sm:$0xff] %v6667
      %6924 = vst [vmem:[%s488 + $0x5c] sm:$0xff] %v6668
      %6925 = vst [vmem:[%s488 + $0x64] sm:$0xff] %v6669
      %6926 = vst.msk [vmem:[%s488 + $0x6c] sm:$0xf] %vm3277, %v6670
      %6927 = vst [vmem:[%s488 + $0x70] sm:$0xff] %v6671
      %6928 = vst [vmem:[%s488 + $0x78] sm:$0xff] %v6672
      %6929 = vst [vmem:[%s488 + $0x80] sm:$0xff] %v6673
      %6930 = vst.msk [vmem:[%s488 + $0x88] sm:$0xf] %vm3277, %v6674
      %6931 = vst [vmem:[%s488 + $0x8c] sm:$0xff] %v6675
      %6932 = vst [vmem:[%s488 + $0x94] sm:$0xff] %v6676
      %6933 = vst [vmem:[%s488 + $0x9c] sm:$0xff] %v6677
      %6934 = vst.msk [vmem:[%s488 + $0xa4] sm:$0xf] %vm3277, %v6678
      %6935 = vst [vmem:[%s488 + $0xa8] sm:$0xff] %v6679
      %6936 = vst [vmem:[%s488 + $0xb0] sm:$0xff] %v6680
      %6937 = vst [vmem:[%s488 + $0xb8] sm:$0xff] %v6681
      %6938 = vst.msk [vmem:[%s488 + $0xc0] sm:$0xf] %vm3277, %v6682
      %6939 = vst [vmem:[%s488 + $0xc4] sm:$0xff] %v6683
      %6940 = vst [vmem:[%s488 + $0xcc] sm:$0xff] %v6684
      %6941 = vst [vmem:[%s488 + $0xd4] sm:$0xff] %v6685
      %6942 = vst.msk [vmem:[%s488 + $0xdc] sm:$0xf] %vm3277, %v6686
      %6943 = vst [vmem:[%s488 + $0xe0] sm:$0xff] %v6687
      %6944 = vst [vmem:[%s488 + $0xe8] sm:$0xff] %v6688
      %6945 = vst [vmem:[%s488 + $0xf0] sm:$0xff] %v6689
      %6946 = vst.msk [vmem:[%s488 + $0xf8] sm:$0xf] %vm3277, %v6690
      %6947 = vst [vmem:[%s488 + $0xfc] sm:$0xff] %v6691
      %6948 = vst [vmem:[%s488 + $0x104] sm:$0xff] %v6692
      %6949 = vst [vmem:[%s488 + $0x10c] sm:$0xff] %v6693
      %6950 = vst.msk [vmem:[%s488 + $0x114] sm:$0xf] %vm3277, %v6694
      %6951 = vst [vmem:[%s488 + $0x118] sm:$0xff] %v6695
      %6952 = vst [vmem:[%s488 + $0x120] sm:$0xff] %v6696
      %6953 = vst [vmem:[%s488 + $0x128] sm:$0xff] %v6697
      %6954 = vst.msk [vmem:[%s488 + $0x130] sm:$0xf] %vm3277, %v6698
      %6955 = vst [vmem:[%s488 + $0x134] sm:$0xff] %v6699
      %6956 = vst [vmem:[%s488 + $0x13c] sm:$0xff] %v6700
      %6957 = vst [vmem:[%s488 + $0x144] sm:$0xff] %v6701
      %6958 = vst.msk [vmem:[%s488 + $0x14c] sm:$0xf] %vm3277, %v6702
      %6959 = vst [vmem:[%s488 + $0x150] sm:$0xff] %v6703
      %6960 = vst [vmem:[%s488 + $0x158] sm:$0xff] %v6704
      %6961 = vst [vmem:[%s488 + $0x160] sm:$0xff] %v6705
      %6962 = vst.msk [vmem:[%s488 + $0x168] sm:$0xf] %vm3277, %v6706
      %6963 = vst [vmem:[%s488 + $0x16c] sm:$0xff] %v6707
      %6964 = vst [vmem:[%s488 + $0x174] sm:$0xff] %v6708
      %6965 = vst [vmem:[%s488 + $0x17c] sm:$0xff] %v6709
      %6966 = vst.msk [vmem:[%s488 + $0x184] sm:$0xf] %vm3277, %v6710
      %6967 = vst [vmem:[%s488 + $0x188] sm:$0xff] %v6711
      %6968 = vst [vmem:[%s488 + $0x190] sm:$0xff] %v6712
      %6969 = vst [vmem:[%s488 + $0x198] sm:$0xff] %v6713
      %6970 = vst.msk [vmem:[%s488 + $0x1a0] sm:$0xf] %vm3277, %v6714
      %6971 = vst [vmem:[%s488 + $0x1a4] sm:$0xff] %v6715
      %6972 = vst [vmem:[%s488 + $0x1ac] sm:$0xff] %v6716
      %6973 = vst [vmem:[%s488 + $0x1b4] sm:$0xff] %v6717
      %6974 = vst.msk [vmem:[%s488 + $0x1bc] sm:$0xf] %vm3277, %v6718
      %6975 = vst [vmem:[%s488 + $0x1c0] sm:$0xff] %v6719
      %6976 = vst [vmem:[%s488 + $0x1c8] sm:$0xff] %v6720
      %6977 = vst [vmem:[%s488 + $0x1d0] sm:$0xff] %v6721
      %6978 = vst.msk [vmem:[%s488 + $0x1d8] sm:$0xf] %vm3277, %v6722
      %6979 = vst [vmem:[%s488 + $0x1dc] sm:$0xff] %v6723
      %6980 = vst [vmem:[%s488 + $0x1e4] sm:$0xff] %v6724
      %6981 = vst [vmem:[%s488 + $0x1ec] sm:$0xff] %v6725
      %6982 = vst.msk [vmem:[%s488 + $0x1f4] sm:$0xf] %vm3277, %v6726
      %6983 = vst [vmem:[%s488 + $0x1f8] sm:$0xff] %v6727
      %6984 = vst [vmem:[%s488 + $0x200] sm:$0xff] %v6728
      %6985 = vst [vmem:[%s488 + $0x208] sm:$0xff] %v6729
      %6986 = vst.msk [vmem:[%s488 + $0x210] sm:$0xf] %vm3277, %v6730
      %6987 = vst [vmem:[%s488 + $0x214] sm:$0xff] %v6731
      %6988 = vst [vmem:[%s488 + $0x21c] sm:$0xff] %v6732
      %6989 = vst [vmem:[%s488 + $0x224] sm:$0xff] %v6733
      %6990 = vst.msk [vmem:[%s488 + $0x22c] sm:$0xf] %vm3277, %v6734
      %6991 = vst [vmem:[%s488 + $0x230] sm:$0xff] %v6735
      %6992 = vst [vmem:[%s488 + $0x238] sm:$0xff] %v6736
      %6993 = vst [vmem:[%s488 + $0x240] sm:$0xff] %v6737
      %6994 = vst.msk [vmem:[%s488 + $0x248] sm:$0xf] %vm3277, %v6738
      %6995 = vst [vmem:[%s488 + $0x24c] sm:$0xff] %v6739
      %6996 = vst [vmem:[%s488 + $0x254] sm:$0xff] %v6740
      %6997 = vst [vmem:[%s488 + $0x25c] sm:$0xff] %v6741
      %6998 = vst.msk [vmem:[%s488 + $0x264] sm:$0xf] %vm3277, %v6742
      %6999 = vst [vmem:[%s488 + $0x268] sm:$0xff] %v6743
      %7000 = vst [vmem:[%s488 + $0x270] sm:$0xff] %v6744
      %7001 = vst [vmem:[%s488 + $0x278] sm:$0xff] %v6745
      %7002 = vst.msk [vmem:[%s488 + $0x280] sm:$0xf] %vm3277, %v6746
      %7003 = vst [vmem:[%s488 + $0x284] sm:$0xff] %v6747
      %7004 = vst [vmem:[%s488 + $0x28c] sm:$0xff] %v6748
      %7005 = vst [vmem:[%s488 + $0x294] sm:$0xff] %v6749
      %7006 = vst.msk [vmem:[%s488 + $0x29c] sm:$0xf] %vm3277, %v6750
      %7007 = vst [vmem:[%s488 + $0x2a0] sm:$0xff] %v6751
      %7008 = vst [vmem:[%s488 + $0x2a8] sm:$0xff] %v6752
      %7009 = vst [vmem:[%s488 + $0x2b0] sm:$0xff] %v6753
      %7010 = vst.msk [vmem:[%s488 + $0x2b8] sm:$0xf] %vm3277, %v6754
      %7011 = vst [vmem:[%s488 + $0x2bc] sm:$0xff] %v6755
      %7012 = vst [vmem:[%s488 + $0x2c4] sm:$0xff] %v6756
      %7013 = vst [vmem:[%s488 + $0x2cc] sm:$0xff] %v6757
      %7014 = vst.msk [vmem:[%s488 + $0x2d4] sm:$0xf] %vm3277, %v6758
      %7015 = vst [vmem:[%s488 + $0x2d8] sm:$0xff] %v6759
      %7016 = vst [vmem:[%s488 + $0x2e0] sm:$0xff] %v6760
      %7017 = vst [vmem:[%s488 + $0x2e8] sm:$0xff] %v6761
      %7018 = vst.msk [vmem:[%s488 + $0x2f0] sm:$0xf] %vm3277, %v6762
      %7019 = vst [vmem:[%s488 + $0x2f4] sm:$0xff] %v6763
      %7020 = vst [vmem:[%s488 + $0x2fc] sm:$0xff] %v6764
      %7021 = vst [vmem:[%s488 + $0x304] sm:$0xff] %v6765
      %7022 = vst.msk [vmem:[%s488 + $0x30c] sm:$0xf] %vm3277, %v6766
      %7023 = vst [vmem:[%s488 + $0x310] sm:$0xff] %v6767
      %7024 = vst [vmem:[%s488 + $0x318] sm:$0xff] %v6768
      %7025 = vst [vmem:[%s488 + $0x320] sm:$0xff] %v6769
      %7026 = vst.msk [vmem:[%s488 + $0x328] sm:$0xf] %vm3277, %v6770
      %7027 = vst [vmem:[%s488 + $0x32c] sm:$0xff] %v6771
      %7028 = vst [vmem:[%s488 + $0x334] sm:$0xff] %v6772
      %7029 = vst [vmem:[%s488 + $0x33c] sm:$0xff] %v6773
      %7030 = vst.msk [vmem:[%s488 + $0x344] sm:$0xf] %vm3277, %v6774
      %7031 = vst [vmem:[%s488 + $0x348] sm:$0xff] %v6775
      %7032 = vst [vmem:[%s488 + $0x350] sm:$0xff] %v6776
      %7033 = vst [vmem:[%s488 + $0x358] sm:$0xff] %v6777
      %7034 = vst.msk [vmem:[%s488 + $0x360] sm:$0xf] %vm3277, %v6778
      %7035 = vst [vmem:[%s488 + $0x364] sm:$0xff] %v6779
      %7036 = vst [vmem:[%s488 + $0x36c] sm:$0xff] %v6780
      %7037 = vst [vmem:[%s488 + $0x374] sm:$0xff] %v6781
      %7038 = vst.msk [vmem:[%s488 + $0x37c] sm:$0xf] %vm3277, %v6782
      %s7039 = smul.u32 32, %s26
      %p7040 = scmp.lt.s32.totalorder %s7039, 127
      %s7041 = scalar_select %p7040, %s7039, 127
      %s7042 = smul.addr %s7041, 4
      %s7043 = scalar_lea.vmem %s13, %s7042
      %s7044 = smul.u32 32, %s26
      %p7045 = scmp.lt.s32.totalorder %s7044, 127
      %s7046 = scalar_select %p7045, %s7044, 127
      %s7047 = smul.addr %s7046, 7
      %s7048 = smul.addr %s7047, 4
      %s7049 = scalar_lea.vmem %s14, %s7048
      // Predicated region
      $region73: #{model_ae_forward.1} parent=71 // pred_check
        %p7050 = pneg %p322
      $region74: #{model_ae_forward.1} parent=71 // pred_check_branch
        %7052 = sbr.rel (%p7050) target = $region76
      $region75: #{model_ae_forward.1} parent=71 // pred_region
        %s7053 = smul.u32 32, %s26
      $region76: #{model_ae_forward.1} parent=71 // pred_fallthru
        _
      // Predicated region
      $region77: #{model_ae_forward.1} parent=71 // pred_check
        %p7054 = pneg %p348
      $region78: #{model_ae_forward.1} parent=71 // pred_check_branch
        %7056 = sbr.rel (%p7054) target = $region80
      $region79: #{model_ae_forward.1} parent=71 // pred_region
        %s7057 = smul.u32 32, %s26
      $region80: #{model_ae_forward.1} parent=71 // pred_fallthru
        _
    $region72: #{model_ae_forward.1} parent=5 // pred_fallthru
      _
    %p7058 = scmp.le.s32.totalorder 2, %s21
    // Predicated region
    $region81: #{model_ae_forward.1} parent=5 // pred_check
      %p7059 = pneg %p7058
    $region82: #{model_ae_forward.1} parent=5 // pred_check_branch
      %7061 = sbr.rel (%p7059) target = $region84
    $region83: #{model_ae_forward.1} parent=5 // pred_region
      %s7062 = ssub.s32 %s21, 2
      // Predicated region
      $region85: #{model_ae_forward.1} parent=83 // pred_check
        %p7063 = pneg %p328
      $region86: #{model_ae_forward.1} parent=83 // pred_check_branch
        %7065 = sbr.rel (%p7063) target = $region88
      $region87: #{model_ae_forward.1} parent=83 // pred_region
        %s7066 = smul.u32 32, %s27
        %p7067 = scmp.lt.s32.totalorder %s7066, 127
        %s7068 = scalar_select %p7067, %s7066, 127
        %s7069 = smul.addr %s7068, 4
        %s7070 = scalar_lea.vmem %s13, %s7069
      $region88: #{model_ae_forward.1} parent=83 // pred_fallthru
        _
      // Predicated region
      $region89: #{model_ae_forward.1} parent=83 // pred_check
        %p7071 = pneg %p354
      $region90: #{model_ae_forward.1} parent=83 // pred_check_branch
        %7073 = sbr.rel (%p7071) target = $region92
      $region91: #{model_ae_forward.1} parent=83 // pred_region
        %s7074 = smul.u32 32, %s27
        %p7075 = scmp.lt.s32.totalorder %s7074, 127
        %s7076 = scalar_select %p7075, %s7074, 127
        %s7077 = smul.addr %s7076, 7
        %s7078 = smul.addr %s7077, 4
        %s7079 = scalar_lea.vmem %s14, %s7078
      $region92: #{model_ae_forward.1} parent=83 // pred_fallthru
        _
    $region84: #{model_ae_forward.1} parent=5 // pred_fallthru
      _
  $region6: #{model_ae_forward.1} parent=0 // loop_footer
    %s25 = sadd.s32 1, %s21
  $region7: #{model_ae_forward.1} parent=0 // loop_footer_branch
    %20 = sbr.rel target = $region3
  $region8: #{model_ae_forward.1} parent=0 // loop_exit
    _

</llo_original>
